<compile_context>
chip_gen: v7x
topology: tpu7x:2x2x1
jax: 0.10.0
libtpu: 0.0.40
codegen_flags: <defaults>
</compile_context>

<pallas_src>
import jax
import jax.numpy as jnp
from jax.experimental import pallas as pl
from jax.experimental.pallas import tpu as pltpu

EPS = 1e-5
_HP = jax.lax.Precision.HIGHEST      # only used by the pure-JAX reference

# Optional Pallas/Mosaic features, feature-detected at first call and cached.
_FEATURES = {"strided_reads": True, "single_buffer_consts": True}


# --------------------------------------------------------------------------
# In-kernel helpers
# --------------------------------------------------------------------------
def _conv3x3(src_ref, w_ref, rows, cols, rstride, cstride, cin):
    """3x3 conv of a padded (.., W+2, C) scratch ref with HWIO-flattened weights
    w_ref (9, C, D): 9 shifted bf16 MXU matmuls, f32 accumulator initialised
    from the first tap.  rstride/cstride apply the conv stride at read time.
    # TODO(synk): for Cin<=128 layers fuse the 3 kx taps into one K=3*Cin matmul
    # (3 MXU pushes instead of 9); on v7x accumulate taps in the MRB via explicit
    # matmul_push_rhs / matmul_acc_lhs / matmul_pop instead of VPU adds.
    """
    acc = None
    for t in range(9):
        ky, kx = divmod(t, 3)
        if rstride == 1 and cstride == 1:
            patch = src_ref[pl.ds(ky, rows), pl.ds(kx, cols), :]
        else:
            patch = src_ref[pl.ds(ky, rows, stride=rstride),
                            pl.ds(kx, cols, stride=cstride), :]
        d = jnp.dot(patch.reshape(rows * cols, cin), w_ref[t],
                    preferred_element_type=jnp.float32)
        acc = d if acc is None else acc + d
    return acc                                            # (rows*cols, D) f32


def _subsample(v, s):
    """v[::s, ::s, :] from reshapes + static slices (fallback when strided
    ref reads are unavailable)."""
    if s == 1:
        return v
    H_, W_, C = v.shape
    v = v.reshape(H_ // s, s, W_, C)[:, 0, :, :]
    v = v.reshape(H_ // s, W_ // s, s, C)[:, :, 0, :]
    return v


# --------------------------------------------------------------------------
# Fused kernel: BN1 -> conv3x3 -> PReLU -> conv3x3(stride) -> BN2 -> +shortcut
# One grid step = one (batch element, row band).
# --------------------------------------------------------------------------
def _make_kernel(stride, conv_shortcut, H, W, Cin, D, band, use_strided):
    R = band + 2                      # conv1 rows computed per band (1-row halo)
    Bo = band // stride               # output rows per band
    Wo = W // stride
    strided_conv2 = use_strided and stride > 1

    def kernel(*refs):
        if conv_shortcut:
            (x_ref, s1_ref, b1_ref, w1_ref, alpha_ref, w2_ref, s2_ref, b2_ref,
             wsc_ref, ssc_ref, bsc_ref, o_ref, xp_sc, yp_sc) = refs
        else:
            (x_ref, s1_ref, b1_ref, w1_ref, alpha_ref, w2_ref, s2_ref, b2_ref,
             o_ref, xp_sc, yp_sc) = refs

        b = pl.program_id(1)
        nb = pl.num_programs(1)
        band_start = pl.multiple_of(b * band, band)

        s1 = s1_ref[...]
        b1v = b1_ref[...]

        def bn1(v):                                       # folded eval-mode BN1
            return (v.astype(jnp.float32) * s1 + b1v).astype(jnp.bfloat16)

        # ---- stage BN1(x) band (+2-row halo) into the padded bf16 scratch ----
        # W-padding columns every band (cheap; correct under megacore sharding).
        xp_sc[pl.ds(0, band + 4), pl.ds(0, 1), :] = jnp.zeros((band + 4, 1, Cin), jnp.bfloat16)
        xp_sc[pl.ds(0, band + 4), pl.ds(W + 1, 1), :] = jnp.zeros((band + 4, 1, Cin), jnp.bfloat16)

        x_body = x_ref[0, pl.ds(band_start, band), :, :]          # (band, W, Cin)
        xp_sc[pl.ds(2, band), pl.ds(1, W), :] = bn1(x_body)

        @pl.when(b == 0)                                   # conv1 top zero padding
        def _():
            xp_sc[pl.ds(0, 2), pl.ds(0, W + 2), :] = jnp.zeros((2, W + 2, Cin), jnp.bfloat16)

        @pl.when(b > 0)                                    # top halo rows
        def _():
            xp_sc[pl.ds(0, 2), pl.ds(1, W), :] = bn1(
                x_ref[0, pl.ds(band_start - 2, 2), :, :])

        @pl.when(b == nb - 1)                              # conv1 bottom zero padding
        def _():
            xp_sc[pl.ds(band + 2, 2), pl.ds(0, W + 2), :] = jnp.zeros((2, W + 2, Cin), jnp.bfloat16)

        @pl.when(b < nb - 1)                               # bottom halo rows
        def _():
            xp_sc[pl.ds(band + 2, 2), pl.ds(1, W), :] = bn1(
                x_ref[0, pl.ds(band_start + band, 2), :, :])

        # ---- conv1 (3x3, stride 1) + PReLU over band+2 rows -------------------
        acc1 = _conv3x3(xp_sc, w1_ref, R, W, 1, 1, Cin)            # (R*W, D)
        y1 = jnp.where(acc1 > 0, acc1, acc1 * alpha_ref[...])

        yp_sc[pl.ds(0, R), pl.ds(0, 1), :] = jnp.zeros((R, 1, D), jnp.bfloat16)
        yp_sc[pl.ds(0, R), pl.ds(W + 1, 1), :] = jnp.zeros((R, 1, D), jnp.bfloat16)
        yp_sc[pl.ds(0, R), pl.ds(1, W), :] = y1.reshape(R, W, D).astype(jnp.bfloat16)

        @pl.when(b == 0)                                   # conv2 top zero padding
        def _():
            yp_sc[pl.ds(0, 1), pl.ds(0, W + 2), :] = jnp.zeros((1, W + 2, D), jnp.bfloat16)

        @pl.when(b == nb - 1)                              # conv2 bottom zero padding
        def _():
            yp_sc[pl.ds(R - 1, 1), pl.ds(0, W + 2), :] = jnp.zeros((1, W + 2, D), jnp.bfloat16)

        # ---- conv2 (3x3, stride s) + BN2 --------------------------------------
        if strided_conv2:
            # Stride applied directly via strided reads: no wasted MXU work.
            acc2 = _conv3x3(yp_sc, w2_ref, Bo, Wo, stride, stride, D)
            res = (acc2 * s2_ref[...] + b2_ref[...]).reshape(Bo, Wo, D)
        else:
            acc2 = _conv3x3(yp_sc, w2_ref, band, W, 1, 1, D)
            res = _subsample((acc2 * s2_ref[...] + b2_ref[...]).reshape(band, W, D),
                             stride)

        # ---- shortcut (from the x block already resident in VMEM) -------------
        if stride == 1:
            x_s = x_body
        elif use_strided:
            x_s = x_ref[0, pl.ds(band_start, Bo, stride=stride),
                        pl.ds(0, Wo, stride=stride), :]
        else:
            x_s = _subsample(x_body, stride)
        if conv_shortcut:                                  # 1x1 conv + BN shortcut
            sc = jnp.dot(x_s.reshape(Bo * Wo, Cin).astype(jnp.bfloat16),
                         wsc_ref[...], preferred_element_type=jnp.float32)
            sc = (sc * ssc_ref[...] + bsc_ref[...]).reshape(Bo, Wo, D)
        else:                                              # MaxPool2d(1, stride)
            sc = x_s.astype(jnp.float32)

        o_ref[0] = (res + sc).astype(o_ref.dtype)

    return kernel


# --------------------------------------------------------------------------
# Wrapper
# --------------------------------------------------------------------------
def _fold_bn(g, b, m, v):
    s = g / jnp.sqrt(v + EPS)
    return (s.reshape(1, -1).astype(jnp.float32),
            (b - m * s).reshape(1, -1).astype(jnp.float32))


def _pick_band(H, stride, requested=None):
    """Largest band <= target that divides H and is a multiple of stride."""
    target = 16 if requested is None else requested
    target = int(max(stride, min(target, H)))
    for cand in range(target, 1, -1):
        if H % cand == 0 and cand % stride == 0:
            return cand
    return H


def bottleneck_ir_forward(x_nchw, p, stride, band_rows=None):
    """Forward of bottleneck_IR.  x_nchw: (N, Cin, H, W) -> (N, D, H/s, W/s)."""
    # TODO(synk): an NHWC-native entry point (or NCHW ingest with an in-kernel
    # transpose) would remove this XLA transpose HBM round-trip; bf16 I/O would
    # further halve input/output HBM traffic for bf16 networks.
    x = jnp.transpose(x_nchw, (0, 2, 3, 1))                       # NHWC, caller dtype
    N, H, W, Cin = x.shape
    D = p["w1"].shape[0]
    assert H % stride == 0 and W % stride == 0
    Ho, Wo = H // stride, W // stride

    band = _pick_band(H, stride, band_rows)
    nb = H // band
    Bo = band // stride

    s1, b1 = _fold_bn(p["g1"], p["b1"], p["m1"], p["v1"])
    s2, b2 = _fold_bn(p["g2"], p["b2"], p["m2"], p["v2"])
    w1k = jnp.transpose(p["w1"], (2, 3, 1, 0)).reshape(9, Cin, D).astype(jnp.bfloat16)
    w2k = jnp.transpose(p["w2"], (2, 3, 1, 0)).reshape(9, D, D).astype(jnp.bfloat16)
    alpha = p["alpha"].reshape(1, D).astype(jnp.float32)

    conv_sc = (Cin != D)
    args = [x, s1, b1, w1k, alpha, w2k, s2, b2]
    const_shapes = [None, (1, Cin), (1, Cin), (9, Cin, D), (1, D),
                    (9, D, D), (1, D), (1, D)]
    if conv_sc:
        ssc, bsc = _fold_bn(p["g_sc"], p["b_sc"], p["m_sc"], p["v_sc"])
        wsck = p["w_sc"][:, :, 0, 0].T.astype(jnp.bfloat16)        # (Cin, D)
        args += [wsck, ssc, bsc]
        const_shapes += [(Cin, D), (1, D), (1, D)]

    # Explicit VMEM budget (double-buffered activations, worst-case 2x weights).
    est = (2 * H * W * Cin * x.dtype.itemsize
           + 2 * Bo * Wo * D * 4
           + (band + 4) * (W + 2) * Cin * 2
           + (band + 2) * (W + 2) * D * 2
           + 4 * (9 * Cin * D + 9 * D * D + Cin * D)
           + 16 * (Cin + 4 * D))
    vmem_limit = int(min(64 * 2 ** 20, max(32 * 2 ** 20, 2 * est)))

    def build(use_strided, single_buffer_consts):
        in_specs = []
        for shp in const_shapes:
            if shp is None:                                        # the activation input
                in_specs.append(pl.BlockSpec((1, H, W, Cin), lambda n, b: (n, 0, 0, 0)))
            else:                                                  # grid-constant operand
                zero_map = (lambda r: (lambda n, b: (0,) * r))(len(shp))
                if single_buffer_consts:
                    in_specs.append(pl.BlockSpec(shp, zero_map,
                                                 pipeline_mode=pl.Buffered(1)))
                else:
                    in_specs.append(pl.BlockSpec(shp, zero_map))
        return pl.pallas_call(
            _make_kernel(stride, conv_sc, H, W, Cin, D, band, use_strided),
            out_shape=jax.ShapeDtypeStruct((N, Ho, Wo, D), jnp.float32),
            grid_spec=pltpu.PrefetchScalarGridSpec(
                num_scalar_prefetch=0,
                grid=(N, nb),
                in_specs=in_specs,
                out_specs=pl.BlockSpec((1, Bo, Wo, D), lambda n, b: (n, b, 0, 0)),
                scratch_shapes=[
                    pltpu.VMEM((band + 4, W + 2, Cin), jnp.bfloat16),   # padded BN1(x)
                    pltpu.VMEM((band + 2, W + 2, D), jnp.bfloat16),     # padded PReLU(conv1)
                ],
            ),
            compiler_params=pltpu.CompilerParams(
                dimension_semantics=("parallel", "parallel"),
                vmem_limit_bytes=vmem_limit),
        )

    # Try optional features first; drop them (and cache the decision) if this
    # Pallas/Mosaic build rejects them.  All configurations are semantically
    # identical — only performance differs.
    cfgs = [(_FEATURES["strided_reads"], _FEATURES["single_buffer_consts"])]
    if cfgs[0][1]:
        cfgs.append((cfgs[0][0], False))
    if cfgs[0][0]:
        cfgs.append((False, False))
    last_err = None
    for use_strided, single_buf in cfgs:
        try:
            out = jax.block_until_ready(build(use_strided, single_buf)(*args))
            _FEATURES["strided_reads"] = use_strided
            _FEATURES["single_buffer_consts"] = single_buf
            return jnp.transpose(out, (0, 3, 1, 2))                # back to NCHW
        except Exception as e:                                     # retry w/o optional feature
            last_err = e
    raise last_err


# --------------------------------------------------------------------------
# Pure-JAX reference (mirrors the PyTorch module with eval-mode BatchNorm)
# --------------------------------------------------------------------------
def reference_forward(x, p, stride):
    cin = x.shape[1]
    d = p["w1"].shape[0]

    def bn(v, g, b, m, var):
        g, b, m, var = (t[None, :, None, None] for t in (g, b, m, var))
        return (v - m) / jnp.sqrt(var + EPS) * g + b

    dn = ("NCHW", "OIHW", "NCHW")
    if cin == d:
        sc = x[:, :, ::stride, ::stride]
    else:
        sc = jax.lax.conv_general_dilated(x, p["w_sc"], (stride, stride),
                                          "VALID", dimension_numbers=dn,
                                          precision=_HP)
        sc = bn(sc, p["g_sc"], p["b_sc"], p["m_sc"], p["v_sc"])
    r = bn(x, p["g1"], p["b1"], p["m1"], p["v1"])
    r = jax.lax.conv_general_dilated(r, p["w1"], (1, 1), ((1, 1), (1, 1)),
                                     dimension_numbers=dn, precision=_HP)
    r = jnp.where(r > 0, r, r * p["alpha"][None, :, None, None])
    r = jax.lax.conv_general_dilated(r, p["w2"], (stride, stride),
                                     ((1, 1), (1, 1)),
                                     dimension_numbers=dn, precision=_HP)
    r = bn(r, p["g2"], p["b2"], p["m2"], p["v2"])
    return r + sc


def make_params(key, cin, d):
    ks = jax.random.split(key, 15)
    u = lambda k, s: jax.random.uniform(k, s, jnp.float32, 0.5, 1.5)
    n = lambda k, s: 0.1 * jax.random.normal(k, s, jnp.float32)
    return dict(
        g1=u(ks[0], (cin,)), b1=n(ks[1], (cin,)),
        m1=n(ks[2], (cin,)), v1=u(ks[3], (cin,)),
        w1=n(ks[4], (d, cin, 3, 3)),
        alpha=jnp.full((d,), 0.25, jnp.float32),   # PyTorch PReLU default init
        w2=n(ks[5], (d, d, 3, 3)),
        g2=u(ks[6], (d,)), b2=n(ks[7], (d,)),
        m2=n(ks[8], (d,)), v2=u(ks[9], (d,)),
        w_sc=n(ks[10], (d, cin, 1, 1)),
        g_sc=u(ks[11], (d,)), b_sc=n(ks[12], (d,)),
        m_sc=n(ks[13], (d,)), v_sc=u(ks[14], (d,)),
    )


def _rel_err(a, b):
    a = a.astype(jnp.float32).ravel()
    b = b.astype(jnp.float32).ravel()
    return float(jnp.linalg.norm(a - b) / (jnp.linalg.norm(b) + 1e-12))


if __name__ == "__main__":
    key = jax.random.PRNGKey(0)
    k1, k2, k3, k4 = jax.random.split(key, 4)

    # Case 1: in_channel != depth, stride 2  -> conv1x1 + BN shortcut; 2 row bands
    N, Cin, D, H, W = 2, 4, 8, 16, 16
    p = make_params(k1, Cin, D)
    x = jax.random.normal(k2, (N, Cin, H, W), jnp.float32)
    out = jax.block_until_ready(bottleneck_ir_forward(x, p, 2, band_rows=8))
    ref = jax.block_until_ready(reference_forward(x, p, 2))
    assert out.shape == ref.shape == (N, D, H // 2, W // 2)
    assert _rel_err(out, ref) < 4e-2, f"case1 rel err {_rel_err(out, ref)}"

    # Case 2: in_channel == depth, stride 1 -> identity shortcut; single band
    Cin2 = D2 = 8
    p2 = make_params(k3, Cin2, D2)
    x2 = jax.random.normal(k4, (N, Cin2, H, W), jnp.float32)
    out2 = jax.block_until_ready(bottleneck_ir_forward(x2, p2, 1))
    ref2 = jax.block_until_ready(reference_forward(x2, p2, 1))
    assert out2.shape == ref2.shape == (N, D2, H, W)
    assert _rel_err(out2, ref2) < 4e-2, f"case2 rel err {_rel_err(out2, ref2)}"

    # Case 3: in_channel == depth, stride 2 -> MaxPool2d(1, 2) shortcut; 4 row bands
    out3 = jax.block_until_ready(bottleneck_ir_forward(x2, p2, 2, band_rows=4))
    ref3 = jax.block_until_ready(reference_forward(x2, p2, 2))
    assert out3.shape == ref3.shape == (N, D2, H // 2, W // 2)
    assert _rel_err(out3, ref3) < 4e-2, f"case3 rel err {_rel_err(out3, ref3)}"

    print("KERNEL_OK")
</pallas_src>

<mosaic_0001>
module attributes {stable_mosaic.version = 11 : i64} {
  func.func @kernel(%arg0: i32, %arg1: i32, %arg2: memref<1x16x16x4xf32, #tpu.memory_space<vmem>>, %arg3: memref<1x4xf32, #tpu.memory_space<vmem>>, %arg4: memref<1x4xf32, #tpu.memory_space<vmem>>, %arg5: memref<9x4x8xbf16, #tpu.memory_space<vmem>>, %arg6: memref<1x8xf32, #tpu.memory_space<vmem>>, %arg7: memref<9x8x8xbf16, #tpu.memory_space<vmem>>, %arg8: memref<1x8xf32, #tpu.memory_space<vmem>>, %arg9: memref<1x8xf32, #tpu.memory_space<vmem>>, %arg10: memref<4x8xbf16, #tpu.memory_space<vmem>>, %arg11: memref<1x8xf32, #tpu.memory_space<vmem>>, %arg12: memref<1x8xf32, #tpu.memory_space<vmem>>, %arg13: memref<1x4x8x8xf32, #tpu.memory_space<vmem>>, %arg14: memref<12x18x4xbf16, #tpu.memory_space<vmem>>, %arg15: memref<10x18x8xbf16, #tpu.memory_space<vmem>>) attributes {dimension_semantics = [#tpu.dimension_semantics<parallel>, #tpu.dimension_semantics<parallel>], iteration_bounds = array<i64: 2, 2>, scalar_prefetch = 0 : i64, scratch_operands = 2 : i64, tpu.core_type = #tpu.core_type<tc>, window_params = [{transform_indices = @transform_0, window_bounds = array<i64: 1, 16, 16, 4>}, {pipeline_mode = #tpu.pipeline_mode<synchronous>, transform_indices = @transform_1, window_bounds = array<i64: 1, 4>}, {pipeline_mode = #tpu.pipeline_mode<synchronous>, transform_indices = @transform_2, window_bounds = array<i64: 1, 4>}, {pipeline_mode = #tpu.pipeline_mode<synchronous>, transform_indices = @transform_3, window_bounds = array<i64: 9, 4, 8>}, {pipeline_mode = #tpu.pipeline_mode<synchronous>, transform_indices = @transform_4, window_bounds = array<i64: 1, 8>}, {pipeline_mode = #tpu.pipeline_mode<synchronous>, transform_indices = @transform_5, window_bounds = array<i64: 9, 8, 8>}, {pipeline_mode = #tpu.pipeline_mode<synchronous>, transform_indices = @transform_6, window_bounds = array<i64: 1, 8>}, {pipeline_mode = #tpu.pipeline_mode<synchronous>, transform_indices = @transform_7, window_bounds = array<i64: 1, 8>}, {pipeline_mode = #tpu.pipeline_mode<synchronous>, transform_indices = @transform_8, window_bounds = array<i64: 4, 8>}, {pipeline_mode = #tpu.pipeline_mode<synchronous>, transform_indices = @transform_9, window_bounds = array<i64: 1, 8>}, {pipeline_mode = #tpu.pipeline_mode<synchronous>, transform_indices = @transform_10, window_bounds = array<i64: 1, 8>}, {transform_indices = @transform_11, window_bounds = array<i64: 1, 4, 8, 8>}]} {
    %c8_i32 = arith.constant 8 : i32
    %0 = arith.muli %arg1, %c8_i32 : i32
    %1 = tpu.assume_multiple %0, 8 : i32
    %c0 = arith.constant 0 : index
    %c0_0 = arith.constant 0 : index
    %2 = vector.load %arg3[%c0, %c0_0] : memref<1x4xf32, #tpu.memory_space<vmem>>, vector<1x4xf32>
    %c0_1 = arith.constant 0 : index
    %c0_2 = arith.constant 0 : index
    %3 = vector.load %arg4[%c0_1, %c0_2] : memref<1x4xf32, #tpu.memory_space<vmem>>, vector<1x4xf32>
    %cst = arith.constant 0.000000e+00 : bf16
    %4 = vector.broadcast %cst : bf16 to vector<12x1x4xbf16>
    %c0_3 = arith.constant 0 : index
    %c0_4 = arith.constant 0 : index
    %c0_5 = arith.constant 0 : index
    %5 = vector.load %arg14[%c0_3, %c0_4, %c0_5] : memref<12x18x4xbf16, #tpu.memory_space<vmem>>, vector<12x1x4xbf16>
    tpu.vector_store %arg14[%c0_3, %c0_4, %c0_5], %4 {strides = array<i32>} : memref<12x18x4xbf16, #tpu.memory_space<vmem>>, vector<12x1x4xbf16>,
    %cst_6 = arith.constant 0.000000e+00 : bf16
    %6 = vector.broadcast %cst_6 : bf16 to vector<12x1x4xbf16>
    %c0_7 = arith.constant 0 : index
    %c17 = arith.constant 17 : index
    %c0_8 = arith.constant 0 : index
    %7 = vector.load %arg14[%c0_7, %c17, %c0_8] : memref<12x18x4xbf16, #tpu.memory_space<vmem>>, vector<12x1x4xbf16>
    tpu.vector_store %arg14[%c0_7, %c17, %c0_8], %6 {strides = array<i32>} : memref<12x18x4xbf16, #tpu.memory_space<vmem>>, vector<12x1x4xbf16>,
    %c0_9 = arith.constant 0 : index
    %8 = arith.index_cast %1 : i32 to index
    %c0_10 = arith.constant 0 : index
    %c0_11 = arith.constant 0 : index
    %9 = vector.load %arg2[%c0_9, %8, %c0_10, %c0_11] : memref<1x16x16x4xf32, #tpu.memory_space<vmem>>, vector<1x8x16x4xf32>
    %10 = vector.shape_cast %9 : vector<1x8x16x4xf32> to vector<8x16x4xf32>
    %11 = vector.shape_cast %2 : vector<1x4xf32> to vector<1x1x4xf32>
    %12 = vector.broadcast %11 : vector<1x1x4xf32> to vector<8x16x4xf32>
    %13 = arith.mulf %10, %12 : vector<8x16x4xf32>
    %14 = vector.shape_cast %3 : vector<1x4xf32> to vector<1x1x4xf32>
    %15 = vector.broadcast %14 : vector<1x1x4xf32> to vector<8x16x4xf32>
    %16 = arith.addf %13, %15 : vector<8x16x4xf32>
    %17 = arith.truncf %16 : vector<8x16x4xf32> to vector<8x16x4xbf16>
    %c2 = arith.constant 2 : index
    %c1 = arith.constant 1 : index
    %c0_12 = arith.constant 0 : index
    %18 = vector.load %arg14[%c2, %c1, %c0_12] : memref<12x18x4xbf16, #tpu.memory_space<vmem>>, vector<8x16x4xbf16>
    tpu.vector_store %arg14[%c2, %c1, %c0_12], %17 {strides = array<i32>} : memref<12x18x4xbf16, #tpu.memory_space<vmem>>, vector<8x16x4xbf16>,
    %c0_i32 = arith.constant 0 : i32
    %19 = arith.cmpi eq, %arg1, %c0_i32 : i32
    %20 = arith.extui %19 : i1 to i32
    %c0_i32_13 = arith.constant 0 : i32
    %21 = arith.cmpi ne, %20, %c0_i32_13 : i32
    scf.if %21 {
      %cst_175 = arith.constant 0.000000e+00 : bf16
      %181 = vector.broadcast %cst_175 : bf16 to vector<2x18x4xbf16>
      %c0_176 = arith.constant 0 : index
      %c0_177 = arith.constant 0 : index
      %c0_178 = arith.constant 0 : index
      %182 = vector.load %arg14[%c0_176, %c0_177, %c0_178] : memref<12x18x4xbf16, #tpu.memory_space<vmem>>, vector<2x18x4xbf16>
      tpu.vector_store %arg14[%c0_176, %c0_177, %c0_178], %181 {strides = array<i32>} : memref<12x18x4xbf16, #tpu.memory_space<vmem>>, vector<2x18x4xbf16>,
    } else {
    }
    %c0_i32_14 = arith.constant 0 : i32
    %22 = arith.cmpi sgt, %arg1, %c0_i32_14 : i32
    %23 = arith.extui %22 : i1 to i32
    %c0_i32_15 = arith.constant 0 : i32
    %24 = arith.cmpi ne, %23, %c0_i32_15 : i32
    scf.if %24 {
      %c2_i32 = arith.constant 2 : i32
      %181 = arith.subi %1, %c2_i32 : i32
      %c0_175 = arith.constant 0 : index
      %182 = arith.index_cast %181 : i32 to index
      %c0_176 = arith.constant 0 : index
      %c0_177 = arith.constant 0 : index
      %183 = vector.load %arg2[%c0_175, %182, %c0_176, %c0_177] : memref<1x16x16x4xf32, #tpu.memory_space<vmem>>, vector<1x2x16x4xf32>
      %184 = vector.shape_cast %183 : vector<1x2x16x4xf32> to vector<2x16x4xf32>
      %185 = vector.shape_cast %2 : vector<1x4xf32> to vector<1x1x4xf32>
      %186 = vector.broadcast %185 : vector<1x1x4xf32> to vector<2x16x4xf32>
      %187 = arith.mulf %184, %186 : vector<2x16x4xf32>
      %188 = vector.shape_cast %3 : vector<1x4xf32> to vector<1x1x4xf32>
      %189 = vector.broadcast %188 : vector<1x1x4xf32> to vector<2x16x4xf32>
      %190 = arith.addf %187, %189 : vector<2x16x4xf32>
      %191 = arith.truncf %190 : vector<2x16x4xf32> to vector<2x16x4xbf16>
      %c0_178 = arith.constant 0 : index
      %c1_179 = arith.constant 1 : index
      %c0_180 = arith.constant 0 : index
      %192 = vector.load %arg14[%c0_178, %c1_179, %c0_180] : memref<12x18x4xbf16, #tpu.memory_space<vmem>>, vector<2x16x4xbf16>
      tpu.vector_store %arg14[%c0_178, %c1_179, %c0_180], %191 {strides = array<i32>} : memref<12x18x4xbf16, #tpu.memory_space<vmem>>, vector<2x16x4xbf16>,
    } else {
    }
    %c1_i32 = arith.constant 1 : i32
    %25 = arith.cmpi eq, %arg1, %c1_i32 : i32
    %26 = arith.extui %25 : i1 to i32
    %c0_i32_16 = arith.constant 0 : i32
    %27 = arith.cmpi ne, %26, %c0_i32_16 : i32
    scf.if %27 {
      %cst_175 = arith.constant 0.000000e+00 : bf16
      %181 = vector.broadcast %cst_175 : bf16 to vector<2x18x4xbf16>
      %c10 = arith.constant 10 : index
      %c0_176 = arith.constant 0 : index
      %c0_177 = arith.constant 0 : index
      %182 = vector.load %arg14[%c10, %c0_176, %c0_177] : memref<12x18x4xbf16, #tpu.memory_space<vmem>>, vector<2x18x4xbf16>
      tpu.vector_store %arg14[%c10, %c0_176, %c0_177], %181 {strides = array<i32>} : memref<12x18x4xbf16, #tpu.memory_space<vmem>>, vector<2x18x4xbf16>,
    } else {
    }
    %c1_i32_17 = arith.constant 1 : i32
    %28 = arith.cmpi slt, %arg1, %c1_i32_17 : i32
    %29 = arith.extui %28 : i1 to i32
    %c0_i32_18 = arith.constant 0 : i32
    %30 = arith.cmpi ne, %29, %c0_i32_18 : i32
    scf.if %30 {
      %c8_i32_175 = arith.constant 8 : i32
      %181 = arith.addi %1, %c8_i32_175 : i32
      %c0_176 = arith.constant 0 : index
      %182 = arith.index_cast %181 : i32 to index
      %c0_177 = arith.constant 0 : index
      %c0_178 = arith.constant 0 : index
      %183 = vector.load %arg2[%c0_176, %182, %c0_177, %c0_178] : memref<1x16x16x4xf32, #tpu.memory_space<vmem>>, vector<1x2x16x4xf32>
      %184 = vector.shape_cast %183 : vector<1x2x16x4xf32> to vector<2x16x4xf32>
      %185 = vector.shape_cast %2 : vector<1x4xf32> to vector<1x1x4xf32>
      %186 = vector.broadcast %185 : vector<1x1x4xf32> to vector<2x16x4xf32>
      %187 = arith.mulf %184, %186 : vector<2x16x4xf32>
      %188 = vector.shape_cast %3 : vector<1x4xf32> to vector<1x1x4xf32>
      %189 = vector.broadcast %188 : vector<1x1x4xf32> to vector<2x16x4xf32>
      %190 = arith.addf %187, %189 : vector<2x16x4xf32>
      %191 = arith.truncf %190 : vector<2x16x4xf32> to vector<2x16x4xbf16>
      %c10 = arith.constant 10 : index
      %c1_179 = arith.constant 1 : index
      %c0_180 = arith.constant 0 : index
      %192 = vector.load %arg14[%c10, %c1_179, %c0_180] : memref<12x18x4xbf16, #tpu.memory_space<vmem>>, vector<2x16x4xbf16>
      tpu.vector_store %arg14[%c10, %c1_179, %c0_180], %191 {strides = array<i32>} : memref<12x18x4xbf16, #tpu.memory_space<vmem>>, vector<2x16x4xbf16>,
    } else {
    }
    %c0_19 = arith.constant 0 : index
    %c0_20 = arith.constant 0 : index
    %c0_21 = arith.constant 0 : index
    %31 = vector.load %arg14[%c0_19, %c0_20, %c0_21] : memref<12x18x4xbf16, #tpu.memory_space<vmem>>, vector<10x16x4xbf16>
    %32 = vector.shape_cast %31 : vector<10x16x4xbf16> to vector<160x4xbf16>
    %c0_22 = arith.constant 0 : index
    %c0_23 = arith.constant 0 : index
    %c0_24 = arith.constant 0 : index
    %33 = vector.load %arg5[%c0_22, %c0_23, %c0_24] : memref<9x4x8xbf16, #tpu.memory_space<vmem>>, vector<1x4x8xbf16>
    %34 = vector.shape_cast %33 : vector<1x4x8xbf16> to vector<4x8xbf16>
    %cst_25 = arith.constant dense<0.000000e+00> : vector<160x8xf32>
    %35 = tpu.matmul %32, %34, %cst_25 {dimension_numbers = #tpu.dot_dimension_numbers<[1], [0], [0], [1], [0, 0, 1, 1], [], []>} : vector<160x4xbf16>, vector<4x8xbf16>, vector<160x8xf32> -> vector<160x8xf32>
    %c0_26 = arith.constant 0 : index
    %c1_27 = arith.constant 1 : index
    %c0_28 = arith.constant 0 : index
    %36 = vector.load %arg14[%c0_26, %c1_27, %c0_28] : memref<12x18x4xbf16, #tpu.memory_space<vmem>>, vector<10x16x4xbf16>
    %37 = vector.shape_cast %36 : vector<10x16x4xbf16> to vector<160x4xbf16>
    %c1_29 = arith.constant 1 : index
    %c0_30 = arith.constant 0 : index
    %c0_31 = arith.constant 0 : index
    %38 = vector.load %arg5[%c1_29, %c0_30, %c0_31] : memref<9x4x8xbf16, #tpu.memory_space<vmem>>, vector<1x4x8xbf16>
    %39 = vector.shape_cast %38 : vector<1x4x8xbf16> to vector<4x8xbf16>
    %cst_32 = arith.constant dense<0.000000e+00> : vector<160x8xf32>
    %40 = tpu.matmul %37, %39, %cst_32 {dimension_numbers = #tpu.dot_dimension_numbers<[1], [0], [0], [1], [0, 0, 1, 1], [], []>} : vector<160x4xbf16>, vector<4x8xbf16>, vector<160x8xf32> -> vector<160x8xf32>
    %41 = arith.addf %35, %40 : vector<160x8xf32>
    %c0_33 = arith.constant 0 : index
    %c2_34 = arith.constant 2 : index
    %c0_35 = arith.constant 0 : index
    %42 = vector.load %arg14[%c0_33, %c2_34, %c0_35] : memref<12x18x4xbf16, #tpu.memory_space<vmem>>, vector<10x16x4xbf16>
    %43 = vector.shape_cast %42 : vector<10x16x4xbf16> to vector<160x4xbf16>
    %c2_36 = arith.constant 2 : index
    %c0_37 = arith.constant 0 : index
    %c0_38 = arith.constant 0 : index
    %44 = vector.load %arg5[%c2_36, %c0_37, %c0_38] : memref<9x4x8xbf16, #tpu.memory_space<vmem>>, vector<1x4x8xbf16>
    %45 = vector.shape_cast %44 : vector<1x4x8xbf16> to vector<4x8xbf16>
    %cst_39 = arith.constant dense<0.000000e+00> : vector<160x8xf32>
    %46 = tpu.matmul %43, %45, %cst_39 {dimension_numbers = #tpu.dot_dimension_numbers<[1], [0], [0], [1], [0, 0, 1, 1], [], []>} : vector<160x4xbf16>, vector<4x8xbf16>, vector<160x8xf32> -> vector<160x8xf32>
    %47 = arith.addf %41, %46 : vector<160x8xf32>
    %c1_40 = arith.constant 1 : index
    %c0_41 = arith.constant 0 : index
    %c0_42 = arith.constant 0 : index
    %48 = vector.load %arg14[%c1_40, %c0_41, %c0_42] : memref<12x18x4xbf16, #tpu.memory_space<vmem>>, vector<10x16x4xbf16>
    %49 = vector.shape_cast %48 : vector<10x16x4xbf16> to vector<160x4xbf16>
    %c3 = arith.constant 3 : index
    %c0_43 = arith.constant 0 : index
    %c0_44 = arith.constant 0 : index
    %50 = vector.load %arg5[%c3, %c0_43, %c0_44] : memref<9x4x8xbf16, #tpu.memory_space<vmem>>, vector<1x4x8xbf16>
    %51 = vector.shape_cast %50 : vector<1x4x8xbf16> to vector<4x8xbf16>
    %cst_45 = arith.constant dense<0.000000e+00> : vector<160x8xf32>
    %52 = tpu.matmul %49, %51, %cst_45 {dimension_numbers = #tpu.dot_dimension_numbers<[1], [0], [0], [1], [0, 0, 1, 1], [], []>} : vector<160x4xbf16>, vector<4x8xbf16>, vector<160x8xf32> -> vector<160x8xf32>
    %53 = arith.addf %47, %52 : vector<160x8xf32>
    %c1_46 = arith.constant 1 : index
    %c1_47 = arith.constant 1 : index
    %c0_48 = arith.constant 0 : index
    %54 = vector.load %arg14[%c1_46, %c1_47, %c0_48] : memref<12x18x4xbf16, #tpu.memory_space<vmem>>, vector<10x16x4xbf16>
    %55 = vector.shape_cast %54 : vector<10x16x4xbf16> to vector<160x4xbf16>
    %c4 = arith.constant 4 : index
    %c0_49 = arith.constant 0 : index
    %c0_50 = arith.constant 0 : index
    %56 = vector.load %arg5[%c4, %c0_49, %c0_50] : memref<9x4x8xbf16, #tpu.memory_space<vmem>>, vector<1x4x8xbf16>
    %57 = vector.shape_cast %56 : vector<1x4x8xbf16> to vector<4x8xbf16>
    %cst_51 = arith.constant dense<0.000000e+00> : vector<160x8xf32>
    %58 = tpu.matmul %55, %57, %cst_51 {dimension_numbers = #tpu.dot_dimension_numbers<[1], [0], [0], [1], [0, 0, 1, 1], [], []>} : vector<160x4xbf16>, vector<4x8xbf16>, vector<160x8xf32> -> vector<160x8xf32>
    %59 = arith.addf %53, %58 : vector<160x8xf32>
    %c1_52 = arith.constant 1 : index
    %c2_53 = arith.constant 2 : index
    %c0_54 = arith.constant 0 : index
    %60 = vector.load %arg14[%c1_52, %c2_53, %c0_54] : memref<12x18x4xbf16, #tpu.memory_space<vmem>>, vector<10x16x4xbf16>
    %61 = vector.shape_cast %60 : vector<10x16x4xbf16> to vector<160x4xbf16>
    %c5 = arith.constant 5 : index
    %c0_55 = arith.constant 0 : index
    %c0_56 = arith.constant 0 : index
    %62 = vector.load %arg5[%c5, %c0_55, %c0_56] : memref<9x4x8xbf16, #tpu.memory_space<vmem>>, vector<1x4x8xbf16>
    %63 = vector.shape_cast %62 : vector<1x4x8xbf16> to vector<4x8xbf16>
    %cst_57 = arith.constant dense<0.000000e+00> : vector<160x8xf32>
    %64 = tpu.matmul %61, %63, %cst_57 {dimension_numbers = #tpu.dot_dimension_numbers<[1], [0], [0], [1], [0, 0, 1, 1], [], []>} : vector<160x4xbf16>, vector<4x8xbf16>, vector<160x8xf32> -> vector<160x8xf32>
    %65 = arith.addf %59, %64 : vector<160x8xf32>
    %c2_58 = arith.constant 2 : index
    %c0_59 = arith.constant 0 : index
    %c0_60 = arith.constant 0 : index
    %66 = vector.load %arg14[%c2_58, %c0_59, %c0_60] : memref<12x18x4xbf16, #tpu.memory_space<vmem>>, vector<10x16x4xbf16>
    %67 = vector.shape_cast %66 : vector<10x16x4xbf16> to vector<160x4xbf16>
    %c6 = arith.constant 6 : index
    %c0_61 = arith.constant 0 : index
    %c0_62 = arith.constant 0 : index
    %68 = vector.load %arg5[%c6, %c0_61, %c0_62] : memref<9x4x8xbf16, #tpu.memory_space<vmem>>, vector<1x4x8xbf16>
    %69 = vector.shape_cast %68 : vector<1x4x8xbf16> to vector<4x8xbf16>
    %cst_63 = arith.constant dense<0.000000e+00> : vector<160x8xf32>
    %70 = tpu.matmul %67, %69, %cst_63 {dimension_numbers = #tpu.dot_dimension_numbers<[1], [0], [0], [1], [0, 0, 1, 1], [], []>} : vector<160x4xbf16>, vector<4x8xbf16>, vector<160x8xf32> -> vector<160x8xf32>
    %71 = arith.addf %65, %70 : vector<160x8xf32>
    %c2_64 = arith.constant 2 : index
    %c1_65 = arith.constant 1 : index
    %c0_66 = arith.constant 0 : index
    %72 = vector.load %arg14[%c2_64, %c1_65, %c0_66] : memref<12x18x4xbf16, #tpu.memory_space<vmem>>, vector<10x16x4xbf16>
    %73 = vector.shape_cast %72 : vector<10x16x4xbf16> to vector<160x4xbf16>
    %c7 = arith.constant 7 : index
    %c0_67 = arith.constant 0 : index
    %c0_68 = arith.constant 0 : index
    %74 = vector.load %arg5[%c7, %c0_67, %c0_68] : memref<9x4x8xbf16, #tpu.memory_space<vmem>>, vector<1x4x8xbf16>
    %75 = vector.shape_cast %74 : vector<1x4x8xbf16> to vector<4x8xbf16>
    %cst_69 = arith.constant dense<0.000000e+00> : vector<160x8xf32>
    %76 = tpu.matmul %73, %75, %cst_69 {dimension_numbers = #tpu.dot_dimension_numbers<[1], [0], [0], [1], [0, 0, 1, 1], [], []>} : vector<160x4xbf16>, vector<4x8xbf16>, vector<160x8xf32> -> vector<160x8xf32>
    %77 = arith.addf %71, %76 : vector<160x8xf32>
    %c2_70 = arith.constant 2 : index
    %c2_71 = arith.constant 2 : index
    %c0_72 = arith.constant 0 : index
    %78 = vector.load %arg14[%c2_70, %c2_71, %c0_72] : memref<12x18x4xbf16, #tpu.memory_space<vmem>>, vector<10x16x4xbf16>
    %79 = vector.shape_cast %78 : vector<10x16x4xbf16> to vector<160x4xbf16>
    %c8 = arith.constant 8 : index
    %c0_73 = arith.constant 0 : index
    %c0_74 = arith.constant 0 : index
    %80 = vector.load %arg5[%c8, %c0_73, %c0_74] : memref<9x4x8xbf16, #tpu.memory_space<vmem>>, vector<1x4x8xbf16>
    %81 = vector.shape_cast %80 : vector<1x4x8xbf16> to vector<4x8xbf16>
    %cst_75 = arith.constant dense<0.000000e+00> : vector<160x8xf32>
    %82 = tpu.matmul %79, %81, %cst_75 {dimension_numbers = #tpu.dot_dimension_numbers<[1], [0], [0], [1], [0, 0, 1, 1], [], []>} : vector<160x4xbf16>, vector<4x8xbf16>, vector<160x8xf32> -> vector<160x8xf32>
    %83 = arith.addf %77, %82 : vector<160x8xf32>
    %cst_76 = arith.constant 0.000000e+00 : f32
    %84 = vector.broadcast %cst_76 : f32 to vector<160x8xf32>
    %85 = arith.cmpf ogt, %83, %84 : vector<160x8xf32>
    %c0_77 = arith.constant 0 : index
    %c0_78 = arith.constant 0 : index
    %86 = vector.load %arg6[%c0_77, %c0_78] : memref<1x8xf32, #tpu.memory_space<vmem>>, vector<1x8xf32>
    %87 = vector.broadcast %86 : vector<1x8xf32> to vector<160x8xf32>
    %88 = arith.mulf %83, %87 : vector<160x8xf32>
    %89 = arith.select %85, %83, %88 : vector<160x8xi1>, vector<160x8xf32>
    %cst_79 = arith.constant 0.000000e+00 : bf16
    %90 = vector.broadcast %cst_79 : bf16 to vector<10x1x8xbf16>
    %c0_80 = arith.constant 0 : index
    %c0_81 = arith.constant 0 : index
    %c0_82 = arith.constant 0 : index
    %91 = vector.load %arg15[%c0_80, %c0_81, %c0_82] : memref<10x18x8xbf16, #tpu.memory_space<vmem>>, vector<10x1x8xbf16>
    tpu.vector_store %arg15[%c0_80, %c0_81, %c0_82], %90 {strides = array<i32>} : memref<10x18x8xbf16, #tpu.memory_space<vmem>>, vector<10x1x8xbf16>,
    %cst_83 = arith.constant 0.000000e+00 : bf16
    %92 = vector.broadcast %cst_83 : bf16 to vector<10x1x8xbf16>
    %c0_84 = arith.constant 0 : index
    %c17_85 = arith.constant 17 : index
    %c0_86 = arith.constant 0 : index
    %93 = vector.load %arg15[%c0_84, %c17_85, %c0_86] : memref<10x18x8xbf16, #tpu.memory_space<vmem>>, vector<10x1x8xbf16>
    tpu.vector_store %arg15[%c0_84, %c17_85, %c0_86], %92 {strides = array<i32>} : memref<10x18x8xbf16, #tpu.memory_space<vmem>>, vector<10x1x8xbf16>,
    %94 = vector.shape_cast %89 : vector<160x8xf32> to vector<10x16x8xf32>
    %95 = arith.truncf %94 : vector<10x16x8xf32> to vector<10x16x8xbf16>
    %c0_87 = arith.constant 0 : index
    %c1_88 = arith.constant 1 : index
    %c0_89 = arith.constant 0 : index
    %96 = vector.load %arg15[%c0_87, %c1_88, %c0_89] : memref<10x18x8xbf16, #tpu.memory_space<vmem>>, vector<10x16x8xbf16>
    tpu.vector_store %arg15[%c0_87, %c1_88, %c0_89], %95 {strides = array<i32>} : memref<10x18x8xbf16, #tpu.memory_space<vmem>>, vector<10x16x8xbf16>,
    %c0_i32_90 = arith.constant 0 : i32
    %97 = arith.cmpi eq, %arg1, %c0_i32_90 : i32
    %98 = arith.extui %97 : i1 to i32
    %c0_i32_91 = arith.constant 0 : i32
    %99 = arith.cmpi ne, %98, %c0_i32_91 : i32
    scf.if %99 {
      %cst_175 = arith.constant 0.000000e+00 : bf16
      %181 = vector.broadcast %cst_175 : bf16 to vector<1x18x8xbf16>
      %c0_176 = arith.constant 0 : index
      %c0_177 = arith.constant 0 : index
      %c0_178 = arith.constant 0 : index
      %182 = vector.load %arg15[%c0_176, %c0_177, %c0_178] : memref<10x18x8xbf16, #tpu.memory_space<vmem>>, vector<1x18x8xbf16>
      tpu.vector_store %arg15[%c0_176, %c0_177, %c0_178], %181 {strides = array<i32>} : memref<10x18x8xbf16, #tpu.memory_space<vmem>>, vector<1x18x8xbf16>,
    } else {
    }
    %c1_i32_92 = arith.constant 1 : i32
    %100 = arith.cmpi eq, %arg1, %c1_i32_92 : i32
    %101 = arith.extui %100 : i1 to i32
    %c0_i32_93 = arith.constant 0 : i32
    %102 = arith.cmpi ne, %101, %c0_i32_93 : i32
    scf.if %102 {
      %cst_175 = arith.constant 0.000000e+00 : bf16
      %181 = vector.broadcast %cst_175 : bf16 to vector<1x18x8xbf16>
      %c9 = arith.constant 9 : index
      %c0_176 = arith.constant 0 : index
      %c0_177 = arith.constant 0 : index
      %182 = vector.load %arg15[%c9, %c0_176, %c0_177] : memref<10x18x8xbf16, #tpu.memory_space<vmem>>, vector<1x18x8xbf16>
      tpu.vector_store %arg15[%c9, %c0_176, %c0_177], %181 {strides = array<i32>} : memref<10x18x8xbf16, #tpu.memory_space<vmem>>, vector<1x18x8xbf16>,
    } else {
    }
    %c0_94 = arith.constant 0 : index
    %c0_95 = arith.constant 0 : index
    %c0_96 = arith.constant 0 : index
    %103 = tpu.strided_load %arg15[%c0_94, %c0_95, %c0_96] {strides = array<i32: 2, 2, 1>} : memref<10x18x8xbf16, #tpu.memory_space<vmem>>, vector<4x8x8xbf16>
    %104 = vector.shape_cast %103 : vector<4x8x8xbf16> to vector<32x8xbf16>
    %c0_97 = arith.constant 0 : index
    %c0_98 = arith.constant 0 : index
    %c0_99 = arith.constant 0 : index
    %105 = vector.load %arg7[%c0_97, %c0_98, %c0_99] : memref<9x8x8xbf16, #tpu.memory_space<vmem>>, vector<1x8x8xbf16>
    %106 = vector.shape_cast %105 : vector<1x8x8xbf16> to vector<8x8xbf16>
    %cst_100 = arith.constant dense<0.000000e+00> : vector<32x8xf32>
    %107 = tpu.matmul %104, %106, %cst_100 {dimension_numbers = #tpu.dot_dimension_numbers<[1], [0], [0], [1], [0, 0, 1, 1], [], []>} : vector<32x8xbf16>, vector<8x8xbf16>, vector<32x8xf32> -> vector<32x8xf32>
    %c0_101 = arith.constant 0 : index
    %c1_102 = arith.constant 1 : index
    %c0_103 = arith.constant 0 : index
    %108 = tpu.strided_load %arg15[%c0_101, %c1_102, %c0_103] {strides = array<i32: 2, 2, 1>} : memref<10x18x8xbf16, #tpu.memory_space<vmem>>, vector<4x8x8xbf16>
    %109 = vector.shape_cast %108 : vector<4x8x8xbf16> to vector<32x8xbf16>
    %c1_104 = arith.constant 1 : index
    %c0_105 = arith.constant 0 : index
    %c0_106 = arith.constant 0 : index
    %110 = vector.load %arg7[%c1_104, %c0_105, %c0_106] : memref<9x8x8xbf16, #tpu.memory_space<vmem>>, vector<1x8x8xbf16>
    %111 = vector.shape_cast %110 : vector<1x8x8xbf16> to vector<8x8xbf16>
    %cst_107 = arith.constant dense<0.000000e+00> : vector<32x8xf32>
    %112 = tpu.matmul %109, %111, %cst_107 {dimension_numbers = #tpu.dot_dimension_numbers<[1], [0], [0], [1], [0, 0, 1, 1], [], []>} : vector<32x8xbf16>, vector<8x8xbf16>, vector<32x8xf32> -> vector<32x8xf32>
    %113 = arith.addf %107, %112 : vector<32x8xf32>
    %c0_108 = arith.constant 0 : index
    %c2_109 = arith.constant 2 : index
    %c0_110 = arith.constant 0 : index
    %114 = tpu.strided_load %arg15[%c0_108, %c2_109, %c0_110] {strides = array<i32: 2, 2, 1>} : memref<10x18x8xbf16, #tpu.memory_space<vmem>>, vector<4x8x8xbf16>
    %115 = vector.shape_cast %114 : vector<4x8x8xbf16> to vector<32x8xbf16>
    %c2_111 = arith.constant 2 : index
    %c0_112 = arith.constant 0 : index
    %c0_113 = arith.constant 0 : index
    %116 = vector.load %arg7[%c2_111, %c0_112, %c0_113] : memref<9x8x8xbf16, #tpu.memory_space<vmem>>, vector<1x8x8xbf16>
    %117 = vector.shape_cast %116 : vector<1x8x8xbf16> to vector<8x8xbf16>
    %cst_114 = arith.constant dense<0.000000e+00> : vector<32x8xf32>
    %118 = tpu.matmul %115, %117, %cst_114 {dimension_numbers = #tpu.dot_dimension_numbers<[1], [0], [0], [1], [0, 0, 1, 1], [], []>} : vector<32x8xbf16>, vector<8x8xbf16>, vector<32x8xf32> -> vector<32x8xf32>
    %119 = arith.addf %113, %118 : vector<32x8xf32>
    %c1_115 = arith.constant 1 : index
    %c0_116 = arith.constant 0 : index
    %c0_117 = arith.constant 0 : index
    %120 = tpu.strided_load %arg15[%c1_115, %c0_116, %c0_117] {strides = array<i32: 2, 2, 1>} : memref<10x18x8xbf16, #tpu.memory_space<vmem>>, vector<4x8x8xbf16>
    %121 = vector.shape_cast %120 : vector<4x8x8xbf16> to vector<32x8xbf16>
    %c3_118 = arith.constant 3 : index
    %c0_119 = arith.constant 0 : index
    %c0_120 = arith.constant 0 : index
    %122 = vector.load %arg7[%c3_118, %c0_119, %c0_120] : memref<9x8x8xbf16, #tpu.memory_space<vmem>>, vector<1x8x8xbf16>
    %123 = vector.shape_cast %122 : vector<1x8x8xbf16> to vector<8x8xbf16>
    %cst_121 = arith.constant dense<0.000000e+00> : vector<32x8xf32>
    %124 = tpu.matmul %121, %123, %cst_121 {dimension_numbers = #tpu.dot_dimension_numbers<[1], [0], [0], [1], [0, 0, 1, 1], [], []>} : vector<32x8xbf16>, vector<8x8xbf16>, vector<32x8xf32> -> vector<32x8xf32>
    %125 = arith.addf %119, %124 : vector<32x8xf32>
    %c1_122 = arith.constant 1 : index
    %c1_123 = arith.constant 1 : index
    %c0_124 = arith.constant 0 : index
    %126 = tpu.strided_load %arg15[%c1_122, %c1_123, %c0_124] {strides = array<i32: 2, 2, 1>} : memref<10x18x8xbf16, #tpu.memory_space<vmem>>, vector<4x8x8xbf16>
    %127 = vector.shape_cast %126 : vector<4x8x8xbf16> to vector<32x8xbf16>
    %c4_125 = arith.constant 4 : index
    %c0_126 = arith.constant 0 : index
    %c0_127 = arith.constant 0 : index
    %128 = vector.load %arg7[%c4_125, %c0_126, %c0_127] : memref<9x8x8xbf16, #tpu.memory_space<vmem>>, vector<1x8x8xbf16>
    %129 = vector.shape_cast %128 : vector<1x8x8xbf16> to vector<8x8xbf16>
    %cst_128 = arith.constant dense<0.000000e+00> : vector<32x8xf32>
    %130 = tpu.matmul %127, %129, %cst_128 {dimension_numbers = #tpu.dot_dimension_numbers<[1], [0], [0], [1], [0, 0, 1, 1], [], []>} : vector<32x8xbf16>, vector<8x8xbf16>, vector<32x8xf32> -> vector<32x8xf32>
    %131 = arith.addf %125, %130 : vector<32x8xf32>
    %c1_129 = arith.constant 1 : index
    %c2_130 = arith.constant 2 : index
    %c0_131 = arith.constant 0 : index
    %132 = tpu.strided_load %arg15[%c1_129, %c2_130, %c0_131] {strides = array<i32: 2, 2, 1>} : memref<10x18x8xbf16, #tpu.memory_space<vmem>>, vector<4x8x8xbf16>
    %133 = vector.shape_cast %132 : vector<4x8x8xbf16> to vector<32x8xbf16>
    %c5_132 = arith.constant 5 : index
    %c0_133 = arith.constant 0 : index
    %c0_134 = arith.constant 0 : index
    %134 = vector.load %arg7[%c5_132, %c0_133, %c0_134] : memref<9x8x8xbf16, #tpu.memory_space<vmem>>, vector<1x8x8xbf16>
    %135 = vector.shape_cast %134 : vector<1x8x8xbf16> to vector<8x8xbf16>
    %cst_135 = arith.constant dense<0.000000e+00> : vector<32x8xf32>
    %136 = tpu.matmul %133, %135, %cst_135 {dimension_numbers = #tpu.dot_dimension_numbers<[1], [0], [0], [1], [0, 0, 1, 1], [], []>} : vector<32x8xbf16>, vector<8x8xbf16>, vector<32x8xf32> -> vector<32x8xf32>
    %137 = arith.addf %131, %136 : vector<32x8xf32>
    %c2_136 = arith.constant 2 : index
    %c0_137 = arith.constant 0 : index
    %c0_138 = arith.constant 0 : index
    %138 = tpu.strided_load %arg15[%c2_136, %c0_137, %c0_138] {strides = array<i32: 2, 2, 1>} : memref<10x18x8xbf16, #tpu.memory_space<vmem>>, vector<4x8x8xbf16>
    %139 = vector.shape_cast %138 : vector<4x8x8xbf16> to vector<32x8xbf16>
    %c6_139 = arith.constant 6 : index
    %c0_140 = arith.constant 0 : index
    %c0_141 = arith.constant 0 : index
    %140 = vector.load %arg7[%c6_139, %c0_140, %c0_141] : memref<9x8x8xbf16, #tpu.memory_space<vmem>>, vector<1x8x8xbf16>
    %141 = vector.shape_cast %140 : vector<1x8x8xbf16> to vector<8x8xbf16>
    %cst_142 = arith.constant dense<0.000000e+00> : vector<32x8xf32>
    %142 = tpu.matmul %139, %141, %cst_142 {dimension_numbers = #tpu.dot_dimension_numbers<[1], [0], [0], [1], [0, 0, 1, 1], [], []>} : vector<32x8xbf16>, vector<8x8xbf16>, vector<32x8xf32> -> vector<32x8xf32>
    %143 = arith.addf %137, %142 : vector<32x8xf32>
    %c2_143 = arith.constant 2 : index
    %c1_144 = arith.constant 1 : index
    %c0_145 = arith.constant 0 : index
    %144 = tpu.strided_load %arg15[%c2_143, %c1_144, %c0_145] {strides = array<i32: 2, 2, 1>} : memref<10x18x8xbf16, #tpu.memory_space<vmem>>, vector<4x8x8xbf16>
    %145 = vector.shape_cast %144 : vector<4x8x8xbf16> to vector<32x8xbf16>
    %c7_146 = arith.constant 7 : index
    %c0_147 = arith.constant 0 : index
    %c0_148 = arith.constant 0 : index
    %146 = vector.load %arg7[%c7_146, %c0_147, %c0_148] : memref<9x8x8xbf16, #tpu.memory_space<vmem>>, vector<1x8x8xbf16>
    %147 = vector.shape_cast %146 : vector<1x8x8xbf16> to vector<8x8xbf16>
    %cst_149 = arith.constant dense<0.000000e+00> : vector<32x8xf32>
    %148 = tpu.matmul %145, %147, %cst_149 {dimension_numbers = #tpu.dot_dimension_numbers<[1], [0], [0], [1], [0, 0, 1, 1], [], []>} : vector<32x8xbf16>, vector<8x8xbf16>, vector<32x8xf32> -> vector<32x8xf32>
    %149 = arith.addf %143, %148 : vector<32x8xf32>
    %c2_150 = arith.constant 2 : index
    %c2_151 = arith.constant 2 : index
    %c0_152 = arith.constant 0 : index
    %150 = tpu.strided_load %arg15[%c2_150, %c2_151, %c0_152] {strides = array<i32: 2, 2, 1>} : memref<10x18x8xbf16, #tpu.memory_space<vmem>>, vector<4x8x8xbf16>
    %151 = vector.shape_cast %150 : vector<4x8x8xbf16> to vector<32x8xbf16>
    %c8_153 = arith.constant 8 : index
    %c0_154 = arith.constant 0 : index
    %c0_155 = arith.constant 0 : index
    %152 = vector.load %arg7[%c8_153, %c0_154, %c0_155] : memref<9x8x8xbf16, #tpu.memory_space<vmem>>, vector<1x8x8xbf16>
    %153 = vector.shape_cast %152 : vector<1x8x8xbf16> to vector<8x8xbf16>
    %cst_156 = arith.constant dense<0.000000e+00> : vector<32x8xf32>
    %154 = tpu.matmul %151, %153, %cst_156 {dimension_numbers = #tpu.dot_dimension_numbers<[1], [0], [0], [1], [0, 0, 1, 1], [], []>} : vector<32x8xbf16>, vector<8x8xbf16>, vector<32x8xf32> -> vector<32x8xf32>
    %155 = arith.addf %149, %154 : vector<32x8xf32>
    %c0_157 = arith.constant 0 : index
    %c0_158 = arith.constant 0 : index
    %156 = vector.load %arg8[%c0_157, %c0_158] : memref<1x8xf32, #tpu.memory_space<vmem>>, vector<1x8xf32>
    %157 = vector.broadcast %156 : vector<1x8xf32> to vector<32x8xf32>
    %158 = arith.mulf %155, %157 : vector<32x8xf32>
    %c0_159 = arith.constant 0 : index
    %c0_160 = arith.constant 0 : index
    %159 = vector.load %arg9[%c0_159, %c0_160] : memref<1x8xf32, #tpu.memory_space<vmem>>, vector<1x8xf32>
    %160 = vector.broadcast %159 : vector<1x8xf32> to vector<32x8xf32>
    %161 = arith.addf %158, %160 : vector<32x8xf32>
    %162 = vector.shape_cast %161 : vector<32x8xf32> to vector<4x8x8xf32>
    %c0_161 = arith.constant 0 : index
    %163 = arith.index_cast %1 : i32 to index
    %c0_162 = arith.constant 0 : index
    %c0_163 = arith.constant 0 : index
    %164 = tpu.strided_load %arg2[%c0_161, %163, %c0_162, %c0_163] {strides = array<i32: 1, 2, 2, 1>} : memref<1x16x16x4xf32, #tpu.memory_space<vmem>>, vector<1x4x8x4xf32>
    %165 = vector.shape_cast %164 : vector<1x4x8x4xf32> to vector<4x8x4xf32>
    %166 = vector.shape_cast %165 : vector<4x8x4xf32> to vector<32x4xf32>
    %167 = arith.truncf %166 : vector<32x4xf32> to vector<32x4xbf16>
    %c0_164 = arith.constant 0 : index
    %c0_165 = arith.constant 0 : index
    %168 = vector.load %arg10[%c0_164, %c0_165] : memref<4x8xbf16, #tpu.memory_space<vmem>>, vector<4x8xbf16>
    %cst_166 = arith.constant dense<0.000000e+00> : vector<32x8xf32>
    %169 = tpu.matmul %167, %168, %cst_166 {dimension_numbers = #tpu.dot_dimension_numbers<[1], [0], [0], [1], [0, 0, 1, 1], [], []>} : vector<32x4xbf16>, vector<4x8xbf16>, vector<32x8xf32> -> vector<32x8xf32>
    %c0_167 = arith.constant 0 : index
    %c0_168 = arith.constant 0 : index
    %170 = vector.load %arg11[%c0_167, %c0_168] : memref<1x8xf32, #tpu.memory_space<vmem>>, vector<1x8xf32>
    %171 = vector.broadcast %170 : vector<1x8xf32> to vector<32x8xf32>
    %172 = arith.mulf %169, %171 : vector<32x8xf32>
    %c0_169 = arith.constant 0 : index
    %c0_170 = arith.constant 0 : index
    %173 = vector.load %arg12[%c0_169, %c0_170] : memref<1x8xf32, #tpu.memory_space<vmem>>, vector<1x8xf32>
    %174 = vector.broadcast %173 : vector<1x8xf32> to vector<32x8xf32>
    %175 = arith.addf %172, %174 : vector<32x8xf32>
    %176 = vector.shape_cast %175 : vector<32x8xf32> to vector<4x8x8xf32>
    %177 = arith.addf %162, %176 : vector<4x8x8xf32>
    %c0_171 = arith.constant 0 : index
    %c0_172 = arith.constant 0 : index
    %c0_173 = arith.constant 0 : index
    %c0_174 = arith.constant 0 : index
    %178 = vector.load %arg13[%c0_171, %c0_172, %c0_173, %c0_174] : memref<1x4x8x8xf32, #tpu.memory_space<vmem>>, vector<1x4x8x8xf32>
    %179 = vector.shape_cast %178 : vector<1x4x8x8xf32> to vector<4x8x8xf32>
    %180 = vector.shape_cast %177 : vector<4x8x8xf32> to vector<1x4x8x8xf32>
    tpu.vector_store %arg13[%c0_171, %c0_172, %c0_173, %c0_174], %180 {strides = array<i32>} : memref<1x4x8x8xf32, #tpu.memory_space<vmem>>, vector<1x4x8x8xf32>,
    return
  }
  func.func @transform_0(%arg0: i32, %arg1: i32) -> (i32, i32, i32, i32) {
    %c0_i32 = arith.constant 0 : i32
    %c0_i32_0 = arith.constant 0 : i32
    %c0_i32_1 = arith.constant 0 : i32
    %c0_i32_2 = arith.constant 0 : i32
    return %arg0, %c0_i32, %c0_i32_0, %c0_i32_1 : i32, i32, i32, i32
  }
  func.func @transform_1(%arg0: i32, %arg1: i32) -> (i32, i32) {
    %c0_i32 = arith.constant 0 : i32
    %c0_i32_0 = arith.constant 0 : i32
    %c0_i32_1 = arith.constant 0 : i32
    return %c0_i32, %c0_i32_0 : i32, i32
  }
  func.func @transform_2(%arg0: i32, %arg1: i32) -> (i32, i32) {
    %c0_i32 = arith.constant 0 : i32
    %c0_i32_0 = arith.constant 0 : i32
    %c0_i32_1 = arith.constant 0 : i32
    return %c0_i32, %c0_i32_0 : i32, i32
  }
  func.func @transform_3(%arg0: i32, %arg1: i32) -> (i32, i32, i32) {
    %c0_i32 = arith.constant 0 : i32
    %c0_i32_0 = arith.constant 0 : i32
    %c0_i32_1 = arith.constant 0 : i32
    %c0_i32_2 = arith.constant 0 : i32
    return %c0_i32, %c0_i32_0, %c0_i32_1 : i32, i32, i32
  }
  func.func @transform_4(%arg0: i32, %arg1: i32) -> (i32, i32) {
    %c0_i32 = arith.constant 0 : i32
    %c0_i32_0 = arith.constant 0 : i32
    %c0_i32_1 = arith.constant 0 : i32
    return %c0_i32, %c0_i32_0 : i32, i32
  }
  func.func @transform_5(%arg0: i32, %arg1: i32) -> (i32, i32, i32) {
    %c0_i32 = arith.constant 0 : i32
    %c0_i32_0 = arith.constant 0 : i32
    %c0_i32_1 = arith.constant 0 : i32
    %c0_i32_2 = arith.constant 0 : i32
    return %c0_i32, %c0_i32_0, %c0_i32_1 : i32, i32, i32
  }
  func.func @transform_6(%arg0: i32, %arg1: i32) -> (i32, i32) {
    %c0_i32 = arith.constant 0 : i32
    %c0_i32_0 = arith.constant 0 : i32
    %c0_i32_1 = arith.constant 0 : i32
    return %c0_i32, %c0_i32_0 : i32, i32
  }
  func.func @transform_7(%arg0: i32, %arg1: i32) -> (i32, i32) {
    %c0_i32 = arith.constant 0 : i32
    %c0_i32_0 = arith.constant 0 : i32
    %c0_i32_1 = arith.constant 0 : i32
    return %c0_i32, %c0_i32_0 : i32, i32
  }
  func.func @transform_8(%arg0: i32, %arg1: i32) -> (i32, i32) {
    %c0_i32 = arith.constant 0 : i32
    %c0_i32_0 = arith.constant 0 : i32
    %c0_i32_1 = arith.constant 0 : i32
    return %c0_i32, %c0_i32_0 : i32, i32
  }
  func.func @transform_9(%arg0: i32, %arg1: i32) -> (i32, i32) {
    %c0_i32 = arith.constant 0 : i32
    %c0_i32_0 = arith.constant 0 : i32
    %c0_i32_1 = arith.constant 0 : i32
    return %c0_i32, %c0_i32_0 : i32, i32
  }
  func.func @transform_10(%arg0: i32, %arg1: i32) -> (i32, i32) {
    %c0_i32 = arith.constant 0 : i32
    %c0_i32_0 = arith.constant 0 : i32
    %c0_i32_1 = arith.constant 0 : i32
    return %c0_i32, %c0_i32_0 : i32, i32
  }
  func.func @transform_11(%arg0: i32, %arg1: i32) -> (i32, i32, i32, i32) {
    %c0_i32 = arith.constant 0 : i32
    %c0_i32_0 = arith.constant 0 : i32
    %c0_i32_1 = arith.constant 0 : i32
    return %arg0, %arg1, %c0_i32, %c0_i32_0 : i32, i32, i32, i32
  }
}

module attributes {stable_mosaic.version = 11 : i64} {
  func.func @kernel(%arg0: i32, %arg1: i32, %arg2: memref<1x16x16x4xf32, #tpu.memory_space<vmem>>, %arg3: memref<1x4xf32, #tpu.memory_space<vmem>>, %arg4: memref<1x4xf32, #tpu.memory_space<vmem>>, %arg5: memref<9x4x8xbf16, #tpu.memory_space<vmem>>, %arg6: memref<1x8xf32, #tpu.memory_space<vmem>>, %arg7: memref<9x8x8xbf16, #tpu.memory_space<vmem>>, %arg8: memref<1x8xf32, #tpu.memory_space<vmem>>, %arg9: memref<1x8xf32, #tpu.memory_space<vmem>>, %arg10: memref<4x8xbf16, #tpu.memory_space<vmem>>, %arg11: memref<1x8xf32, #tpu.memory_space<vmem>>, %arg12: memref<1x8xf32, #tpu.memory_space<vmem>>, %arg13: memref<1x4x8x8xf32, #tpu.memory_space<vmem>>, %arg14: memref<12x18x4xbf16, #tpu.memory_space<vmem>>, %arg15: memref<10x18x8xbf16, #tpu.memory_space<vmem>>) attributes {dimension_semantics = [#tpu.dimension_semantics<parallel>, #tpu.dimension_semantics<parallel>], iteration_bounds = array<i64: 2, 2>, scalar_prefetch = 0 : i64, scratch_operands = 2 : i64, tpu.core_type = #tpu.core_type<tc>, window_params = [{transform_indices = @transform_0, window_bounds = array<i64: 1, 16, 16, 4>}, {pipeline_mode = #tpu.pipeline_mode<synchronous>, transform_indices = @transform_1, window_bounds = array<i64: 1, 4>}, {pipeline_mode = #tpu.pipeline_mode<synchronous>, transform_indices = @transform_2, window_bounds = array<i64: 1, 4>}, {pipeline_mode = #tpu.pipeline_mode<synchronous>, transform_indices = @transform_3, window_bounds = array<i64: 9, 4, 8>}, {pipeline_mode = #tpu.pipeline_mode<synchronous>, transform_indices = @transform_4, window_bounds = array<i64: 1, 8>}, {pipeline_mode = #tpu.pipeline_mode<synchronous>, transform_indices = @transform_5, window_bounds = array<i64: 9, 8, 8>}, {pipeline_mode = #tpu.pipeline_mode<synchronous>, transform_indices = @transform_6, window_bounds = array<i64: 1, 8>}, {pipeline_mode = #tpu.pipeline_mode<synchronous>, transform_indices = @transform_7, window_bounds = array<i64: 1, 8>}, {pipeline_mode = #tpu.pipeline_mode<synchronous>, transform_indices = @transform_8, window_bounds = array<i64: 4, 8>}, {pipeline_mode = #tpu.pipeline_mode<synchronous>, transform_indices = @transform_9, window_bounds = array<i64: 1, 8>}, {pipeline_mode = #tpu.pipeline_mode<synchronous>, transform_indices = @transform_10, window_bounds = array<i64: 1, 8>}, {transform_indices = @transform_11, window_bounds = array<i64: 1, 4, 8, 8>}]} {
    %c8_i32 = arith.constant 8 : i32
    %0 = arith.muli %arg1, %c8_i32 : i32
    %1 = tpu.assume_multiple %0, 8 : i32
    %c0 = arith.constant 0 : index
    %c0_0 = arith.constant 0 : index
    %2 = vector.load %arg3[%c0, %c0_0] : memref<1x4xf32, #tpu.memory_space<vmem>>, vector<1x4xf32>
    %c0_1 = arith.constant 0 : index
    %c0_2 = arith.constant 0 : index
    %3 = vector.load %arg4[%c0_1, %c0_2] : memref<1x4xf32, #tpu.memory_space<vmem>>, vector<1x4xf32>
    %cst = arith.constant 0.000000e+00 : bf16
    %4 = vector.broadcast %cst : bf16 to vector<12x1x4xbf16>
    %c0_3 = arith.constant 0 : index
    %c0_4 = arith.constant 0 : index
    %c0_5 = arith.constant 0 : index
    %5 = vector.load %arg14[%c0_3, %c0_4, %c0_5] : memref<12x18x4xbf16, #tpu.memory_space<vmem>>, vector<12x1x4xbf16>
    tpu.vector_store %arg14[%c0_3, %c0_4, %c0_5], %4 {strides = array<i32>} : memref<12x18x4xbf16, #tpu.memory_space<vmem>>, vector<12x1x4xbf16>,
    %cst_6 = arith.constant 0.000000e+00 : bf16
    %6 = vector.broadcast %cst_6 : bf16 to vector<12x1x4xbf16>
    %c0_7 = arith.constant 0 : index
    %c17 = arith.constant 17 : index
    %c0_8 = arith.constant 0 : index
    %7 = vector.load %arg14[%c0_7, %c17, %c0_8] : memref<12x18x4xbf16, #tpu.memory_space<vmem>>, vector<12x1x4xbf16>
    tpu.vector_store %arg14[%c0_7, %c17, %c0_8], %6 {strides = array<i32>} : memref<12x18x4xbf16, #tpu.memory_space<vmem>>, vector<12x1x4xbf16>,
    %c0_9 = arith.constant 0 : index
    %8 = arith.index_cast %1 : i32 to index
    %c0_10 = arith.constant 0 : index
    %c0_11 = arith.constant 0 : index
    %9 = vector.load %arg2[%c0_9, %8, %c0_10, %c0_11] : memref<1x16x16x4xf32, #tpu.memory_space<vmem>>, vector<1x8x16x4xf32>
    %10 = vector.shape_cast %9 : vector<1x8x16x4xf32> to vector<8x16x4xf32>
    %11 = vector.shape_cast %2 : vector<1x4xf32> to vector<1x1x4xf32>
    %12 = vector.broadcast %11 : vector<1x1x4xf32> to vector<8x16x4xf32>
    %13 = arith.mulf %10, %12 : vector<8x16x4xf32>
    %14 = vector.shape_cast %3 : vector<1x4xf32> to vector<1x1x4xf32>
    %15 = vector.broadcast %14 : vector<1x1x4xf32> to vector<8x16x4xf32>
    %16 = arith.addf %13, %15 : vector<8x16x4xf32>
    %17 = arith.truncf %16 : vector<8x16x4xf32> to vector<8x16x4xbf16>
    %c2 = arith.constant 2 : index
    %c1 = arith.constant 1 : index
    %c0_12 = arith.constant 0 : index
    %18 = vector.load %arg14[%c2, %c1, %c0_12] : memref<12x18x4xbf16, #tpu.memory_space<vmem>>, vector<8x16x4xbf16>
    tpu.vector_store %arg14[%c2, %c1, %c0_12], %17 {strides = array<i32>} : memref<12x18x4xbf16, #tpu.memory_space<vmem>>, vector<8x16x4xbf16>,
    %c0_i32 = arith.constant 0 : i32
    %19 = arith.cmpi eq, %arg1, %c0_i32 : i32
    %20 = arith.extui %19 : i1 to i32
    %c0_i32_13 = arith.constant 0 : i32
    %21 = arith.cmpi ne, %20, %c0_i32_13 : i32
    scf.if %21 {
      %cst_175 = arith.constant 0.000000e+00 : bf16
      %181 = vector.broadcast %cst_175 : bf16 to vector<2x18x4xbf16>
      %c0_176 = arith.constant 0 : index
      %c0_177 = arith.constant 0 : index
      %c0_178 = arith.constant 0 : index
      %182 = vector.load %arg14[%c0_176, %c0_177, %c0_178] : memref<12x18x4xbf16, #tpu.memory_space<vmem>>, vector<2x18x4xbf16>
      tpu.vector_store %arg14[%c0_176, %c0_177, %c0_178], %181 {strides = array<i32>} : memref<12x18x4xbf16, #tpu.memory_space<vmem>>, vector<2x18x4xbf16>,
    } else {
    }
    %c0_i32_14 = arith.constant 0 : i32
    %22 = arith.cmpi sgt, %arg1, %c0_i32_14 : i32
    %23 = arith.extui %22 : i1 to i32
    %c0_i32_15 = arith.constant 0 : i32
    %24 = arith.cmpi ne, %23, %c0_i32_15 : i32
    scf.if %24 {
      %c2_i32 = arith.constant 2 : i32
      %181 = arith.subi %1, %c2_i32 : i32
      %c0_175 = arith.constant 0 : index
      %182 = arith.index_cast %181 : i32 to index
      %c0_176 = arith.constant 0 : index
      %c0_177 = arith.constant 0 : index
      %183 = vector.load %arg2[%c0_175, %182, %c0_176, %c0_177] : memref<1x16x16x4xf32, #tpu.memory_space<vmem>>, vector<1x2x16x4xf32>
      %184 = vector.shape_cast %183 : vector<1x2x16x4xf32> to vector<2x16x4xf32>
      %185 = vector.shape_cast %2 : vector<1x4xf32> to vector<1x1x4xf32>
      %186 = vector.broadcast %185 : vector<1x1x4xf32> to vector<2x16x4xf32>
      %187 = arith.mulf %184, %186 : vector<2x16x4xf32>
      %188 = vector.shape_cast %3 : vector<1x4xf32> to vector<1x1x4xf32>
      %189 = vector.broadcast %188 : vector<1x1x4xf32> to vector<2x16x4xf32>
      %190 = arith.addf %187, %189 : vector<2x16x4xf32>
      %191 = arith.truncf %190 : vector<2x16x4xf32> to vector<2x16x4xbf16>
      %c0_178 = arith.constant 0 : index
      %c1_179 = arith.constant 1 : index
      %c0_180 = arith.constant 0 : index
      %192 = vector.load %arg14[%c0_178, %c1_179, %c0_180] : memref<12x18x4xbf16, #tpu.memory_space<vmem>>, vector<2x16x4xbf16>
      tpu.vector_store %arg14[%c0_178, %c1_179, %c0_180], %191 {strides = array<i32>} : memref<12x18x4xbf16, #tpu.memory_space<vmem>>, vector<2x16x4xbf16>,
    } else {
    }
    %c1_i32 = arith.constant 1 : i32
    %25 = arith.cmpi eq, %arg1, %c1_i32 : i32
    %26 = arith.extui %25 : i1 to i32
    %c0_i32_16 = arith.constant 0 : i32
    %27 = arith.cmpi ne, %26, %c0_i32_16 : i32
    scf.if %27 {
      %cst_175 = arith.constant 0.000000e+00 : bf16
      %181 = vector.broadcast %cst_175 : bf16 to vector<2x18x4xbf16>
      %c10 = arith.constant 10 : index
      %c0_176 = arith.constant 0 : index
      %c0_177 = arith.constant 0 : index
      %182 = vector.load %arg14[%c10, %c0_176, %c0_177] : memref<12x18x4xbf16, #tpu.memory_space<vmem>>, vector<2x18x4xbf16>
      tpu.vector_store %arg14[%c10, %c0_176, %c0_177], %181 {strides = array<i32>} : memref<12x18x4xbf16, #tpu.memory_space<vmem>>, vector<2x18x4xbf16>,
    } else {
    }
    %c1_i32_17 = arith.constant 1 : i32
    %28 = arith.cmpi slt, %arg1, %c1_i32_17 : i32
    %29 = arith.extui %28 : i1 to i32
    %c0_i32_18 = arith.constant 0 : i32
    %30 = arith.cmpi ne, %29, %c0_i32_18 : i32
    scf.if %30 {
      %c8_i32_175 = arith.constant 8 : i32
      %181 = arith.addi %1, %c8_i32_175 : i32
      %c0_176 = arith.constant 0 : index
      %182 = arith.index_cast %181 : i32 to index
      %c0_177 = arith.constant 0 : index
      %c0_178 = arith.constant 0 : index
      %183 = vector.load %arg2[%c0_176, %182, %c0_177, %c0_178] : memref<1x16x16x4xf32, #tpu.memory_space<vmem>>, vector<1x2x16x4xf32>
      %184 = vector.shape_cast %183 : vector<1x2x16x4xf32> to vector<2x16x4xf32>
      %185 = vector.shape_cast %2 : vector<1x4xf32> to vector<1x1x4xf32>
      %186 = vector.broadcast %185 : vector<1x1x4xf32> to vector<2x16x4xf32>
      %187 = arith.mulf %184, %186 : vector<2x16x4xf32>
      %188 = vector.shape_cast %3 : vector<1x4xf32> to vector<1x1x4xf32>
      %189 = vector.broadcast %188 : vector<1x1x4xf32> to vector<2x16x4xf32>
      %190 = arith.addf %187, %189 : vector<2x16x4xf32>
      %191 = arith.truncf %190 : vector<2x16x4xf32> to vector<2x16x4xbf16>
      %c10 = arith.constant 10 : index
      %c1_179 = arith.constant 1 : index
      %c0_180 = arith.constant 0 : index
      %192 = vector.load %arg14[%c10, %c1_179, %c0_180] : memref<12x18x4xbf16, #tpu.memory_space<vmem>>, vector<2x16x4xbf16>
      tpu.vector_store %arg14[%c10, %c1_179, %c0_180], %191 {strides = array<i32>} : memref<12x18x4xbf16, #tpu.memory_space<vmem>>, vector<2x16x4xbf16>,
    } else {
    }
    %c0_19 = arith.constant 0 : index
    %c0_20 = arith.constant 0 : index
    %c0_21 = arith.constant 0 : index
    %31 = vector.load %arg14[%c0_19, %c0_20, %c0_21] : memref<12x18x4xbf16, #tpu.memory_space<vmem>>, vector<10x16x4xbf16>
    %32 = vector.shape_cast %31 : vector<10x16x4xbf16> to vector<160x4xbf16>
    %c0_22 = arith.constant 0 : index
    %c0_23 = arith.constant 0 : index
    %c0_24 = arith.constant 0 : index
    %33 = vector.load %arg5[%c0_22, %c0_23, %c0_24] : memref<9x4x8xbf16, #tpu.memory_space<vmem>>, vector<1x4x8xbf16>
    %34 = vector.shape_cast %33 : vector<1x4x8xbf16> to vector<4x8xbf16>
    %cst_25 = arith.constant dense<0.000000e+00> : vector<160x8xf32>
    %35 = tpu.matmul %32, %34, %cst_25 {dimension_numbers = #tpu.dot_dimension_numbers<[1], [0], [0], [1], [0, 0, 1, 1], [], []>} : vector<160x4xbf16>, vector<4x8xbf16>, vector<160x8xf32> -> vector<160x8xf32>
    %c0_26 = arith.constant 0 : index
    %c1_27 = arith.constant 1 : index
    %c0_28 = arith.constant 0 : index
    %36 = vector.load %arg14[%c0_26, %c1_27, %c0_28] : memref<12x18x4xbf16, #tpu.memory_space<vmem>>, vector<10x16x4xbf16>
    %37 = vector.shape_cast %36 : vector<10x16x4xbf16> to vector<160x4xbf16>
    %c1_29 = arith.constant 1 : index
    %c0_30 = arith.constant 0 : index
    %c0_31 = arith.constant 0 : index
    %38 = vector.load %arg5[%c1_29, %c0_30, %c0_31] : memref<9x4x8xbf16, #tpu.memory_space<vmem>>, vector<1x4x8xbf16>
    %39 = vector.shape_cast %38 : vector<1x4x8xbf16> to vector<4x8xbf16>
    %cst_32 = arith.constant dense<0.000000e+00> : vector<160x8xf32>
    %40 = tpu.matmul %37, %39, %cst_32 {dimension_numbers = #tpu.dot_dimension_numbers<[1], [0], [0], [1], [0, 0, 1, 1], [], []>} : vector<160x4xbf16>, vector<4x8xbf16>, vector<160x8xf32> -> vector<160x8xf32>
    %41 = arith.addf %35, %40 : vector<160x8xf32>
    %c0_33 = arith.constant 0 : index
    %c2_34 = arith.constant 2 : index
    %c0_35 = arith.constant 0 : index
    %42 = vector.load %arg14[%c0_33, %c2_34, %c0_35] : memref<12x18x4xbf16, #tpu.memory_space<vmem>>, vector<10x16x4xbf16>
    %43 = vector.shape_cast %42 : vector<10x16x4xbf16> to vector<160x4xbf16>
    %c2_36 = arith.constant 2 : index
    %c0_37 = arith.constant 0 : index
    %c0_38 = arith.constant 0 : index
    %44 = vector.load %arg5[%c2_36, %c0_37, %c0_38] : memref<9x4x8xbf16, #tpu.memory_space<vmem>>, vector<1x4x8xbf16>
    %45 = vector.shape_cast %44 : vector<1x4x8xbf16> to vector<4x8xbf16>
    %cst_39 = arith.constant dense<0.000000e+00> : vector<160x8xf32>
    %46 = tpu.matmul %43, %45, %cst_39 {dimension_numbers = #tpu.dot_dimension_numbers<[1], [0], [0], [1], [0, 0, 1, 1], [], []>} : vector<160x4xbf16>, vector<4x8xbf16>, vector<160x8xf32> -> vector<160x8xf32>
    %47 = arith.addf %41, %46 : vector<160x8xf32>
    %c1_40 = arith.constant 1 : index
    %c0_41 = arith.constant 0 : index
    %c0_42 = arith.constant 0 : index
    %48 = vector.load %arg14[%c1_40, %c0_41, %c0_42] : memref<12x18x4xbf16, #tpu.memory_space<vmem>>, vector<10x16x4xbf16>
    %49 = vector.shape_cast %48 : vector<10x16x4xbf16> to vector<160x4xbf16>
    %c3 = arith.constant 3 : index
    %c0_43 = arith.constant 0 : index
    %c0_44 = arith.constant 0 : index
    %50 = vector.load %arg5[%c3, %c0_43, %c0_44] : memref<9x4x8xbf16, #tpu.memory_space<vmem>>, vector<1x4x8xbf16>
    %51 = vector.shape_cast %50 : vector<1x4x8xbf16> to vector<4x8xbf16>
    %cst_45 = arith.constant dense<0.000000e+00> : vector<160x8xf32>
    %52 = tpu.matmul %49, %51, %cst_45 {dimension_numbers = #tpu.dot_dimension_numbers<[1], [0], [0], [1], [0, 0, 1, 1], [], []>} : vector<160x4xbf16>, vector<4x8xbf16>, vector<160x8xf32> -> vector<160x8xf32>
    %53 = arith.addf %47, %52 : vector<160x8xf32>
    %c1_46 = arith.constant 1 : index
    %c1_47 = arith.constant 1 : index
    %c0_48 = arith.constant 0 : index
    %54 = vector.load %arg14[%c1_46, %c1_47, %c0_48] : memref<12x18x4xbf16, #tpu.memory_space<vmem>>, vector<10x16x4xbf16>
    %55 = vector.shape_cast %54 : vector<10x16x4xbf16> to vector<160x4xbf16>
    %c4 = arith.constant 4 : index
    %c0_49 = arith.constant 0 : index
    %c0_50 = arith.constant 0 : index
    %56 = vector.load %arg5[%c4, %c0_49, %c0_50] : memref<9x4x8xbf16, #tpu.memory_space<vmem>>, vector<1x4x8xbf16>
    %57 = vector.shape_cast %56 : vector<1x4x8xbf16> to vector<4x8xbf16>
    %cst_51 = arith.constant dense<0.000000e+00> : vector<160x8xf32>
    %58 = tpu.matmul %55, %57, %cst_51 {dimension_numbers = #tpu.dot_dimension_numbers<[1], [0], [0], [1], [0, 0, 1, 1], [], []>} : vector<160x4xbf16>, vector<4x8xbf16>, vector<160x8xf32> -> vector<160x8xf32>
    %59 = arith.addf %53, %58 : vector<160x8xf32>
    %c1_52 = arith.constant 1 : index
    %c2_53 = arith.constant 2 : index
    %c0_54 = arith.constant 0 : index
    %60 = vector.load %arg14[%c1_52, %c2_53, %c0_54] : memref<12x18x4xbf16, #tpu.memory_space<vmem>>, vector<10x16x4xbf16>
    %61 = vector.shape_cast %60 : vector<10x16x4xbf16> to vector<160x4xbf16>
    %c5 = arith.constant 5 : index
    %c0_55 = arith.constant 0 : index
    %c0_56 = arith.constant 0 : index
    %62 = vector.load %arg5[%c5, %c0_55, %c0_56] : memref<9x4x8xbf16, #tpu.memory_space<vmem>>, vector<1x4x8xbf16>
    %63 = vector.shape_cast %62 : vector<1x4x8xbf16> to vector<4x8xbf16>
    %cst_57 = arith.constant dense<0.000000e+00> : vector<160x8xf32>
    %64 = tpu.matmul %61, %63, %cst_57 {dimension_numbers = #tpu.dot_dimension_numbers<[1], [0], [0], [1], [0, 0, 1, 1], [], []>} : vector<160x4xbf16>, vector<4x8xbf16>, vector<160x8xf32> -> vector<160x8xf32>
    %65 = arith.addf %59, %64 : vector<160x8xf32>
    %c2_58 = arith.constant 2 : index
    %c0_59 = arith.constant 0 : index
    %c0_60 = arith.constant 0 : index
    %66 = vector.load %arg14[%c2_58, %c0_59, %c0_60] : memref<12x18x4xbf16, #tpu.memory_space<vmem>>, vector<10x16x4xbf16>
    %67 = vector.shape_cast %66 : vector<10x16x4xbf16> to vector<160x4xbf16>
    %c6 = arith.constant 6 : index
    %c0_61 = arith.constant 0 : index
    %c0_62 = arith.constant 0 : index
    %68 = vector.load %arg5[%c6, %c0_61, %c0_62] : memref<9x4x8xbf16, #tpu.memory_space<vmem>>, vector<1x4x8xbf16>
    %69 = vector.shape_cast %68 : vector<1x4x8xbf16> to vector<4x8xbf16>
    %cst_63 = arith.constant dense<0.000000e+00> : vector<160x8xf32>
    %70 = tpu.matmul %67, %69, %cst_63 {dimension_numbers = #tpu.dot_dimension_numbers<[1], [0], [0], [1], [0, 0, 1, 1], [], []>} : vector<160x4xbf16>, vector<4x8xbf16>, vector<160x8xf32> -> vector<160x8xf32>
    %71 = arith.addf %65, %70 : vector<160x8xf32>
    %c2_64 = arith.constant 2 : index
    %c1_65 = arith.constant 1 : index
    %c0_66 = arith.constant 0 : index
    %72 = vector.load %arg14[%c2_64, %c1_65, %c0_66] : memref<12x18x4xbf16, #tpu.memory_space<vmem>>, vector<10x16x4xbf16>
    %73 = vector.shape_cast %72 : vector<10x16x4xbf16> to vector<160x4xbf16>
    %c7 = arith.constant 7 : index
    %c0_67 = arith.constant 0 : index
    %c0_68 = arith.constant 0 : index
    %74 = vector.load %arg5[%c7, %c0_67, %c0_68] : memref<9x4x8xbf16, #tpu.memory_space<vmem>>, vector<1x4x8xbf16>
    %75 = vector.shape_cast %74 : vector<1x4x8xbf16> to vector<4x8xbf16>
    %cst_69 = arith.constant dense<0.000000e+00> : vector<160x8xf32>
    %76 = tpu.matmul %73, %75, %cst_69 {dimension_numbers = #tpu.dot_dimension_numbers<[1], [0], [0], [1], [0, 0, 1, 1], [], []>} : vector<160x4xbf16>, vector<4x8xbf16>, vector<160x8xf32> -> vector<160x8xf32>
    %77 = arith.addf %71, %76 : vector<160x8xf32>
    %c2_70 = arith.constant 2 : index
    %c2_71 = arith.constant 2 : index
    %c0_72 = arith.constant 0 : index
    %78 = vector.load %arg14[%c2_70, %c2_71, %c0_72] : memref<12x18x4xbf16, #tpu.memory_space<vmem>>, vector<10x16x4xbf16>
    %79 = vector.shape_cast %78 : vector<10x16x4xbf16> to vector<160x4xbf16>
    %c8 = arith.constant 8 : index
    %c0_73 = arith.constant 0 : index
    %c0_74 = arith.constant 0 : index
    %80 = vector.load %arg5[%c8, %c0_73, %c0_74] : memref<9x4x8xbf16, #tpu.memory_space<vmem>>, vector<1x4x8xbf16>
    %81 = vector.shape_cast %80 : vector<1x4x8xbf16> to vector<4x8xbf16>
    %cst_75 = arith.constant dense<0.000000e+00> : vector<160x8xf32>
    %82 = tpu.matmul %79, %81, %cst_75 {dimension_numbers = #tpu.dot_dimension_numbers<[1], [0], [0], [1], [0, 0, 1, 1], [], []>} : vector<160x4xbf16>, vector<4x8xbf16>, vector<160x8xf32> -> vector<160x8xf32>
    %83 = arith.addf %77, %82 : vector<160x8xf32>
    %cst_76 = arith.constant 0.000000e+00 : f32
    %84 = vector.broadcast %cst_76 : f32 to vector<160x8xf32>
    %85 = arith.cmpf ogt, %83, %84 : vector<160x8xf32>
    %c0_77 = arith.constant 0 : index
    %c0_78 = arith.constant 0 : index
    %86 = vector.load %arg6[%c0_77, %c0_78] : memref<1x8xf32, #tpu.memory_space<vmem>>, vector<1x8xf32>
    %87 = vector.broadcast %86 : vector<1x8xf32> to vector<160x8xf32>
    %88 = arith.mulf %83, %87 : vector<160x8xf32>
    %89 = arith.select %85, %83, %88 : vector<160x8xi1>, vector<160x8xf32>
    %cst_79 = arith.constant 0.000000e+00 : bf16
    %90 = vector.broadcast %cst_79 : bf16 to vector<10x1x8xbf16>
    %c0_80 = arith.constant 0 : index
    %c0_81 = arith.constant 0 : index
    %c0_82 = arith.constant 0 : index
    %91 = vector.load %arg15[%c0_80, %c0_81, %c0_82] : memref<10x18x8xbf16, #tpu.memory_space<vmem>>, vector<10x1x8xbf16>
    tpu.vector_store %arg15[%c0_80, %c0_81, %c0_82], %90 {strides = array<i32>} : memref<10x18x8xbf16, #tpu.memory_space<vmem>>, vector<10x1x8xbf16>,
    %cst_83 = arith.constant 0.000000e+00 : bf16
    %92 = vector.broadcast %cst_83 : bf16 to vector<10x1x8xbf16>
    %c0_84 = arith.constant 0 : index
    %c17_85 = arith.constant 17 : index
    %c0_86 = arith.constant 0 : index
    %93 = vector.load %arg15[%c0_84, %c17_85, %c0_86] : memref<10x18x8xbf16, #tpu.memory_space<vmem>>, vector<10x1x8xbf16>
    tpu.vector_store %arg15[%c0_84, %c17_85, %c0_86], %92 {strides = array<i32>} : memref<10x18x8xbf16, #tpu.memory_space<vmem>>, vector<10x1x8xbf16>,
    %94 = vector.shape_cast %89 : vector<160x8xf32> to vector<10x16x8xf32>
    %95 = arith.truncf %94 : vector<10x16x8xf32> to vector<10x16x8xbf16>
    %c0_87 = arith.constant 0 : index
    %c1_88 = arith.constant 1 : index
    %c0_89 = arith.constant 0 : index
    %96 = vector.load %arg15[%c0_87, %c1_88, %c0_89] : memref<10x18x8xbf16, #tpu.memory_space<vmem>>, vector<10x16x8xbf16>
    tpu.vector_store %arg15[%c0_87, %c1_88, %c0_89], %95 {strides = array<i32>} : memref<10x18x8xbf16, #tpu.memory_space<vmem>>, vector<10x16x8xbf16>,
    %c0_i32_90 = arith.constant 0 : i32
    %97 = arith.cmpi eq, %arg1, %c0_i32_90 : i32
    %98 = arith.extui %97 : i1 to i32
    %c0_i32_91 = arith.constant 0 : i32
    %99 = arith.cmpi ne, %98, %c0_i32_91 : i32
    scf.if %99 {
      %cst_175 = arith.constant 0.000000e+00 : bf16
      %181 = vector.broadcast %cst_175 : bf16 to vector<1x18x8xbf16>
      %c0_176 = arith.constant 0 : index
      %c0_177 = arith.constant 0 : index
      %c0_178 = arith.constant 0 : index
      %182 = vector.load %arg15[%c0_176, %c0_177, %c0_178] : memref<10x18x8xbf16, #tpu.memory_space<vmem>>, vector<1x18x8xbf16>
      tpu.vector_store %arg15[%c0_176, %c0_177, %c0_178], %181 {strides = array<i32>} : memref<10x18x8xbf16, #tpu.memory_space<vmem>>, vector<1x18x8xbf16>,
    } else {
    }
    %c1_i32_92 = arith.constant 1 : i32
    %100 = arith.cmpi eq, %arg1, %c1_i32_92 : i32
    %101 = arith.extui %100 : i1 to i32
    %c0_i32_93 = arith.constant 0 : i32
    %102 = arith.cmpi ne, %101, %c0_i32_93 : i32
    scf.if %102 {
      %cst_175 = arith.constant 0.000000e+00 : bf16
      %181 = vector.broadcast %cst_175 : bf16 to vector<1x18x8xbf16>
      %c9 = arith.constant 9 : index
      %c0_176 = arith.constant 0 : index
      %c0_177 = arith.constant 0 : index
      %182 = vector.load %arg15[%c9, %c0_176, %c0_177] : memref<10x18x8xbf16, #tpu.memory_space<vmem>>, vector<1x18x8xbf16>
      tpu.vector_store %arg15[%c9, %c0_176, %c0_177], %181 {strides = array<i32>} : memref<10x18x8xbf16, #tpu.memory_space<vmem>>, vector<1x18x8xbf16>,
    } else {
    }
    %c0_94 = arith.constant 0 : index
    %c0_95 = arith.constant 0 : index
    %c0_96 = arith.constant 0 : index
    %103 = tpu.strided_load %arg15[%c0_94, %c0_95, %c0_96] {strides = array<i32: 2, 2, 1>} : memref<10x18x8xbf16, #tpu.memory_space<vmem>>, vector<4x8x8xbf16>
    %104 = vector.shape_cast %103 : vector<4x8x8xbf16> to vector<32x8xbf16>
    %c0_97 = arith.constant 0 : index
    %c0_98 = arith.constant 0 : index
    %c0_99 = arith.constant 0 : index
    %105 = vector.load %arg7[%c0_97, %c0_98, %c0_99] : memref<9x8x8xbf16, #tpu.memory_space<vmem>>, vector<1x8x8xbf16>
    %106 = vector.shape_cast %105 : vector<1x8x8xbf16> to vector<8x8xbf16>
    %cst_100 = arith.constant dense<0.000000e+00> : vector<32x8xf32>
    %107 = tpu.matmul %104, %106, %cst_100 {dimension_numbers = #tpu.dot_dimension_numbers<[1], [0], [0], [1], [0, 0, 1, 1], [], []>} : vector<32x8xbf16>, vector<8x8xbf16>, vector<32x8xf32> -> vector<32x8xf32>
    %c0_101 = arith.constant 0 : index
    %c1_102 = arith.constant 1 : index
    %c0_103 = arith.constant 0 : index
    %108 = tpu.strided_load %arg15[%c0_101, %c1_102, %c0_103] {strides = array<i32: 2, 2, 1>} : memref<10x18x8xbf16, #tpu.memory_space<vmem>>, vector<4x8x8xbf16>
    %109 = vector.shape_cast %108 : vector<4x8x8xbf16> to vector<32x8xbf16>
    %c1_104 = arith.constant 1 : index
    %c0_105 = arith.constant 0 : index
    %c0_106 = arith.constant 0 : index
    %110 = vector.load %arg7[%c1_104, %c0_105, %c0_106] : memref<9x8x8xbf16, #tpu.memory_space<vmem>>, vector<1x8x8xbf16>
    %111 = vector.shape_cast %110 : vector<1x8x8xbf16> to vector<8x8xbf16>
    %cst_107 = arith.constant dense<0.000000e+00> : vector<32x8xf32>
    %112 = tpu.matmul %109, %111, %cst_107 {dimension_numbers = #tpu.dot_dimension_numbers<[1], [0], [0], [1], [0, 0, 1, 1], [], []>} : vector<32x8xbf16>, vector<8x8xbf16>, vector<32x8xf32> -> vector<32x8xf32>
    %113 = arith.addf %107, %112 : vector<32x8xf32>
    %c0_108 = arith.constant 0 : index
    %c2_109 = arith.constant 2 : index
    %c0_110 = arith.constant 0 : index
    %114 = tpu.strided_load %arg15[%c0_108, %c2_109, %c0_110] {strides = array<i32: 2, 2, 1>} : memref<10x18x8xbf16, #tpu.memory_space<vmem>>, vector<4x8x8xbf16>
    %115 = vector.shape_cast %114 : vector<4x8x8xbf16> to vector<32x8xbf16>
    %c2_111 = arith.constant 2 : index
    %c0_112 = arith.constant 0 : index
    %c0_113 = arith.constant 0 : index
    %116 = vector.load %arg7[%c2_111, %c0_112, %c0_113] : memref<9x8x8xbf16, #tpu.memory_space<vmem>>, vector<1x8x8xbf16>
    %117 = vector.shape_cast %116 : vector<1x8x8xbf16> to vector<8x8xbf16>
    %cst_114 = arith.constant dense<0.000000e+00> : vector<32x8xf32>
    %118 = tpu.matmul %115, %117, %cst_114 {dimension_numbers = #tpu.dot_dimension_numbers<[1], [0], [0], [1], [0, 0, 1, 1], [], []>} : vector<32x8xbf16>, vector<8x8xbf16>, vector<32x8xf32> -> vector<32x8xf32>
    %119 = arith.addf %113, %118 : vector<32x8xf32>
    %c1_115 = arith.constant 1 : index
    %c0_116 = arith.constant 0 : index
    %c0_117 = arith.constant 0 : index
    %120 = tpu.strided_load %arg15[%c1_115, %c0_116, %c0_117] {strides = array<i32: 2, 2, 1>} : memref<10x18x8xbf16, #tpu.memory_space<vmem>>, vector<4x8x8xbf16>
    %121 = vector.shape_cast %120 : vector<4x8x8xbf16> to vector<32x8xbf16>
    %c3_118 = arith.constant 3 : index
    %c0_119 = arith.constant 0 : index
    %c0_120 = arith.constant 0 : index
    %122 = vector.load %arg7[%c3_118, %c0_119, %c0_120] : memref<9x8x8xbf16, #tpu.memory_space<vmem>>, vector<1x8x8xbf16>
    %123 = vector.shape_cast %122 : vector<1x8x8xbf16> to vector<8x8xbf16>
    %cst_121 = arith.constant dense<0.000000e+00> : vector<32x8xf32>
    %124 = tpu.matmul %121, %123, %cst_121 {dimension_numbers = #tpu.dot_dimension_numbers<[1], [0], [0], [1], [0, 0, 1, 1], [], []>} : vector<32x8xbf16>, vector<8x8xbf16>, vector<32x8xf32> -> vector<32x8xf32>
    %125 = arith.addf %119, %124 : vector<32x8xf32>
    %c1_122 = arith.constant 1 : index
    %c1_123 = arith.constant 1 : index
    %c0_124 = arith.constant 0 : index
    %126 = tpu.strided_load %arg15[%c1_122, %c1_123, %c0_124] {strides = array<i32: 2, 2, 1>} : memref<10x18x8xbf16, #tpu.memory_space<vmem>>, vector<4x8x8xbf16>
    %127 = vector.shape_cast %126 : vector<4x8x8xbf16> to vector<32x8xbf16>
    %c4_125 = arith.constant 4 : index
    %c0_126 = arith.constant 0 : index
    %c0_127 = arith.constant 0 : index
    %128 = vector.load %arg7[%c4_125, %c0_126, %c0_127] : memref<9x8x8xbf16, #tpu.memory_space<vmem>>, vector<1x8x8xbf16>
    %129 = vector.shape_cast %128 : vector<1x8x8xbf16> to vector<8x8xbf16>
    %cst_128 = arith.constant dense<0.000000e+00> : vector<32x8xf32>
    %130 = tpu.matmul %127, %129, %cst_128 {dimension_numbers = #tpu.dot_dimension_numbers<[1], [0], [0], [1], [0, 0, 1, 1], [], []>} : vector<32x8xbf16>, vector<8x8xbf16>, vector<32x8xf32> -> vector<32x8xf32>
    %131 = arith.addf %125, %130 : vector<32x8xf32>
    %c1_129 = arith.constant 1 : index
    %c2_130 = arith.constant 2 : index
    %c0_131 = arith.constant 0 : index
    %132 = tpu.strided_load %arg15[%c1_129, %c2_130, %c0_131] {strides = array<i32: 2, 2, 1>} : memref<10x18x8xbf16, #tpu.memory_space<vmem>>, vector<4x8x8xbf16>
    %133 = vector.shape_cast %132 : vector<4x8x8xbf16> to vector<32x8xbf16>
    %c5_132 = arith.constant 5 : index
    %c0_133 = arith.constant 0 : index
    %c0_134 = arith.constant 0 : index
    %134 = vector.load %arg7[%c5_132, %c0_133, %c0_134] : memref<9x8x8xbf16, #tpu.memory_space<vmem>>, vector<1x8x8xbf16>
    %135 = vector.shape_cast %134 : vector<1x8x8xbf16> to vector<8x8xbf16>
    %cst_135 = arith.constant dense<0.000000e+00> : vector<32x8xf32>
    %136 = tpu.matmul %133, %135, %cst_135 {dimension_numbers = #tpu.dot_dimension_numbers<[1], [0], [0], [1], [0, 0, 1, 1], [], []>} : vector<32x8xbf16>, vector<8x8xbf16>, vector<32x8xf32> -> vector<32x8xf32>
    %137 = arith.addf %131, %136 : vector<32x8xf32>
    %c2_136 = arith.constant 2 : index
    %c0_137 = arith.constant 0 : index
    %c0_138 = arith.constant 0 : index
    %138 = tpu.strided_load %arg15[%c2_136, %c0_137, %c0_138] {strides = array<i32: 2, 2, 1>} : memref<10x18x8xbf16, #tpu.memory_space<vmem>>, vector<4x8x8xbf16>
    %139 = vector.shape_cast %138 : vector<4x8x8xbf16> to vector<32x8xbf16>
    %c6_139 = arith.constant 6 : index
    %c0_140 = arith.constant 0 : index
    %c0_141 = arith.constant 0 : index
    %140 = vector.load %arg7[%c6_139, %c0_140, %c0_141] : memref<9x8x8xbf16, #tpu.memory_space<vmem>>, vector<1x8x8xbf16>
    %141 = vector.shape_cast %140 : vector<1x8x8xbf16> to vector<8x8xbf16>
    %cst_142 = arith.constant dense<0.000000e+00> : vector<32x8xf32>
    %142 = tpu.matmul %139, %141, %cst_142 {dimension_numbers = #tpu.dot_dimension_numbers<[1], [0], [0], [1], [0, 0, 1, 1], [], []>} : vector<32x8xbf16>, vector<8x8xbf16>, vector<32x8xf32> -> vector<32x8xf32>
    %143 = arith.addf %137, %142 : vector<32x8xf32>
    %c2_143 = arith.constant 2 : index
    %c1_144 = arith.constant 1 : index
    %c0_145 = arith.constant 0 : index
    %144 = tpu.strided_load %arg15[%c2_143, %c1_144, %c0_145] {strides = array<i32: 2, 2, 1>} : memref<10x18x8xbf16, #tpu.memory_space<vmem>>, vector<4x8x8xbf16>
    %145 = vector.shape_cast %144 : vector<4x8x8xbf16> to vector<32x8xbf16>
    %c7_146 = arith.constant 7 : index
    %c0_147 = arith.constant 0 : index
    %c0_148 = arith.constant 0 : index
    %146 = vector.load %arg7[%c7_146, %c0_147, %c0_148] : memref<9x8x8xbf16, #tpu.memory_space<vmem>>, vector<1x8x8xbf16>
    %147 = vector.shape_cast %146 : vector<1x8x8xbf16> to vector<8x8xbf16>
    %cst_149 = arith.constant dense<0.000000e+00> : vector<32x8xf32>
    %148 = tpu.matmul %145, %147, %cst_149 {dimension_numbers = #tpu.dot_dimension_numbers<[1], [0], [0], [1], [0, 0, 1, 1], [], []>} : vector<32x8xbf16>, vector<8x8xbf16>, vector<32x8xf32> -> vector<32x8xf32>
    %149 = arith.addf %143, %148 : vector<32x8xf32>
    %c2_150 = arith.constant 2 : index
    %c2_151 = arith.constant 2 : index
    %c0_152 = arith.constant 0 : index
    %150 = tpu.strided_load %arg15[%c2_150, %c2_151, %c0_152] {strides = array<i32: 2, 2, 1>} : memref<10x18x8xbf16, #tpu.memory_space<vmem>>, vector<4x8x8xbf16>
    %151 = vector.shape_cast %150 : vector<4x8x8xbf16> to vector<32x8xbf16>
    %c8_153 = arith.constant 8 : index
    %c0_154 = arith.constant 0 : index
    %c0_155 = arith.constant 0 : index
    %152 = vector.load %arg7[%c8_153, %c0_154, %c0_155] : memref<9x8x8xbf16, #tpu.memory_space<vmem>>, vector<1x8x8xbf16>
    %153 = vector.shape_cast %152 : vector<1x8x8xbf16> to vector<8x8xbf16>
    %cst_156 = arith.constant dense<0.000000e+00> : vector<32x8xf32>
    %154 = tpu.matmul %151, %153, %cst_156 {dimension_numbers = #tpu.dot_dimension_numbers<[1], [0], [0], [1], [0, 0, 1, 1], [], []>} : vector<32x8xbf16>, vector<8x8xbf16>, vector<32x8xf32> -> vector<32x8xf32>
    %155 = arith.addf %149, %154 : vector<32x8xf32>
    %c0_157 = arith.constant 0 : index
    %c0_158 = arith.constant 0 : index
    %156 = vector.load %arg8[%c0_157, %c0_158] : memref<1x8xf32, #tpu.memory_space<vmem>>, vector<1x8xf32>
    %157 = vector.broadcast %156 : vector<1x8xf32> to vector<32x8xf32>
    %158 = arith.mulf %155, %157 : vector<32x8xf32>
    %c0_159 = arith.constant 0 : index
    %c0_160 = arith.constant 0 : index
    %159 = vector.load %arg9[%c0_159, %c0_160] : memref<1x8xf32, #tpu.memory_space<vmem>>, vector<1x8xf32>
    %160 = vector.broadcast %159 : vector<1x8xf32> to vector<32x8xf32>
    %161 = arith.addf %158, %160 : vector<32x8xf32>
    %162 = vector.shape_cast %161 : vector<32x8xf32> to vector<4x8x8xf32>
    %c0_161 = arith.constant 0 : index
    %163 = arith.index_cast %1 : i32 to index
    %c0_162 = arith.constant 0 : index
    %c0_163 = arith.constant 0 : index
    %164 = tpu.strided_load %arg2[%c0_161, %163, %c0_162, %c0_163] {strides = array<i32: 1, 2, 2, 1>} : memref<1x16x16x4xf32, #tpu.memory_space<vmem>>, vector<1x4x8x4xf32>
    %165 = vector.shape_cast %164 : vector<1x4x8x4xf32> to vector<4x8x4xf32>
    %166 = vector.shape_cast %165 : vector<4x8x4xf32> to vector<32x4xf32>
    %167 = arith.truncf %166 : vector<32x4xf32> to vector<32x4xbf16>
    %c0_164 = arith.constant 0 : index
    %c0_165 = arith.constant 0 : index
    %168 = vector.load %arg10[%c0_164, %c0_165] : memref<4x8xbf16, #tpu.memory_space<vmem>>, vector<4x8xbf16>
    %cst_166 = arith.constant dense<0.000000e+00> : vector<32x8xf32>
    %169 = tpu.matmul %167, %168, %cst_166 {dimension_numbers = #tpu.dot_dimension_numbers<[1], [0], [0], [1], [0, 0, 1, 1], [], []>} : vector<32x4xbf16>, vector<4x8xbf16>, vector<32x8xf32> -> vector<32x8xf32>
    %c0_167 = arith.constant 0 : index
    %c0_168 = arith.constant 0 : index
    %170 = vector.load %arg11[%c0_167, %c0_168] : memref<1x8xf32, #tpu.memory_space<vmem>>, vector<1x8xf32>
    %171 = vector.broadcast %170 : vector<1x8xf32> to vector<32x8xf32>
    %172 = arith.mulf %169, %171 : vector<32x8xf32>
    %c0_169 = arith.constant 0 : index
    %c0_170 = arith.constant 0 : index
    %173 = vector.load %arg12[%c0_169, %c0_170] : memref<1x8xf32, #tpu.memory_space<vmem>>, vector<1x8xf32>
    %174 = vector.broadcast %173 : vector<1x8xf32> to vector<32x8xf32>
    %175 = arith.addf %172, %174 : vector<32x8xf32>
    %176 = vector.shape_cast %175 : vector<32x8xf32> to vector<4x8x8xf32>
    %177 = arith.addf %162, %176 : vector<4x8x8xf32>
    %c0_171 = arith.constant 0 : index
    %c0_172 = arith.constant 0 : index
    %c0_173 = arith.constant 0 : index
    %c0_174 = arith.constant 0 : index
    %178 = vector.load %arg13[%c0_171, %c0_172, %c0_173, %c0_174] : memref<1x4x8x8xf32, #tpu.memory_space<vmem>>, vector<1x4x8x8xf32>
    %179 = vector.shape_cast %178 : vector<1x4x8x8xf32> to vector<4x8x8xf32>
    %180 = vector.shape_cast %177 : vector<4x8x8xf32> to vector<1x4x8x8xf32>
    tpu.vector_store %arg13[%c0_171, %c0_172, %c0_173, %c0_174], %180 {strides = array<i32>} : memref<1x4x8x8xf32, #tpu.memory_space<vmem>>, vector<1x4x8x8xf32>,
    return
  }
  func.func @transform_0(%arg0: i32, %arg1: i32) -> (i32, i32, i32, i32) {
    %c0_i32 = arith.constant 0 : i32
    %c0_i32_0 = arith.constant 0 : i32
    %c0_i32_1 = arith.constant 0 : i32
    %c0_i32_2 = arith.constant 0 : i32
    return %arg0, %c0_i32, %c0_i32_0, %c0_i32_1 : i32, i32, i32, i32
  }
  func.func @transform_1(%arg0: i32, %arg1: i32) -> (i32, i32) {
    %c0_i32 = arith.constant 0 : i32
    %c0_i32_0 = arith.constant 0 : i32
    %c0_i32_1 = arith.constant 0 : i32
    return %c0_i32, %c0_i32_0 : i32, i32
  }
  func.func @transform_2(%arg0: i32, %arg1: i32) -> (i32, i32) {
    %c0_i32 = arith.constant 0 : i32
    %c0_i32_0 = arith.constant 0 : i32
    %c0_i32_1 = arith.constant 0 : i32
    return %c0_i32, %c0_i32_0 : i32, i32
  }
  func.func @transform_3(%arg0: i32, %arg1: i32) -> (i32, i32, i32) {
    %c0_i32 = arith.constant 0 : i32
    %c0_i32_0 = arith.constant 0 : i32
    %c0_i32_1 = arith.constant 0 : i32
    %c0_i32_2 = arith.constant 0 : i32
    return %c0_i32, %c0_i32_0, %c0_i32_1 : i32, i32, i32
  }
  func.func @transform_4(%arg0: i32, %arg1: i32) -> (i32, i32) {
    %c0_i32 = arith.constant 0 : i32
    %c0_i32_0 = arith.constant 0 : i32
    %c0_i32_1 = arith.constant 0 : i32
    return %c0_i32, %c0_i32_0 : i32, i32
  }
  func.func @transform_5(%arg0: i32, %arg1: i32) -> (i32, i32, i32) {
    %c0_i32 = arith.constant 0 : i32
    %c0_i32_0 = arith.constant 0 : i32
    %c0_i32_1 = arith.constant 0 : i32
    %c0_i32_2 = arith.constant 0 : i32
    return %c0_i32, %c0_i32_0, %c0_i32_1 : i32, i32, i32
  }
  func.func @transform_6(%arg0: i32, %arg1: i32) -> (i32, i32) {
    %c0_i32 = arith.constant 0 : i32
    %c0_i32_0 = arith.constant 0 : i32
    %c0_i32_1 = arith.constant 0 : i32
    return %c0_i32, %c0_i32_0 : i32, i32
  }
  func.func @transform_7(%arg0: i32, %arg1: i32) -> (i32, i32) {
    %c0_i32 = arith.constant 0 : i32
    %c0_i32_0 = arith.constant 0 : i32
    %c0_i32_1 = arith.constant 0 : i32
    return %c0_i32, %c0_i32_0 : i32, i32
  }
  func.func @transform_8(%arg0: i32, %arg1: i32) -> (i32, i32) {
    %c0_i32 = arith.constant 0 : i32
    %c0_i32_0 = arith.constant 0 : i32
    %c0_i32_1 = arith.constant 0 : i32
    return %c0_i32, %c0_i32_0 : i32, i32
  }
  func.func @transform_9(%arg0: i32, %arg1: i32) -> (i32, i32) {
    %c0_i32 = arith.constant 0 : i32
    %c0_i32_0 = arith.constant 0 : i32
    %c0_i32_1 = arith.constant 0 : i32
    return %c0_i32, %c0_i32_0 : i32, i32
  }
  func.func @transform_10(%arg0: i32, %arg1: i32) -> (i32, i32) {
    %c0_i32 = arith.constant 0 : i32
    %c0_i32_0 = arith.constant 0 : i32
    %c0_i32_1 = arith.constant 0 : i32
    return %c0_i32, %c0_i32_0 : i32, i32
  }
  func.func @transform_11(%arg0: i32, %arg1: i32) -> (i32, i32, i32, i32) {
    %c0_i32 = arith.constant 0 : i32
    %c0_i32_0 = arith.constant 0 : i32
    %c0_i32_1 = arith.constant 0 : i32
    return %arg0, %arg1, %c0_i32, %c0_i32_0 : i32, i32, i32, i32
  }
}

module attributes {stable_mosaic.version = 11 : i64} {
  func.func @kernel(%arg0: i32, %arg1: i32, %arg2: memref<1x16x16x4xf32, #tpu.memory_space<vmem>>, %arg3: memref<1x4xf32, #tpu.memory_space<vmem>>, %arg4: memref<1x4xf32, #tpu.memory_space<vmem>>, %arg5: memref<9x4x8xbf16, #tpu.memory_space<vmem>>, %arg6: memref<1x8xf32, #tpu.memory_space<vmem>>, %arg7: memref<9x8x8xbf16, #tpu.memory_space<vmem>>, %arg8: memref<1x8xf32, #tpu.memory_space<vmem>>, %arg9: memref<1x8xf32, #tpu.memory_space<vmem>>, %arg10: memref<4x8xbf16, #tpu.memory_space<vmem>>, %arg11: memref<1x8xf32, #tpu.memory_space<vmem>>, %arg12: memref<1x8xf32, #tpu.memory_space<vmem>>, %arg13: memref<1x4x8x8xf32, #tpu.memory_space<vmem>>, %arg14: memref<12x18x4xbf16, #tpu.memory_space<vmem>>, %arg15: memref<10x18x8xbf16, #tpu.memory_space<vmem>>) attributes {dimension_semantics = [#tpu.dimension_semantics<parallel>, #tpu.dimension_semantics<parallel>], iteration_bounds = array<i64: 2, 2>, scalar_prefetch = 0 : i64, scratch_operands = 2 : i64, tpu.core_type = #tpu.core_type<tc>, window_params = [{transform_indices = @transform_0, window_bounds = array<i64: 1, 16, 16, 4>}, {pipeline_mode = #tpu.pipeline_mode<synchronous>, transform_indices = @transform_1, window_bounds = array<i64: 1, 4>}, {pipeline_mode = #tpu.pipeline_mode<synchronous>, transform_indices = @transform_2, window_bounds = array<i64: 1, 4>}, {pipeline_mode = #tpu.pipeline_mode<synchronous>, transform_indices = @transform_3, window_bounds = array<i64: 9, 4, 8>}, {pipeline_mode = #tpu.pipeline_mode<synchronous>, transform_indices = @transform_4, window_bounds = array<i64: 1, 8>}, {pipeline_mode = #tpu.pipeline_mode<synchronous>, transform_indices = @transform_5, window_bounds = array<i64: 9, 8, 8>}, {pipeline_mode = #tpu.pipeline_mode<synchronous>, transform_indices = @transform_6, window_bounds = array<i64: 1, 8>}, {pipeline_mode = #tpu.pipeline_mode<synchronous>, transform_indices = @transform_7, window_bounds = array<i64: 1, 8>}, {pipeline_mode = #tpu.pipeline_mode<synchronous>, transform_indices = @transform_8, window_bounds = array<i64: 4, 8>}, {pipeline_mode = #tpu.pipeline_mode<synchronous>, transform_indices = @transform_9, window_bounds = array<i64: 1, 8>}, {pipeline_mode = #tpu.pipeline_mode<synchronous>, transform_indices = @transform_10, window_bounds = array<i64: 1, 8>}, {transform_indices = @transform_11, window_bounds = array<i64: 1, 4, 8, 8>}]} {
    %c8_i32 = arith.constant 8 : i32
    %0 = arith.muli %arg1, %c8_i32 : i32
    %1 = tpu.assume_multiple %0, 8 : i32
    %c0 = arith.constant 0 : index
    %c0_0 = arith.constant 0 : index
    %2 = vector.load %arg3[%c0, %c0_0] : memref<1x4xf32, #tpu.memory_space<vmem>>, vector<1x4xf32>
    %c0_1 = arith.constant 0 : index
    %c0_2 = arith.constant 0 : index
    %3 = vector.load %arg4[%c0_1, %c0_2] : memref<1x4xf32, #tpu.memory_space<vmem>>, vector<1x4xf32>
    %cst = arith.constant 0.000000e+00 : bf16
    %4 = vector.broadcast %cst : bf16 to vector<12x1x4xbf16>
    %c0_3 = arith.constant 0 : index
    %c0_4 = arith.constant 0 : index
    %c0_5 = arith.constant 0 : index
    %5 = vector.load %arg14[%c0_3, %c0_4, %c0_5] : memref<12x18x4xbf16, #tpu.memory_space<vmem>>, vector<12x1x4xbf16>
    tpu.vector_store %arg14[%c0_3, %c0_4, %c0_5], %4 {strides = array<i32>} : memref<12x18x4xbf16, #tpu.memory_space<vmem>>, vector<12x1x4xbf16>,
    %cst_6 = arith.constant 0.000000e+00 : bf16
    %6 = vector.broadcast %cst_6 : bf16 to vector<12x1x4xbf16>
    %c0_7 = arith.constant 0 : index
    %c17 = arith.constant 17 : index
    %c0_8 = arith.constant 0 : index
    %7 = vector.load %arg14[%c0_7, %c17, %c0_8] : memref<12x18x4xbf16, #tpu.memory_space<vmem>>, vector<12x1x4xbf16>
    tpu.vector_store %arg14[%c0_7, %c17, %c0_8], %6 {strides = array<i32>} : memref<12x18x4xbf16, #tpu.memory_space<vmem>>, vector<12x1x4xbf16>,
    %c0_9 = arith.constant 0 : index
    %8 = arith.index_cast %1 : i32 to index
    %c0_10 = arith.constant 0 : index
    %c0_11 = arith.constant 0 : index
    %9 = vector.load %arg2[%c0_9, %8, %c0_10, %c0_11] : memref<1x16x16x4xf32, #tpu.memory_space<vmem>>, vector<1x8x16x4xf32>
    %10 = vector.shape_cast %9 : vector<1x8x16x4xf32> to vector<8x16x4xf32>
    %11 = vector.shape_cast %2 : vector<1x4xf32> to vector<1x1x4xf32>
    %12 = vector.broadcast %11 : vector<1x1x4xf32> to vector<8x16x4xf32>
    %13 = arith.mulf %10, %12 : vector<8x16x4xf32>
    %14 = vector.shape_cast %3 : vector<1x4xf32> to vector<1x1x4xf32>
    %15 = vector.broadcast %14 : vector<1x1x4xf32> to vector<8x16x4xf32>
    %16 = arith.addf %13, %15 : vector<8x16x4xf32>
    %17 = arith.truncf %16 : vector<8x16x4xf32> to vector<8x16x4xbf16>
    %c2 = arith.constant 2 : index
    %c1 = arith.constant 1 : index
    %c0_12 = arith.constant 0 : index
    %18 = vector.load %arg14[%c2, %c1, %c0_12] : memref<12x18x4xbf16, #tpu.memory_space<vmem>>, vector<8x16x4xbf16>
    tpu.vector_store %arg14[%c2, %c1, %c0_12], %17 {strides = array<i32>} : memref<12x18x4xbf16, #tpu.memory_space<vmem>>, vector<8x16x4xbf16>,
    %c0_i32 = arith.constant 0 : i32
    %19 = arith.cmpi eq, %arg1, %c0_i32 : i32
    %20 = arith.extui %19 : i1 to i32
    %c0_i32_13 = arith.constant 0 : i32
    %21 = arith.cmpi ne, %20, %c0_i32_13 : i32
    scf.if %21 {
      %cst_172 = arith.constant 0.000000e+00 : bf16
      %190 = vector.broadcast %cst_172 : bf16 to vector<2x18x4xbf16>
      %c0_173 = arith.constant 0 : index
      %c0_174 = arith.constant 0 : index
      %c0_175 = arith.constant 0 : index
      %191 = vector.load %arg14[%c0_173, %c0_174, %c0_175] : memref<12x18x4xbf16, #tpu.memory_space<vmem>>, vector<2x18x4xbf16>
      tpu.vector_store %arg14[%c0_173, %c0_174, %c0_175], %190 {strides = array<i32>} : memref<12x18x4xbf16, #tpu.memory_space<vmem>>, vector<2x18x4xbf16>,
    } else {
    }
    %c0_i32_14 = arith.constant 0 : i32
    %22 = arith.cmpi sgt, %arg1, %c0_i32_14 : i32
    %23 = arith.extui %22 : i1 to i32
    %c0_i32_15 = arith.constant 0 : i32
    %24 = arith.cmpi ne, %23, %c0_i32_15 : i32
    scf.if %24 {
      %c2_i32 = arith.constant 2 : i32
      %190 = arith.subi %1, %c2_i32 : i32
      %c0_172 = arith.constant 0 : index
      %191 = arith.index_cast %190 : i32 to index
      %c0_173 = arith.constant 0 : index
      %c0_174 = arith.constant 0 : index
      %192 = vector.load %arg2[%c0_172, %191, %c0_173, %c0_174] : memref<1x16x16x4xf32, #tpu.memory_space<vmem>>, vector<1x2x16x4xf32>
      %193 = vector.shape_cast %192 : vector<1x2x16x4xf32> to vector<2x16x4xf32>
      %194 = vector.shape_cast %2 : vector<1x4xf32> to vector<1x1x4xf32>
      %195 = vector.broadcast %194 : vector<1x1x4xf32> to vector<2x16x4xf32>
      %196 = arith.mulf %193, %195 : vector<2x16x4xf32>
      %197 = vector.shape_cast %3 : vector<1x4xf32> to vector<1x1x4xf32>
      %198 = vector.broadcast %197 : vector<1x1x4xf32> to vector<2x16x4xf32>
      %199 = arith.addf %196, %198 : vector<2x16x4xf32>
      %200 = arith.truncf %199 : vector<2x16x4xf32> to vector<2x16x4xbf16>
      %c0_175 = arith.constant 0 : index
      %c1_176 = arith.constant 1 : index
      %c0_177 = arith.constant 0 : index
      %201 = vector.load %arg14[%c0_175, %c1_176, %c0_177] : memref<12x18x4xbf16, #tpu.memory_space<vmem>>, vector<2x16x4xbf16>
      tpu.vector_store %arg14[%c0_175, %c1_176, %c0_177], %200 {strides = array<i32>} : memref<12x18x4xbf16, #tpu.memory_space<vmem>>, vector<2x16x4xbf16>,
    } else {
    }
    %c1_i32 = arith.constant 1 : i32
    %25 = arith.cmpi eq, %arg1, %c1_i32 : i32
    %26 = arith.extui %25 : i1 to i32
    %c0_i32_16 = arith.constant 0 : i32
    %27 = arith.cmpi ne, %26, %c0_i32_16 : i32
    scf.if %27 {
      %cst_172 = arith.constant 0.000000e+00 : bf16
      %190 = vector.broadcast %cst_172 : bf16 to vector<2x18x4xbf16>
      %c10 = arith.constant 10 : index
      %c0_173 = arith.constant 0 : index
      %c0_174 = arith.constant 0 : index
      %191 = vector.load %arg14[%c10, %c0_173, %c0_174] : memref<12x18x4xbf16, #tpu.memory_space<vmem>>, vector<2x18x4xbf16>
      tpu.vector_store %arg14[%c10, %c0_173, %c0_174], %190 {strides = array<i32>} : memref<12x18x4xbf16, #tpu.memory_space<vmem>>, vector<2x18x4xbf16>,
    } else {
    }
    %c1_i32_17 = arith.constant 1 : i32
    %28 = arith.cmpi slt, %arg1, %c1_i32_17 : i32
    %29 = arith.extui %28 : i1 to i32
    %c0_i32_18 = arith.constant 0 : i32
    %30 = arith.cmpi ne, %29, %c0_i32_18 : i32
    scf.if %30 {
      %c8_i32_172 = arith.constant 8 : i32
      %190 = arith.addi %1, %c8_i32_172 : i32
      %c0_173 = arith.constant 0 : index
      %191 = arith.index_cast %190 : i32 to index
      %c0_174 = arith.constant 0 : index
      %c0_175 = arith.constant 0 : index
      %192 = vector.load %arg2[%c0_173, %191, %c0_174, %c0_175] : memref<1x16x16x4xf32, #tpu.memory_space<vmem>>, vector<1x2x16x4xf32>
      %193 = vector.shape_cast %192 : vector<1x2x16x4xf32> to vector<2x16x4xf32>
      %194 = vector.shape_cast %2 : vector<1x4xf32> to vector<1x1x4xf32>
      %195 = vector.broadcast %194 : vector<1x1x4xf32> to vector<2x16x4xf32>
      %196 = arith.mulf %193, %195 : vector<2x16x4xf32>
      %197 = vector.shape_cast %3 : vector<1x4xf32> to vector<1x1x4xf32>
      %198 = vector.broadcast %197 : vector<1x1x4xf32> to vector<2x16x4xf32>
      %199 = arith.addf %196, %198 : vector<2x16x4xf32>
      %200 = arith.truncf %199 : vector<2x16x4xf32> to vector<2x16x4xbf16>
      %c10 = arith.constant 10 : index
      %c1_176 = arith.constant 1 : index
      %c0_177 = arith.constant 0 : index
      %201 = vector.load %arg14[%c10, %c1_176, %c0_177] : memref<12x18x4xbf16, #tpu.memory_space<vmem>>, vector<2x16x4xbf16>
      tpu.vector_store %arg14[%c10, %c1_176, %c0_177], %200 {strides = array<i32>} : memref<12x18x4xbf16, #tpu.memory_space<vmem>>, vector<2x16x4xbf16>,
    } else {
    }
    %c0_19 = arith.constant 0 : index
    %c0_20 = arith.constant 0 : index
    %c0_21 = arith.constant 0 : index
    %31 = vector.load %arg14[%c0_19, %c0_20, %c0_21] : memref<12x18x4xbf16, #tpu.memory_space<vmem>>, vector<10x16x4xbf16>
    %32 = vector.shape_cast %31 : vector<10x16x4xbf16> to vector<160x4xbf16>
    %c0_22 = arith.constant 0 : index
    %c0_23 = arith.constant 0 : index
    %c0_24 = arith.constant 0 : index
    %33 = vector.load %arg5[%c0_22, %c0_23, %c0_24] : memref<9x4x8xbf16, #tpu.memory_space<vmem>>, vector<1x4x8xbf16>
    %34 = vector.shape_cast %33 : vector<1x4x8xbf16> to vector<4x8xbf16>
    %cst_25 = arith.constant dense<0.000000e+00> : vector<160x8xf32>
    %35 = tpu.matmul %32, %34, %cst_25 {dimension_numbers = #tpu.dot_dimension_numbers<[1], [0], [0], [1], [0, 0, 1, 1], [], []>} : vector<160x4xbf16>, vector<4x8xbf16>, vector<160x8xf32> -> vector<160x8xf32>
    %c0_26 = arith.constant 0 : index
    %c1_27 = arith.constant 1 : index
    %c0_28 = arith.constant 0 : index
    %36 = vector.load %arg14[%c0_26, %c1_27, %c0_28] : memref<12x18x4xbf16, #tpu.memory_space<vmem>>, vector<10x16x4xbf16>
    %37 = vector.shape_cast %36 : vector<10x16x4xbf16> to vector<160x4xbf16>
    %c1_29 = arith.constant 1 : index
    %c0_30 = arith.constant 0 : index
    %c0_31 = arith.constant 0 : index
    %38 = vector.load %arg5[%c1_29, %c0_30, %c0_31] : memref<9x4x8xbf16, #tpu.memory_space<vmem>>, vector<1x4x8xbf16>
    %39 = vector.shape_cast %38 : vector<1x4x8xbf16> to vector<4x8xbf16>
    %cst_32 = arith.constant dense<0.000000e+00> : vector<160x8xf32>
    %40 = tpu.matmul %37, %39, %cst_32 {dimension_numbers = #tpu.dot_dimension_numbers<[1], [0], [0], [1], [0, 0, 1, 1], [], []>} : vector<160x4xbf16>, vector<4x8xbf16>, vector<160x8xf32> -> vector<160x8xf32>
    %41 = arith.addf %35, %40 : vector<160x8xf32>
    %c0_33 = arith.constant 0 : index
    %c2_34 = arith.constant 2 : index
    %c0_35 = arith.constant 0 : index
    %42 = vector.load %arg14[%c0_33, %c2_34, %c0_35] : memref<12x18x4xbf16, #tpu.memory_space<vmem>>, vector<10x16x4xbf16>
    %43 = vector.shape_cast %42 : vector<10x16x4xbf16> to vector<160x4xbf16>
    %c2_36 = arith.constant 2 : index
    %c0_37 = arith.constant 0 : index
    %c0_38 = arith.constant 0 : index
    %44 = vector.load %arg5[%c2_36, %c0_37, %c0_38] : memref<9x4x8xbf16, #tpu.memory_space<vmem>>, vector<1x4x8xbf16>
    %45 = vector.shape_cast %44 : vector<1x4x8xbf16> to vector<4x8xbf16>
    %cst_39 = arith.constant dense<0.000000e+00> : vector<160x8xf32>
    %46 = tpu.matmul %43, %45, %cst_39 {dimension_numbers = #tpu.dot_dimension_numbers<[1], [0], [0], [1], [0, 0, 1, 1], [], []>} : vector<160x4xbf16>, vector<4x8xbf16>, vector<160x8xf32> -> vector<160x8xf32>
    %47 = arith.addf %41, %46 : vector<160x8xf32>
    %c1_40 = arith.constant 1 : index
    %c0_41 = arith.constant 0 : index
    %c0_42 = arith.constant 0 : index
    %48 = vector.load %arg14[%c1_40, %c0_41, %c0_42] : memref<12x18x4xbf16, #tpu.memory_space<vmem>>, vector<10x16x4xbf16>
    %49 = vector.shape_cast %48 : vector<10x16x4xbf16> to vector<160x4xbf16>
    %c3 = arith.constant 3 : index
    %c0_43 = arith.constant 0 : index
    %c0_44 = arith.constant 0 : index
    %50 = vector.load %arg5[%c3, %c0_43, %c0_44] : memref<9x4x8xbf16, #tpu.memory_space<vmem>>, vector<1x4x8xbf16>
    %51 = vector.shape_cast %50 : vector<1x4x8xbf16> to vector<4x8xbf16>
    %cst_45 = arith.constant dense<0.000000e+00> : vector<160x8xf32>
    %52 = tpu.matmul %49, %51, %cst_45 {dimension_numbers = #tpu.dot_dimension_numbers<[1], [0], [0], [1], [0, 0, 1, 1], [], []>} : vector<160x4xbf16>, vector<4x8xbf16>, vector<160x8xf32> -> vector<160x8xf32>
    %53 = arith.addf %47, %52 : vector<160x8xf32>
    %c1_46 = arith.constant 1 : index
    %c1_47 = arith.constant 1 : index
    %c0_48 = arith.constant 0 : index
    %54 = vector.load %arg14[%c1_46, %c1_47, %c0_48] : memref<12x18x4xbf16, #tpu.memory_space<vmem>>, vector<10x16x4xbf16>
    %55 = vector.shape_cast %54 : vector<10x16x4xbf16> to vector<160x4xbf16>
    %c4 = arith.constant 4 : index
    %c0_49 = arith.constant 0 : index
    %c0_50 = arith.constant 0 : index
    %56 = vector.load %arg5[%c4, %c0_49, %c0_50] : memref<9x4x8xbf16, #tpu.memory_space<vmem>>, vector<1x4x8xbf16>
    %57 = vector.shape_cast %56 : vector<1x4x8xbf16> to vector<4x8xbf16>
    %cst_51 = arith.constant dense<0.000000e+00> : vector<160x8xf32>
    %58 = tpu.matmul %55, %57, %cst_51 {dimension_numbers = #tpu.dot_dimension_numbers<[1], [0], [0], [1], [0, 0, 1, 1], [], []>} : vector<160x4xbf16>, vector<4x8xbf16>, vector<160x8xf32> -> vector<160x8xf32>
    %59 = arith.addf %53, %58 : vector<160x8xf32>
    %c1_52 = arith.constant 1 : index
    %c2_53 = arith.constant 2 : index
    %c0_54 = arith.constant 0 : index
    %60 = vector.load %arg14[%c1_52, %c2_53, %c0_54] : memref<12x18x4xbf16, #tpu.memory_space<vmem>>, vector<10x16x4xbf16>
    %61 = vector.shape_cast %60 : vector<10x16x4xbf16> to vector<160x4xbf16>
    %c5 = arith.constant 5 : index
    %c0_55 = arith.constant 0 : index
    %c0_56 = arith.constant 0 : index
    %62 = vector.load %arg5[%c5, %c0_55, %c0_56] : memref<9x4x8xbf16, #tpu.memory_space<vmem>>, vector<1x4x8xbf16>
    %63 = vector.shape_cast %62 : vector<1x4x8xbf16> to vector<4x8xbf16>
    %cst_57 = arith.constant dense<0.000000e+00> : vector<160x8xf32>
    %64 = tpu.matmul %61, %63, %cst_57 {dimension_numbers = #tpu.dot_dimension_numbers<[1], [0], [0], [1], [0, 0, 1, 1], [], []>} : vector<160x4xbf16>, vector<4x8xbf16>, vector<160x8xf32> -> vector<160x8xf32>
    %65 = arith.addf %59, %64 : vector<160x8xf32>
    %c2_58 = arith.constant 2 : index
    %c0_59 = arith.constant 0 : index
    %c0_60 = arith.constant 0 : index
    %66 = vector.load %arg14[%c2_58, %c0_59, %c0_60] : memref<12x18x4xbf16, #tpu.memory_space<vmem>>, vector<10x16x4xbf16>
    %67 = vector.shape_cast %66 : vector<10x16x4xbf16> to vector<160x4xbf16>
    %c6 = arith.constant 6 : index
    %c0_61 = arith.constant 0 : index
    %c0_62 = arith.constant 0 : index
    %68 = vector.load %arg5[%c6, %c0_61, %c0_62] : memref<9x4x8xbf16, #tpu.memory_space<vmem>>, vector<1x4x8xbf16>
    %69 = vector.shape_cast %68 : vector<1x4x8xbf16> to vector<4x8xbf16>
    %cst_63 = arith.constant dense<0.000000e+00> : vector<160x8xf32>
    %70 = tpu.matmul %67, %69, %cst_63 {dimension_numbers = #tpu.dot_dimension_numbers<[1], [0], [0], [1], [0, 0, 1, 1], [], []>} : vector<160x4xbf16>, vector<4x8xbf16>, vector<160x8xf32> -> vector<160x8xf32>
    %71 = arith.addf %65, %70 : vector<160x8xf32>
    %c2_64 = arith.constant 2 : index
    %c1_65 = arith.constant 1 : index
    %c0_66 = arith.constant 0 : index
    %72 = vector.load %arg14[%c2_64, %c1_65, %c0_66] : memref<12x18x4xbf16, #tpu.memory_space<vmem>>, vector<10x16x4xbf16>
    %73 = vector.shape_cast %72 : vector<10x16x4xbf16> to vector<160x4xbf16>
    %c7 = arith.constant 7 : index
    %c0_67 = arith.constant 0 : index
    %c0_68 = arith.constant 0 : index
    %74 = vector.load %arg5[%c7, %c0_67, %c0_68] : memref<9x4x8xbf16, #tpu.memory_space<vmem>>, vector<1x4x8xbf16>
    %75 = vector.shape_cast %74 : vector<1x4x8xbf16> to vector<4x8xbf16>
    %cst_69 = arith.constant dense<0.000000e+00> : vector<160x8xf32>
    %76 = tpu.matmul %73, %75, %cst_69 {dimension_numbers = #tpu.dot_dimension_numbers<[1], [0], [0], [1], [0, 0, 1, 1], [], []>} : vector<160x4xbf16>, vector<4x8xbf16>, vector<160x8xf32> -> vector<160x8xf32>
    %77 = arith.addf %71, %76 : vector<160x8xf32>
    %c2_70 = arith.constant 2 : index
    %c2_71 = arith.constant 2 : index
    %c0_72 = arith.constant 0 : index
    %78 = vector.load %arg14[%c2_70, %c2_71, %c0_72] : memref<12x18x4xbf16, #tpu.memory_space<vmem>>, vector<10x16x4xbf16>
    %79 = vector.shape_cast %78 : vector<10x16x4xbf16> to vector<160x4xbf16>
    %c8 = arith.constant 8 : index
    %c0_73 = arith.constant 0 : index
    %c0_74 = arith.constant 0 : index
    %80 = vector.load %arg5[%c8, %c0_73, %c0_74] : memref<9x4x8xbf16, #tpu.memory_space<vmem>>, vector<1x4x8xbf16>
    %81 = vector.shape_cast %80 : vector<1x4x8xbf16> to vector<4x8xbf16>
    %cst_75 = arith.constant dense<0.000000e+00> : vector<160x8xf32>
    %82 = tpu.matmul %79, %81, %cst_75 {dimension_numbers = #tpu.dot_dimension_numbers<[1], [0], [0], [1], [0, 0, 1, 1], [], []>} : vector<160x4xbf16>, vector<4x8xbf16>, vector<160x8xf32> -> vector<160x8xf32>
    %83 = arith.addf %77, %82 : vector<160x8xf32>
    %cst_76 = arith.constant 0.000000e+00 : f32
    %84 = vector.broadcast %cst_76 : f32 to vector<160x8xf32>
    %85 = arith.cmpf ogt, %83, %84 : vector<160x8xf32>
    %c0_77 = arith.constant 0 : index
    %c0_78 = arith.constant 0 : index
    %86 = vector.load %arg6[%c0_77, %c0_78] : memref<1x8xf32, #tpu.memory_space<vmem>>, vector<1x8xf32>
    %87 = vector.broadcast %86 : vector<1x8xf32> to vector<160x8xf32>
    %88 = arith.mulf %83, %87 : vector<160x8xf32>
    %89 = arith.select %85, %83, %88 : vector<160x8xi1>, vector<160x8xf32>
    %cst_79 = arith.constant 0.000000e+00 : bf16
    %90 = vector.broadcast %cst_79 : bf16 to vector<10x1x8xbf16>
    %c0_80 = arith.constant 0 : index
    %c0_81 = arith.constant 0 : index
    %c0_82 = arith.constant 0 : index
    %91 = vector.load %arg15[%c0_80, %c0_81, %c0_82] : memref<10x18x8xbf16, #tpu.memory_space<vmem>>, vector<10x1x8xbf16>
    tpu.vector_store %arg15[%c0_80, %c0_81, %c0_82], %90 {strides = array<i32>} : memref<10x18x8xbf16, #tpu.memory_space<vmem>>, vector<10x1x8xbf16>,
    %cst_83 = arith.constant 0.000000e+00 : bf16
    %92 = vector.broadcast %cst_83 : bf16 to vector<10x1x8xbf16>
    %c0_84 = arith.constant 0 : index
    %c17_85 = arith.constant 17 : index
    %c0_86 = arith.constant 0 : index
    %93 = vector.load %arg15[%c0_84, %c17_85, %c0_86] : memref<10x18x8xbf16, #tpu.memory_space<vmem>>, vector<10x1x8xbf16>
    tpu.vector_store %arg15[%c0_84, %c17_85, %c0_86], %92 {strides = array<i32>} : memref<10x18x8xbf16, #tpu.memory_space<vmem>>, vector<10x1x8xbf16>,
    %94 = vector.shape_cast %89 : vector<160x8xf32> to vector<10x16x8xf32>
    %95 = arith.truncf %94 : vector<10x16x8xf32> to vector<10x16x8xbf16>
    %c0_87 = arith.constant 0 : index
    %c1_88 = arith.constant 1 : index
    %c0_89 = arith.constant 0 : index
    %96 = vector.load %arg15[%c0_87, %c1_88, %c0_89] : memref<10x18x8xbf16, #tpu.memory_space<vmem>>, vector<10x16x8xbf16>
    tpu.vector_store %arg15[%c0_87, %c1_88, %c0_89], %95 {strides = array<i32>} : memref<10x18x8xbf16, #tpu.memory_space<vmem>>, vector<10x16x8xbf16>,
    %c0_i32_90 = arith.constant 0 : i32
    %97 = arith.cmpi eq, %arg1, %c0_i32_90 : i32
    %98 = arith.extui %97 : i1 to i32
    %c0_i32_91 = arith.constant 0 : i32
    %99 = arith.cmpi ne, %98, %c0_i32_91 : i32
    scf.if %99 {
      %cst_172 = arith.constant 0.000000e+00 : bf16
      %190 = vector.broadcast %cst_172 : bf16 to vector<1x18x8xbf16>
      %c0_173 = arith.constant 0 : index
      %c0_174 = arith.constant 0 : index
      %c0_175 = arith.constant 0 : index
      %191 = vector.load %arg15[%c0_173, %c0_174, %c0_175] : memref<10x18x8xbf16, #tpu.memory_space<vmem>>, vector<1x18x8xbf16>
      tpu.vector_store %arg15[%c0_173, %c0_174, %c0_175], %190 {strides = array<i32>} : memref<10x18x8xbf16, #tpu.memory_space<vmem>>, vector<1x18x8xbf16>,
    } else {
    }
    %c1_i32_92 = arith.constant 1 : i32
    %100 = arith.cmpi eq, %arg1, %c1_i32_92 : i32
    %101 = arith.extui %100 : i1 to i32
    %c0_i32_93 = arith.constant 0 : i32
    %102 = arith.cmpi ne, %101, %c0_i32_93 : i32
    scf.if %102 {
      %cst_172 = arith.constant 0.000000e+00 : bf16
      %190 = vector.broadcast %cst_172 : bf16 to vector<1x18x8xbf16>
      %c9 = arith.constant 9 : index
      %c0_173 = arith.constant 0 : index
      %c0_174 = arith.constant 0 : index
      %191 = vector.load %arg15[%c9, %c0_173, %c0_174] : memref<10x18x8xbf16, #tpu.memory_space<vmem>>, vector<1x18x8xbf16>
      tpu.vector_store %arg15[%c9, %c0_173, %c0_174], %190 {strides = array<i32>} : memref<10x18x8xbf16, #tpu.memory_space<vmem>>, vector<1x18x8xbf16>,
    } else {
    }
    %c0_94 = arith.constant 0 : index
    %c0_95 = arith.constant 0 : index
    %c0_96 = arith.constant 0 : index
    %103 = vector.load %arg15[%c0_94, %c0_95, %c0_96] : memref<10x18x8xbf16, #tpu.memory_space<vmem>>, vector<8x16x8xbf16>
    %104 = vector.shape_cast %103 : vector<8x16x8xbf16> to vector<128x8xbf16>
    %c0_97 = arith.constant 0 : index
    %c0_98 = arith.constant 0 : index
    %c0_99 = arith.constant 0 : index
    %105 = vector.load %arg7[%c0_97, %c0_98, %c0_99] : memref<9x8x8xbf16, #tpu.memory_space<vmem>>, vector<1x8x8xbf16>
    %106 = vector.shape_cast %105 : vector<1x8x8xbf16> to vector<8x8xbf16>
    %cst_100 = arith.constant dense<0.000000e+00> : vector<128x8xf32>
    %107 = tpu.matmul %104, %106, %cst_100 {dimension_numbers = #tpu.dot_dimension_numbers<[1], [0], [0], [1], [0, 0, 1, 1], [], []>} : vector<128x8xbf16>, vector<8x8xbf16>, vector<128x8xf32> -> vector<128x8xf32>
    %c0_101 = arith.constant 0 : index
    %c1_102 = arith.constant 1 : index
    %c0_103 = arith.constant 0 : index
    %108 = vector.load %arg15[%c0_101, %c1_102, %c0_103] : memref<10x18x8xbf16, #tpu.memory_space<vmem>>, vector<8x16x8xbf16>
    %109 = vector.shape_cast %108 : vector<8x16x8xbf16> to vector<128x8xbf16>
    %c1_104 = arith.constant 1 : index
    %c0_105 = arith.constant 0 : index
    %c0_106 = arith.constant 0 : index
    %110 = vector.load %arg7[%c1_104, %c0_105, %c0_106] : memref<9x8x8xbf16, #tpu.memory_space<vmem>>, vector<1x8x8xbf16>
    %111 = vector.shape_cast %110 : vector<1x8x8xbf16> to vector<8x8xbf16>
    %cst_107 = arith.constant dense<0.000000e+00> : vector<128x8xf32>
    %112 = tpu.matmul %109, %111, %cst_107 {dimension_numbers = #tpu.dot_dimension_numbers<[1], [0], [0], [1], [0, 0, 1, 1], [], []>} : vector<128x8xbf16>, vector<8x8xbf16>, vector<128x8xf32> -> vector<128x8xf32>
    %113 = arith.addf %107, %112 : vector<128x8xf32>
    %c0_108 = arith.constant 0 : index
    %c2_109 = arith.constant 2 : index
    %c0_110 = arith.constant 0 : index
    %114 = vector.load %arg15[%c0_108, %c2_109, %c0_110] : memref<10x18x8xbf16, #tpu.memory_space<vmem>>, vector<8x16x8xbf16>
    %115 = vector.shape_cast %114 : vector<8x16x8xbf16> to vector<128x8xbf16>
    %c2_111 = arith.constant 2 : index
    %c0_112 = arith.constant 0 : index
    %c0_113 = arith.constant 0 : index
    %116 = vector.load %arg7[%c2_111, %c0_112, %c0_113] : memref<9x8x8xbf16, #tpu.memory_space<vmem>>, vector<1x8x8xbf16>
    %117 = vector.shape_cast %116 : vector<1x8x8xbf16> to vector<8x8xbf16>
    %cst_114 = arith.constant dense<0.000000e+00> : vector<128x8xf32>
    %118 = tpu.matmul %115, %117, %cst_114 {dimension_numbers = #tpu.dot_dimension_numbers<[1], [0], [0], [1], [0, 0, 1, 1], [], []>} : vector<128x8xbf16>, vector<8x8xbf16>, vector<128x8xf32> -> vector<128x8xf32>
    %119 = arith.addf %113, %118 : vector<128x8xf32>
    %c1_115 = arith.constant 1 : index
    %c0_116 = arith.constant 0 : index
    %c0_117 = arith.constant 0 : index
    %120 = vector.load %arg15[%c1_115, %c0_116, %c0_117] : memref<10x18x8xbf16, #tpu.memory_space<vmem>>, vector<8x16x8xbf16>
    %121 = vector.shape_cast %120 : vector<8x16x8xbf16> to vector<128x8xbf16>
    %c3_118 = arith.constant 3 : index
    %c0_119 = arith.constant 0 : index
    %c0_120 = arith.constant 0 : index
    %122 = vector.load %arg7[%c3_118, %c0_119, %c0_120] : memref<9x8x8xbf16, #tpu.memory_space<vmem>>, vector<1x8x8xbf16>
    %123 = vector.shape_cast %122 : vector<1x8x8xbf16> to vector<8x8xbf16>
    %cst_121 = arith.constant dense<0.000000e+00> : vector<128x8xf32>
    %124 = tpu.matmul %121, %123, %cst_121 {dimension_numbers = #tpu.dot_dimension_numbers<[1], [0], [0], [1], [0, 0, 1, 1], [], []>} : vector<128x8xbf16>, vector<8x8xbf16>, vector<128x8xf32> -> vector<128x8xf32>
    %125 = arith.addf %119, %124 : vector<128x8xf32>
    %c1_122 = arith.constant 1 : index
    %c1_123 = arith.constant 1 : index
    %c0_124 = arith.constant 0 : index
    %126 = vector.load %arg15[%c1_122, %c1_123, %c0_124] : memref<10x18x8xbf16, #tpu.memory_space<vmem>>, vector<8x16x8xbf16>
    %127 = vector.shape_cast %126 : vector<8x16x8xbf16> to vector<128x8xbf16>
    %c4_125 = arith.constant 4 : index
    %c0_126 = arith.constant 0 : index
    %c0_127 = arith.constant 0 : index
    %128 = vector.load %arg7[%c4_125, %c0_126, %c0_127] : memref<9x8x8xbf16, #tpu.memory_space<vmem>>, vector<1x8x8xbf16>
    %129 = vector.shape_cast %128 : vector<1x8x8xbf16> to vector<8x8xbf16>
    %cst_128 = arith.constant dense<0.000000e+00> : vector<128x8xf32>
    %130 = tpu.matmul %127, %129, %cst_128 {dimension_numbers = #tpu.dot_dimension_numbers<[1], [0], [0], [1], [0, 0, 1, 1], [], []>} : vector<128x8xbf16>, vector<8x8xbf16>, vector<128x8xf32> -> vector<128x8xf32>
    %131 = arith.addf %125, %130 : vector<128x8xf32>
    %c1_129 = arith.constant 1 : index
    %c2_130 = arith.constant 2 : index
    %c0_131 = arith.constant 0 : index
    %132 = vector.load %arg15[%c1_129, %c2_130, %c0_131] : memref<10x18x8xbf16, #tpu.memory_space<vmem>>, vector<8x16x8xbf16>
    %133 = vector.shape_cast %132 : vector<8x16x8xbf16> to vector<128x8xbf16>
    %c5_132 = arith.constant 5 : index
    %c0_133 = arith.constant 0 : index
    %c0_134 = arith.constant 0 : index
    %134 = vector.load %arg7[%c5_132, %c0_133, %c0_134] : memref<9x8x8xbf16, #tpu.memory_space<vmem>>, vector<1x8x8xbf16>
    %135 = vector.shape_cast %134 : vector<1x8x8xbf16> to vector<8x8xbf16>
    %cst_135 = arith.constant dense<0.000000e+00> : vector<128x8xf32>
    %136 = tpu.matmul %133, %135, %cst_135 {dimension_numbers = #tpu.dot_dimension_numbers<[1], [0], [0], [1], [0, 0, 1, 1], [], []>} : vector<128x8xbf16>, vector<8x8xbf16>, vector<128x8xf32> -> vector<128x8xf32>
    %137 = arith.addf %131, %136 : vector<128x8xf32>
    %c2_136 = arith.constant 2 : index
    %c0_137 = arith.constant 0 : index
    %c0_138 = arith.constant 0 : index
    %138 = vector.load %arg15[%c2_136, %c0_137, %c0_138] : memref<10x18x8xbf16, #tpu.memory_space<vmem>>, vector<8x16x8xbf16>
    %139 = vector.shape_cast %138 : vector<8x16x8xbf16> to vector<128x8xbf16>
    %c6_139 = arith.constant 6 : index
    %c0_140 = arith.constant 0 : index
    %c0_141 = arith.constant 0 : index
    %140 = vector.load %arg7[%c6_139, %c0_140, %c0_141] : memref<9x8x8xbf16, #tpu.memory_space<vmem>>, vector<1x8x8xbf16>
    %141 = vector.shape_cast %140 : vector<1x8x8xbf16> to vector<8x8xbf16>
    %cst_142 = arith.constant dense<0.000000e+00> : vector<128x8xf32>
    %142 = tpu.matmul %139, %141, %cst_142 {dimension_numbers = #tpu.dot_dimension_numbers<[1], [0], [0], [1], [0, 0, 1, 1], [], []>} : vector<128x8xbf16>, vector<8x8xbf16>, vector<128x8xf32> -> vector<128x8xf32>
    %143 = arith.addf %137, %142 : vector<128x8xf32>
    %c2_143 = arith.constant 2 : index
    %c1_144 = arith.constant 1 : index
    %c0_145 = arith.constant 0 : index
    %144 = vector.load %arg15[%c2_143, %c1_144, %c0_145] : memref<10x18x8xbf16, #tpu.memory_space<vmem>>, vector<8x16x8xbf16>
    %145 = vector.shape_cast %144 : vector<8x16x8xbf16> to vector<128x8xbf16>
    %c7_146 = arith.constant 7 : index
    %c0_147 = arith.constant 0 : index
    %c0_148 = arith.constant 0 : index
    %146 = vector.load %arg7[%c7_146, %c0_147, %c0_148] : memref<9x8x8xbf16, #tpu.memory_space<vmem>>, vector<1x8x8xbf16>
    %147 = vector.shape_cast %146 : vector<1x8x8xbf16> to vector<8x8xbf16>
    %cst_149 = arith.constant dense<0.000000e+00> : vector<128x8xf32>
    %148 = tpu.matmul %145, %147, %cst_149 {dimension_numbers = #tpu.dot_dimension_numbers<[1], [0], [0], [1], [0, 0, 1, 1], [], []>} : vector<128x8xbf16>, vector<8x8xbf16>, vector<128x8xf32> -> vector<128x8xf32>
    %149 = arith.addf %143, %148 : vector<128x8xf32>
    %c2_150 = arith.constant 2 : index
    %c2_151 = arith.constant 2 : index
    %c0_152 = arith.constant 0 : index
    %150 = vector.load %arg15[%c2_150, %c2_151, %c0_152] : memref<10x18x8xbf16, #tpu.memory_space<vmem>>, vector<8x16x8xbf16>
    %151 = vector.shape_cast %150 : vector<8x16x8xbf16> to vector<128x8xbf16>
    %c8_153 = arith.constant 8 : index
    %c0_154 = arith.constant 0 : index
    %c0_155 = arith.constant 0 : index
    %152 = vector.load %arg7[%c8_153, %c0_154, %c0_155] : memref<9x8x8xbf16, #tpu.memory_space<vmem>>, vector<1x8x8xbf16>
    %153 = vector.shape_cast %152 : vector<1x8x8xbf16> to vector<8x8xbf16>
    %cst_156 = arith.constant dense<0.000000e+00> : vector<128x8xf32>
    %154 = tpu.matmul %151, %153, %cst_156 {dimension_numbers = #tpu.dot_dimension_numbers<[1], [0], [0], [1], [0, 0, 1, 1], [], []>} : vector<128x8xbf16>, vector<8x8xbf16>, vector<128x8xf32> -> vector<128x8xf32>
    %155 = arith.addf %149, %154 : vector<128x8xf32>
    %c0_157 = arith.constant 0 : index
    %c0_158 = arith.constant 0 : index
    %156 = vector.load %arg8[%c0_157, %c0_158] : memref<1x8xf32, #tpu.memory_space<vmem>>, vector<1x8xf32>
    %157 = vector.broadcast %156 : vector<1x8xf32> to vector<128x8xf32>
    %158 = arith.mulf %155, %157 : vector<128x8xf32>
    %c0_159 = arith.constant 0 : index
    %c0_160 = arith.constant 0 : index
    %159 = vector.load %arg9[%c0_159, %c0_160] : memref<1x8xf32, #tpu.memory_space<vmem>>, vector<1x8xf32>
    %160 = vector.broadcast %159 : vector<1x8xf32> to vector<128x8xf32>
    %161 = arith.addf %158, %160 : vector<128x8xf32>
    %162 = vector.shape_cast %161 : vector<128x8xf32> to vector<8x16x8xf32>
    %163 = vector.shape_cast %162 : vector<8x16x8xf32> to vector<4x2x16x8xf32>
    %164 = vector.extract_strided_slice %163 {offsets = [0, 0, 0, 0], sizes = [4, 1, 16, 8], strides = [1, 1, 1, 1]} : vector<4x2x16x8xf32> to vector<4x1x16x8xf32>
    %165 = vector.shape_cast %164 : vector<4x1x16x8xf32> to vector<4x16x8xf32>
    %166 = vector.shape_cast %165 : vector<4x16x8xf32> to vector<4x8x2x8xf32>
    %167 = vector.extract_strided_slice %166 {offsets = [0, 0, 0, 0], sizes = [4, 8, 1, 8], strides = [1, 1, 1, 1]} : vector<4x8x2x8xf32> to vector<4x8x1x8xf32>
    %168 = vector.shape_cast %167 : vector<4x8x1x8xf32> to vector<4x8x8xf32>
    %169 = vector.shape_cast %10 : vector<8x16x4xf32> to vector<4x2x16x4xf32>
    %170 = vector.extract_strided_slice %169 {offsets = [0, 0, 0, 0], sizes = [4, 1, 16, 4], strides = [1, 1, 1, 1]} : vector<4x2x16x4xf32> to vector<4x1x16x4xf32>
    %171 = vector.shape_cast %170 : vector<4x1x16x4xf32> to vector<4x16x4xf32>
    %172 = vector.shape_cast %171 : vector<4x16x4xf32> to vector<4x8x2x4xf32>
    %173 = vector.extract_strided_slice %172 {offsets = [0, 0, 0, 0], sizes = [4, 8, 1, 4], strides = [1, 1, 1, 1]} : vector<4x8x2x4xf32> to vector<4x8x1x4xf32>
    %174 = vector.shape_cast %173 : vector<4x8x1x4xf32> to vector<4x8x4xf32>
    %175 = vector.shape_cast %174 : vector<4x8x4xf32> to vector<32x4xf32>
    %176 = arith.truncf %175 : vector<32x4xf32> to vector<32x4xbf16>
    %c0_161 = arith.constant 0 : index
    %c0_162 = arith.constant 0 : index
    %177 = vector.load %arg10[%c0_161, %c0_162] : memref<4x8xbf16, #tpu.memory_space<vmem>>, vector<4x8xbf16>
    %cst_163 = arith.constant dense<0.000000e+00> : vector<32x8xf32>
    %178 = tpu.matmul %176, %177, %cst_163 {dimension_numbers = #tpu.dot_dimension_numbers<[1], [0], [0], [1], [0, 0, 1, 1], [], []>} : vector<32x4xbf16>, vector<4x8xbf16>, vector<32x8xf32> -> vector<32x8xf32>
    %c0_164 = arith.constant 0 : index
    %c0_165 = arith.constant 0 : index
    %179 = vector.load %arg11[%c0_164, %c0_165] : memref<1x8xf32, #tpu.memory_space<vmem>>, vector<1x8xf32>
    %180 = vector.broadcast %179 : vector<1x8xf32> to vector<32x8xf32>
    %181 = arith.mulf %178, %180 : vector<32x8xf32>
    %c0_166 = arith.constant 0 : index
    %c0_167 = arith.constant 0 : index
    %182 = vector.load %arg12[%c0_166, %c0_167] : memref<1x8xf32, #tpu.memory_space<vmem>>, vector<1x8xf32>
    %183 = vector.broadcast %182 : vector<1x8xf32> to vector<32x8xf32>
    %184 = arith.addf %181, %183 : vector<32x8xf32>
    %185 = vector.shape_cast %184 : vector<32x8xf32> to vector<4x8x8xf32>
    %186 = arith.addf %168, %185 : vector<4x8x8xf32>
    %c0_168 = arith.constant 0 : index
    %c0_169 = arith.constant 0 : index
    %c0_170 = arith.constant 0 : index
    %c0_171 = arith.constant 0 : index
    %187 = vector.load %arg13[%c0_168, %c0_169, %c0_170, %c0_171] : memref<1x4x8x8xf32, #tpu.memory_space<vmem>>, vector<1x4x8x8xf32>
    %188 = vector.shape_cast %187 : vector<1x4x8x8xf32> to vector<4x8x8xf32>
    %189 = vector.shape_cast %186 : vector<4x8x8xf32> to vector<1x4x8x8xf32>
    tpu.vector_store %arg13[%c0_168, %c0_169, %c0_170, %c0_171], %189 {strides = array<i32>} : memref<1x4x8x8xf32, #tpu.memory_space<vmem>>, vector<1x4x8x8xf32>,
    return
  }
  func.func @transform_0(%arg0: i32, %arg1: i32) -> (i32, i32, i32, i32) {
    %c0_i32 = arith.constant 0 : i32
    %c0_i32_0 = arith.constant 0 : i32
    %c0_i32_1 = arith.constant 0 : i32
    %c0_i32_2 = arith.constant 0 : i32
    return %arg0, %c0_i32, %c0_i32_0, %c0_i32_1 : i32, i32, i32, i32
  }
  func.func @transform_1(%arg0: i32, %arg1: i32) -> (i32, i32) {
    %c0_i32 = arith.constant 0 : i32
    %c0_i32_0 = arith.constant 0 : i32
    %c0_i32_1 = arith.constant 0 : i32
    return %c0_i32, %c0_i32_0 : i32, i32
  }
  func.func @transform_2(%arg0: i32, %arg1: i32) -> (i32, i32) {
    %c0_i32 = arith.constant 0 : i32
    %c0_i32_0 = arith.constant 0 : i32
    %c0_i32_1 = arith.constant 0 : i32
    return %c0_i32, %c0_i32_0 : i32, i32
  }
  func.func @transform_3(%arg0: i32, %arg1: i32) -> (i32, i32, i32) {
    %c0_i32 = arith.constant 0 : i32
    %c0_i32_0 = arith.constant 0 : i32
    %c0_i32_1 = arith.constant 0 : i32
    %c0_i32_2 = arith.constant 0 : i32
    return %c0_i32, %c0_i32_0, %c0_i32_1 : i32, i32, i32
  }
  func.func @transform_4(%arg0: i32, %arg1: i32) -> (i32, i32) {
    %c0_i32 = arith.constant 0 : i32
    %c0_i32_0 = arith.constant 0 : i32
    %c0_i32_1 = arith.constant 0 : i32
    return %c0_i32, %c0_i32_0 : i32, i32
  }
  func.func @transform_5(%arg0: i32, %arg1: i32) -> (i32, i32, i32) {
    %c0_i32 = arith.constant 0 : i32
    %c0_i32_0 = arith.constant 0 : i32
    %c0_i32_1 = arith.constant 0 : i32
    %c0_i32_2 = arith.constant 0 : i32
    return %c0_i32, %c0_i32_0, %c0_i32_1 : i32, i32, i32
  }
  func.func @transform_6(%arg0: i32, %arg1: i32) -> (i32, i32) {
    %c0_i32 = arith.constant 0 : i32
    %c0_i32_0 = arith.constant 0 : i32
    %c0_i32_1 = arith.constant 0 : i32
    return %c0_i32, %c0_i32_0 : i32, i32
  }
  func.func @transform_7(%arg0: i32, %arg1: i32) -> (i32, i32) {
    %c0_i32 = arith.constant 0 : i32
    %c0_i32_0 = arith.constant 0 : i32
    %c0_i32_1 = arith.constant 0 : i32
    return %c0_i32, %c0_i32_0 : i32, i32
  }
  func.func @transform_8(%arg0: i32, %arg1: i32) -> (i32, i32) {
    %c0_i32 = arith.constant 0 : i32
    %c0_i32_0 = arith.constant 0 : i32
    %c0_i32_1 = arith.constant 0 : i32
    return %c0_i32, %c0_i32_0 : i32, i32
  }
  func.func @transform_9(%arg0: i32, %arg1: i32) -> (i32, i32) {
    %c0_i32 = arith.constant 0 : i32
    %c0_i32_0 = arith.constant 0 : i32
    %c0_i32_1 = arith.constant 0 : i32
    return %c0_i32, %c0_i32_0 : i32, i32
  }
  func.func @transform_10(%arg0: i32, %arg1: i32) -> (i32, i32) {
    %c0_i32 = arith.constant 0 : i32
    %c0_i32_0 = arith.constant 0 : i32
    %c0_i32_1 = arith.constant 0 : i32
    return %c0_i32, %c0_i32_0 : i32, i32
  }
  func.func @transform_11(%arg0: i32, %arg1: i32) -> (i32, i32, i32, i32) {
    %c0_i32 = arith.constant 0 : i32
    %c0_i32_0 = arith.constant 0 : i32
    %c0_i32_1 = arith.constant 0 : i32
    return %arg0, %arg1, %c0_i32, %c0_i32_0 : i32, i32, i32, i32
  }
}

</mosaic_0001>

<llo_original>
// kernel: tpu_custom_call.1
$region0: #{tpu_custom_call.1}
  #allocation0 [shape = 'u32[]', space=smem, size = 0x4, offset = 0x4, fixed_abs, tag = 'smem constant byte address 0x4 - core index']
  #allocation1 [shape = 'u32[144,128]{1,0:T(1,128)}', space=vmem, size = 0x12000, scoped, tag = 'internal scratch']
  #allocation2 [shape = 'bf16[12,18,4]{2,1,0:T(8,128)(2,1)}', space=vmem, size = 0x12000, scoped, tag = 'scratch operand']
  #allocation3 [shape = 'bf16[10,18,8]{2,1,0:T(8,128)(2,1)}', space=vmem, size = 0xf000, scoped, tag = 'scratch operand']
  %s0 = inlined_call_operand.vmem [shape: f32[2,16,16,4], index: 0, kind: input, shape index: {}]
  %s1 = inlined_call_operand.vmem [shape: f32[1,4], index: 1, kind: input, shape index: {}]
  %s2 = inlined_call_operand.vmem [shape: f32[1,4], index: 2, kind: input, shape index: {}]
  %s3 = inlined_call_operand.vmem [shape: bf16[9,4,8], index: 3, kind: input, shape index: {}]
  %s4 = inlined_call_operand.vmem [shape: f32[1,8], index: 4, kind: input, shape index: {}]
  %s5 = inlined_call_operand.vmem [shape: bf16[9,8,8], index: 5, kind: input, shape index: {}]
  %s6 = inlined_call_operand.vmem [shape: f32[1,8], index: 6, kind: input, shape index: {}]
  %s7 = inlined_call_operand.vmem [shape: f32[1,8], index: 7, kind: input, shape index: {}]
  %s8 = inlined_call_operand.vmem [shape: bf16[4,8], index: 8, kind: input, shape index: {}]
  %s9 = inlined_call_operand.vmem [shape: f32[1,8], index: 9, kind: input, shape index: {}]
  %s10 = inlined_call_operand.vmem [shape: f32[1,8], index: 10, kind: input, shape index: {}]
  %s11 = inlined_call_operand.hbm [shape: f32[2,8,8,8], index: 11, kind: output, shape index: {}]
  %s12 = sld [smem:[#allocation0]]
  $region101: #{tpu_custom_call.1} parent=0
    _
  %s14 = ssub.s32 1, %s12
  %s15 = scalar_select 0, %s14, %s12
  $region1: #{tpu_custom_call.1} parent=0
    #allocation4 [shape = 'u8[32768]{0}', space=vmem, size = 0x8000, scoped, tag = 'output window, operand 0']
    #allocation5 [shape = 's32[2]{0}', space=sflag, size = 0x8, scoped, tag = 'scoped memory for tpu_custom_call.1']
    %16 = vsyncpa [#allocation5], 0
    %s17 = scalar_lea.sflag [#allocation5], 1
    %18 = vsyncpa %s17, 0
    loop: start=0, step=1, limit=6
    $region2: #{tpu_custom_call.1} parent=1 // loop_pre_header
      _
    $region3: #{tpu_custom_call.1} parent=1 // loop_header
      %s20 = sphi 0, %s24
      %p21 = scmp.ge.s32.totalorder %s20, 6
      %s27 = sphi 0, %s39
      %s28 = sphi 0, %s35
      %s29 = sphi 0, %s27
      %s30 = sphi 0, %s28
      %s31 = sphi 0, %s29
      %s32 = sphi 0, %s30
      %s42 = sphi 0, %s44
      %s45 = sphi 0, %s42
      %s46 = sphi 0, %s45
      %s62 = sphi 0, %s46
      %s66 = sphi 0, %s66
      %s68 = sphi 0, %s66
      %s69 = sphi 0, %s68
      %s83 = sphi 0, %s69
      %s87 = sphi 0, %s87
      %s89 = sphi 0, %s87
      %s90 = sphi 0, %s89
      %s104 = sphi 0, %s90
      %s108 = sphi 0, %s108
      %s110 = sphi 0, %s108
      %s111 = sphi 0, %s110
      %s125 = sphi 0, %s111
      %s129 = sphi 0, %s129
      %s131 = sphi 0, %s129
      %s132 = sphi 0, %s131
      %s146 = sphi 0, %s132
      %s150 = sphi 0, %s150
      %s152 = sphi 0, %s150
      %s153 = sphi 0, %s152
      %s167 = sphi 0, %s153
      %s171 = sphi 0, %s171
      %s173 = sphi 0, %s171
      %s174 = sphi 0, %s173
      %s188 = sphi 0, %s174
      %s192 = sphi 0, %s192
      %s194 = sphi 0, %s192
      %s195 = sphi 0, %s194
      %s209 = sphi 0, %s195
      %s213 = sphi 0, %s213
      %s215 = sphi 0, %s213
      %s216 = sphi 0, %s215
      %s230 = sphi 0, %s216
      %s234 = sphi 0, %s234
      %s236 = sphi 0, %s234
      %s237 = sphi 0, %s236
      %s251 = sphi 0, %s237
      %s255 = sphi 0, %s255
      %s257 = sphi 0, %s255
      %s258 = sphi 0, %s257
      %s272 = sphi 0, %s258
      %s280 = sphi 0, %s282
      %s283 = sphi 0, %s280
      %s284 = sphi 0, %s283
      %s300 = sphi 0, %s284
    $region4: #{tpu_custom_call.1} parent=1 // loop_header_branch
      %23 = sbr.rel (%p21) target = $region8
    $region5: #{tpu_custom_call.1} parent=1 // loop_body
      %s25 = ssub.s32 %s20, 1
      %s26 = ssub.s32 %s20, 2
      %s33 = sadd.s32 1, %s28
      %p34 = scmp.ge.s32.totalorder %s33, 2
      %s35 = scalar_select %p34, 0, %s33
      %s36 = sadd.s32 1, %s27
      %s37 = scalar_select %p34, %s36, %s27
      %p38 = scmp.ge.s32.totalorder %s37, 2
      %s39 = scalar_select %p38, 0, %s37
      %s40 = ssub.s32 %s27, %s39
      %p41 = scmp.eq.s32.totalorder %s40, 0
      %s43 = sadd.s32 %s42, 1
      %s44 = scalar_select %p41, %s42, %s43
      %p47 = pneg %p41
      %p48 = scmp.eq.s32.totalorder %s20, 3
      %p49 = por %p47, %p48
      %p50 = scmp.ne.s32.totalorder %s42, %s45
      %p51 = scmp.eq.s32.totalorder %s20, 0
      %p52 = por %p50, %p51
      %p53 = scmp.ne.s32.totalorder %s42, %s45
      %p54 = scmp.eq.s32.totalorder %s25, 3
      %p55 = por %p53, %p54
      %p56 = scmp.ne.s32.totalorder %s45, %s46
      %p57 = scmp.eq.s32.totalorder %s25, 0
      %p58 = por %p56, %p57
      %p59 = scmp.ne.s32.totalorder %s45, %s46
      %p60 = scmp.eq.s32.totalorder %s26, 3
      %p61 = por %p59, %p60
      %p63 = scmp.ne.s32.totalorder %s46, %s62
      %p64 = scmp.eq.s32.totalorder %s26, 0
      %p65 = por %p63, %p64
      %s67 = sadd.s32 %s66, 1
      %p70 = scmp.eq.s32.totalorder %s20, 3
      %p71 = scmp.ne.s32.totalorder %s66, %s68
      %p72 = scmp.eq.s32.totalorder %s20, 0
      %p73 = por %p71, %p72
      %p74 = scmp.ne.s32.totalorder %s66, %s68
      %p75 = scmp.eq.s32.totalorder %s25, 3
      %p76 = por %p74, %p75
      %p77 = scmp.ne.s32.totalorder %s68, %s69
      %p78 = scmp.eq.s32.totalorder %s25, 0
      %p79 = por %p77, %p78
      %p80 = scmp.ne.s32.totalorder %s68, %s69
      %p81 = scmp.eq.s32.totalorder %s26, 3
      %p82 = por %p80, %p81
      %p84 = scmp.ne.s32.totalorder %s69, %s83
      %p85 = scmp.eq.s32.totalorder %s26, 0
      %p86 = por %p84, %p85
      %s88 = sadd.s32 %s87, 1
      %p91 = scmp.eq.s32.totalorder %s20, 3
      %p92 = scmp.ne.s32.totalorder %s87, %s89
      %p93 = scmp.eq.s32.totalorder %s20, 0
      %p94 = por %p92, %p93
      %p95 = scmp.ne.s32.totalorder %s87, %s89
      %p96 = scmp.eq.s32.totalorder %s25, 3
      %p97 = por %p95, %p96
      %p98 = scmp.ne.s32.totalorder %s89, %s90
      %p99 = scmp.eq.s32.totalorder %s25, 0
      %p100 = por %p98, %p99
      %p101 = scmp.ne.s32.totalorder %s89, %s90
      %p102 = scmp.eq.s32.totalorder %s26, 3
      %p103 = por %p101, %p102
      %p105 = scmp.ne.s32.totalorder %s90, %s104
      %p106 = scmp.eq.s32.totalorder %s26, 0
      %p107 = por %p105, %p106
      %s109 = sadd.s32 %s108, 1
      %p112 = scmp.eq.s32.totalorder %s20, 3
      %p113 = scmp.ne.s32.totalorder %s108, %s110
      %p114 = scmp.eq.s32.totalorder %s20, 0
      %p115 = por %p113, %p114
      %p116 = scmp.ne.s32.totalorder %s108, %s110
      %p117 = scmp.eq.s32.totalorder %s25, 3
      %p118 = por %p116, %p117
      %p119 = scmp.ne.s32.totalorder %s110, %s111
      %p120 = scmp.eq.s32.totalorder %s25, 0
      %p121 = por %p119, %p120
      %p122 = scmp.ne.s32.totalorder %s110, %s111
      %p123 = scmp.eq.s32.totalorder %s26, 3
      %p124 = por %p122, %p123
      %p126 = scmp.ne.s32.totalorder %s111, %s125
      %p127 = scmp.eq.s32.totalorder %s26, 0
      %p128 = por %p126, %p127
      %s130 = sadd.s32 %s129, 1
      %p133 = scmp.eq.s32.totalorder %s20, 3
      %p134 = scmp.ne.s32.totalorder %s129, %s131
      %p135 = scmp.eq.s32.totalorder %s20, 0
      %p136 = por %p134, %p135
      %p137 = scmp.ne.s32.totalorder %s129, %s131
      %p138 = scmp.eq.s32.totalorder %s25, 3
      %p139 = por %p137, %p138
      %p140 = scmp.ne.s32.totalorder %s131, %s132
      %p141 = scmp.eq.s32.totalorder %s25, 0
      %p142 = por %p140, %p141
      %p143 = scmp.ne.s32.totalorder %s131, %s132
      %p144 = scmp.eq.s32.totalorder %s26, 3
      %p145 = por %p143, %p144
      %p147 = scmp.ne.s32.totalorder %s132, %s146
      %p148 = scmp.eq.s32.totalorder %s26, 0
      %p149 = por %p147, %p148
      %s151 = sadd.s32 %s150, 1
      %p154 = scmp.eq.s32.totalorder %s20, 3
      %p155 = scmp.ne.s32.totalorder %s150, %s152
      %p156 = scmp.eq.s32.totalorder %s20, 0
      %p157 = por %p155, %p156
      %p158 = scmp.ne.s32.totalorder %s150, %s152
      %p159 = scmp.eq.s32.totalorder %s25, 3
      %p160 = por %p158, %p159
      %p161 = scmp.ne.s32.totalorder %s152, %s153
      %p162 = scmp.eq.s32.totalorder %s25, 0
      %p163 = por %p161, %p162
      %p164 = scmp.ne.s32.totalorder %s152, %s153
      %p165 = scmp.eq.s32.totalorder %s26, 3
      %p166 = por %p164, %p165
      %p168 = scmp.ne.s32.totalorder %s153, %s167
      %p169 = scmp.eq.s32.totalorder %s26, 0
      %p170 = por %p168, %p169
      %s172 = sadd.s32 %s171, 1
      %p175 = scmp.eq.s32.totalorder %s20, 3
      %p176 = scmp.ne.s32.totalorder %s171, %s173
      %p177 = scmp.eq.s32.totalorder %s20, 0
      %p178 = por %p176, %p177
      %p179 = scmp.ne.s32.totalorder %s171, %s173
      %p180 = scmp.eq.s32.totalorder %s25, 3
      %p181 = por %p179, %p180
      %p182 = scmp.ne.s32.totalorder %s173, %s174
      %p183 = scmp.eq.s32.totalorder %s25, 0
      %p184 = por %p182, %p183
      %p185 = scmp.ne.s32.totalorder %s173, %s174
      %p186 = scmp.eq.s32.totalorder %s26, 3
      %p187 = por %p185, %p186
      %p189 = scmp.ne.s32.totalorder %s174, %s188
      %p190 = scmp.eq.s32.totalorder %s26, 0
      %p191 = por %p189, %p190
      %s193 = sadd.s32 %s192, 1
      %p196 = scmp.eq.s32.totalorder %s20, 3
      %p197 = scmp.ne.s32.totalorder %s192, %s194
      %p198 = scmp.eq.s32.totalorder %s20, 0
      %p199 = por %p197, %p198
      %p200 = scmp.ne.s32.totalorder %s192, %s194
      %p201 = scmp.eq.s32.totalorder %s25, 3
      %p202 = por %p200, %p201
      %p203 = scmp.ne.s32.totalorder %s194, %s195
      %p204 = scmp.eq.s32.totalorder %s25, 0
      %p205 = por %p203, %p204
      %p206 = scmp.ne.s32.totalorder %s194, %s195
      %p207 = scmp.eq.s32.totalorder %s26, 3
      %p208 = por %p206, %p207
      %p210 = scmp.ne.s32.totalorder %s195, %s209
      %p211 = scmp.eq.s32.totalorder %s26, 0
      %p212 = por %p210, %p211
      %s214 = sadd.s32 %s213, 1
      %p217 = scmp.eq.s32.totalorder %s20, 3
      %p218 = scmp.ne.s32.totalorder %s213, %s215
      %p219 = scmp.eq.s32.totalorder %s20, 0
      %p220 = por %p218, %p219
      %p221 = scmp.ne.s32.totalorder %s213, %s215
      %p222 = scmp.eq.s32.totalorder %s25, 3
      %p223 = por %p221, %p222
      %p224 = scmp.ne.s32.totalorder %s215, %s216
      %p225 = scmp.eq.s32.totalorder %s25, 0
      %p226 = por %p224, %p225
      %p227 = scmp.ne.s32.totalorder %s215, %s216
      %p228 = scmp.eq.s32.totalorder %s26, 3
      %p229 = por %p227, %p228
      %p231 = scmp.ne.s32.totalorder %s216, %s230
      %p232 = scmp.eq.s32.totalorder %s26, 0
      %p233 = por %p231, %p232
      %s235 = sadd.s32 %s234, 1
      %p238 = scmp.eq.s32.totalorder %s20, 3
      %p239 = scmp.ne.s32.totalorder %s234, %s236
      %p240 = scmp.eq.s32.totalorder %s20, 0
      %p241 = por %p239, %p240
      %p242 = scmp.ne.s32.totalorder %s234, %s236
      %p243 = scmp.eq.s32.totalorder %s25, 3
      %p244 = por %p242, %p243
      %p245 = scmp.ne.s32.totalorder %s236, %s237
      %p246 = scmp.eq.s32.totalorder %s25, 0
      %p247 = por %p245, %p246
      %p248 = scmp.ne.s32.totalorder %s236, %s237
      %p249 = scmp.eq.s32.totalorder %s26, 3
      %p250 = por %p248, %p249
      %p252 = scmp.ne.s32.totalorder %s237, %s251
      %p253 = scmp.eq.s32.totalorder %s26, 0
      %p254 = por %p252, %p253
      %s256 = sadd.s32 %s255, 1
      %p259 = scmp.eq.s32.totalorder %s20, 3
      %p260 = scmp.ne.s32.totalorder %s255, %s257
      %p261 = scmp.eq.s32.totalorder %s20, 0
      %p262 = por %p260, %p261
      %p263 = scmp.ne.s32.totalorder %s255, %s257
      %p264 = scmp.eq.s32.totalorder %s25, 3
      %p265 = por %p263, %p264
      %p266 = scmp.ne.s32.totalorder %s257, %s258
      %p267 = scmp.eq.s32.totalorder %s25, 0
      %p268 = por %p266, %p267
      %p269 = scmp.ne.s32.totalorder %s257, %s258
      %p270 = scmp.eq.s32.totalorder %s26, 3
      %p271 = por %p269, %p270
      %p273 = scmp.ne.s32.totalorder %s258, %s272
      %p274 = scmp.eq.s32.totalorder %s26, 0
      %p275 = por %p273, %p274
      %s276 = ssub.s32 %s27, %s39
      %s277 = ssub.s32 %s28, %s35
      %s278 = sor.u32 %s276, %s277
      %p279 = scmp.eq.s32.totalorder %s278, 0
      %s281 = sadd.s32 %s280, 1
      %s282 = scalar_select %p279, %s280, %s281
      %p285 = pneg %p279
      %p286 = scmp.eq.s32.totalorder %s20, 3
      %p287 = por %p285, %p286
      %p288 = scmp.ne.s32.totalorder %s280, %s283
      %p289 = scmp.eq.s32.totalorder %s20, 0
      %p290 = por %p288, %p289
      %p291 = scmp.ne.s32.totalorder %s280, %s283
      %p292 = scmp.eq.s32.totalorder %s25, 3
      %p293 = por %p291, %p292
      %p294 = scmp.ne.s32.totalorder %s283, %s284
      %p295 = scmp.eq.s32.totalorder %s25, 0
      %p296 = por %p294, %p295
      %p297 = scmp.ne.s32.totalorder %s283, %s284
      %p298 = scmp.eq.s32.totalorder %s26, 3
      %p299 = por %p297, %p298
      %p301 = scmp.ne.s32.totalorder %s284, %s300
      %p302 = scmp.eq.s32.totalorder %s26, 0
      %p303 = por %p301, %p302
      %p304 = scmp.le.s32.totalorder 1, %s20
      %p305 = scmp.lt.s32.totalorder %s20, 5
      %p306 = pnand %p304, %p305
      %p307 = pneg %p306
      // Predicated region
      $region9: #{tpu_custom_call.1} parent=5 // pred_check
        _
      $region10: #{tpu_custom_call.1} parent=5 // pred_check_branch
        %309 = sbr.rel (%p306) target = $region12
      $region11: #{tpu_custom_call.1} parent=5 // pred_region
        %s310 = ssub.s32 %s20, 1
        // Predicated region
        $region13: #{tpu_custom_call.1} parent=11 // pred_check
          %p311 = pneg %p79
        $region14: #{tpu_custom_call.1} parent=11 // pred_check_branch
          %313 = sbr.rel (%p311) target = $region16
        $region15: #{tpu_custom_call.1} parent=11 // pred_region
          _
        $region16: #{tpu_custom_call.1} parent=11 // pred_fallthru
          _
        // Predicated region
        $region17: #{tpu_custom_call.1} parent=11 // pred_check
          %p314 = pneg %p100
        $region18: #{tpu_custom_call.1} parent=11 // pred_check_branch
          %316 = sbr.rel (%p314) target = $region20
        $region19: #{tpu_custom_call.1} parent=11 // pred_region
          _
        $region20: #{tpu_custom_call.1} parent=11 // pred_fallthru
          _
        // Predicated region
        $region21: #{tpu_custom_call.1} parent=11 // pred_check
          %p317 = pneg %p121
        $region22: #{tpu_custom_call.1} parent=11 // pred_check_branch
          %319 = sbr.rel (%p317) target = $region24
        $region23: #{tpu_custom_call.1} parent=11 // pred_region
          _
        $region24: #{tpu_custom_call.1} parent=11 // pred_fallthru
          _
        // Predicated region
        $region25: #{tpu_custom_call.1} parent=11 // pred_check
          %p320 = pneg %p142
        $region26: #{tpu_custom_call.1} parent=11 // pred_check_branch
          %322 = sbr.rel (%p320) target = $region28
        $region27: #{tpu_custom_call.1} parent=11 // pred_region
          _
        $region28: #{tpu_custom_call.1} parent=11 // pred_fallthru
          _
        // Predicated region
        $region29: #{tpu_custom_call.1} parent=11 // pred_check
          %p323 = pneg %p163
        $region30: #{tpu_custom_call.1} parent=11 // pred_check_branch
          %325 = sbr.rel (%p323) target = $region32
        $region31: #{tpu_custom_call.1} parent=11 // pred_region
          _
        $region32: #{tpu_custom_call.1} parent=11 // pred_fallthru
          _
        // Predicated region
        $region33: #{tpu_custom_call.1} parent=11 // pred_check
          %p326 = pneg %p184
        $region34: #{tpu_custom_call.1} parent=11 // pred_check_branch
          %328 = sbr.rel (%p326) target = $region36
        $region35: #{tpu_custom_call.1} parent=11 // pred_region
          _
        $region36: #{tpu_custom_call.1} parent=11 // pred_fallthru
          _
        // Predicated region
        $region37: #{tpu_custom_call.1} parent=11 // pred_check
          %p329 = pneg %p205
        $region38: #{tpu_custom_call.1} parent=11 // pred_check_branch
          %331 = sbr.rel (%p329) target = $region40
        $region39: #{tpu_custom_call.1} parent=11 // pred_region
          _
        $region40: #{tpu_custom_call.1} parent=11 // pred_fallthru
          _
        // Predicated region
        $region41: #{tpu_custom_call.1} parent=11 // pred_check
          %p332 = pneg %p226
        $region42: #{tpu_custom_call.1} parent=11 // pred_check_branch
          %334 = sbr.rel (%p332) target = $region44
        $region43: #{tpu_custom_call.1} parent=11 // pred_region
          _
        $region44: #{tpu_custom_call.1} parent=11 // pred_fallthru
          _
        // Predicated region
        $region45: #{tpu_custom_call.1} parent=11 // pred_check
          %p335 = pneg %p247
        $region46: #{tpu_custom_call.1} parent=11 // pred_check_branch
          %337 = sbr.rel (%p335) target = $region48
        $region47: #{tpu_custom_call.1} parent=11 // pred_region
          _
        $region48: #{tpu_custom_call.1} parent=11 // pred_fallthru
          _
        // Predicated region
        $region49: #{tpu_custom_call.1} parent=11 // pred_check
          %p338 = pneg %p268
        $region50: #{tpu_custom_call.1} parent=11 // pred_check_branch
          %340 = sbr.rel (%p338) target = $region52
        $region51: #{tpu_custom_call.1} parent=11 // pred_region
          _
        $region52: #{tpu_custom_call.1} parent=11 // pred_fallthru
          _
      $region12: #{tpu_custom_call.1} parent=5 // pred_fallthru
        _
      %p341 = scmp.lt.s32.totalorder %s20, 4
      // Predicated region
      $region53: #{tpu_custom_call.1} parent=5 // pred_check
        %p342 = pneg %p341
      $region54: #{tpu_custom_call.1} parent=5 // pred_check_branch
        %344 = sbr.rel (%p342) target = $region56
      $region55: #{tpu_custom_call.1} parent=5 // pred_region
        // Predicated region
        $region57: #{tpu_custom_call.1} parent=55 // pred_check
          %p345 = pneg %p52
        $region58: #{tpu_custom_call.1} parent=55 // pred_check_branch
          %347 = sbr.rel (%p345) target = $region60
        $region59: #{tpu_custom_call.1} parent=55 // pred_region
          %p348 = scmp.lt.s32.totalorder %s27, 1
          %s349 = scalar_select %p348, %s27, 1
          %s350 = smul.addr %s349, 32
          %s351 = smul.addr %s350, 8
          %s352 = scalar_lea.vmem %s0, %s351
        $region60: #{tpu_custom_call.1} parent=55 // pred_fallthru
          _
      $region56: #{tpu_custom_call.1} parent=5 // pred_fallthru
        _
      %p353 = scmp.le.s32.totalorder 1, %s20
      %p354 = scmp.lt.s32.totalorder %s20, 5
      %p355 = pnand %p353, %p354
      %p356 = pneg %p355
      // Predicated region
      $region61: #{tpu_custom_call.1} parent=5 // pred_check
        _
      $region62: #{tpu_custom_call.1} parent=5 // pred_check_branch
        %358 = sbr.rel (%p355) target = $region64
      $region63: #{tpu_custom_call.1} parent=5 // pred_region
        %s359 = ssub.s32 %s20, 1
        %p360 = scmp.lt.s32.totalorder %s29, 1
        %s361 = scalar_select %p360, %s29, 1
        %s362 = smul.addr %s361, 32
        %s363 = smul.addr %s362, 8
        %s364 = scalar_lea.vmem %s0, %s363
        %p365 = pneg %p58
        %p366 = pneg %p55
        %p367 = pneg %p79
        %p368 = pneg %p76
        %p369 = pneg %p100
        %p370 = pneg %p97
        %p371 = pneg %p121
        %p372 = pneg %p118
        %p373 = pneg %p142
        %p374 = pneg %p139
        %p375 = pneg %p163
        %p376 = pneg %p160
        %p377 = pneg %p184
        %p378 = pneg %p181
        %p379 = pneg %p205
        %p380 = pneg %p202
        %p381 = pneg %p226
        %p382 = pneg %p223
        %p383 = pneg %p247
        %p384 = pneg %p244
        %p385 = pneg %p268
        %p386 = pneg %p265
        %p387 = pneg %p296
        %p388 = pneg %p293
        %s389 = sand.u32 %s283, 1
        %s390 = scalar_lea.sflag [#allocation5], %s389
        %s391 = sand.u32 %s283, 1
        %s392 = smul.addr %s391, 32
        %s393 = scalar_lea.vmem [#allocation4], %s392
        %p394 = scmp.lt.s32.totalorder %s29, 1
        %s395 = scalar_select %p394, %s29, 1
        %s396 = smul.addr %s395, 32
        %s397 = smul.addr %s396, 8
        %s398 = scalar_lea.vmem %s0, %s397
        %s399 = smul.u32 4, %s30
        %s401 = smul.u32 %s30, 8
        %v402 = vld [vmem:[%s1] sm:$0x1]
        %v403 = vld [vmem:[%s2] sm:$0x1]
        %vm404 = vcmask 24576
        %vm405 = vsmask.f32 256
        %vm406 = vmand %vm404, %vm405
        %v407 = vld [vmem:[#allocation2] sm:$0x1]
        %v408 = vsel %vm406, 0, %v407
        %409 = vst [vmem:[#allocation2] sm:$0x1] %v408
        %v410 = vld [vmem:[#allocation2 + $0xc] sm:$0x1]
        %v411 = vsel %vm406, 0, %v410
        %412 = vst [vmem:[#allocation2 + $0xc] sm:$0x1] %v411
        %v413 = vld [vmem:[#allocation2 + $0x18] sm:$0x1]
        %v414 = vsel %vm406, 0, %v413
        %415 = vst [vmem:[#allocation2 + $0x18] sm:$0x1] %v414
        %v416 = vld [vmem:[#allocation2 + $0x24] sm:$0x1]
        %v417 = vsel %vm406, 0, %v416
        %418 = vst [vmem:[#allocation2 + $0x24] sm:$0x1] %v417
        %v419 = vld [vmem:[#allocation2 + $0x30] sm:$0x1]
        %v420 = vsel %vm406, 0, %v419
        %421 = vst [vmem:[#allocation2 + $0x30] sm:$0x1] %v420
        %v422 = vld [vmem:[#allocation2 + $0x3c] sm:$0x1]
        %v423 = vsel %vm406, 0, %v422
        %424 = vst [vmem:[#allocation2 + $0x3c] sm:$0x1] %v423
        %v425 = vld [vmem:[#allocation2 + $0x48] sm:$0x1]
        %v426 = vsel %vm406, 0, %v425
        %427 = vst [vmem:[#allocation2 + $0x48] sm:$0x1] %v426
        %v428 = vld [vmem:[#allocation2 + $0x54] sm:$0x1]
        %v429 = vsel %vm406, 0, %v428
        %430 = vst [vmem:[#allocation2 + $0x54] sm:$0x1] %v429
        %v431 = vld [vmem:[#allocation2 + $0x60] sm:$0x1]
        %v432 = vsel %vm406, 0, %v431
        %433 = vst [vmem:[#allocation2 + $0x60] sm:$0x1] %v432
        %v434 = vld [vmem:[#allocation2 + $0x6c] sm:$0x1]
        %v435 = vsel %vm406, 0, %v434
        %436 = vst [vmem:[#allocation2 + $0x6c] sm:$0x1] %v435
        %v437 = vld [vmem:[#allocation2 + $0x78] sm:$0x1]
        %v438 = vsel %vm406, 0, %v437
        %439 = vst [vmem:[#allocation2 + $0x78] sm:$0x1] %v438
        %v440 = vld [vmem:[#allocation2 + $0x84] sm:$0x1]
        %v441 = vsel %vm406, 0, %v440
        %442 = vst [vmem:[#allocation2 + $0x84] sm:$0x1] %v441
        %vm443 = vsmask.f32 7938
        %vm444 = vmand %vm404, %vm443
        %v445 = vld [vmem:[#allocation2 + $0x8] sm:$0x1]
        %v446 = vsel %vm444, 0, %v445
        %447 = vst [vmem:[#allocation2 + $0x8] sm:$0x1] %v446
        %v448 = vld [vmem:[#allocation2 + $0x14] sm:$0x1]
        %v449 = vsel %vm444, 0, %v448
        %450 = vst [vmem:[#allocation2 + $0x14] sm:$0x1] %v449
        %v451 = vld [vmem:[#allocation2 + $0x20] sm:$0x1]
        %v452 = vsel %vm444, 0, %v451
        %453 = vst [vmem:[#allocation2 + $0x20] sm:$0x1] %v452
        %v454 = vld [vmem:[#allocation2 + $0x2c] sm:$0x1]
        %v455 = vsel %vm444, 0, %v454
        %456 = vst [vmem:[#allocation2 + $0x2c] sm:$0x1] %v455
        %v457 = vld [vmem:[#allocation2 + $0x38] sm:$0x1]
        %v458 = vsel %vm444, 0, %v457
        %459 = vst [vmem:[#allocation2 + $0x38] sm:$0x1] %v458
        %v460 = vld [vmem:[#allocation2 + $0x44] sm:$0x1]
        %v461 = vsel %vm444, 0, %v460
        %462 = vst [vmem:[#allocation2 + $0x44] sm:$0x1] %v461
        %v463 = vld [vmem:[#allocation2 + $0x50] sm:$0x1]
        %v464 = vsel %vm444, 0, %v463
        %465 = vst [vmem:[#allocation2 + $0x50] sm:$0x1] %v464
        %v466 = vld [vmem:[#allocation2 + $0x5c] sm:$0x1]
        %v467 = vsel %vm444, 0, %v466
        %468 = vst [vmem:[#allocation2 + $0x5c] sm:$0x1] %v467
        %v469 = vld [vmem:[#allocation2 + $0x68] sm:$0x1]
        %v470 = vsel %vm444, 0, %v469
        %471 = vst [vmem:[#allocation2 + $0x68] sm:$0x1] %v470
        %v472 = vld [vmem:[#allocation2 + $0x74] sm:$0x1]
        %v473 = vsel %vm444, 0, %v472
        %474 = vst [vmem:[#allocation2 + $0x74] sm:$0x1] %v473
        %v475 = vld [vmem:[#allocation2 + $0x80] sm:$0x1]
        %v476 = vsel %vm444, 0, %v475
        %477 = vst [vmem:[#allocation2 + $0x80] sm:$0x1] %v476
        %v478 = vld [vmem:[#allocation2 + $0x8c] sm:$0x1]
        %v479 = vsel %vm444, 0, %v478
        %480 = vst [vmem:[#allocation2 + $0x8c] sm:$0x1] %v479
        %s481 = smul.u32 %s401, 16
        %s482 = scalar_lea.vmem %s398, %s481
        %v483 = vld [vmem:[%s482] sm:$0xff]
        %v484 = vld [vmem:[%s482 + $0x8] sm:$0xff]
        %v485 = vld [vmem:[%s482 + $0x10] sm:$0xff]
        %v486 = vld [vmem:[%s482 + $0x18] sm:$0xff]
        %v487 = vld [vmem:[%s482 + $0x20] sm:$0xff]
        %v488 = vld [vmem:[%s482 + $0x28] sm:$0xff]
        %v489 = vld [vmem:[%s482 + $0x30] sm:$0xff]
        %v490 = vld [vmem:[%s482 + $0x38] sm:$0xff]
        %v491 = vld [vmem:[%s482 + $0x40] sm:$0xff]
        %v492 = vld [vmem:[%s482 + $0x48] sm:$0xff]
        %v493 = vld [vmem:[%s482 + $0x50] sm:$0xff]
        %v494 = vld [vmem:[%s482 + $0x58] sm:$0xff]
        %v495 = vld [vmem:[%s482 + $0x60] sm:$0xff]
        %v496 = vld [vmem:[%s482 + $0x68] sm:$0xff]
        %v497 = vld [vmem:[%s482 + $0x70] sm:$0xff]
        %v498 = vld [vmem:[%s482 + $0x78] sm:$0xff]
        %v500 = vlaneseq
        %v501 = vshrl.u32 %v500, 7
        %v502 = vsub.s32 0, %v501
        %v503 = vrot.slane %v402, %v502
        %v505 = vmul.f32 %v483, %v503
        %v506 = vmul.f32 %v484, %v503
        %v507 = vmul.f32 %v485, %v503
        %v508 = vmul.f32 %v486, %v503
        %v509 = vmul.f32 %v487, %v503
        %v510 = vmul.f32 %v488, %v503
        %v511 = vmul.f32 %v489, %v503
        %v512 = vmul.f32 %v490, %v503
        %v513 = vmul.f32 %v491, %v503
        %v514 = vmul.f32 %v492, %v503
        %v515 = vmul.f32 %v493, %v503
        %v516 = vmul.f32 %v494, %v503
        %v517 = vmul.f32 %v495, %v503
        %v518 = vmul.f32 %v496, %v503
        %v519 = vmul.f32 %v497, %v503
        %v520 = vmul.f32 %v498, %v503
        %v522 = vlaneseq
        %v523 = vshrl.u32 %v522, 7
        %v524 = vsub.s32 0, %v523
        %v525 = vrot.slane %v403, %v524
        %v527 = vadd.f32 %v505, %v525
        %v528 = vadd.f32 %v506, %v525
        %v529 = vadd.f32 %v507, %v525
        %v530 = vadd.f32 %v508, %v525
        %v531 = vadd.f32 %v509, %v525
        %v532 = vadd.f32 %v510, %v525
        %v533 = vadd.f32 %v511, %v525
        %v534 = vadd.f32 %v512, %v525
        %v535 = vadd.f32 %v513, %v525
        %v536 = vadd.f32 %v514, %v525
        %v537 = vadd.f32 %v515, %v525
        %v538 = vadd.f32 %v516, %v525
        %v539 = vadd.f32 %v517, %v525
        %v540 = vadd.f32 %v518, %v525
        %v541 = vadd.f32 %v519, %v525
        %v542 = vadd.f32 %v520, %v525
        %v543 = vpack.c.bf16 %v528, %v527
        %v544 = vpack.c.bf16 %v530, %v529
        %v545 = vpack.c.bf16 %v532, %v531
        %v546 = vpack.c.bf16 %v534, %v533
        %v547 = vpack.c.bf16 %v536, %v535
        %v548 = vpack.c.bf16 %v538, %v537
        %v549 = vpack.c.bf16 %v540, %v539
        %v550 = vpack.c.bf16 %v542, %v541
        %v559 = vunpack.c.l.b16 %v543
        %v560 = vunpack.c.h.b16 %v543
        %v561 = vunpack.c.l.b16 %v544
        %v562 = vunpack.c.h.b16 %v544
        %v563 = vunpack.c.l.b16 %v545
        %v564 = vunpack.c.h.b16 %v545
        %v565 = vunpack.c.l.b16 %v546
        %v566 = vunpack.c.h.b16 %v546
        %v567 = vunpack.c.l.b16 %v547
        %v568 = vunpack.c.h.b16 %v547
        %v569 = vunpack.c.l.b16 %v548
        %v570 = vunpack.c.h.b16 %v548
        %v571 = vunpack.c.l.b16 %v549
        %v572 = vunpack.c.h.b16 %v549
        %v573 = vunpack.c.l.b16 %v550
        %v574 = vunpack.c.h.b16 %v550
        %v575 = vpack.c.b16 %v559, %v559
        %v576 = vpack.c.b16 %v560, %v560
        %v577 = vpack.c.b16 %v561, %v561
        %v578 = vpack.c.b16 %v562, %v562
        %v579 = vpack.c.b16 %v563, %v563
        %v580 = vpack.c.b16 %v564, %v564
        %v581 = vpack.c.b16 %v565, %v565
        %v582 = vpack.c.b16 %v566, %v566
        %v583 = vpack.c.b16 %v567, %v567
        %v584 = vpack.c.b16 %v568, %v568
        %v585 = vpack.c.b16 %v569, %v569
        %v586 = vpack.c.b16 %v570, %v570
        %v587 = vpack.c.b16 %v571, %v571
        %v588 = vpack.c.b16 %v572, %v572
        %v589 = vpack.c.b16 %v573, %v573
        %v590 = vpack.c.b16 %v574, %v574
        %vm591 = vsmask.f32 4368
        %vm592 = vmor %vm405, %vm591
        %v594 = vshrl.u32 %v575, 16
        %v596 = vrot.slane %v594, 7
        %v597 = vshll.u32 %v575, 16
        %v599 = vor.u32 %v596, %v597
        %v600 = vrot.slane %v596, 4
        %v602 = vshrl.u32 %v576, 16
        %v604 = vrot.slane %v602, 7
        %v605 = vshll.u32 %v576, 16
        %v607 = vor.u32 %v604, %v605
        %v608 = vsel %vm592, %v600, %v607
        %v609 = vrot.slane %v604, 4
        %v611 = vshrl.u32 %v577, 16
        %v613 = vrot.slane %v611, 7
        %v614 = vshll.u32 %v577, 16
        %v616 = vor.u32 %v613, %v614
        %v617 = vrot.slane %v613, 4
        %v619 = vshrl.u32 %v578, 16
        %v621 = vrot.slane %v619, 7
        %v622 = vshll.u32 %v578, 16
        %v624 = vor.u32 %v621, %v622
        %v625 = vsel %vm592, %v617, %v624
        %v626 = vrot.slane %v621, 4
        %v628 = vshrl.u32 %v579, 16
        %v630 = vrot.slane %v628, 7
        %v631 = vshll.u32 %v579, 16
        %v633 = vor.u32 %v630, %v631
        %v634 = vrot.slane %v630, 4
        %v636 = vshrl.u32 %v580, 16
        %v638 = vrot.slane %v636, 7
        %v639 = vshll.u32 %v580, 16
        %v641 = vor.u32 %v638, %v639
        %v642 = vsel %vm592, %v634, %v641
        %v643 = vrot.slane %v638, 4
        %v645 = vshrl.u32 %v581, 16
        %v647 = vrot.slane %v645, 7
        %v648 = vshll.u32 %v581, 16
        %v650 = vor.u32 %v647, %v648
        %v651 = vrot.slane %v647, 4
        %v653 = vshrl.u32 %v582, 16
        %v655 = vrot.slane %v653, 7
        %v656 = vshll.u32 %v582, 16
        %v658 = vor.u32 %v655, %v656
        %v659 = vsel %vm592, %v651, %v658
        %v660 = vrot.slane %v655, 4
        %v662 = vshrl.u32 %v583, 16
        %v664 = vrot.slane %v662, 7
        %v665 = vshll.u32 %v583, 16
        %v667 = vor.u32 %v664, %v665
        %v668 = vrot.slane %v664, 4
        %v670 = vshrl.u32 %v584, 16
        %v672 = vrot.slane %v670, 7
        %v673 = vshll.u32 %v584, 16
        %v675 = vor.u32 %v672, %v673
        %v676 = vsel %vm592, %v668, %v675
        %v677 = vrot.slane %v672, 4
        %v679 = vshrl.u32 %v585, 16
        %v681 = vrot.slane %v679, 7
        %v682 = vshll.u32 %v585, 16
        %v684 = vor.u32 %v681, %v682
        %v685 = vrot.slane %v681, 4
        %v687 = vshrl.u32 %v586, 16
        %v689 = vrot.slane %v687, 7
        %v690 = vshll.u32 %v586, 16
        %v692 = vor.u32 %v689, %v690
        %v693 = vsel %vm592, %v685, %v692
        %v694 = vrot.slane %v689, 4
        %v696 = vshrl.u32 %v587, 16
        %v698 = vrot.slane %v696, 7
        %v699 = vshll.u32 %v587, 16
        %v701 = vor.u32 %v698, %v699
        %v702 = vrot.slane %v698, 4
        %v704 = vshrl.u32 %v588, 16
        %v706 = vrot.slane %v704, 7
        %v707 = vshll.u32 %v588, 16
        %v709 = vor.u32 %v706, %v707
        %v710 = vsel %vm592, %v702, %v709
        %v711 = vrot.slane %v706, 4
        %v713 = vshrl.u32 %v589, 16
        %v715 = vrot.slane %v713, 7
        %v716 = vshll.u32 %v589, 16
        %v718 = vor.u32 %v715, %v716
        %v719 = vrot.slane %v715, 4
        %v721 = vshrl.u32 %v590, 16
        %v723 = vrot.slane %v721, 7
        %v724 = vshll.u32 %v590, 16
        %v726 = vor.u32 %v723, %v724
        %v727 = vsel %vm592, %v719, %v726
        %v728 = vrot.slane %v723, 4
        %s753 = scalar_lea.vmem [#allocation2], 24
        %vm754 = vcmask 27648
        %vm755 = vmand %vm754, %vm443
        %v756 = vld [vmem:[%s753] sm:$0xf]
        %v757 = vsel %vm755, %v599, %v756
        %758 = vst [vmem:[%s753] sm:$0xf] %v757
        %vm759 = vcmask 27648
        %760 = vst.msk [vmem:[%s753 + $0x4] sm:$0xf] %vm759, %v608
        %v761 = vld [vmem:[%s753 + $0x8] sm:$0x1]
        %v762 = vsel %vm406, %v609, %v761
        %763 = vst [vmem:[%s753 + $0x8] sm:$0x1] %v762
        %v764 = vld [vmem:[%s753 + $0xc] sm:$0xf]
        %v765 = vsel %vm755, %v616, %v764
        %766 = vst [vmem:[%s753 + $0xc] sm:$0xf] %v765
        %767 = vst.msk [vmem:[%s753 + $0x10] sm:$0xf] %vm759, %v625
        %v768 = vld [vmem:[%s753 + $0x14] sm:$0x1]
        %v769 = vsel %vm406, %v626, %v768
        %770 = vst [vmem:[%s753 + $0x14] sm:$0x1] %v769
        %v771 = vld [vmem:[%s753 + $0x18] sm:$0xf]
        %v772 = vsel %vm755, %v633, %v771
        %773 = vst [vmem:[%s753 + $0x18] sm:$0xf] %v772
        %774 = vst.msk [vmem:[%s753 + $0x1c] sm:$0xf] %vm759, %v642
        %v775 = vld [vmem:[%s753 + $0x20] sm:$0x1]
        %v776 = vsel %vm406, %v643, %v775
        %777 = vst [vmem:[%s753 + $0x20] sm:$0x1] %v776
        %v778 = vld [vmem:[%s753 + $0x24] sm:$0xf]
        %v779 = vsel %vm755, %v650, %v778
        %780 = vst [vmem:[%s753 + $0x24] sm:$0xf] %v779
        %781 = vst.msk [vmem:[%s753 + $0x28] sm:$0xf] %vm759, %v659
        %v782 = vld [vmem:[%s753 + $0x2c] sm:$0x1]
        %v783 = vsel %vm406, %v660, %v782
        %784 = vst [vmem:[%s753 + $0x2c] sm:$0x1] %v783
        %v785 = vld [vmem:[%s753 + $0x30] sm:$0xf]
        %v786 = vsel %vm755, %v667, %v785
        %787 = vst [vmem:[%s753 + $0x30] sm:$0xf] %v786
        %788 = vst.msk [vmem:[%s753 + $0x34] sm:$0xf] %vm759, %v676
        %v789 = vld [vmem:[%s753 + $0x38] sm:$0x1]
        %v790 = vsel %vm406, %v677, %v789
        %791 = vst [vmem:[%s753 + $0x38] sm:$0x1] %v790
        %v792 = vld [vmem:[%s753 + $0x3c] sm:$0xf]
        %v793 = vsel %vm755, %v684, %v792
        %794 = vst [vmem:[%s753 + $0x3c] sm:$0xf] %v793
        %795 = vst.msk [vmem:[%s753 + $0x40] sm:$0xf] %vm759, %v693
        %v796 = vld [vmem:[%s753 + $0x44] sm:$0x1]
        %v797 = vsel %vm406, %v694, %v796
        %798 = vst [vmem:[%s753 + $0x44] sm:$0x1] %v797
        %v799 = vld [vmem:[%s753 + $0x48] sm:$0xf]
        %v800 = vsel %vm755, %v701, %v799
        %801 = vst [vmem:[%s753 + $0x48] sm:$0xf] %v800
        %802 = vst.msk [vmem:[%s753 + $0x4c] sm:$0xf] %vm759, %v710
        %v803 = vld [vmem:[%s753 + $0x50] sm:$0x1]
        %v804 = vsel %vm406, %v711, %v803
        %805 = vst [vmem:[%s753 + $0x50] sm:$0x1] %v804
        %v806 = vld [vmem:[%s753 + $0x54] sm:$0xf]
        %v807 = vsel %vm755, %v718, %v806
        %808 = vst [vmem:[%s753 + $0x54] sm:$0xf] %v807
        %809 = vst.msk [vmem:[%s753 + $0x58] sm:$0xf] %vm759, %v727
        %v810 = vld [vmem:[%s753 + $0x5c] sm:$0x1]
        %v811 = vsel %vm406, %v728, %v810
        %812 = vst [vmem:[%s753 + $0x5c] sm:$0x1] %v811
        %p813 = scmp.eq.s32.totalorder %s30, 0
        // Predicated region
        $region65: #{tpu_custom_call.1} parent=63 // pred_check
          %p814 = pneg %p813
        $region66: #{tpu_custom_call.1} parent=63 // pred_check_branch
          %816 = sbr.rel (%p814) target = $region68
        $region67: #{tpu_custom_call.1} parent=63 // pred_region
          %817 = vst.msk [vmem:[#allocation2] sm:$0xf] %vm759, 0
          %818 = vst.msk [vmem:[#allocation2 + $0x4] sm:$0xf] %vm759, 0
          %vm819 = vcmask 24576
          %820 = vst.msk [vmem:[#allocation2 + $0x8] sm:$0x1] %vm819, 0
          %821 = vst.msk [vmem:[#allocation2 + $0xc] sm:$0xf] %vm759, 0
          %822 = vst.msk [vmem:[#allocation2 + $0x10] sm:$0xf] %vm759, 0
          %823 = vst.msk [vmem:[#allocation2 + $0x14] sm:$0x1] %vm819, 0
        $region68: #{tpu_custom_call.1} parent=63 // pred_fallthru
          _
        %p824 = scmp.gt.s32.totalorder %s30, 0
        // Predicated region
        $region69: #{tpu_custom_call.1} parent=63 // pred_check
          %p825 = pneg %p824
        $region70: #{tpu_custom_call.1} parent=63 // pred_check_branch
          %827 = sbr.rel (%p825) target = $region72
        $region71: #{tpu_custom_call.1} parent=63 // pred_region
          %s828 = ssub.s32 %s401, 2
          %s829 = smul.u32 %s828, 16
          %s830 = scalar_lea.vmem %s398, %s829
          %v831 = vld [vmem:[%s830] sm:$0xff]
          %v832 = vld [vmem:[%s830 + $0x8] sm:$0xff]
          %v833 = vld [vmem:[%s830 + $0x10] sm:$0xff]
          %v834 = vld [vmem:[%s830 + $0x18] sm:$0xff]
          %v835 = vmul.f32 %v831, %v503
          %v836 = vmul.f32 %v832, %v503
          %v837 = vmul.f32 %v833, %v503
          %v838 = vmul.f32 %v834, %v503
          %v839 = vadd.f32 %v835, %v525
          %v840 = vadd.f32 %v836, %v525
          %v841 = vadd.f32 %v837, %v525
          %v842 = vadd.f32 %v838, %v525
          %v843 = vpack.c.bf16 %v840, %v839
          %v844 = vpack.c.bf16 %v842, %v841
          %v847 = vunpack.c.l.b16 %v843
          %v848 = vunpack.c.h.b16 %v843
          %v849 = vunpack.c.l.b16 %v844
          %v850 = vunpack.c.h.b16 %v844
          %v851 = vpack.c.b16 %v847, %v847
          %v852 = vpack.c.b16 %v848, %v848
          %v853 = vpack.c.b16 %v849, %v849
          %v854 = vpack.c.b16 %v850, %v850
          %v856 = vshrl.u32 %v851, 16
          %v858 = vrot.slane %v856, 7
          %v859 = vshll.u32 %v851, 16
          %v861 = vor.u32 %v858, %v859
          %v862 = vrot.slane %v858, 4
          %v864 = vshrl.u32 %v852, 16
          %v866 = vrot.slane %v864, 7
          %v867 = vshll.u32 %v852, 16
          %v869 = vor.u32 %v866, %v867
          %v870 = vsel %vm592, %v862, %v869
          %v871 = vrot.slane %v866, 4
          %v873 = vshrl.u32 %v853, 16
          %v875 = vrot.slane %v873, 7
          %v876 = vshll.u32 %v853, 16
          %v878 = vor.u32 %v875, %v876
          %v879 = vrot.slane %v875, 4
          %v881 = vshrl.u32 %v854, 16
          %v883 = vrot.slane %v881, 7
          %v884 = vshll.u32 %v854, 16
          %v886 = vor.u32 %v883, %v884
          %v887 = vsel %vm592, %v879, %v886
          %v888 = vrot.slane %v883, 4
          %v895 = vld [vmem:[#allocation2] sm:$0xf]
          %v896 = vsel %vm755, %v861, %v895
          %897 = vst [vmem:[#allocation2] sm:$0xf] %v896
          %898 = vst.msk [vmem:[#allocation2 + $0x4] sm:$0xf] %vm759, %v870
          %v899 = vld [vmem:[#allocation2 + $0x8] sm:$0x1]
          %v900 = vsel %vm406, %v871, %v899
          %901 = vst [vmem:[#allocation2 + $0x8] sm:$0x1] %v900
          %v902 = vld [vmem:[#allocation2 + $0xc] sm:$0xf]
          %v903 = vsel %vm755, %v878, %v902
          %904 = vst [vmem:[#allocation2 + $0xc] sm:$0xf] %v903
          %905 = vst.msk [vmem:[#allocation2 + $0x10] sm:$0xf] %vm759, %v887
          %v906 = vld [vmem:[#allocation2 + $0x14] sm:$0x1]
          %v907 = vsel %vm406, %v888, %v906
          %908 = vst [vmem:[#allocation2 + $0x14] sm:$0x1] %v907
        $region72: #{tpu_custom_call.1} parent=63 // pred_fallthru
          _
        %p909 = scmp.eq.s32.totalorder %s30, 1
        // Predicated region
        $region73: #{tpu_custom_call.1} parent=63 // pred_check
          %p910 = pneg %p909
        $region74: #{tpu_custom_call.1} parent=63 // pred_check_branch
          %912 = sbr.rel (%p910) target = $region76
        $region75: #{tpu_custom_call.1} parent=63 // pred_region
          %s913 = scalar_lea.vmem [#allocation2], 120
          %914 = vst.msk [vmem:[%s913] sm:$0xf] %vm759, 0
          %915 = vst.msk [vmem:[%s913 + $0x4] sm:$0xf] %vm759, 0
          %vm916 = vcmask 24576
          %917 = vst.msk [vmem:[%s913 + $0x8] sm:$0x1] %vm916, 0
          %918 = vst.msk [vmem:[%s913 + $0xc] sm:$0xf] %vm759, 0
          %919 = vst.msk [vmem:[%s913 + $0x10] sm:$0xf] %vm759, 0
          %920 = vst.msk [vmem:[%s913 + $0x14] sm:$0x1] %vm916, 0
        $region76: #{tpu_custom_call.1} parent=63 // pred_fallthru
          _
        %p921 = scmp.lt.s32.totalorder %s30, 1
        // Predicated region
        $region77: #{tpu_custom_call.1} parent=63 // pred_check
          %p922 = pneg %p921
        $region78: #{tpu_custom_call.1} parent=63 // pred_check_branch
          %924 = sbr.rel (%p922) target = $region80
        $region79: #{tpu_custom_call.1} parent=63 // pred_region
          %s925 = sadd.s32 %s401, 8
          %s926 = smul.u32 %s925, 16
          %s927 = scalar_lea.vmem %s398, %s926
          %v928 = vld [vmem:[%s927] sm:$0xff]
          %v929 = vld [vmem:[%s927 + $0x8] sm:$0xff]
          %v930 = vld [vmem:[%s927 + $0x10] sm:$0xff]
          %v931 = vld [vmem:[%s927 + $0x18] sm:$0xff]
          %v932 = vmul.f32 %v928, %v503
          %v933 = vmul.f32 %v929, %v503
          %v934 = vmul.f32 %v930, %v503
          %v935 = vmul.f32 %v931, %v503
          %v936 = vadd.f32 %v932, %v525
          %v937 = vadd.f32 %v933, %v525
          %v938 = vadd.f32 %v934, %v525
          %v939 = vadd.f32 %v935, %v525
          %v940 = vpack.c.bf16 %v937, %v936
          %v941 = vpack.c.bf16 %v939, %v938
          %v944 = vunpack.c.l.b16 %v940
          %v945 = vunpack.c.h.b16 %v940
          %v946 = vunpack.c.l.b16 %v941
          %v947 = vunpack.c.h.b16 %v941
          %v948 = vpack.c.b16 %v944, %v944
          %v949 = vpack.c.b16 %v945, %v945
          %v950 = vpack.c.b16 %v946, %v946
          %v951 = vpack.c.b16 %v947, %v947
          %v953 = vshrl.u32 %v948, 16
          %v955 = vrot.slane %v953, 7
          %v956 = vshll.u32 %v948, 16
          %v958 = vor.u32 %v955, %v956
          %v959 = vrot.slane %v955, 4
          %v961 = vshrl.u32 %v949, 16
          %v963 = vrot.slane %v961, 7
          %v964 = vshll.u32 %v949, 16
          %v966 = vor.u32 %v963, %v964
          %v967 = vsel %vm592, %v959, %v966
          %v968 = vrot.slane %v963, 4
          %v970 = vshrl.u32 %v950, 16
          %v972 = vrot.slane %v970, 7
          %v973 = vshll.u32 %v950, 16
          %v975 = vor.u32 %v972, %v973
          %v976 = vrot.slane %v972, 4
          %v978 = vshrl.u32 %v951, 16
          %v980 = vrot.slane %v978, 7
          %v981 = vshll.u32 %v951, 16
          %v983 = vor.u32 %v980, %v981
          %v984 = vsel %vm592, %v976, %v983
          %v985 = vrot.slane %v980, 4
          %s992 = scalar_lea.vmem [#allocation2], 120
          %v993 = vld [vmem:[%s992] sm:$0xf]
          %v994 = vsel %vm755, %v958, %v993
          %995 = vst [vmem:[%s992] sm:$0xf] %v994
          %996 = vst.msk [vmem:[%s992 + $0x4] sm:$0xf] %vm759, %v967
          %v997 = vld [vmem:[%s992 + $0x8] sm:$0x1]
          %v998 = vsel %vm406, %v968, %v997
          %999 = vst [vmem:[%s992 + $0x8] sm:$0x1] %v998
          %v1000 = vld [vmem:[%s992 + $0xc] sm:$0xf]
          %v1001 = vsel %vm755, %v975, %v1000
          %1002 = vst [vmem:[%s992 + $0xc] sm:$0xf] %v1001
          %1003 = vst.msk [vmem:[%s992 + $0x10] sm:$0xf] %vm759, %v984
          %v1004 = vld [vmem:[%s992 + $0x14] sm:$0x1]
          %v1005 = vsel %vm406, %v985, %v1004
          %1006 = vst [vmem:[%s992 + $0x14] sm:$0x1] %v1005
        $region80: #{tpu_custom_call.1} parent=63 // pred_fallthru
          _
        %v1007 = vld [vmem:[#allocation2] sm:$0xf]
        %v1008 = vld [vmem:[#allocation2 + $0x4] sm:$0xf]
        %v1009 = vld [vmem:[#allocation2 + $0xc] sm:$0xf]
        %v1010 = vld [vmem:[#allocation2 + $0x10] sm:$0xf]
        %v1011 = vld [vmem:[#allocation2 + $0x18] sm:$0xf]
        %v1012 = vld [vmem:[#allocation2 + $0x1c] sm:$0xf]
        %v1013 = vld [vmem:[#allocation2 + $0x24] sm:$0xf]
        %v1014 = vld [vmem:[#allocation2 + $0x28] sm:$0xf]
        %v1015 = vld [vmem:[#allocation2 + $0x30] sm:$0xf]
        %v1016 = vld [vmem:[#allocation2 + $0x34] sm:$0xf]
        %v1017 = vld [vmem:[#allocation2 + $0x3c] sm:$0xf]
        %v1018 = vld [vmem:[#allocation2 + $0x40] sm:$0xf]
        %v1019 = vld [vmem:[#allocation2 + $0x48] sm:$0xf]
        %v1020 = vld [vmem:[#allocation2 + $0x4c] sm:$0xf]
        %v1021 = vld [vmem:[#allocation2 + $0x54] sm:$0xf]
        %v1022 = vld [vmem:[#allocation2 + $0x58] sm:$0xf]
        %v1023 = vld [vmem:[#allocation2 + $0x60] sm:$0xf]
        %v1024 = vld [vmem:[#allocation2 + $0x64] sm:$0xf]
        %v1025 = vld [vmem:[#allocation2 + $0x6c] sm:$0xf]
        %v1026 = vld [vmem:[#allocation2 + $0x70] sm:$0xf]
        %v1027 = vld [vmem:[%s3] sm:$0x3]
        %v1028 = vld [vmem:[#allocation2 + $0x8] sm:$0x1]
        %v1029 = vld [vmem:[#allocation2 + $0x14] sm:$0x1]
        %v1030 = vld [vmem:[#allocation2 + $0x20] sm:$0x1]
        %v1031 = vld [vmem:[#allocation2 + $0x2c] sm:$0x1]
        %v1032 = vld [vmem:[#allocation2 + $0x38] sm:$0x1]
        %v1033 = vld [vmem:[#allocation2 + $0x44] sm:$0x1]
        %v1034 = vld [vmem:[#allocation2 + $0x50] sm:$0x1]
        %v1035 = vld [vmem:[#allocation2 + $0x5c] sm:$0x1]
        %v1036 = vld [vmem:[#allocation2 + $0x68] sm:$0x1]
        %v1037 = vld [vmem:[#allocation2 + $0x74] sm:$0x1]
        %vm1038 = vsmask.f32 3328
        %vm1039 = vsmask.f32 7440
        %vm1040 = vmor %vm1038, %vm1039
        %v1042 = vshrl.u32 %v1007, 16
        %v1044 = vrot.slane %v1042, 4
        %v1045 = vshll.u32 %v1007, 16
        %v1047 = vrot.slane %v1045, 5
        %v1048 = vor.u32 %v1044, %v1047
        %v1049 = vrot.slane %v1048, 4
        %v1051 = vshll.u32 %v1008, 16
        %v1053 = vrot.slane %v1051, 5
        %v1054 = vsel %vm1040, %v1049, %v1053
        %v1055 = vshrl.u32 %v1008, 16
        %v1057 = vrot.slane %v1055, 4
        %v1058 = vor.u32 %v1057, %v1053
        %v1059 = vrot.slane %v1058, 4
        %v1061 = vshll.u32 %v1028, 16
        %v1063 = vrot.slane %v1061, 5
        %v1064 = vsel %vm1040, %v1059, %v1063
        %v1066 = vshrl.u32 %v1009, 16
        %v1068 = vrot.slane %v1066, 4
        %v1069 = vshll.u32 %v1009, 16
        %v1071 = vrot.slane %v1069, 5
        %v1072 = vor.u32 %v1068, %v1071
        %v1073 = vrot.slane %v1072, 4
        %v1075 = vshll.u32 %v1010, 16
        %v1077 = vrot.slane %v1075, 5
        %v1078 = vsel %vm1040, %v1073, %v1077
        %v1079 = vshrl.u32 %v1010, 16
        %v1081 = vrot.slane %v1079, 4
        %v1082 = vor.u32 %v1081, %v1077
        %v1083 = vrot.slane %v1082, 4
        %v1085 = vshll.u32 %v1029, 16
        %v1087 = vrot.slane %v1085, 5
        %v1088 = vsel %vm1040, %v1083, %v1087
        %v1090 = vshrl.u32 %v1011, 16
        %v1092 = vrot.slane %v1090, 4
        %v1093 = vshll.u32 %v1011, 16
        %v1095 = vrot.slane %v1093, 5
        %v1096 = vor.u32 %v1092, %v1095
        %v1097 = vrot.slane %v1096, 4
        %v1099 = vshll.u32 %v1012, 16
        %v1101 = vrot.slane %v1099, 5
        %v1102 = vsel %vm1040, %v1097, %v1101
        %v1103 = vshrl.u32 %v1012, 16
        %v1105 = vrot.slane %v1103, 4
        %v1106 = vor.u32 %v1105, %v1101
        %v1107 = vrot.slane %v1106, 4
        %v1109 = vshll.u32 %v1030, 16
        %v1111 = vrot.slane %v1109, 5
        %v1112 = vsel %vm1040, %v1107, %v1111
        %v1114 = vshrl.u32 %v1013, 16
        %v1116 = vrot.slane %v1114, 4
        %v1117 = vshll.u32 %v1013, 16
        %v1119 = vrot.slane %v1117, 5
        %v1120 = vor.u32 %v1116, %v1119
        %v1121 = vrot.slane %v1120, 4
        %v1123 = vshll.u32 %v1014, 16
        %v1125 = vrot.slane %v1123, 5
        %v1126 = vsel %vm1040, %v1121, %v1125
        %v1127 = vshrl.u32 %v1014, 16
        %v1129 = vrot.slane %v1127, 4
        %v1130 = vor.u32 %v1129, %v1125
        %v1131 = vrot.slane %v1130, 4
        %v1133 = vshll.u32 %v1031, 16
        %v1135 = vrot.slane %v1133, 5
        %v1136 = vsel %vm1040, %v1131, %v1135
        %v1138 = vshrl.u32 %v1015, 16
        %v1140 = vrot.slane %v1138, 4
        %v1141 = vshll.u32 %v1015, 16
        %v1143 = vrot.slane %v1141, 5
        %v1144 = vor.u32 %v1140, %v1143
        %v1145 = vrot.slane %v1144, 4
        %v1147 = vshll.u32 %v1016, 16
        %v1149 = vrot.slane %v1147, 5
        %v1150 = vsel %vm1040, %v1145, %v1149
        %v1151 = vshrl.u32 %v1016, 16
        %v1153 = vrot.slane %v1151, 4
        %v1154 = vor.u32 %v1153, %v1149
        %v1155 = vrot.slane %v1154, 4
        %v1157 = vshll.u32 %v1032, 16
        %v1159 = vrot.slane %v1157, 5
        %v1160 = vsel %vm1040, %v1155, %v1159
        %v1162 = vshrl.u32 %v1017, 16
        %v1164 = vrot.slane %v1162, 4
        %v1165 = vshll.u32 %v1017, 16
        %v1167 = vrot.slane %v1165, 5
        %v1168 = vor.u32 %v1164, %v1167
        %v1169 = vrot.slane %v1168, 4
        %v1171 = vshll.u32 %v1018, 16
        %v1173 = vrot.slane %v1171, 5
        %v1174 = vsel %vm1040, %v1169, %v1173
        %v1175 = vshrl.u32 %v1018, 16
        %v1177 = vrot.slane %v1175, 4
        %v1178 = vor.u32 %v1177, %v1173
        %v1179 = vrot.slane %v1178, 4
        %v1181 = vshll.u32 %v1033, 16
        %v1183 = vrot.slane %v1181, 5
        %v1184 = vsel %vm1040, %v1179, %v1183
        %v1186 = vshrl.u32 %v1019, 16
        %v1188 = vrot.slane %v1186, 4
        %v1189 = vshll.u32 %v1019, 16
        %v1191 = vrot.slane %v1189, 5
        %v1192 = vor.u32 %v1188, %v1191
        %v1193 = vrot.slane %v1192, 4
        %v1195 = vshll.u32 %v1020, 16
        %v1197 = vrot.slane %v1195, 5
        %v1198 = vsel %vm1040, %v1193, %v1197
        %v1199 = vshrl.u32 %v1020, 16
        %v1201 = vrot.slane %v1199, 4
        %v1202 = vor.u32 %v1201, %v1197
        %v1203 = vrot.slane %v1202, 4
        %v1205 = vshll.u32 %v1034, 16
        %v1207 = vrot.slane %v1205, 5
        %v1208 = vsel %vm1040, %v1203, %v1207
        %v1210 = vshrl.u32 %v1021, 16
        %v1212 = vrot.slane %v1210, 4
        %v1213 = vshll.u32 %v1021, 16
        %v1215 = vrot.slane %v1213, 5
        %v1216 = vor.u32 %v1212, %v1215
        %v1217 = vrot.slane %v1216, 4
        %v1219 = vshll.u32 %v1022, 16
        %v1221 = vrot.slane %v1219, 5
        %v1222 = vsel %vm1040, %v1217, %v1221
        %v1223 = vshrl.u32 %v1022, 16
        %v1225 = vrot.slane %v1223, 4
        %v1226 = vor.u32 %v1225, %v1221
        %v1227 = vrot.slane %v1226, 4
        %v1229 = vshll.u32 %v1035, 16
        %v1231 = vrot.slane %v1229, 5
        %v1232 = vsel %vm1040, %v1227, %v1231
        %v1234 = vshrl.u32 %v1023, 16
        %v1236 = vrot.slane %v1234, 4
        %v1237 = vshll.u32 %v1023, 16
        %v1239 = vrot.slane %v1237, 5
        %v1240 = vor.u32 %v1236, %v1239
        %v1241 = vrot.slane %v1240, 4
        %v1243 = vshll.u32 %v1024, 16
        %v1245 = vrot.slane %v1243, 5
        %v1246 = vsel %vm1040, %v1241, %v1245
        %v1247 = vshrl.u32 %v1024, 16
        %v1249 = vrot.slane %v1247, 4
        %v1250 = vor.u32 %v1249, %v1245
        %v1251 = vrot.slane %v1250, 4
        %v1253 = vshll.u32 %v1036, 16
        %v1255 = vrot.slane %v1253, 5
        %v1256 = vsel %vm1040, %v1251, %v1255
        %v1258 = vshrl.u32 %v1025, 16
        %v1260 = vrot.slane %v1258, 4
        %v1261 = vshll.u32 %v1025, 16
        %v1263 = vrot.slane %v1261, 5
        %v1264 = vor.u32 %v1260, %v1263
        %v1265 = vrot.slane %v1264, 4
        %v1267 = vshll.u32 %v1026, 16
        %v1269 = vrot.slane %v1267, 5
        %v1270 = vsel %vm1040, %v1265, %v1269
        %v1271 = vshrl.u32 %v1026, 16
        %v1273 = vrot.slane %v1271, 4
        %v1274 = vor.u32 %v1273, %v1269
        %v1275 = vrot.slane %v1274, 4
        %v1277 = vshll.u32 %v1037, 16
        %v1279 = vrot.slane %v1277, 5
        %v1280 = vsel %vm1040, %v1275, %v1279
        %s1281 = scalar_lea.vmem %s3, 2
        %v1282 = vld [vmem:[%s1281] sm:$0x3]
        %v1283 = vunpack.c.l.b16 %v1054
        %v1284 = vunpack.c.l.b16 %v1064
        %v1285 = vunpack.c.l.b16 %v1078
        %v1286 = vunpack.c.l.b16 %v1088
        %v1287 = vunpack.c.l.b16 %v1102
        %v1288 = vunpack.c.l.b16 %v1112
        %v1289 = vunpack.c.l.b16 %v1126
        %v1290 = vunpack.c.l.b16 %v1136
        %v1291 = vunpack.c.l.b16 %v1150
        %v1292 = vunpack.c.l.b16 %v1160
        %v1293 = vunpack.c.l.b16 %v1174
        %v1294 = vunpack.c.l.b16 %v1184
        %v1295 = vunpack.c.l.b16 %v1198
        %v1296 = vunpack.c.l.b16 %v1208
        %v1297 = vunpack.c.l.b16 %v1222
        %v1298 = vunpack.c.l.b16 %v1232
        %v1299 = vunpack.c.l.b16 %v1246
        %v1300 = vunpack.c.l.b16 %v1256
        %v1301 = vunpack.c.l.b16 %v1270
        %v1302 = vunpack.c.l.b16 %v1280
        %v1303 = vpack.c.b16 %v1284, %v1283
        %v1304 = vpack.c.b16 %v1286, %v1285
        %v1305 = vpack.c.b16 %v1288, %v1287
        %v1306 = vpack.c.b16 %v1290, %v1289
        %v1307 = vpack.c.b16 %v1292, %v1291
        %v1308 = vpack.c.b16 %v1294, %v1293
        %v1309 = vpack.c.b16 %v1296, %v1295
        %v1310 = vpack.c.b16 %v1298, %v1297
        %v1311 = vpack.c.b16 %v1300, %v1299
        %v1312 = vpack.c.b16 %v1302, %v1301
        %vm1313 = vcmask 31744
        %v1315 = vsel %vm1313, %v1303, 0
        %v1318 = vsel %vm1313, %v1304, 0
        %v1321 = vsel %vm1313, %v1305, 0
        %v1324 = vsel %vm1313, %v1306, 0
        %v1327 = vsel %vm1313, %v1307, 0
        %v1330 = vsel %vm1313, %v1308, 0
        %v1333 = vsel %vm1313, %v1309, 0
        %v1336 = vsel %vm1313, %v1310, 0
        %v1339 = vsel %vm1313, %v1311, 0
        %v1342 = vsel %vm1313, %v1312, 0
        %vm1344 = vcmask 1041408
        %v1346 = vsel %vm1344, %v1282, 0
        %1348 = vmatprep.subr.bf16.mxu0 0
        %1349 = vmatpush1.bf16.msra.mxu0 %v1346
        %1350 = vmatprep.subr.bf16.mxu0 0
        %1351 = vmatpush1.bf16.msra.mxu0 0
        %1352 = vmatprep.subr.bf16.mxu0 0
        %1353 = vmatpush1.bf16.msra.mxu0 0
        %1354 = vmatprep.subr.bf16.mxu0 0
        %1355 = vmatpush1.bf16.msra.mxu0 0
        %1356 = vmatprep.subr.bf16.mxu0 0
        %1357 = vmatpush1.bf16.msra.mxu0 0
        %1358 = vmatprep.subr.bf16.mxu0 0
        %1359 = vmatpush1.bf16.msra.mxu0 0
        %1360 = vmatprep.subr.bf16.mxu0 0
        %1361 = vmatpush1.bf16.msra.mxu0 0
        %1362 = vmatprep.subr.bf16.mxu0 0
        %1363 = vmatpush1.bf16.msra.mxu0 0
        %1364 = vmatprep.subr.bf16.mxu0 0
        %1365 = vmatpush1.bf16.msra.mxu0 0
        %1366 = vmatprep.subr.bf16.mxu0 0
        %1367 = vmatpush1.bf16.msra.mxu0 0
        %1368 = vmatprep.subr.bf16.mxu0 0
        %1369 = vmatpush1.bf16.msra.mxu0 0
        %1370 = vmatprep.subr.bf16.mxu0 0
        %1371 = vmatpush1.bf16.msra.mxu0 0
        %1372 = vmatprep.subr.bf16.mxu0 0
        %1373 = vmatpush1.bf16.msra.mxu0 0
        %1374 = vmatprep.subr.bf16.mxu0 0
        %1375 = vmatpush1.bf16.msra.mxu0 0
        %1376 = vmatprep.subr.bf16.mxu0 0
        %1377 = vmatpush1.bf16.msra.mxu0 0
        %1378 = vmatprep.subr.bf16.mxu0 0
        %1379 = vmatpush1.bf16.msra.mxu0 0
        %1380 = vmatprep.mubr.bf16.mxu0 0
        %1381 = vmatmul.mubr.bf16.gmra.mrb[0].mxu0 %v1315
        %v1382 = vpop.f32.mrb[0].mxu0
        %v1383 = vadd.f32 0.0, %v1382
        %v1384 = vpop.f32.mrb[0].mxu0
        %v1385 = vpop.f32.mrb[0].mxu0
        %v1386 = vadd.f32 0.0, %v1385
        %v1387 = vpop.f32.mrb[0].mxu0
        %1388 = vmatprep.mubr.bf16.mxu0 0
        %1389 = vmatmul.mubr.bf16.gmra.mrb[0].mxu0 %v1318
        %v1390 = vpop.f32.mrb[0].mxu0
        %v1391 = vadd.f32 0.0, %v1390
        %v1392 = vpop.f32.mrb[0].mxu0
        %v1393 = vpop.f32.mrb[0].mxu0
        %v1394 = vadd.f32 0.0, %v1393
        %v1395 = vpop.f32.mrb[0].mxu0
        %1396 = vmatprep.mubr.bf16.mxu0 0
        %1397 = vmatmul.mubr.bf16.gmra.mrb[0].mxu0 %v1321
        %v1398 = vpop.f32.mrb[0].mxu0
        %v1399 = vadd.f32 0.0, %v1398
        %v1400 = vpop.f32.mrb[0].mxu0
        %v1401 = vpop.f32.mrb[0].mxu0
        %v1402 = vadd.f32 0.0, %v1401
        %v1403 = vpop.f32.mrb[0].mxu0
        %1404 = vmatprep.mubr.bf16.mxu0 0
        %1405 = vmatmul.mubr.bf16.gmra.mrb[0].mxu0 %v1324
        %v1406 = vpop.f32.mrb[0].mxu0
        %v1407 = vadd.f32 0.0, %v1406
        %v1408 = vpop.f32.mrb[0].mxu0
        %v1409 = vpop.f32.mrb[0].mxu0
        %v1410 = vadd.f32 0.0, %v1409
        %v1411 = vpop.f32.mrb[0].mxu0
        %1412 = vmatprep.mubr.bf16.mxu0 0
        %1413 = vmatmul.mubr.bf16.gmra.mrb[0].mxu0 %v1327
        %v1414 = vpop.f32.mrb[0].mxu0
        %v1415 = vadd.f32 0.0, %v1414
        %v1416 = vpop.f32.mrb[0].mxu0
        %v1417 = vpop.f32.mrb[0].mxu0
        %v1418 = vadd.f32 0.0, %v1417
        %v1419 = vpop.f32.mrb[0].mxu0
        %1420 = vmatprep.mubr.bf16.mxu0 0
        %1421 = vmatmul.mubr.bf16.gmra.mrb[0].mxu0 %v1330
        %v1422 = vpop.f32.mrb[0].mxu0
        %v1423 = vadd.f32 0.0, %v1422
        %v1424 = vpop.f32.mrb[0].mxu0
        %v1425 = vpop.f32.mrb[0].mxu0
        %v1426 = vadd.f32 0.0, %v1425
        %v1427 = vpop.f32.mrb[0].mxu0
        %1428 = vmatprep.mubr.bf16.mxu0 0
        %1429 = vmatmul.mubr.bf16.gmra.mrb[0].mxu0 %v1333
        %v1430 = vpop.f32.mrb[0].mxu0
        %v1431 = vadd.f32 0.0, %v1430
        %v1432 = vpop.f32.mrb[0].mxu0
        %v1433 = vpop.f32.mrb[0].mxu0
        %v1434 = vadd.f32 0.0, %v1433
        %v1435 = vpop.f32.mrb[0].mxu0
        %1436 = vmatprep.mubr.bf16.mxu0 0
        %1437 = vmatmul.mubr.bf16.gmra.mrb[0].mxu0 %v1336
        %v1438 = vpop.f32.mrb[0].mxu0
        %v1439 = vadd.f32 0.0, %v1438
        %v1440 = vpop.f32.mrb[0].mxu0
        %v1441 = vpop.f32.mrb[0].mxu0
        %v1442 = vadd.f32 0.0, %v1441
        %v1443 = vpop.f32.mrb[0].mxu0
        %1444 = vmatprep.mubr.bf16.mxu0 0
        %1445 = vmatmul.mubr.bf16.gmra.mrb[0].mxu0 %v1339
        %v1446 = vpop.f32.mrb[0].mxu0
        %v1447 = vadd.f32 0.0, %v1446
        %v1448 = vpop.f32.mrb[0].mxu0
        %v1449 = vpop.f32.mrb[0].mxu0
        %v1450 = vadd.f32 0.0, %v1449
        %v1451 = vpop.f32.mrb[0].mxu0
        %1452 = vmatprep.mubr.bf16.mxu0 0
        %1453 = vmatmul.mubr.bf16.gmra.mrb[0].mxu0 %v1342
        %v1454 = vpop.f32.mrb[0].mxu0
        %v1455 = vadd.f32 0.0, %v1454
        %v1456 = vpop.f32.mrb[0].mxu0
        %v1457 = vpop.f32.mrb[0].mxu0
        %v1458 = vadd.f32 0.0, %v1457
        %v1459 = vpop.f32.mrb[0].mxu0
        %1460 = vdwg.mxu0
        %v1481 = vunpack.c.l.b16 %v1007
        %v1482 = vunpack.c.l.b16 %v1008
        %v1483 = vunpack.c.l.b16 %v1009
        %v1484 = vunpack.c.l.b16 %v1010
        %v1485 = vunpack.c.l.b16 %v1011
        %v1486 = vunpack.c.l.b16 %v1012
        %v1487 = vunpack.c.l.b16 %v1013
        %v1488 = vunpack.c.l.b16 %v1014
        %v1489 = vunpack.c.l.b16 %v1015
        %v1490 = vunpack.c.l.b16 %v1016
        %v1491 = vunpack.c.l.b16 %v1017
        %v1492 = vunpack.c.l.b16 %v1018
        %v1493 = vunpack.c.l.b16 %v1019
        %v1494 = vunpack.c.l.b16 %v1020
        %v1495 = vunpack.c.l.b16 %v1021
        %v1496 = vunpack.c.l.b16 %v1022
        %v1497 = vunpack.c.l.b16 %v1023
        %v1498 = vunpack.c.l.b16 %v1024
        %v1499 = vunpack.c.l.b16 %v1025
        %v1500 = vunpack.c.l.b16 %v1026
        %v1501 = vpack.c.b16 %v1482, %v1481
        %v1502 = vpack.c.b16 %v1484, %v1483
        %v1503 = vpack.c.b16 %v1486, %v1485
        %v1504 = vpack.c.b16 %v1488, %v1487
        %v1505 = vpack.c.b16 %v1490, %v1489
        %v1506 = vpack.c.b16 %v1492, %v1491
        %v1507 = vpack.c.b16 %v1494, %v1493
        %v1508 = vpack.c.b16 %v1496, %v1495
        %v1509 = vpack.c.b16 %v1498, %v1497
        %v1510 = vpack.c.b16 %v1500, %v1499
        %v1512 = vsel %vm1313, %v1501, 0
        %v1515 = vsel %vm1313, %v1502, 0
        %v1518 = vsel %vm1313, %v1503, 0
        %v1521 = vsel %vm1313, %v1504, 0
        %v1524 = vsel %vm1313, %v1505, 0
        %v1527 = vsel %vm1313, %v1506, 0
        %v1530 = vsel %vm1313, %v1507, 0
        %v1533 = vsel %vm1313, %v1508, 0
        %v1536 = vsel %vm1313, %v1509, 0
        %v1539 = vsel %vm1313, %v1510, 0
        %v1542 = vsel %vm1344, %v1027, 0
        %1544 = vmatprep.subr.bf16.mxu0 0
        %1545 = vmatpush1.bf16.msra.mxu0 %v1542
        %1546 = vmatprep.subr.bf16.mxu0 0
        %1547 = vmatpush1.bf16.msra.mxu0 0
        %1548 = vmatprep.subr.bf16.mxu0 0
        %1549 = vmatpush1.bf16.msra.mxu0 0
        %1550 = vmatprep.subr.bf16.mxu0 0
        %1551 = vmatpush1.bf16.msra.mxu0 0
        %1552 = vmatprep.subr.bf16.mxu0 0
        %1553 = vmatpush1.bf16.msra.mxu0 0
        %1554 = vmatprep.subr.bf16.mxu0 0
        %1555 = vmatpush1.bf16.msra.mxu0 0
        %1556 = vmatprep.subr.bf16.mxu0 0
        %1557 = vmatpush1.bf16.msra.mxu0 0
        %1558 = vmatprep.subr.bf16.mxu0 0
        %1559 = vmatpush1.bf16.msra.mxu0 0
        %1560 = vmatprep.subr.bf16.mxu0 0
        %1561 = vmatpush1.bf16.msra.mxu0 0
        %1562 = vmatprep.subr.bf16.mxu0 0
        %1563 = vmatpush1.bf16.msra.mxu0 0
        %1564 = vmatprep.subr.bf16.mxu0 0
        %1565 = vmatpush1.bf16.msra.mxu0 0
        %1566 = vmatprep.subr.bf16.mxu0 0
        %1567 = vmatpush1.bf16.msra.mxu0 0
        %1568 = vmatprep.subr.bf16.mxu0 0
        %1569 = vmatpush1.bf16.msra.mxu0 0
        %1570 = vmatprep.subr.bf16.mxu0 0
        %1571 = vmatpush1.bf16.msra.mxu0 0
        %1572 = vmatprep.subr.bf16.mxu0 0
        %1573 = vmatpush1.bf16.msra.mxu0 0
        %1574 = vmatprep.subr.bf16.mxu0 0
        %1575 = vmatpush1.bf16.msra.mxu0 0
        %1576 = vmatprep.mubr.bf16.mxu0 0
        %1577 = vmatmul.mubr.bf16.gmra.mrb[0].mxu0 %v1512
        %v1578 = vpop.f32.mrb[0].mxu0
        %v1579 = vadd.f32 %v1383, %v1578
        %v1580 = vpop.f32.mrb[0].mxu0
        %v1581 = vpop.f32.mrb[0].mxu0
        %v1582 = vadd.f32 %v1386, %v1581
        %v1583 = vpop.f32.mrb[0].mxu0
        %1584 = vmatprep.mubr.bf16.mxu0 0
        %1585 = vmatmul.mubr.bf16.gmra.mrb[0].mxu0 %v1515
        %v1586 = vpop.f32.mrb[0].mxu0
        %v1587 = vadd.f32 %v1391, %v1586
        %v1588 = vpop.f32.mrb[0].mxu0
        %v1589 = vpop.f32.mrb[0].mxu0
        %v1590 = vadd.f32 %v1394, %v1589
        %v1591 = vpop.f32.mrb[0].mxu0
        %1592 = vmatprep.mubr.bf16.mxu0 0
        %1593 = vmatmul.mubr.bf16.gmra.mrb[0].mxu0 %v1518
        %v1594 = vpop.f32.mrb[0].mxu0
        %v1595 = vadd.f32 %v1399, %v1594
        %v1596 = vpop.f32.mrb[0].mxu0
        %v1597 = vpop.f32.mrb[0].mxu0
        %v1598 = vadd.f32 %v1402, %v1597
        %v1599 = vpop.f32.mrb[0].mxu0
        %1600 = vmatprep.mubr.bf16.mxu0 0
        %1601 = vmatmul.mubr.bf16.gmra.mrb[0].mxu0 %v1521
        %v1602 = vpop.f32.mrb[0].mxu0
        %v1603 = vadd.f32 %v1407, %v1602
        %v1604 = vpop.f32.mrb[0].mxu0
        %v1605 = vpop.f32.mrb[0].mxu0
        %v1606 = vadd.f32 %v1410, %v1605
        %v1607 = vpop.f32.mrb[0].mxu0
        %1608 = vmatprep.mubr.bf16.mxu0 0
        %1609 = vmatmul.mubr.bf16.gmra.mrb[0].mxu0 %v1524
        %v1610 = vpop.f32.mrb[0].mxu0
        %v1611 = vadd.f32 %v1415, %v1610
        %v1612 = vpop.f32.mrb[0].mxu0
        %v1613 = vpop.f32.mrb[0].mxu0
        %v1614 = vadd.f32 %v1418, %v1613
        %v1615 = vpop.f32.mrb[0].mxu0
        %1616 = vmatprep.mubr.bf16.mxu0 0
        %1617 = vmatmul.mubr.bf16.gmra.mrb[0].mxu0 %v1527
        %v1618 = vpop.f32.mrb[0].mxu0
        %v1619 = vadd.f32 %v1423, %v1618
        %v1620 = vpop.f32.mrb[0].mxu0
        %v1621 = vpop.f32.mrb[0].mxu0
        %v1622 = vadd.f32 %v1426, %v1621
        %v1623 = vpop.f32.mrb[0].mxu0
        %1624 = vmatprep.mubr.bf16.mxu0 0
        %1625 = vmatmul.mubr.bf16.gmra.mrb[0].mxu0 %v1530
        %v1626 = vpop.f32.mrb[0].mxu0
        %v1627 = vadd.f32 %v1431, %v1626
        %v1628 = vpop.f32.mrb[0].mxu0
        %v1629 = vpop.f32.mrb[0].mxu0
        %v1630 = vadd.f32 %v1434, %v1629
        %v1631 = vpop.f32.mrb[0].mxu0
        %1632 = vmatprep.mubr.bf16.mxu0 0
        %1633 = vmatmul.mubr.bf16.gmra.mrb[0].mxu0 %v1533
        %v1634 = vpop.f32.mrb[0].mxu0
        %v1635 = vadd.f32 %v1439, %v1634
        %v1636 = vpop.f32.mrb[0].mxu0
        %v1637 = vpop.f32.mrb[0].mxu0
        %v1638 = vadd.f32 %v1442, %v1637
        %v1639 = vpop.f32.mrb[0].mxu0
        %1640 = vmatprep.mubr.bf16.mxu0 0
        %1641 = vmatmul.mubr.bf16.gmra.mrb[0].mxu0 %v1536
        %v1642 = vpop.f32.mrb[0].mxu0
        %v1643 = vadd.f32 %v1447, %v1642
        %v1644 = vpop.f32.mrb[0].mxu0
        %v1645 = vpop.f32.mrb[0].mxu0
        %v1646 = vadd.f32 %v1450, %v1645
        %v1647 = vpop.f32.mrb[0].mxu0
        %1648 = vmatprep.mubr.bf16.mxu0 0
        %1649 = vmatmul.mubr.bf16.gmra.mrb[0].mxu0 %v1539
        %v1650 = vpop.f32.mrb[0].mxu0
        %v1651 = vadd.f32 %v1455, %v1650
        %v1652 = vpop.f32.mrb[0].mxu0
        %v1653 = vpop.f32.mrb[0].mxu0
        %v1654 = vadd.f32 %v1458, %v1653
        %v1655 = vpop.f32.mrb[0].mxu0
        %1656 = vdwg.mxu0
        %v1657 = vld [vmem:[#allocation2] sm:$0xe]
        %v1658 = vld [vmem:[#allocation2 + $0xc] sm:$0xe]
        %v1659 = vld [vmem:[#allocation2 + $0x18] sm:$0xe]
        %v1660 = vld [vmem:[#allocation2 + $0x24] sm:$0xe]
        %v1661 = vld [vmem:[#allocation2 + $0x30] sm:$0xe]
        %v1662 = vld [vmem:[#allocation2 + $0x3c] sm:$0xe]
        %v1663 = vld [vmem:[#allocation2 + $0x48] sm:$0xe]
        %v1664 = vld [vmem:[#allocation2 + $0x54] sm:$0xe]
        %v1665 = vld [vmem:[#allocation2 + $0x60] sm:$0xe]
        %v1666 = vld [vmem:[#allocation2 + $0x6c] sm:$0xe]
        %vm1687 = vcmask 1042432
        %vm1688 = vcmask 1046532
        %vm1689 = vmor %vm1687, %vm1688
        %v1690 = vrot.slane %v1657, 5
        %v1691 = vrot.slane %v1690, 4
        %v1692 = vrot.slane %v1008, 5
        %v1693 = vsel %vm1689, %v1691, %v1692
        %v1694 = vrot.slane %v1692, 4
        %v1695 = vrot.slane %v1028, 5
        %v1696 = vsel %vm1689, %v1694, %v1695
        %v1697 = vrot.slane %v1658, 5
        %v1698 = vrot.slane %v1697, 4
        %v1699 = vrot.slane %v1010, 5
        %v1700 = vsel %vm1689, %v1698, %v1699
        %v1701 = vrot.slane %v1699, 4
        %v1702 = vrot.slane %v1029, 5
        %v1703 = vsel %vm1689, %v1701, %v1702
        %v1704 = vrot.slane %v1659, 5
        %v1705 = vrot.slane %v1704, 4
        %v1706 = vrot.slane %v1012, 5
        %v1707 = vsel %vm1689, %v1705, %v1706
        %v1708 = vrot.slane %v1706, 4
        %v1709 = vrot.slane %v1030, 5
        %v1710 = vsel %vm1689, %v1708, %v1709
        %v1711 = vrot.slane %v1660, 5
        %v1712 = vrot.slane %v1711, 4
        %v1713 = vrot.slane %v1014, 5
        %v1714 = vsel %vm1689, %v1712, %v1713
        %v1715 = vrot.slane %v1713, 4
        %v1716 = vrot.slane %v1031, 5
        %v1717 = vsel %vm1689, %v1715, %v1716
        %v1718 = vrot.slane %v1661, 5
        %v1719 = vrot.slane %v1718, 4
        %v1720 = vrot.slane %v1016, 5
        %v1721 = vsel %vm1689, %v1719, %v1720
        %v1722 = vrot.slane %v1720, 4
        %v1723 = vrot.slane %v1032, 5
        %v1724 = vsel %vm1689, %v1722, %v1723
        %v1725 = vrot.slane %v1662, 5
        %v1726 = vrot.slane %v1725, 4
        %v1727 = vrot.slane %v1018, 5
        %v1728 = vsel %vm1689, %v1726, %v1727
        %v1729 = vrot.slane %v1727, 4
        %v1730 = vrot.slane %v1033, 5
        %v1731 = vsel %vm1689, %v1729, %v1730
        %v1732 = vrot.slane %v1663, 5
        %v1733 = vrot.slane %v1732, 4
        %v1734 = vrot.slane %v1020, 5
        %v1735 = vsel %vm1689, %v1733, %v1734
        %v1736 = vrot.slane %v1734, 4
        %v1737 = vrot.slane %v1034, 5
        %v1738 = vsel %vm1689, %v1736, %v1737
        %v1739 = vrot.slane %v1664, 5
        %v1740 = vrot.slane %v1739, 4
        %v1741 = vrot.slane %v1022, 5
        %v1742 = vsel %vm1689, %v1740, %v1741
        %v1743 = vrot.slane %v1741, 4
        %v1744 = vrot.slane %v1035, 5
        %v1745 = vsel %vm1689, %v1743, %v1744
        %v1746 = vrot.slane %v1665, 5
        %v1747 = vrot.slane %v1746, 4
        %v1748 = vrot.slane %v1024, 5
        %v1749 = vsel %vm1689, %v1747, %v1748
        %v1750 = vrot.slane %v1748, 4
        %v1751 = vrot.slane %v1036, 5
        %v1752 = vsel %vm1689, %v1750, %v1751
        %v1753 = vrot.slane %v1666, 5
        %v1754 = vrot.slane %v1753, 4
        %v1755 = vrot.slane %v1026, 5
        %v1756 = vsel %vm1689, %v1754, %v1755
        %v1757 = vrot.slane %v1755, 4
        %v1758 = vrot.slane %v1037, 5
        %v1759 = vsel %vm1689, %v1757, %v1758
        %s1760 = scalar_lea.vmem %s3, 4
        %v1761 = vld [vmem:[%s1760] sm:$0x3]
        %v1762 = vunpack.c.l.b16 %v1693
        %v1763 = vunpack.c.l.b16 %v1696
        %v1764 = vunpack.c.l.b16 %v1700
        %v1765 = vunpack.c.l.b16 %v1703
        %v1766 = vunpack.c.l.b16 %v1707
        %v1767 = vunpack.c.l.b16 %v1710
        %v1768 = vunpack.c.l.b16 %v1714
        %v1769 = vunpack.c.l.b16 %v1717
        %v1770 = vunpack.c.l.b16 %v1721
        %v1771 = vunpack.c.l.b16 %v1724
        %v1772 = vunpack.c.l.b16 %v1728
        %v1773 = vunpack.c.l.b16 %v1731
        %v1774 = vunpack.c.l.b16 %v1735
        %v1775 = vunpack.c.l.b16 %v1738
        %v1776 = vunpack.c.l.b16 %v1742
        %v1777 = vunpack.c.l.b16 %v1745
        %v1778 = vunpack.c.l.b16 %v1749
        %v1779 = vunpack.c.l.b16 %v1752
        %v1780 = vunpack.c.l.b16 %v1756
        %v1781 = vunpack.c.l.b16 %v1759
        %v1782 = vpack.c.b16 %v1763, %v1762
        %v1783 = vpack.c.b16 %v1765, %v1764
        %v1784 = vpack.c.b16 %v1767, %v1766
        %v1785 = vpack.c.b16 %v1769, %v1768
        %v1786 = vpack.c.b16 %v1771, %v1770
        %v1787 = vpack.c.b16 %v1773, %v1772
        %v1788 = vpack.c.b16 %v1775, %v1774
        %v1789 = vpack.c.b16 %v1777, %v1776
        %v1790 = vpack.c.b16 %v1779, %v1778
        %v1791 = vpack.c.b16 %v1781, %v1780
        %v1793 = vsel %vm1313, %v1782, 0
        %v1796 = vsel %vm1313, %v1783, 0
        %v1799 = vsel %vm1313, %v1784, 0
        %v1802 = vsel %vm1313, %v1785, 0
        %v1805 = vsel %vm1313, %v1786, 0
        %v1808 = vsel %vm1313, %v1787, 0
        %v1811 = vsel %vm1313, %v1788, 0
        %v1814 = vsel %vm1313, %v1789, 0
        %v1817 = vsel %vm1313, %v1790, 0
        %v1820 = vsel %vm1313, %v1791, 0
        %v1823 = vsel %vm1344, %v1761, 0
        %1825 = vmatprep.subr.bf16.mxu0 0
        %1826 = vmatpush1.bf16.msra.mxu0 %v1823
        %1827 = vmatprep.subr.bf16.mxu0 0
        %1828 = vmatpush1.bf16.msra.mxu0 0
        %1829 = vmatprep.subr.bf16.mxu0 0
        %1830 = vmatpush1.bf16.msra.mxu0 0
        %1831 = vmatprep.subr.bf16.mxu0 0
        %1832 = vmatpush1.bf16.msra.mxu0 0
        %1833 = vmatprep.subr.bf16.mxu0 0
        %1834 = vmatpush1.bf16.msra.mxu0 0
        %1835 = vmatprep.subr.bf16.mxu0 0
        %1836 = vmatpush1.bf16.msra.mxu0 0
        %1837 = vmatprep.subr.bf16.mxu0 0
        %1838 = vmatpush1.bf16.msra.mxu0 0
        %1839 = vmatprep.subr.bf16.mxu0 0
        %1840 = vmatpush1.bf16.msra.mxu0 0
        %1841 = vmatprep.subr.bf16.mxu0 0
        %1842 = vmatpush1.bf16.msra.mxu0 0
        %1843 = vmatprep.subr.bf16.mxu0 0
        %1844 = vmatpush1.bf16.msra.mxu0 0
        %1845 = vmatprep.subr.bf16.mxu0 0
        %1846 = vmatpush1.bf16.msra.mxu0 0
        %1847 = vmatprep.subr.bf16.mxu0 0
        %1848 = vmatpush1.bf16.msra.mxu0 0
        %1849 = vmatprep.subr.bf16.mxu0 0
        %1850 = vmatpush1.bf16.msra.mxu0 0
        %1851 = vmatprep.subr.bf16.mxu0 0
        %1852 = vmatpush1.bf16.msra.mxu0 0
        %1853 = vmatprep.subr.bf16.mxu0 0
        %1854 = vmatpush1.bf16.msra.mxu0 0
        %1855 = vmatprep.subr.bf16.mxu0 0
        %1856 = vmatpush1.bf16.msra.mxu0 0
        %1857 = vmatprep.mubr.bf16.mxu0 0
        %1858 = vmatmul.mubr.bf16.gmra.mrb[0].mxu0 %v1793
        %v1859 = vpop.f32.mrb[0].mxu0
        %v1860 = vadd.f32 0.0, %v1859
        %v1861 = vpop.f32.mrb[0].mxu0
        %v1862 = vpop.f32.mrb[0].mxu0
        %v1863 = vadd.f32 0.0, %v1862
        %v1864 = vpop.f32.mrb[0].mxu0
        %1865 = vmatprep.mubr.bf16.mxu0 0
        %1866 = vmatmul.mubr.bf16.gmra.mrb[0].mxu0 %v1796
        %v1867 = vpop.f32.mrb[0].mxu0
        %v1868 = vadd.f32 0.0, %v1867
        %v1869 = vpop.f32.mrb[0].mxu0
        %v1870 = vpop.f32.mrb[0].mxu0
        %v1871 = vadd.f32 0.0, %v1870
        %v1872 = vpop.f32.mrb[0].mxu0
        %1873 = vmatprep.mubr.bf16.mxu0 0
        %1874 = vmatmul.mubr.bf16.gmra.mrb[0].mxu0 %v1799
        %v1875 = vpop.f32.mrb[0].mxu0
        %v1876 = vadd.f32 0.0, %v1875
        %v1877 = vpop.f32.mrb[0].mxu0
        %v1878 = vpop.f32.mrb[0].mxu0
        %v1879 = vadd.f32 0.0, %v1878
        %v1880 = vpop.f32.mrb[0].mxu0
        %1881 = vmatprep.mubr.bf16.mxu0 0
        %1882 = vmatmul.mubr.bf16.gmra.mrb[0].mxu0 %v1802
        %v1883 = vpop.f32.mrb[0].mxu0
        %v1884 = vadd.f32 0.0, %v1883
        %v1885 = vpop.f32.mrb[0].mxu0
        %v1886 = vpop.f32.mrb[0].mxu0
        %v1887 = vadd.f32 0.0, %v1886
        %v1888 = vpop.f32.mrb[0].mxu0
        %1889 = vmatprep.mubr.bf16.mxu0 0
        %1890 = vmatmul.mubr.bf16.gmra.mrb[0].mxu0 %v1805
        %v1891 = vpop.f32.mrb[0].mxu0
        %v1892 = vadd.f32 0.0, %v1891
        %v1893 = vpop.f32.mrb[0].mxu0
        %v1894 = vpop.f32.mrb[0].mxu0
        %v1895 = vadd.f32 0.0, %v1894
        %v1896 = vpop.f32.mrb[0].mxu0
        %1897 = vmatprep.mubr.bf16.mxu0 0
        %1898 = vmatmul.mubr.bf16.gmra.mrb[0].mxu0 %v1808
        %v1899 = vpop.f32.mrb[0].mxu0
        %v1900 = vadd.f32 0.0, %v1899
        %v1901 = vpop.f32.mrb[0].mxu0
        %v1902 = vpop.f32.mrb[0].mxu0
        %v1903 = vadd.f32 0.0, %v1902
        %v1904 = vpop.f32.mrb[0].mxu0
        %1905 = vmatprep.mubr.bf16.mxu0 0
        %1906 = vmatmul.mubr.bf16.gmra.mrb[0].mxu0 %v1811
        %v1907 = vpop.f32.mrb[0].mxu0
        %v1908 = vadd.f32 0.0, %v1907
        %v1909 = vpop.f32.mrb[0].mxu0
        %v1910 = vpop.f32.mrb[0].mxu0
        %v1911 = vadd.f32 0.0, %v1910
        %v1912 = vpop.f32.mrb[0].mxu0
        %1913 = vmatprep.mubr.bf16.mxu0 0
        %1914 = vmatmul.mubr.bf16.gmra.mrb[0].mxu0 %v1814
        %v1915 = vpop.f32.mrb[0].mxu0
        %v1916 = vadd.f32 0.0, %v1915
        %v1917 = vpop.f32.mrb[0].mxu0
        %v1918 = vpop.f32.mrb[0].mxu0
        %v1919 = vadd.f32 0.0, %v1918
        %v1920 = vpop.f32.mrb[0].mxu0
        %1921 = vmatprep.mubr.bf16.mxu0 0
        %1922 = vmatmul.mubr.bf16.gmra.mrb[0].mxu0 %v1817
        %v1923 = vpop.f32.mrb[0].mxu0
        %v1924 = vadd.f32 0.0, %v1923
        %v1925 = vpop.f32.mrb[0].mxu0
        %v1926 = vpop.f32.mrb[0].mxu0
        %v1927 = vadd.f32 0.0, %v1926
        %v1928 = vpop.f32.mrb[0].mxu0
        %1929 = vmatprep.mubr.bf16.mxu0 0
        %1930 = vmatmul.mubr.bf16.gmra.mrb[0].mxu0 %v1820
        %v1931 = vpop.f32.mrb[0].mxu0
        %v1932 = vadd.f32 0.0, %v1931
        %v1933 = vpop.f32.mrb[0].mxu0
        %v1934 = vpop.f32.mrb[0].mxu0
        %v1935 = vadd.f32 0.0, %v1934
        %v1936 = vpop.f32.mrb[0].mxu0
        %1937 = vdwg.mxu0
        %v1938 = vadd.f32 %v1579, %v1860
        %v1939 = vadd.f32 %v1582, %v1863
        %v1940 = vadd.f32 %v1587, %v1868
        %v1941 = vadd.f32 %v1590, %v1871
        %v1942 = vadd.f32 %v1595, %v1876
        %v1943 = vadd.f32 %v1598, %v1879
        %v1944 = vadd.f32 %v1603, %v1884
        %v1945 = vadd.f32 %v1606, %v1887
        %v1946 = vadd.f32 %v1611, %v1892
        %v1947 = vadd.f32 %v1614, %v1895
        %v1948 = vadd.f32 %v1619, %v1900
        %v1949 = vadd.f32 %v1622, %v1903
        %v1950 = vadd.f32 %v1627, %v1908
        %v1951 = vadd.f32 %v1630, %v1911
        %v1952 = vadd.f32 %v1635, %v1916
        %v1953 = vadd.f32 %v1638, %v1919
        %v1954 = vadd.f32 %v1643, %v1924
        %v1955 = vadd.f32 %v1646, %v1927
        %v1956 = vadd.f32 %v1651, %v1932
        %v1957 = vadd.f32 %v1654, %v1935
        %s1958 = scalar_lea.vmem [#allocation2], 12
        %v1959 = vld [vmem:[%s1958] sm:$0xf]
        %v1960 = vld [vmem:[%s1958 + $0x4] sm:$0xf]
        %v1961 = vld [vmem:[%s1958 + $0xc] sm:$0xf]
        %v1962 = vld [vmem:[%s1958 + $0x10] sm:$0xf]
        %v1963 = vld [vmem:[%s1958 + $0x18] sm:$0xf]
        %v1964 = vld [vmem:[%s1958 + $0x1c] sm:$0xf]
        %v1965 = vld [vmem:[%s1958 + $0x24] sm:$0xf]
        %v1966 = vld [vmem:[%s1958 + $0x28] sm:$0xf]
        %v1967 = vld [vmem:[%s1958 + $0x30] sm:$0xf]
        %v1968 = vld [vmem:[%s1958 + $0x34] sm:$0xf]
        %v1969 = vld [vmem:[%s1958 + $0x3c] sm:$0xf]
        %v1970 = vld [vmem:[%s1958 + $0x40] sm:$0xf]
        %v1971 = vld [vmem:[%s1958 + $0x48] sm:$0xf]
        %v1972 = vld [vmem:[%s1958 + $0x4c] sm:$0xf]
        %v1973 = vld [vmem:[%s1958 + $0x54] sm:$0xf]
        %v1974 = vld [vmem:[%s1958 + $0x58] sm:$0xf]
        %v1975 = vld [vmem:[%s1958 + $0x60] sm:$0xf]
        %v1976 = vld [vmem:[%s1958 + $0x64] sm:$0xf]
        %v1977 = vld [vmem:[%s1958 + $0x6c] sm:$0xf]
        %v1978 = vld [vmem:[%s1958 + $0x70] sm:$0xf]
        %s1979 = scalar_lea.vmem %s3, 6
        %v1980 = vld [vmem:[%s1979] sm:$0x3]
        %v2001 = vunpack.c.l.b16 %v1959
        %v2002 = vunpack.c.l.b16 %v1960
        %v2003 = vunpack.c.l.b16 %v1961
        %v2004 = vunpack.c.l.b16 %v1962
        %v2005 = vunpack.c.l.b16 %v1963
        %v2006 = vunpack.c.l.b16 %v1964
        %v2007 = vunpack.c.l.b16 %v1965
        %v2008 = vunpack.c.l.b16 %v1966
        %v2009 = vunpack.c.l.b16 %v1967
        %v2010 = vunpack.c.l.b16 %v1968
        %v2011 = vunpack.c.l.b16 %v1969
        %v2012 = vunpack.c.l.b16 %v1970
        %v2013 = vunpack.c.l.b16 %v1971
        %v2014 = vunpack.c.l.b16 %v1972
        %v2015 = vunpack.c.l.b16 %v1973
        %v2016 = vunpack.c.l.b16 %v1974
        %v2017 = vunpack.c.l.b16 %v1975
        %v2018 = vunpack.c.l.b16 %v1976
        %v2019 = vunpack.c.l.b16 %v1977
        %v2020 = vunpack.c.l.b16 %v1978
        %v2021 = vpack.c.b16 %v2002, %v2001
        %v2022 = vpack.c.b16 %v2004, %v2003
        %v2023 = vpack.c.b16 %v2006, %v2005
        %v2024 = vpack.c.b16 %v2008, %v2007
        %v2025 = vpack.c.b16 %v2010, %v2009
        %v2026 = vpack.c.b16 %v2012, %v2011
        %v2027 = vpack.c.b16 %v2014, %v2013
        %v2028 = vpack.c.b16 %v2016, %v2015
        %v2029 = vpack.c.b16 %v2018, %v2017
        %v2030 = vpack.c.b16 %v2020, %v2019
        %v2032 = vsel %vm1313, %v2021, 0
        %v2035 = vsel %vm1313, %v2022, 0
        %v2038 = vsel %vm1313, %v2023, 0
        %v2041 = vsel %vm1313, %v2024, 0
        %v2044 = vsel %vm1313, %v2025, 0
        %v2047 = vsel %vm1313, %v2026, 0
        %v2050 = vsel %vm1313, %v2027, 0
        %v2053 = vsel %vm1313, %v2028, 0
        %v2056 = vsel %vm1313, %v2029, 0
        %v2059 = vsel %vm1313, %v2030, 0
        %v2062 = vsel %vm1344, %v1980, 0
        %2064 = vmatprep.subr.bf16.mxu0 0
        %2065 = vmatpush1.bf16.msra.mxu0 %v2062
        %2066 = vmatprep.subr.bf16.mxu0 0
        %2067 = vmatpush1.bf16.msra.mxu0 0
        %2068 = vmatprep.subr.bf16.mxu0 0
        %2069 = vmatpush1.bf16.msra.mxu0 0
        %2070 = vmatprep.subr.bf16.mxu0 0
        %2071 = vmatpush1.bf16.msra.mxu0 0
        %2072 = vmatprep.subr.bf16.mxu0 0
        %2073 = vmatpush1.bf16.msra.mxu0 0
        %2074 = vmatprep.subr.bf16.mxu0 0
        %2075 = vmatpush1.bf16.msra.mxu0 0
        %2076 = vmatprep.subr.bf16.mxu0 0
        %2077 = vmatpush1.bf16.msra.mxu0 0
        %2078 = vmatprep.subr.bf16.mxu0 0
        %2079 = vmatpush1.bf16.msra.mxu0 0
        %2080 = vmatprep.subr.bf16.mxu0 0
        %2081 = vmatpush1.bf16.msra.mxu0 0
        %2082 = vmatprep.subr.bf16.mxu0 0
        %2083 = vmatpush1.bf16.msra.mxu0 0
        %2084 = vmatprep.subr.bf16.mxu0 0
        %2085 = vmatpush1.bf16.msra.mxu0 0
        %2086 = vmatprep.subr.bf16.mxu0 0
        %2087 = vmatpush1.bf16.msra.mxu0 0
        %2088 = vmatprep.subr.bf16.mxu0 0
        %2089 = vmatpush1.bf16.msra.mxu0 0
        %2090 = vmatprep.subr.bf16.mxu0 0
        %2091 = vmatpush1.bf16.msra.mxu0 0
        %2092 = vmatprep.subr.bf16.mxu0 0
        %2093 = vmatpush1.bf16.msra.mxu0 0
        %2094 = vmatprep.subr.bf16.mxu0 0
        %2095 = vmatpush1.bf16.msra.mxu0 0
        %2096 = vmatprep.mubr.bf16.mxu0 0
        %2097 = vmatmul.mubr.bf16.gmra.mrb[0].mxu0 %v2032
        %v2098 = vpop.f32.mrb[0].mxu0
        %v2099 = vadd.f32 0.0, %v2098
        %v2100 = vpop.f32.mrb[0].mxu0
        %v2101 = vpop.f32.mrb[0].mxu0
        %v2102 = vadd.f32 0.0, %v2101
        %v2103 = vpop.f32.mrb[0].mxu0
        %2104 = vmatprep.mubr.bf16.mxu0 0
        %2105 = vmatmul.mubr.bf16.gmra.mrb[0].mxu0 %v2035
        %v2106 = vpop.f32.mrb[0].mxu0
        %v2107 = vadd.f32 0.0, %v2106
        %v2108 = vpop.f32.mrb[0].mxu0
        %v2109 = vpop.f32.mrb[0].mxu0
        %v2110 = vadd.f32 0.0, %v2109
        %v2111 = vpop.f32.mrb[0].mxu0
        %2112 = vmatprep.mubr.bf16.mxu0 0
        %2113 = vmatmul.mubr.bf16.gmra.mrb[0].mxu0 %v2038
        %v2114 = vpop.f32.mrb[0].mxu0
        %v2115 = vadd.f32 0.0, %v2114
        %v2116 = vpop.f32.mrb[0].mxu0
        %v2117 = vpop.f32.mrb[0].mxu0
        %v2118 = vadd.f32 0.0, %v2117
        %v2119 = vpop.f32.mrb[0].mxu0
        %2120 = vmatprep.mubr.bf16.mxu0 0
        %2121 = vmatmul.mubr.bf16.gmra.mrb[0].mxu0 %v2041
        %v2122 = vpop.f32.mrb[0].mxu0
        %v2123 = vadd.f32 0.0, %v2122
        %v2124 = vpop.f32.mrb[0].mxu0
        %v2125 = vpop.f32.mrb[0].mxu0
        %v2126 = vadd.f32 0.0, %v2125
        %v2127 = vpop.f32.mrb[0].mxu0
        %2128 = vmatprep.mubr.bf16.mxu0 0
        %2129 = vmatmul.mubr.bf16.gmra.mrb[0].mxu0 %v2044
        %v2130 = vpop.f32.mrb[0].mxu0
        %v2131 = vadd.f32 0.0, %v2130
        %v2132 = vpop.f32.mrb[0].mxu0
        %v2133 = vpop.f32.mrb[0].mxu0
        %v2134 = vadd.f32 0.0, %v2133
        %v2135 = vpop.f32.mrb[0].mxu0
        %2136 = vmatprep.mubr.bf16.mxu0 0
        %2137 = vmatmul.mubr.bf16.gmra.mrb[0].mxu0 %v2047
        %v2138 = vpop.f32.mrb[0].mxu0
        %v2139 = vadd.f32 0.0, %v2138
        %v2140 = vpop.f32.mrb[0].mxu0
        %v2141 = vpop.f32.mrb[0].mxu0
        %v2142 = vadd.f32 0.0, %v2141
        %v2143 = vpop.f32.mrb[0].mxu0
        %2144 = vmatprep.mubr.bf16.mxu0 0
        %2145 = vmatmul.mubr.bf16.gmra.mrb[0].mxu0 %v2050
        %v2146 = vpop.f32.mrb[0].mxu0
        %v2147 = vadd.f32 0.0, %v2146
        %v2148 = vpop.f32.mrb[0].mxu0
        %v2149 = vpop.f32.mrb[0].mxu0
        %v2150 = vadd.f32 0.0, %v2149
        %v2151 = vpop.f32.mrb[0].mxu0
        %2152 = vmatprep.mubr.bf16.mxu0 0
        %2153 = vmatmul.mubr.bf16.gmra.mrb[0].mxu0 %v2053
        %v2154 = vpop.f32.mrb[0].mxu0
        %v2155 = vadd.f32 0.0, %v2154
        %v2156 = vpop.f32.mrb[0].mxu0
        %v2157 = vpop.f32.mrb[0].mxu0
        %v2158 = vadd.f32 0.0, %v2157
        %v2159 = vpop.f32.mrb[0].mxu0
        %2160 = vmatprep.mubr.bf16.mxu0 0
        %2161 = vmatmul.mubr.bf16.gmra.mrb[0].mxu0 %v2056
        %v2162 = vpop.f32.mrb[0].mxu0
        %v2163 = vadd.f32 0.0, %v2162
        %v2164 = vpop.f32.mrb[0].mxu0
        %v2165 = vpop.f32.mrb[0].mxu0
        %v2166 = vadd.f32 0.0, %v2165
        %v2167 = vpop.f32.mrb[0].mxu0
        %2168 = vmatprep.mubr.bf16.mxu0 0
        %2169 = vmatmul.mubr.bf16.gmra.mrb[0].mxu0 %v2059
        %v2170 = vpop.f32.mrb[0].mxu0
        %v2171 = vadd.f32 0.0, %v2170
        %v2172 = vpop.f32.mrb[0].mxu0
        %v2173 = vpop.f32.mrb[0].mxu0
        %v2174 = vadd.f32 0.0, %v2173
        %v2175 = vpop.f32.mrb[0].mxu0
        %2176 = vdwg.mxu0
        %v2177 = vadd.f32 %v1938, %v2099
        %v2178 = vadd.f32 %v1939, %v2102
        %v2179 = vadd.f32 %v1940, %v2107
        %v2180 = vadd.f32 %v1941, %v2110
        %v2181 = vadd.f32 %v1942, %v2115
        %v2182 = vadd.f32 %v1943, %v2118
        %v2183 = vadd.f32 %v1944, %v2123
        %v2184 = vadd.f32 %v1945, %v2126
        %v2185 = vadd.f32 %v1946, %v2131
        %v2186 = vadd.f32 %v1947, %v2134
        %v2187 = vadd.f32 %v1948, %v2139
        %v2188 = vadd.f32 %v1949, %v2142
        %v2189 = vadd.f32 %v1950, %v2147
        %v2190 = vadd.f32 %v1951, %v2150
        %v2191 = vadd.f32 %v1952, %v2155
        %v2192 = vadd.f32 %v1953, %v2158
        %v2193 = vadd.f32 %v1954, %v2163
        %v2194 = vadd.f32 %v1955, %v2166
        %v2195 = vadd.f32 %v1956, %v2171
        %v2196 = vadd.f32 %v1957, %v2174
        %v2197 = vld [vmem:[%s1958] sm:$0xf]
        %v2198 = vld [vmem:[%s1958 + $0x4] sm:$0xf]
        %v2199 = vld [vmem:[%s1958 + $0x8] sm:$0x1]
        %v2200 = vld [vmem:[%s1958 + $0xc] sm:$0xf]
        %v2201 = vld [vmem:[%s1958 + $0x10] sm:$0xf]
        %v2202 = vld [vmem:[%s1958 + $0x14] sm:$0x1]
        %v2203 = vld [vmem:[%s1958 + $0x18] sm:$0xf]
        %v2204 = vld [vmem:[%s1958 + $0x1c] sm:$0xf]
        %v2205 = vld [vmem:[%s1958 + $0x20] sm:$0x1]
        %v2206 = vld [vmem:[%s1958 + $0x24] sm:$0xf]
        %v2207 = vld [vmem:[%s1958 + $0x28] sm:$0xf]
        %v2208 = vld [vmem:[%s1958 + $0x2c] sm:$0x1]
        %v2209 = vld [vmem:[%s1958 + $0x30] sm:$0xf]
        %v2210 = vld [vmem:[%s1958 + $0x34] sm:$0xf]
        %v2211 = vld [vmem:[%s1958 + $0x38] sm:$0x1]
        %v2212 = vld [vmem:[%s1958 + $0x3c] sm:$0xf]
        %v2213 = vld [vmem:[%s1958 + $0x40] sm:$0xf]
        %v2214 = vld [vmem:[%s1958 + $0x44] sm:$0x1]
        %v2215 = vld [vmem:[%s1958 + $0x48] sm:$0xf]
        %v2216 = vld [vmem:[%s1958 + $0x4c] sm:$0xf]
        %v2217 = vld [vmem:[%s1958 + $0x50] sm:$0x1]
        %v2218 = vld [vmem:[%s1958 + $0x54] sm:$0xf]
        %v2219 = vld [vmem:[%s1958 + $0x58] sm:$0xf]
        %v2220 = vld [vmem:[%s1958 + $0x5c] sm:$0x1]
        %v2221 = vld [vmem:[%s1958 + $0x60] sm:$0xf]
        %v2222 = vld [vmem:[%s1958 + $0x64] sm:$0xf]
        %v2223 = vld [vmem:[%s1958 + $0x68] sm:$0x1]
        %v2224 = vld [vmem:[%s1958 + $0x6c] sm:$0xf]
        %v2225 = vld [vmem:[%s1958 + $0x70] sm:$0xf]
        %v2226 = vld [vmem:[%s1958 + $0x74] sm:$0x1]
        %v2228 = vshrl.u32 %v2197, 16
        %v2230 = vrot.slane %v2228, 4
        %v2231 = vshll.u32 %v2197, 16
        %v2233 = vrot.slane %v2231, 5
        %v2234 = vor.u32 %v2230, %v2233
        %v2235 = vrot.slane %v2234, 4
        %v2237 = vshll.u32 %v2198, 16
        %v2239 = vrot.slane %v2237, 5
        %v2240 = vsel %vm1040, %v2235, %v2239
        %v2241 = vshrl.u32 %v2198, 16
        %v2243 = vrot.slane %v2241, 4
        %v2244 = vor.u32 %v2243, %v2239
        %v2245 = vrot.slane %v2244, 4
        %v2247 = vshll.u32 %v2199, 16
        %v2249 = vrot.slane %v2247, 5
        %v2250 = vsel %vm1040, %v2245, %v2249
        %v2252 = vshrl.u32 %v2200, 16
        %v2254 = vrot.slane %v2252, 4
        %v2255 = vshll.u32 %v2200, 16
        %v2257 = vrot.slane %v2255, 5
        %v2258 = vor.u32 %v2254, %v2257
        %v2259 = vrot.slane %v2258, 4
        %v2261 = vshll.u32 %v2201, 16
        %v2263 = vrot.slane %v2261, 5
        %v2264 = vsel %vm1040, %v2259, %v2263
        %v2265 = vshrl.u32 %v2201, 16
        %v2267 = vrot.slane %v2265, 4
        %v2268 = vor.u32 %v2267, %v2263
        %v2269 = vrot.slane %v2268, 4
        %v2271 = vshll.u32 %v2202, 16
        %v2273 = vrot.slane %v2271, 5
        %v2274 = vsel %vm1040, %v2269, %v2273
        %v2276 = vshrl.u32 %v2203, 16
        %v2278 = vrot.slane %v2276, 4
        %v2279 = vshll.u32 %v2203, 16
        %v2281 = vrot.slane %v2279, 5
        %v2282 = vor.u32 %v2278, %v2281
        %v2283 = vrot.slane %v2282, 4
        %v2285 = vshll.u32 %v2204, 16
        %v2287 = vrot.slane %v2285, 5
        %v2288 = vsel %vm1040, %v2283, %v2287
        %v2289 = vshrl.u32 %v2204, 16
        %v2291 = vrot.slane %v2289, 4
        %v2292 = vor.u32 %v2291, %v2287
        %v2293 = vrot.slane %v2292, 4
        %v2295 = vshll.u32 %v2205, 16
        %v2297 = vrot.slane %v2295, 5
        %v2298 = vsel %vm1040, %v2293, %v2297
        %v2300 = vshrl.u32 %v2206, 16
        %v2302 = vrot.slane %v2300, 4
        %v2303 = vshll.u32 %v2206, 16
        %v2305 = vrot.slane %v2303, 5
        %v2306 = vor.u32 %v2302, %v2305
        %v2307 = vrot.slane %v2306, 4
        %v2309 = vshll.u32 %v2207, 16
        %v2311 = vrot.slane %v2309, 5
        %v2312 = vsel %vm1040, %v2307, %v2311
        %v2313 = vshrl.u32 %v2207, 16
        %v2315 = vrot.slane %v2313, 4
        %v2316 = vor.u32 %v2315, %v2311
        %v2317 = vrot.slane %v2316, 4
        %v2319 = vshll.u32 %v2208, 16
        %v2321 = vrot.slane %v2319, 5
        %v2322 = vsel %vm1040, %v2317, %v2321
        %v2324 = vshrl.u32 %v2209, 16
        %v2326 = vrot.slane %v2324, 4
        %v2327 = vshll.u32 %v2209, 16
        %v2329 = vrot.slane %v2327, 5
        %v2330 = vor.u32 %v2326, %v2329
        %v2331 = vrot.slane %v2330, 4
        %v2333 = vshll.u32 %v2210, 16
        %v2335 = vrot.slane %v2333, 5
        %v2336 = vsel %vm1040, %v2331, %v2335
        %v2337 = vshrl.u32 %v2210, 16
        %v2339 = vrot.slane %v2337, 4
        %v2340 = vor.u32 %v2339, %v2335
        %v2341 = vrot.slane %v2340, 4
        %v2343 = vshll.u32 %v2211, 16
        %v2345 = vrot.slane %v2343, 5
        %v2346 = vsel %vm1040, %v2341, %v2345
        %v2348 = vshrl.u32 %v2212, 16
        %v2350 = vrot.slane %v2348, 4
        %v2351 = vshll.u32 %v2212, 16
        %v2353 = vrot.slane %v2351, 5
        %v2354 = vor.u32 %v2350, %v2353
        %v2355 = vrot.slane %v2354, 4
        %v2357 = vshll.u32 %v2213, 16
        %v2359 = vrot.slane %v2357, 5
        %v2360 = vsel %vm1040, %v2355, %v2359
        %v2361 = vshrl.u32 %v2213, 16
        %v2363 = vrot.slane %v2361, 4
        %v2364 = vor.u32 %v2363, %v2359
        %v2365 = vrot.slane %v2364, 4
        %v2367 = vshll.u32 %v2214, 16
        %v2369 = vrot.slane %v2367, 5
        %v2370 = vsel %vm1040, %v2365, %v2369
        %v2372 = vshrl.u32 %v2215, 16
        %v2374 = vrot.slane %v2372, 4
        %v2375 = vshll.u32 %v2215, 16
        %v2377 = vrot.slane %v2375, 5
        %v2378 = vor.u32 %v2374, %v2377
        %v2379 = vrot.slane %v2378, 4
        %v2381 = vshll.u32 %v2216, 16
        %v2383 = vrot.slane %v2381, 5
        %v2384 = vsel %vm1040, %v2379, %v2383
        %v2385 = vshrl.u32 %v2216, 16
        %v2387 = vrot.slane %v2385, 4
        %v2388 = vor.u32 %v2387, %v2383
        %v2389 = vrot.slane %v2388, 4
        %v2391 = vshll.u32 %v2217, 16
        %v2393 = vrot.slane %v2391, 5
        %v2394 = vsel %vm1040, %v2389, %v2393
        %v2396 = vshrl.u32 %v2218, 16
        %v2398 = vrot.slane %v2396, 4
        %v2399 = vshll.u32 %v2218, 16
        %v2401 = vrot.slane %v2399, 5
        %v2402 = vor.u32 %v2398, %v2401
        %v2403 = vrot.slane %v2402, 4
        %v2405 = vshll.u32 %v2219, 16
        %v2407 = vrot.slane %v2405, 5
        %v2408 = vsel %vm1040, %v2403, %v2407
        %v2409 = vshrl.u32 %v2219, 16
        %v2411 = vrot.slane %v2409, 4
        %v2412 = vor.u32 %v2411, %v2407
        %v2413 = vrot.slane %v2412, 4
        %v2415 = vshll.u32 %v2220, 16
        %v2417 = vrot.slane %v2415, 5
        %v2418 = vsel %vm1040, %v2413, %v2417
        %v2420 = vshrl.u32 %v2221, 16
        %v2422 = vrot.slane %v2420, 4
        %v2423 = vshll.u32 %v2221, 16
        %v2425 = vrot.slane %v2423, 5
        %v2426 = vor.u32 %v2422, %v2425
        %v2427 = vrot.slane %v2426, 4
        %v2429 = vshll.u32 %v2222, 16
        %v2431 = vrot.slane %v2429, 5
        %v2432 = vsel %vm1040, %v2427, %v2431
        %v2433 = vshrl.u32 %v2222, 16
        %v2435 = vrot.slane %v2433, 4
        %v2436 = vor.u32 %v2435, %v2431
        %v2437 = vrot.slane %v2436, 4
        %v2439 = vshll.u32 %v2223, 16
        %v2441 = vrot.slane %v2439, 5
        %v2442 = vsel %vm1040, %v2437, %v2441
        %v2444 = vshrl.u32 %v2224, 16
        %v2446 = vrot.slane %v2444, 4
        %v2447 = vshll.u32 %v2224, 16
        %v2449 = vrot.slane %v2447, 5
        %v2450 = vor.u32 %v2446, %v2449
        %v2451 = vrot.slane %v2450, 4
        %v2453 = vshll.u32 %v2225, 16
        %v2455 = vrot.slane %v2453, 5
        %v2456 = vsel %vm1040, %v2451, %v2455
        %v2457 = vshrl.u32 %v2225, 16
        %v2459 = vrot.slane %v2457, 4
        %v2460 = vor.u32 %v2459, %v2455
        %v2461 = vrot.slane %v2460, 4
        %v2463 = vshll.u32 %v2226, 16
        %v2465 = vrot.slane %v2463, 5
        %v2466 = vsel %vm1040, %v2461, %v2465
        %s2467 = scalar_lea.vmem %s3, 8
        %v2468 = vld [vmem:[%s2467] sm:$0x3]
        %v2469 = vunpack.c.l.b16 %v2240
        %v2470 = vunpack.c.l.b16 %v2250
        %v2471 = vunpack.c.l.b16 %v2264
        %v2472 = vunpack.c.l.b16 %v2274
        %v2473 = vunpack.c.l.b16 %v2288
        %v2474 = vunpack.c.l.b16 %v2298
        %v2475 = vunpack.c.l.b16 %v2312
        %v2476 = vunpack.c.l.b16 %v2322
        %v2477 = vunpack.c.l.b16 %v2336
        %v2478 = vunpack.c.l.b16 %v2346
        %v2479 = vunpack.c.l.b16 %v2360
        %v2480 = vunpack.c.l.b16 %v2370
        %v2481 = vunpack.c.l.b16 %v2384
        %v2482 = vunpack.c.l.b16 %v2394
        %v2483 = vunpack.c.l.b16 %v2408
        %v2484 = vunpack.c.l.b16 %v2418
        %v2485 = vunpack.c.l.b16 %v2432
        %v2486 = vunpack.c.l.b16 %v2442
        %v2487 = vunpack.c.l.b16 %v2456
        %v2488 = vunpack.c.l.b16 %v2466
        %v2489 = vpack.c.b16 %v2470, %v2469
        %v2490 = vpack.c.b16 %v2472, %v2471
        %v2491 = vpack.c.b16 %v2474, %v2473
        %v2492 = vpack.c.b16 %v2476, %v2475
        %v2493 = vpack.c.b16 %v2478, %v2477
        %v2494 = vpack.c.b16 %v2480, %v2479
        %v2495 = vpack.c.b16 %v2482, %v2481
        %v2496 = vpack.c.b16 %v2484, %v2483
        %v2497 = vpack.c.b16 %v2486, %v2485
        %v2498 = vpack.c.b16 %v2488, %v2487
        %v2500 = vsel %vm1313, %v2489, 0
        %v2503 = vsel %vm1313, %v2490, 0
        %v2506 = vsel %vm1313, %v2491, 0
        %v2509 = vsel %vm1313, %v2492, 0
        %v2512 = vsel %vm1313, %v2493, 0
        %v2515 = vsel %vm1313, %v2494, 0
        %v2518 = vsel %vm1313, %v2495, 0
        %v2521 = vsel %vm1313, %v2496, 0
        %v2524 = vsel %vm1313, %v2497, 0
        %v2527 = vsel %vm1313, %v2498, 0
        %v2530 = vsel %vm1344, %v2468, 0
        %2532 = vmatprep.subr.bf16.mxu0 0
        %2533 = vmatpush1.bf16.msra.mxu0 %v2530
        %2534 = vmatprep.subr.bf16.mxu0 0
        %2535 = vmatpush1.bf16.msra.mxu0 0
        %2536 = vmatprep.subr.bf16.mxu0 0
        %2537 = vmatpush1.bf16.msra.mxu0 0
        %2538 = vmatprep.subr.bf16.mxu0 0
        %2539 = vmatpush1.bf16.msra.mxu0 0
        %2540 = vmatprep.subr.bf16.mxu0 0
        %2541 = vmatpush1.bf16.msra.mxu0 0
        %2542 = vmatprep.subr.bf16.mxu0 0
        %2543 = vmatpush1.bf16.msra.mxu0 0
        %2544 = vmatprep.subr.bf16.mxu0 0
        %2545 = vmatpush1.bf16.msra.mxu0 0
        %2546 = vmatprep.subr.bf16.mxu0 0
        %2547 = vmatpush1.bf16.msra.mxu0 0
        %2548 = vmatprep.subr.bf16.mxu0 0
        %2549 = vmatpush1.bf16.msra.mxu0 0
        %2550 = vmatprep.subr.bf16.mxu0 0
        %2551 = vmatpush1.bf16.msra.mxu0 0
        %2552 = vmatprep.subr.bf16.mxu0 0
        %2553 = vmatpush1.bf16.msra.mxu0 0
        %2554 = vmatprep.subr.bf16.mxu0 0
        %2555 = vmatpush1.bf16.msra.mxu0 0
        %2556 = vmatprep.subr.bf16.mxu0 0
        %2557 = vmatpush1.bf16.msra.mxu0 0
        %2558 = vmatprep.subr.bf16.mxu0 0
        %2559 = vmatpush1.bf16.msra.mxu0 0
        %2560 = vmatprep.subr.bf16.mxu0 0
        %2561 = vmatpush1.bf16.msra.mxu0 0
        %2562 = vmatprep.subr.bf16.mxu0 0
        %2563 = vmatpush1.bf16.msra.mxu0 0
        %2564 = vmatprep.mubr.bf16.mxu0 0
        %2565 = vmatmul.mubr.bf16.gmra.mrb[0].mxu0 %v2500
        %v2566 = vpop.f32.mrb[0].mxu0
        %v2567 = vadd.f32 0.0, %v2566
        %v2568 = vpop.f32.mrb[0].mxu0
        %v2569 = vpop.f32.mrb[0].mxu0
        %v2570 = vadd.f32 0.0, %v2569
        %v2571 = vpop.f32.mrb[0].mxu0
        %2572 = vmatprep.mubr.bf16.mxu0 0
        %2573 = vmatmul.mubr.bf16.gmra.mrb[0].mxu0 %v2503
        %v2574 = vpop.f32.mrb[0].mxu0
        %v2575 = vadd.f32 0.0, %v2574
        %v2576 = vpop.f32.mrb[0].mxu0
        %v2577 = vpop.f32.mrb[0].mxu0
        %v2578 = vadd.f32 0.0, %v2577
        %v2579 = vpop.f32.mrb[0].mxu0
        %2580 = vmatprep.mubr.bf16.mxu0 0
        %2581 = vmatmul.mubr.bf16.gmra.mrb[0].mxu0 %v2506
        %v2582 = vpop.f32.mrb[0].mxu0
        %v2583 = vadd.f32 0.0, %v2582
        %v2584 = vpop.f32.mrb[0].mxu0
        %v2585 = vpop.f32.mrb[0].mxu0
        %v2586 = vadd.f32 0.0, %v2585
        %v2587 = vpop.f32.mrb[0].mxu0
        %2588 = vmatprep.mubr.bf16.mxu0 0
        %2589 = vmatmul.mubr.bf16.gmra.mrb[0].mxu0 %v2509
        %v2590 = vpop.f32.mrb[0].mxu0
        %v2591 = vadd.f32 0.0, %v2590
        %v2592 = vpop.f32.mrb[0].mxu0
        %v2593 = vpop.f32.mrb[0].mxu0
        %v2594 = vadd.f32 0.0, %v2593
        %v2595 = vpop.f32.mrb[0].mxu0
        %2596 = vmatprep.mubr.bf16.mxu0 0
        %2597 = vmatmul.mubr.bf16.gmra.mrb[0].mxu0 %v2512
        %v2598 = vpop.f32.mrb[0].mxu0
        %v2599 = vadd.f32 0.0, %v2598
        %v2600 = vpop.f32.mrb[0].mxu0
        %v2601 = vpop.f32.mrb[0].mxu0
        %v2602 = vadd.f32 0.0, %v2601
        %v2603 = vpop.f32.mrb[0].mxu0
        %2604 = vmatprep.mubr.bf16.mxu0 0
        %2605 = vmatmul.mubr.bf16.gmra.mrb[0].mxu0 %v2515
        %v2606 = vpop.f32.mrb[0].mxu0
        %v2607 = vadd.f32 0.0, %v2606
        %v2608 = vpop.f32.mrb[0].mxu0
        %v2609 = vpop.f32.mrb[0].mxu0
        %v2610 = vadd.f32 0.0, %v2609
        %v2611 = vpop.f32.mrb[0].mxu0
        %2612 = vmatprep.mubr.bf16.mxu0 0
        %2613 = vmatmul.mubr.bf16.gmra.mrb[0].mxu0 %v2518
        %v2614 = vpop.f32.mrb[0].mxu0
        %v2615 = vadd.f32 0.0, %v2614
        %v2616 = vpop.f32.mrb[0].mxu0
        %v2617 = vpop.f32.mrb[0].mxu0
        %v2618 = vadd.f32 0.0, %v2617
        %v2619 = vpop.f32.mrb[0].mxu0
        %2620 = vmatprep.mubr.bf16.mxu0 0
        %2621 = vmatmul.mubr.bf16.gmra.mrb[0].mxu0 %v2521
        %v2622 = vpop.f32.mrb[0].mxu0
        %v2623 = vadd.f32 0.0, %v2622
        %v2624 = vpop.f32.mrb[0].mxu0
        %v2625 = vpop.f32.mrb[0].mxu0
        %v2626 = vadd.f32 0.0, %v2625
        %v2627 = vpop.f32.mrb[0].mxu0
        %2628 = vmatprep.mubr.bf16.mxu0 0
        %2629 = vmatmul.mubr.bf16.gmra.mrb[0].mxu0 %v2524
        %v2630 = vpop.f32.mrb[0].mxu0
        %v2631 = vadd.f32 0.0, %v2630
        %v2632 = vpop.f32.mrb[0].mxu0
        %v2633 = vpop.f32.mrb[0].mxu0
        %v2634 = vadd.f32 0.0, %v2633
        %v2635 = vpop.f32.mrb[0].mxu0
        %2636 = vmatprep.mubr.bf16.mxu0 0
        %2637 = vmatmul.mubr.bf16.gmra.mrb[0].mxu0 %v2527
        %v2638 = vpop.f32.mrb[0].mxu0
        %v2639 = vadd.f32 0.0, %v2638
        %v2640 = vpop.f32.mrb[0].mxu0
        %v2641 = vpop.f32.mrb[0].mxu0
        %v2642 = vadd.f32 0.0, %v2641
        %v2643 = vpop.f32.mrb[0].mxu0
        %2644 = vdwg.mxu0
        %v2645 = vadd.f32 %v2177, %v2567
        %v2646 = vadd.f32 %v2178, %v2570
        %v2647 = vadd.f32 %v2179, %v2575
        %v2648 = vadd.f32 %v2180, %v2578
        %v2649 = vadd.f32 %v2181, %v2583
        %v2650 = vadd.f32 %v2182, %v2586
        %v2651 = vadd.f32 %v2183, %v2591
        %v2652 = vadd.f32 %v2184, %v2594
        %v2653 = vadd.f32 %v2185, %v2599
        %v2654 = vadd.f32 %v2186, %v2602
        %v2655 = vadd.f32 %v2187, %v2607
        %v2656 = vadd.f32 %v2188, %v2610
        %v2657 = vadd.f32 %v2189, %v2615
        %v2658 = vadd.f32 %v2190, %v2618
        %v2659 = vadd.f32 %v2191, %v2623
        %v2660 = vadd.f32 %v2192, %v2626
        %v2661 = vadd.f32 %v2193, %v2631
        %v2662 = vadd.f32 %v2194, %v2634
        %v2663 = vadd.f32 %v2195, %v2639
        %v2664 = vadd.f32 %v2196, %v2642
        %v2665 = vld [vmem:[%s1958] sm:$0xe]
        %v2666 = vld [vmem:[%s1958 + $0xc] sm:$0xe]
        %v2667 = vld [vmem:[%s1958 + $0x18] sm:$0xe]
        %v2668 = vld [vmem:[%s1958 + $0x24] sm:$0xe]
        %v2669 = vld [vmem:[%s1958 + $0x30] sm:$0xe]
        %v2670 = vld [vmem:[%s1958 + $0x3c] sm:$0xe]
        %v2671 = vld [vmem:[%s1958 + $0x48] sm:$0xe]
        %v2672 = vld [vmem:[%s1958 + $0x54] sm:$0xe]
        %v2673 = vld [vmem:[%s1958 + $0x60] sm:$0xe]
        %v2674 = vld [vmem:[%s1958 + $0x6c] sm:$0xe]
        %v2705 = vrot.slane %v2665, 5
        %v2706 = vrot.slane %v2705, 4
        %v2707 = vrot.slane %v2198, 5
        %v2708 = vsel %vm1689, %v2706, %v2707
        %v2709 = vrot.slane %v2707, 4
        %v2710 = vrot.slane %v2199, 5
        %v2711 = vsel %vm1689, %v2709, %v2710
        %v2712 = vrot.slane %v2666, 5
        %v2713 = vrot.slane %v2712, 4
        %v2714 = vrot.slane %v2201, 5
        %v2715 = vsel %vm1689, %v2713, %v2714
        %v2716 = vrot.slane %v2714, 4
        %v2717 = vrot.slane %v2202, 5
        %v2718 = vsel %vm1689, %v2716, %v2717
        %v2719 = vrot.slane %v2667, 5
        %v2720 = vrot.slane %v2719, 4
        %v2721 = vrot.slane %v2204, 5
        %v2722 = vsel %vm1689, %v2720, %v2721
        %v2723 = vrot.slane %v2721, 4
        %v2724 = vrot.slane %v2205, 5
        %v2725 = vsel %vm1689, %v2723, %v2724
        %v2726 = vrot.slane %v2668, 5
        %v2727 = vrot.slane %v2726, 4
        %v2728 = vrot.slane %v2207, 5
        %v2729 = vsel %vm1689, %v2727, %v2728
        %v2730 = vrot.slane %v2728, 4
        %v2731 = vrot.slane %v2208, 5
        %v2732 = vsel %vm1689, %v2730, %v2731
        %v2733 = vrot.slane %v2669, 5
        %v2734 = vrot.slane %v2733, 4
        %v2735 = vrot.slane %v2210, 5
        %v2736 = vsel %vm1689, %v2734, %v2735
        %v2737 = vrot.slane %v2735, 4
        %v2738 = vrot.slane %v2211, 5
        %v2739 = vsel %vm1689, %v2737, %v2738
        %v2740 = vrot.slane %v2670, 5
        %v2741 = vrot.slane %v2740, 4
        %v2742 = vrot.slane %v2213, 5
        %v2743 = vsel %vm1689, %v2741, %v2742
        %v2744 = vrot.slane %v2742, 4
        %v2745 = vrot.slane %v2214, 5
        %v2746 = vsel %vm1689, %v2744, %v2745
        %v2747 = vrot.slane %v2671, 5
        %v2748 = vrot.slane %v2747, 4
        %v2749 = vrot.slane %v2216, 5
        %v2750 = vsel %vm1689, %v2748, %v2749
        %v2751 = vrot.slane %v2749, 4
        %v2752 = vrot.slane %v2217, 5
        %v2753 = vsel %vm1689, %v2751, %v2752
        %v2754 = vrot.slane %v2672, 5
        %v2755 = vrot.slane %v2754, 4
        %v2756 = vrot.slane %v2219, 5
        %v2757 = vsel %vm1689, %v2755, %v2756
        %v2758 = vrot.slane %v2756, 4
        %v2759 = vrot.slane %v2220, 5
        %v2760 = vsel %vm1689, %v2758, %v2759
        %v2761 = vrot.slane %v2673, 5
        %v2762 = vrot.slane %v2761, 4
        %v2763 = vrot.slane %v2222, 5
        %v2764 = vsel %vm1689, %v2762, %v2763
        %v2765 = vrot.slane %v2763, 4
        %v2766 = vrot.slane %v2223, 5
        %v2767 = vsel %vm1689, %v2765, %v2766
        %v2768 = vrot.slane %v2674, 5
        %v2769 = vrot.slane %v2768, 4
        %v2770 = vrot.slane %v2225, 5
        %v2771 = vsel %vm1689, %v2769, %v2770
        %v2772 = vrot.slane %v2770, 4
        %v2773 = vrot.slane %v2226, 5
        %v2774 = vsel %vm1689, %v2772, %v2773
        %s2775 = scalar_lea.vmem %s3, 10
        %v2776 = vld [vmem:[%s2775] sm:$0x3]
        %v2777 = vunpack.c.l.b16 %v2708
        %v2778 = vunpack.c.l.b16 %v2711
        %v2779 = vunpack.c.l.b16 %v2715
        %v2780 = vunpack.c.l.b16 %v2718
        %v2781 = vunpack.c.l.b16 %v2722
        %v2782 = vunpack.c.l.b16 %v2725
        %v2783 = vunpack.c.l.b16 %v2729
        %v2784 = vunpack.c.l.b16 %v2732
        %v2785 = vunpack.c.l.b16 %v2736
        %v2786 = vunpack.c.l.b16 %v2739
        %v2787 = vunpack.c.l.b16 %v2743
        %v2788 = vunpack.c.l.b16 %v2746
        %v2789 = vunpack.c.l.b16 %v2750
        %v2790 = vunpack.c.l.b16 %v2753
        %v2791 = vunpack.c.l.b16 %v2757
        %v2792 = vunpack.c.l.b16 %v2760
        %v2793 = vunpack.c.l.b16 %v2764
        %v2794 = vunpack.c.l.b16 %v2767
        %v2795 = vunpack.c.l.b16 %v2771
        %v2796 = vunpack.c.l.b16 %v2774
        %v2797 = vpack.c.b16 %v2778, %v2777
        %v2798 = vpack.c.b16 %v2780, %v2779
        %v2799 = vpack.c.b16 %v2782, %v2781
        %v2800 = vpack.c.b16 %v2784, %v2783
        %v2801 = vpack.c.b16 %v2786, %v2785
        %v2802 = vpack.c.b16 %v2788, %v2787
        %v2803 = vpack.c.b16 %v2790, %v2789
        %v2804 = vpack.c.b16 %v2792, %v2791
        %v2805 = vpack.c.b16 %v2794, %v2793
        %v2806 = vpack.c.b16 %v2796, %v2795
        %v2808 = vsel %vm1313, %v2797, 0
        %v2811 = vsel %vm1313, %v2798, 0
        %v2814 = vsel %vm1313, %v2799, 0
        %v2817 = vsel %vm1313, %v2800, 0
        %v2820 = vsel %vm1313, %v2801, 0
        %v2823 = vsel %vm1313, %v2802, 0
        %v2826 = vsel %vm1313, %v2803, 0
        %v2829 = vsel %vm1313, %v2804, 0
        %v2832 = vsel %vm1313, %v2805, 0
        %v2835 = vsel %vm1313, %v2806, 0
        %v2838 = vsel %vm1344, %v2776, 0
        %2840 = vmatprep.subr.bf16.mxu0 0
        %2841 = vmatpush1.bf16.msra.mxu0 %v2838
        %2842 = vmatprep.subr.bf16.mxu0 0
        %2843 = vmatpush1.bf16.msra.mxu0 0
        %2844 = vmatprep.subr.bf16.mxu0 0
        %2845 = vmatpush1.bf16.msra.mxu0 0
        %2846 = vmatprep.subr.bf16.mxu0 0
        %2847 = vmatpush1.bf16.msra.mxu0 0
        %2848 = vmatprep.subr.bf16.mxu0 0
        %2849 = vmatpush1.bf16.msra.mxu0 0
        %2850 = vmatprep.subr.bf16.mxu0 0
        %2851 = vmatpush1.bf16.msra.mxu0 0
        %2852 = vmatprep.subr.bf16.mxu0 0
        %2853 = vmatpush1.bf16.msra.mxu0 0
        %2854 = vmatprep.subr.bf16.mxu0 0
        %2855 = vmatpush1.bf16.msra.mxu0 0
        %2856 = vmatprep.subr.bf16.mxu0 0
        %2857 = vmatpush1.bf16.msra.mxu0 0
        %2858 = vmatprep.subr.bf16.mxu0 0
        %2859 = vmatpush1.bf16.msra.mxu0 0
        %2860 = vmatprep.subr.bf16.mxu0 0
        %2861 = vmatpush1.bf16.msra.mxu0 0
        %2862 = vmatprep.subr.bf16.mxu0 0
        %2863 = vmatpush1.bf16.msra.mxu0 0
        %2864 = vmatprep.subr.bf16.mxu0 0
        %2865 = vmatpush1.bf16.msra.mxu0 0
        %2866 = vmatprep.subr.bf16.mxu0 0
        %2867 = vmatpush1.bf16.msra.mxu0 0
        %2868 = vmatprep.subr.bf16.mxu0 0
        %2869 = vmatpush1.bf16.msra.mxu0 0
        %2870 = vmatprep.subr.bf16.mxu0 0
        %2871 = vmatpush1.bf16.msra.mxu0 0
        %2872 = vmatprep.mubr.bf16.mxu0 0
        %2873 = vmatmul.mubr.bf16.gmra.mrb[0].mxu0 %v2808
        %v2874 = vpop.f32.mrb[0].mxu0
        %v2875 = vadd.f32 0.0, %v2874
        %v2876 = vpop.f32.mrb[0].mxu0
        %v2877 = vpop.f32.mrb[0].mxu0
        %v2878 = vadd.f32 0.0, %v2877
        %v2879 = vpop.f32.mrb[0].mxu0
        %2880 = vmatprep.mubr.bf16.mxu0 0
        %2881 = vmatmul.mubr.bf16.gmra.mrb[0].mxu0 %v2811
        %v2882 = vpop.f32.mrb[0].mxu0
        %v2883 = vadd.f32 0.0, %v2882
        %v2884 = vpop.f32.mrb[0].mxu0
        %v2885 = vpop.f32.mrb[0].mxu0
        %v2886 = vadd.f32 0.0, %v2885
        %v2887 = vpop.f32.mrb[0].mxu0
        %2888 = vmatprep.mubr.bf16.mxu0 0
        %2889 = vmatmul.mubr.bf16.gmra.mrb[0].mxu0 %v2814
        %v2890 = vpop.f32.mrb[0].mxu0
        %v2891 = vadd.f32 0.0, %v2890
        %v2892 = vpop.f32.mrb[0].mxu0
        %v2893 = vpop.f32.mrb[0].mxu0
        %v2894 = vadd.f32 0.0, %v2893
        %v2895 = vpop.f32.mrb[0].mxu0
        %2896 = vmatprep.mubr.bf16.mxu0 0
        %2897 = vmatmul.mubr.bf16.gmra.mrb[0].mxu0 %v2817
        %v2898 = vpop.f32.mrb[0].mxu0
        %v2899 = vadd.f32 0.0, %v2898
        %v2900 = vpop.f32.mrb[0].mxu0
        %v2901 = vpop.f32.mrb[0].mxu0
        %v2902 = vadd.f32 0.0, %v2901
        %v2903 = vpop.f32.mrb[0].mxu0
        %2904 = vmatprep.mubr.bf16.mxu0 0
        %2905 = vmatmul.mubr.bf16.gmra.mrb[0].mxu0 %v2820
        %v2906 = vpop.f32.mrb[0].mxu0
        %v2907 = vadd.f32 0.0, %v2906
        %v2908 = vpop.f32.mrb[0].mxu0
        %v2909 = vpop.f32.mrb[0].mxu0
        %v2910 = vadd.f32 0.0, %v2909
        %v2911 = vpop.f32.mrb[0].mxu0
        %2912 = vmatprep.mubr.bf16.mxu0 0
        %2913 = vmatmul.mubr.bf16.gmra.mrb[0].mxu0 %v2823
        %v2914 = vpop.f32.mrb[0].mxu0
        %v2915 = vadd.f32 0.0, %v2914
        %v2916 = vpop.f32.mrb[0].mxu0
        %v2917 = vpop.f32.mrb[0].mxu0
        %v2918 = vadd.f32 0.0, %v2917
        %v2919 = vpop.f32.mrb[0].mxu0
        %2920 = vmatprep.mubr.bf16.mxu0 0
        %2921 = vmatmul.mubr.bf16.gmra.mrb[0].mxu0 %v2826
        %v2922 = vpop.f32.mrb[0].mxu0
        %v2923 = vadd.f32 0.0, %v2922
        %v2924 = vpop.f32.mrb[0].mxu0
        %v2925 = vpop.f32.mrb[0].mxu0
        %v2926 = vadd.f32 0.0, %v2925
        %v2927 = vpop.f32.mrb[0].mxu0
        %2928 = vmatprep.mubr.bf16.mxu0 0
        %2929 = vmatmul.mubr.bf16.gmra.mrb[0].mxu0 %v2829
        %v2930 = vpop.f32.mrb[0].mxu0
        %v2931 = vadd.f32 0.0, %v2930
        %v2932 = vpop.f32.mrb[0].mxu0
        %v2933 = vpop.f32.mrb[0].mxu0
        %v2934 = vadd.f32 0.0, %v2933
        %v2935 = vpop.f32.mrb[0].mxu0
        %2936 = vmatprep.mubr.bf16.mxu0 0
        %2937 = vmatmul.mubr.bf16.gmra.mrb[0].mxu0 %v2832
        %v2938 = vpop.f32.mrb[0].mxu0
        %v2939 = vadd.f32 0.0, %v2938
        %v2940 = vpop.f32.mrb[0].mxu0
        %v2941 = vpop.f32.mrb[0].mxu0
        %v2942 = vadd.f32 0.0, %v2941
        %v2943 = vpop.f32.mrb[0].mxu0
        %2944 = vmatprep.mubr.bf16.mxu0 0
        %2945 = vmatmul.mubr.bf16.gmra.mrb[0].mxu0 %v2835
        %v2946 = vpop.f32.mrb[0].mxu0
        %v2947 = vadd.f32 0.0, %v2946
        %v2948 = vpop.f32.mrb[0].mxu0
        %v2949 = vpop.f32.mrb[0].mxu0
        %v2950 = vadd.f32 0.0, %v2949
        %v2951 = vpop.f32.mrb[0].mxu0
        %2952 = vdwg.mxu0
        %v2953 = vadd.f32 %v2645, %v2875
        %v2954 = vadd.f32 %v2646, %v2878
        %v2955 = vadd.f32 %v2647, %v2883
        %v2956 = vadd.f32 %v2648, %v2886
        %v2957 = vadd.f32 %v2649, %v2891
        %v2958 = vadd.f32 %v2650, %v2894
        %v2959 = vadd.f32 %v2651, %v2899
        %v2960 = vadd.f32 %v2652, %v2902
        %v2961 = vadd.f32 %v2653, %v2907
        %v2962 = vadd.f32 %v2654, %v2910
        %v2963 = vadd.f32 %v2655, %v2915
        %v2964 = vadd.f32 %v2656, %v2918
        %v2965 = vadd.f32 %v2657, %v2923
        %v2966 = vadd.f32 %v2658, %v2926
        %v2967 = vadd.f32 %v2659, %v2931
        %v2968 = vadd.f32 %v2660, %v2934
        %v2969 = vadd.f32 %v2661, %v2939
        %v2970 = vadd.f32 %v2662, %v2942
        %v2971 = vadd.f32 %v2663, %v2947
        %v2972 = vadd.f32 %v2664, %v2950
        %v2973 = vld [vmem:[%s753] sm:$0xf]
        %v2974 = vld [vmem:[%s753 + $0x4] sm:$0xf]
        %v2975 = vld [vmem:[%s753 + $0xc] sm:$0xf]
        %v2976 = vld [vmem:[%s753 + $0x10] sm:$0xf]
        %v2977 = vld [vmem:[%s753 + $0x18] sm:$0xf]
        %v2978 = vld [vmem:[%s753 + $0x1c] sm:$0xf]
        %v2979 = vld [vmem:[%s753 + $0x24] sm:$0xf]
        %v2980 = vld [vmem:[%s753 + $0x28] sm:$0xf]
        %v2981 = vld [vmem:[%s753 + $0x30] sm:$0xf]
        %v2982 = vld [vmem:[%s753 + $0x34] sm:$0xf]
        %v2983 = vld [vmem:[%s753 + $0x3c] sm:$0xf]
        %v2984 = vld [vmem:[%s753 + $0x40] sm:$0xf]
        %v2985 = vld [vmem:[%s753 + $0x48] sm:$0xf]
        %v2986 = vld [vmem:[%s753 + $0x4c] sm:$0xf]
        %v2987 = vld [vmem:[%s753 + $0x54] sm:$0xf]
        %v2988 = vld [vmem:[%s753 + $0x58] sm:$0xf]
        %v2989 = vld [vmem:[%s753 + $0x60] sm:$0xf]
        %v2990 = vld [vmem:[%s753 + $0x64] sm:$0xf]
        %v2991 = vld [vmem:[%s753 + $0x6c] sm:$0xf]
        %v2992 = vld [vmem:[%s753 + $0x70] sm:$0xf]
        %s2993 = scalar_lea.vmem %s3, 12
        %v2994 = vld [vmem:[%s2993] sm:$0x3]
        %v3015 = vunpack.c.l.b16 %v2973
        %v3016 = vunpack.c.l.b16 %v2974
        %v3017 = vunpack.c.l.b16 %v2975
        %v3018 = vunpack.c.l.b16 %v2976
        %v3019 = vunpack.c.l.b16 %v2977
        %v3020 = vunpack.c.l.b16 %v2978
        %v3021 = vunpack.c.l.b16 %v2979
        %v3022 = vunpack.c.l.b16 %v2980
        %v3023 = vunpack.c.l.b16 %v2981
        %v3024 = vunpack.c.l.b16 %v2982
        %v3025 = vunpack.c.l.b16 %v2983
        %v3026 = vunpack.c.l.b16 %v2984
        %v3027 = vunpack.c.l.b16 %v2985
        %v3028 = vunpack.c.l.b16 %v2986
        %v3029 = vunpack.c.l.b16 %v2987
        %v3030 = vunpack.c.l.b16 %v2988
        %v3031 = vunpack.c.l.b16 %v2989
        %v3032 = vunpack.c.l.b16 %v2990
        %v3033 = vunpack.c.l.b16 %v2991
        %v3034 = vunpack.c.l.b16 %v2992
        %v3035 = vpack.c.b16 %v3016, %v3015
        %v3036 = vpack.c.b16 %v3018, %v3017
        %v3037 = vpack.c.b16 %v3020, %v3019
        %v3038 = vpack.c.b16 %v3022, %v3021
        %v3039 = vpack.c.b16 %v3024, %v3023
        %v3040 = vpack.c.b16 %v3026, %v3025
        %v3041 = vpack.c.b16 %v3028, %v3027
        %v3042 = vpack.c.b16 %v3030, %v3029
        %v3043 = vpack.c.b16 %v3032, %v3031
        %v3044 = vpack.c.b16 %v3034, %v3033
        %v3046 = vsel %vm1313, %v3035, 0
        %v3049 = vsel %vm1313, %v3036, 0
        %v3052 = vsel %vm1313, %v3037, 0
        %v3055 = vsel %vm1313, %v3038, 0
        %v3058 = vsel %vm1313, %v3039, 0
        %v3061 = vsel %vm1313, %v3040, 0
        %v3064 = vsel %vm1313, %v3041, 0
        %v3067 = vsel %vm1313, %v3042, 0
        %v3070 = vsel %vm1313, %v3043, 0
        %v3073 = vsel %vm1313, %v3044, 0
        %v3076 = vsel %vm1344, %v2994, 0
        %3078 = vmatprep.subr.bf16.mxu0 0
        %3079 = vmatpush1.bf16.msra.mxu0 %v3076
        %3080 = vmatprep.subr.bf16.mxu0 0
        %3081 = vmatpush1.bf16.msra.mxu0 0
        %3082 = vmatprep.subr.bf16.mxu0 0
        %3083 = vmatpush1.bf16.msra.mxu0 0
        %3084 = vmatprep.subr.bf16.mxu0 0
        %3085 = vmatpush1.bf16.msra.mxu0 0
        %3086 = vmatprep.subr.bf16.mxu0 0
        %3087 = vmatpush1.bf16.msra.mxu0 0
        %3088 = vmatprep.subr.bf16.mxu0 0
        %3089 = vmatpush1.bf16.msra.mxu0 0
        %3090 = vmatprep.subr.bf16.mxu0 0
        %3091 = vmatpush1.bf16.msra.mxu0 0
        %3092 = vmatprep.subr.bf16.mxu0 0
        %3093 = vmatpush1.bf16.msra.mxu0 0
        %3094 = vmatprep.subr.bf16.mxu0 0
        %3095 = vmatpush1.bf16.msra.mxu0 0
        %3096 = vmatprep.subr.bf16.mxu0 0
        %3097 = vmatpush1.bf16.msra.mxu0 0
        %3098 = vmatprep.subr.bf16.mxu0 0
        %3099 = vmatpush1.bf16.msra.mxu0 0
        %3100 = vmatprep.subr.bf16.mxu0 0
        %3101 = vmatpush1.bf16.msra.mxu0 0
        %3102 = vmatprep.subr.bf16.mxu0 0
        %3103 = vmatpush1.bf16.msra.mxu0 0
        %3104 = vmatprep.subr.bf16.mxu0 0
        %3105 = vmatpush1.bf16.msra.mxu0 0
        %3106 = vmatprep.subr.bf16.mxu0 0
        %3107 = vmatpush1.bf16.msra.mxu0 0
        %3108 = vmatprep.subr.bf16.mxu0 0
        %3109 = vmatpush1.bf16.msra.mxu0 0
        %3110 = vmatprep.mubr.bf16.mxu0 0
        %3111 = vmatmul.mubr.bf16.gmra.mrb[0].mxu0 %v3046
        %v3112 = vpop.f32.mrb[0].mxu0
        %v3113 = vadd.f32 0.0, %v3112
        %v3114 = vpop.f32.mrb[0].mxu0
        %v3115 = vpop.f32.mrb[0].mxu0
        %v3116 = vadd.f32 0.0, %v3115
        %v3117 = vpop.f32.mrb[0].mxu0
        %3118 = vmatprep.mubr.bf16.mxu0 0
        %3119 = vmatmul.mubr.bf16.gmra.mrb[0].mxu0 %v3049
        %v3120 = vpop.f32.mrb[0].mxu0
        %v3121 = vadd.f32 0.0, %v3120
        %v3122 = vpop.f32.mrb[0].mxu0
        %v3123 = vpop.f32.mrb[0].mxu0
        %v3124 = vadd.f32 0.0, %v3123
        %v3125 = vpop.f32.mrb[0].mxu0
        %3126 = vmatprep.mubr.bf16.mxu0 0
        %3127 = vmatmul.mubr.bf16.gmra.mrb[0].mxu0 %v3052
        %v3128 = vpop.f32.mrb[0].mxu0
        %v3129 = vadd.f32 0.0, %v3128
        %v3130 = vpop.f32.mrb[0].mxu0
        %v3131 = vpop.f32.mrb[0].mxu0
        %v3132 = vadd.f32 0.0, %v3131
        %v3133 = vpop.f32.mrb[0].mxu0
        %3134 = vmatprep.mubr.bf16.mxu0 0
        %3135 = vmatmul.mubr.bf16.gmra.mrb[0].mxu0 %v3055
        %v3136 = vpop.f32.mrb[0].mxu0
        %v3137 = vadd.f32 0.0, %v3136
        %v3138 = vpop.f32.mrb[0].mxu0
        %v3139 = vpop.f32.mrb[0].mxu0
        %v3140 = vadd.f32 0.0, %v3139
        %v3141 = vpop.f32.mrb[0].mxu0
        %3142 = vmatprep.mubr.bf16.mxu0 0
        %3143 = vmatmul.mubr.bf16.gmra.mrb[0].mxu0 %v3058
        %v3144 = vpop.f32.mrb[0].mxu0
        %v3145 = vadd.f32 0.0, %v3144
        %v3146 = vpop.f32.mrb[0].mxu0
        %v3147 = vpop.f32.mrb[0].mxu0
        %v3148 = vadd.f32 0.0, %v3147
        %v3149 = vpop.f32.mrb[0].mxu0
        %3150 = vmatprep.mubr.bf16.mxu0 0
        %3151 = vmatmul.mubr.bf16.gmra.mrb[0].mxu0 %v3061
        %v3152 = vpop.f32.mrb[0].mxu0
        %v3153 = vadd.f32 0.0, %v3152
        %v3154 = vpop.f32.mrb[0].mxu0
        %v3155 = vpop.f32.mrb[0].mxu0
        %v3156 = vadd.f32 0.0, %v3155
        %v3157 = vpop.f32.mrb[0].mxu0
        %3158 = vmatprep.mubr.bf16.mxu0 0
        %3159 = vmatmul.mubr.bf16.gmra.mrb[0].mxu0 %v3064
        %v3160 = vpop.f32.mrb[0].mxu0
        %v3161 = vadd.f32 0.0, %v3160
        %v3162 = vpop.f32.mrb[0].mxu0
        %v3163 = vpop.f32.mrb[0].mxu0
        %v3164 = vadd.f32 0.0, %v3163
        %v3165 = vpop.f32.mrb[0].mxu0
        %3166 = vmatprep.mubr.bf16.mxu0 0
        %3167 = vmatmul.mubr.bf16.gmra.mrb[0].mxu0 %v3067
        %v3168 = vpop.f32.mrb[0].mxu0
        %v3169 = vadd.f32 0.0, %v3168
        %v3170 = vpop.f32.mrb[0].mxu0
        %v3171 = vpop.f32.mrb[0].mxu0
        %v3172 = vadd.f32 0.0, %v3171
        %v3173 = vpop.f32.mrb[0].mxu0
        %3174 = vmatprep.mubr.bf16.mxu0 0
        %3175 = vmatmul.mubr.bf16.gmra.mrb[0].mxu0 %v3070
        %v3176 = vpop.f32.mrb[0].mxu0
        %v3177 = vadd.f32 0.0, %v3176
        %v3178 = vpop.f32.mrb[0].mxu0
        %v3179 = vpop.f32.mrb[0].mxu0
        %v3180 = vadd.f32 0.0, %v3179
        %v3181 = vpop.f32.mrb[0].mxu0
        %3182 = vmatprep.mubr.bf16.mxu0 0
        %3183 = vmatmul.mubr.bf16.gmra.mrb[0].mxu0 %v3073
        %v3184 = vpop.f32.mrb[0].mxu0
        %v3185 = vadd.f32 0.0, %v3184
        %v3186 = vpop.f32.mrb[0].mxu0
        %v3187 = vpop.f32.mrb[0].mxu0
        %v3188 = vadd.f32 0.0, %v3187
        %v3189 = vpop.f32.mrb[0].mxu0
        %3190 = vdwg.mxu0
        %v3191 = vadd.f32 %v2953, %v3113
        %v3192 = vadd.f32 %v2954, %v3116
        %v3193 = vadd.f32 %v2955, %v3121
        %v3194 = vadd.f32 %v2956, %v3124
        %v3195 = vadd.f32 %v2957, %v3129
        %v3196 = vadd.f32 %v2958, %v3132
        %v3197 = vadd.f32 %v2959, %v3137
        %v3198 = vadd.f32 %v2960, %v3140
        %v3199 = vadd.f32 %v2961, %v3145
        %v3200 = vadd.f32 %v2962, %v3148
        %v3201 = vadd.f32 %v2963, %v3153
        %v3202 = vadd.f32 %v2964, %v3156
        %v3203 = vadd.f32 %v2965, %v3161
        %v3204 = vadd.f32 %v2966, %v3164
        %v3205 = vadd.f32 %v2967, %v3169
        %v3206 = vadd.f32 %v2968, %v3172
        %v3207 = vadd.f32 %v2969, %v3177
        %v3208 = vadd.f32 %v2970, %v3180
        %v3209 = vadd.f32 %v2971, %v3185
        %v3210 = vadd.f32 %v2972, %v3188
        %v3211 = vld [vmem:[%s753] sm:$0xf]
        %v3212 = vld [vmem:[%s753 + $0x4] sm:$0xf]
        %v3213 = vld [vmem:[%s753 + $0x8] sm:$0x1]
        %v3214 = vld [vmem:[%s753 + $0xc] sm:$0xf]
        %v3215 = vld [vmem:[%s753 + $0x10] sm:$0xf]
        %v3216 = vld [vmem:[%s753 + $0x14] sm:$0x1]
        %v3217 = vld [vmem:[%s753 + $0x18] sm:$0xf]
        %v3218 = vld [vmem:[%s753 + $0x1c] sm:$0xf]
        %v3219 = vld [vmem:[%s753 + $0x20] sm:$0x1]
        %v3220 = vld [vmem:[%s753 + $0x24] sm:$0xf]
        %v3221 = vld [vmem:[%s753 + $0x28] sm:$0xf]
        %v3222 = vld [vmem:[%s753 + $0x2c] sm:$0x1]
        %v3223 = vld [vmem:[%s753 + $0x30] sm:$0xf]
        %v3224 = vld [vmem:[%s753 + $0x34] sm:$0xf]
        %v3225 = vld [vmem:[%s753 + $0x38] sm:$0x1]
        %v3226 = vld [vmem:[%s753 + $0x3c] sm:$0xf]
        %v3227 = vld [vmem:[%s753 + $0x40] sm:$0xf]
        %v3228 = vld [vmem:[%s753 + $0x44] sm:$0x1]
        %v3229 = vld [vmem:[%s753 + $0x48] sm:$0xf]
        %v3230 = vld [vmem:[%s753 + $0x4c] sm:$0xf]
        %v3231 = vld [vmem:[%s753 + $0x50] sm:$0x1]
        %v3232 = vld [vmem:[%s753 + $0x54] sm:$0xf]
        %v3233 = vld [vmem:[%s753 + $0x58] sm:$0xf]
        %v3234 = vld [vmem:[%s753 + $0x5c] sm:$0x1]
        %v3235 = vld [vmem:[%s753 + $0x60] sm:$0xf]
        %v3236 = vld [vmem:[%s753 + $0x64] sm:$0xf]
        %v3237 = vld [vmem:[%s753 + $0x68] sm:$0x1]
        %v3238 = vld [vmem:[%s753 + $0x6c] sm:$0xf]
        %v3239 = vld [vmem:[%s753 + $0x70] sm:$0xf]
        %v3240 = vld [vmem:[%s753 + $0x74] sm:$0x1]
        %v3242 = vshrl.u32 %v3211, 16
        %v3244 = vrot.slane %v3242, 4
        %v3245 = vshll.u32 %v3211, 16
        %v3247 = vrot.slane %v3245, 5
        %v3248 = vor.u32 %v3244, %v3247
        %v3249 = vrot.slane %v3248, 4
        %v3251 = vshll.u32 %v3212, 16
        %v3253 = vrot.slane %v3251, 5
        %v3254 = vsel %vm1040, %v3249, %v3253
        %v3255 = vshrl.u32 %v3212, 16
        %v3257 = vrot.slane %v3255, 4
        %v3258 = vor.u32 %v3257, %v3253
        %v3259 = vrot.slane %v3258, 4
        %v3261 = vshll.u32 %v3213, 16
        %v3263 = vrot.slane %v3261, 5
        %v3264 = vsel %vm1040, %v3259, %v3263
        %v3266 = vshrl.u32 %v3214, 16
        %v3268 = vrot.slane %v3266, 4
        %v3269 = vshll.u32 %v3214, 16
        %v3271 = vrot.slane %v3269, 5
        %v3272 = vor.u32 %v3268, %v3271
        %v3273 = vrot.slane %v3272, 4
        %v3275 = vshll.u32 %v3215, 16
        %v3277 = vrot.slane %v3275, 5
        %v3278 = vsel %vm1040, %v3273, %v3277
        %v3279 = vshrl.u32 %v3215, 16
        %v3281 = vrot.slane %v3279, 4
        %v3282 = vor.u32 %v3281, %v3277
        %v3283 = vrot.slane %v3282, 4
        %v3285 = vshll.u32 %v3216, 16
        %v3287 = vrot.slane %v3285, 5
        %v3288 = vsel %vm1040, %v3283, %v3287
        %v3290 = vshrl.u32 %v3217, 16
        %v3292 = vrot.slane %v3290, 4
        %v3293 = vshll.u32 %v3217, 16
        %v3295 = vrot.slane %v3293, 5
        %v3296 = vor.u32 %v3292, %v3295
        %v3297 = vrot.slane %v3296, 4
        %v3299 = vshll.u32 %v3218, 16
        %v3301 = vrot.slane %v3299, 5
        %v3302 = vsel %vm1040, %v3297, %v3301
        %v3303 = vshrl.u32 %v3218, 16
        %v3305 = vrot.slane %v3303, 4
        %v3306 = vor.u32 %v3305, %v3301
        %v3307 = vrot.slane %v3306, 4
        %v3309 = vshll.u32 %v3219, 16
        %v3311 = vrot.slane %v3309, 5
        %v3312 = vsel %vm1040, %v3307, %v3311
        %v3314 = vshrl.u32 %v3220, 16
        %v3316 = vrot.slane %v3314, 4
        %v3317 = vshll.u32 %v3220, 16
        %v3319 = vrot.slane %v3317, 5
        %v3320 = vor.u32 %v3316, %v3319
        %v3321 = vrot.slane %v3320, 4
        %v3323 = vshll.u32 %v3221, 16
        %v3325 = vrot.slane %v3323, 5
        %v3326 = vsel %vm1040, %v3321, %v3325
        %v3327 = vshrl.u32 %v3221, 16
        %v3329 = vrot.slane %v3327, 4
        %v3330 = vor.u32 %v3329, %v3325
        %v3331 = vrot.slane %v3330, 4
        %v3333 = vshll.u32 %v3222, 16
        %v3335 = vrot.slane %v3333, 5
        %v3336 = vsel %vm1040, %v3331, %v3335
        %v3338 = vshrl.u32 %v3223, 16
        %v3340 = vrot.slane %v3338, 4
        %v3341 = vshll.u32 %v3223, 16
        %v3343 = vrot.slane %v3341, 5
        %v3344 = vor.u32 %v3340, %v3343
        %v3345 = vrot.slane %v3344, 4
        %v3347 = vshll.u32 %v3224, 16
        %v3349 = vrot.slane %v3347, 5
        %v3350 = vsel %vm1040, %v3345, %v3349
        %v3351 = vshrl.u32 %v3224, 16
        %v3353 = vrot.slane %v3351, 4
        %v3354 = vor.u32 %v3353, %v3349
        %v3355 = vrot.slane %v3354, 4
        %v3357 = vshll.u32 %v3225, 16
        %v3359 = vrot.slane %v3357, 5
        %v3360 = vsel %vm1040, %v3355, %v3359
        %v3362 = vshrl.u32 %v3226, 16
        %v3364 = vrot.slane %v3362, 4
        %v3365 = vshll.u32 %v3226, 16
        %v3367 = vrot.slane %v3365, 5
        %v3368 = vor.u32 %v3364, %v3367
        %v3369 = vrot.slane %v3368, 4
        %v3371 = vshll.u32 %v3227, 16
        %v3373 = vrot.slane %v3371, 5
        %v3374 = vsel %vm1040, %v3369, %v3373
        %v3375 = vshrl.u32 %v3227, 16
        %v3377 = vrot.slane %v3375, 4
        %v3378 = vor.u32 %v3377, %v3373
        %v3379 = vrot.slane %v3378, 4
        %v3381 = vshll.u32 %v3228, 16
        %v3383 = vrot.slane %v3381, 5
        %v3384 = vsel %vm1040, %v3379, %v3383
        %v3386 = vshrl.u32 %v3229, 16
        %v3388 = vrot.slane %v3386, 4
        %v3389 = vshll.u32 %v3229, 16
        %v3391 = vrot.slane %v3389, 5
        %v3392 = vor.u32 %v3388, %v3391
        %v3393 = vrot.slane %v3392, 4
        %v3395 = vshll.u32 %v3230, 16
        %v3397 = vrot.slane %v3395, 5
        %v3398 = vsel %vm1040, %v3393, %v3397
        %v3399 = vshrl.u32 %v3230, 16
        %v3401 = vrot.slane %v3399, 4
        %v3402 = vor.u32 %v3401, %v3397
        %v3403 = vrot.slane %v3402, 4
        %v3405 = vshll.u32 %v3231, 16
        %v3407 = vrot.slane %v3405, 5
        %v3408 = vsel %vm1040, %v3403, %v3407
        %v3410 = vshrl.u32 %v3232, 16
        %v3412 = vrot.slane %v3410, 4
        %v3413 = vshll.u32 %v3232, 16
        %v3415 = vrot.slane %v3413, 5
        %v3416 = vor.u32 %v3412, %v3415
        %v3417 = vrot.slane %v3416, 4
        %v3419 = vshll.u32 %v3233, 16
        %v3421 = vrot.slane %v3419, 5
        %v3422 = vsel %vm1040, %v3417, %v3421
        %v3423 = vshrl.u32 %v3233, 16
        %v3425 = vrot.slane %v3423, 4
        %v3426 = vor.u32 %v3425, %v3421
        %v3427 = vrot.slane %v3426, 4
        %v3429 = vshll.u32 %v3234, 16
        %v3431 = vrot.slane %v3429, 5
        %v3432 = vsel %vm1040, %v3427, %v3431
        %v3434 = vshrl.u32 %v3235, 16
        %v3436 = vrot.slane %v3434, 4
        %v3437 = vshll.u32 %v3235, 16
        %v3439 = vrot.slane %v3437, 5
        %v3440 = vor.u32 %v3436, %v3439
        %v3441 = vrot.slane %v3440, 4
        %v3443 = vshll.u32 %v3236, 16
        %v3445 = vrot.slane %v3443, 5
        %v3446 = vsel %vm1040, %v3441, %v3445
        %v3447 = vshrl.u32 %v3236, 16
        %v3449 = vrot.slane %v3447, 4
        %v3450 = vor.u32 %v3449, %v3445
        %v3451 = vrot.slane %v3450, 4
        %v3453 = vshll.u32 %v3237, 16
        %v3455 = vrot.slane %v3453, 5
        %v3456 = vsel %vm1040, %v3451, %v3455
        %v3458 = vshrl.u32 %v3238, 16
        %v3460 = vrot.slane %v3458, 4
        %v3461 = vshll.u32 %v3238, 16
        %v3463 = vrot.slane %v3461, 5
        %v3464 = vor.u32 %v3460, %v3463
        %v3465 = vrot.slane %v3464, 4
        %v3467 = vshll.u32 %v3239, 16
        %v3469 = vrot.slane %v3467, 5
        %v3470 = vsel %vm1040, %v3465, %v3469
        %v3471 = vshrl.u32 %v3239, 16
        %v3473 = vrot.slane %v3471, 4
        %v3474 = vor.u32 %v3473, %v3469
        %v3475 = vrot.slane %v3474, 4
        %v3477 = vshll.u32 %v3240, 16
        %v3479 = vrot.slane %v3477, 5
        %v3480 = vsel %vm1040, %v3475, %v3479
        %s3481 = scalar_lea.vmem %s3, 14
        %v3482 = vld [vmem:[%s3481] sm:$0x3]
        %v3483 = vunpack.c.l.b16 %v3254
        %v3484 = vunpack.c.l.b16 %v3264
        %v3485 = vunpack.c.l.b16 %v3278
        %v3486 = vunpack.c.l.b16 %v3288
        %v3487 = vunpack.c.l.b16 %v3302
        %v3488 = vunpack.c.l.b16 %v3312
        %v3489 = vunpack.c.l.b16 %v3326
        %v3490 = vunpack.c.l.b16 %v3336
        %v3491 = vunpack.c.l.b16 %v3350
        %v3492 = vunpack.c.l.b16 %v3360
        %v3493 = vunpack.c.l.b16 %v3374
        %v3494 = vunpack.c.l.b16 %v3384
        %v3495 = vunpack.c.l.b16 %v3398
        %v3496 = vunpack.c.l.b16 %v3408
        %v3497 = vunpack.c.l.b16 %v3422
        %v3498 = vunpack.c.l.b16 %v3432
        %v3499 = vunpack.c.l.b16 %v3446
        %v3500 = vunpack.c.l.b16 %v3456
        %v3501 = vunpack.c.l.b16 %v3470
        %v3502 = vunpack.c.l.b16 %v3480
        %v3503 = vpack.c.b16 %v3484, %v3483
        %v3504 = vpack.c.b16 %v3486, %v3485
        %v3505 = vpack.c.b16 %v3488, %v3487
        %v3506 = vpack.c.b16 %v3490, %v3489
        %v3507 = vpack.c.b16 %v3492, %v3491
        %v3508 = vpack.c.b16 %v3494, %v3493
        %v3509 = vpack.c.b16 %v3496, %v3495
        %v3510 = vpack.c.b16 %v3498, %v3497
        %v3511 = vpack.c.b16 %v3500, %v3499
        %v3512 = vpack.c.b16 %v3502, %v3501
        %v3514 = vsel %vm1313, %v3503, 0
        %v3517 = vsel %vm1313, %v3504, 0
        %v3520 = vsel %vm1313, %v3505, 0
        %v3523 = vsel %vm1313, %v3506, 0
        %v3526 = vsel %vm1313, %v3507, 0
        %v3529 = vsel %vm1313, %v3508, 0
        %v3532 = vsel %vm1313, %v3509, 0
        %v3535 = vsel %vm1313, %v3510, 0
        %v3538 = vsel %vm1313, %v3511, 0
        %v3541 = vsel %vm1313, %v3512, 0
        %v3544 = vsel %vm1344, %v3482, 0
        %3546 = vmatprep.subr.bf16.mxu0 0
        %3547 = vmatpush1.bf16.msra.mxu0 %v3544
        %3548 = vmatprep.subr.bf16.mxu0 0
        %3549 = vmatpush1.bf16.msra.mxu0 0
        %3550 = vmatprep.subr.bf16.mxu0 0
        %3551 = vmatpush1.bf16.msra.mxu0 0
        %3552 = vmatprep.subr.bf16.mxu0 0
        %3553 = vmatpush1.bf16.msra.mxu0 0
        %3554 = vmatprep.subr.bf16.mxu0 0
        %3555 = vmatpush1.bf16.msra.mxu0 0
        %3556 = vmatprep.subr.bf16.mxu0 0
        %3557 = vmatpush1.bf16.msra.mxu0 0
        %3558 = vmatprep.subr.bf16.mxu0 0
        %3559 = vmatpush1.bf16.msra.mxu0 0
        %3560 = vmatprep.subr.bf16.mxu0 0
        %3561 = vmatpush1.bf16.msra.mxu0 0
        %3562 = vmatprep.subr.bf16.mxu0 0
        %3563 = vmatpush1.bf16.msra.mxu0 0
        %3564 = vmatprep.subr.bf16.mxu0 0
        %3565 = vmatpush1.bf16.msra.mxu0 0
        %3566 = vmatprep.subr.bf16.mxu0 0
        %3567 = vmatpush1.bf16.msra.mxu0 0
        %3568 = vmatprep.subr.bf16.mxu0 0
        %3569 = vmatpush1.bf16.msra.mxu0 0
        %3570 = vmatprep.subr.bf16.mxu0 0
        %3571 = vmatpush1.bf16.msra.mxu0 0
        %3572 = vmatprep.subr.bf16.mxu0 0
        %3573 = vmatpush1.bf16.msra.mxu0 0
        %3574 = vmatprep.subr.bf16.mxu0 0
        %3575 = vmatpush1.bf16.msra.mxu0 0
        %3576 = vmatprep.subr.bf16.mxu0 0
        %3577 = vmatpush1.bf16.msra.mxu0 0
        %3578 = vmatprep.mubr.bf16.mxu0 0
        %3579 = vmatmul.mubr.bf16.gmra.mrb[0].mxu0 %v3514
        %v3580 = vpop.f32.mrb[0].mxu0
        %v3581 = vadd.f32 0.0, %v3580
        %v3582 = vpop.f32.mrb[0].mxu0
        %v3583 = vpop.f32.mrb[0].mxu0
        %v3584 = vadd.f32 0.0, %v3583
        %v3585 = vpop.f32.mrb[0].mxu0
        %3586 = vmatprep.mubr.bf16.mxu0 0
        %3587 = vmatmul.mubr.bf16.gmra.mrb[0].mxu0 %v3517
        %v3588 = vpop.f32.mrb[0].mxu0
        %v3589 = vadd.f32 0.0, %v3588
        %v3590 = vpop.f32.mrb[0].mxu0
        %v3591 = vpop.f32.mrb[0].mxu0
        %v3592 = vadd.f32 0.0, %v3591
        %v3593 = vpop.f32.mrb[0].mxu0
        %3594 = vmatprep.mubr.bf16.mxu0 0
        %3595 = vmatmul.mubr.bf16.gmra.mrb[0].mxu0 %v3520
        %v3596 = vpop.f32.mrb[0].mxu0
        %v3597 = vadd.f32 0.0, %v3596
        %v3598 = vpop.f32.mrb[0].mxu0
        %v3599 = vpop.f32.mrb[0].mxu0
        %v3600 = vadd.f32 0.0, %v3599
        %v3601 = vpop.f32.mrb[0].mxu0
        %3602 = vmatprep.mubr.bf16.mxu0 0
        %3603 = vmatmul.mubr.bf16.gmra.mrb[0].mxu0 %v3523
        %v3604 = vpop.f32.mrb[0].mxu0
        %v3605 = vadd.f32 0.0, %v3604
        %v3606 = vpop.f32.mrb[0].mxu0
        %v3607 = vpop.f32.mrb[0].mxu0
        %v3608 = vadd.f32 0.0, %v3607
        %v3609 = vpop.f32.mrb[0].mxu0
        %3610 = vmatprep.mubr.bf16.mxu0 0
        %3611 = vmatmul.mubr.bf16.gmra.mrb[0].mxu0 %v3526
        %v3612 = vpop.f32.mrb[0].mxu0
        %v3613 = vadd.f32 0.0, %v3612
        %v3614 = vpop.f32.mrb[0].mxu0
        %v3615 = vpop.f32.mrb[0].mxu0
        %v3616 = vadd.f32 0.0, %v3615
        %v3617 = vpop.f32.mrb[0].mxu0
        %3618 = vmatprep.mubr.bf16.mxu0 0
        %3619 = vmatmul.mubr.bf16.gmra.mrb[0].mxu0 %v3529
        %v3620 = vpop.f32.mrb[0].mxu0
        %v3621 = vadd.f32 0.0, %v3620
        %v3622 = vpop.f32.mrb[0].mxu0
        %v3623 = vpop.f32.mrb[0].mxu0
        %v3624 = vadd.f32 0.0, %v3623
        %v3625 = vpop.f32.mrb[0].mxu0
        %3626 = vmatprep.mubr.bf16.mxu0 0
        %3627 = vmatmul.mubr.bf16.gmra.mrb[0].mxu0 %v3532
        %v3628 = vpop.f32.mrb[0].mxu0
        %v3629 = vadd.f32 0.0, %v3628
        %v3630 = vpop.f32.mrb[0].mxu0
        %v3631 = vpop.f32.mrb[0].mxu0
        %v3632 = vadd.f32 0.0, %v3631
        %v3633 = vpop.f32.mrb[0].mxu0
        %3634 = vmatprep.mubr.bf16.mxu0 0
        %3635 = vmatmul.mubr.bf16.gmra.mrb[0].mxu0 %v3535
        %v3636 = vpop.f32.mrb[0].mxu0
        %v3637 = vadd.f32 0.0, %v3636
        %v3638 = vpop.f32.mrb[0].mxu0
        %v3639 = vpop.f32.mrb[0].mxu0
        %v3640 = vadd.f32 0.0, %v3639
        %v3641 = vpop.f32.mrb[0].mxu0
        %3642 = vmatprep.mubr.bf16.mxu0 0
        %3643 = vmatmul.mubr.bf16.gmra.mrb[0].mxu0 %v3538
        %v3644 = vpop.f32.mrb[0].mxu0
        %v3645 = vadd.f32 0.0, %v3644
        %v3646 = vpop.f32.mrb[0].mxu0
        %v3647 = vpop.f32.mrb[0].mxu0
        %v3648 = vadd.f32 0.0, %v3647
        %v3649 = vpop.f32.mrb[0].mxu0
        %3650 = vmatprep.mubr.bf16.mxu0 0
        %3651 = vmatmul.mubr.bf16.gmra.mrb[0].mxu0 %v3541
        %v3652 = vpop.f32.mrb[0].mxu0
        %v3653 = vadd.f32 0.0, %v3652
        %v3654 = vpop.f32.mrb[0].mxu0
        %v3655 = vpop.f32.mrb[0].mxu0
        %v3656 = vadd.f32 0.0, %v3655
        %v3657 = vpop.f32.mrb[0].mxu0
        %3658 = vdwg.mxu0
        %v3659 = vadd.f32 %v3191, %v3581
        %v3660 = vadd.f32 %v3192, %v3584
        %v3661 = vadd.f32 %v3193, %v3589
        %v3662 = vadd.f32 %v3194, %v3592
        %v3663 = vadd.f32 %v3195, %v3597
        %v3664 = vadd.f32 %v3196, %v3600
        %v3665 = vadd.f32 %v3197, %v3605
        %v3666 = vadd.f32 %v3198, %v3608
        %v3667 = vadd.f32 %v3199, %v3613
        %v3668 = vadd.f32 %v3200, %v3616
        %v3669 = vadd.f32 %v3201, %v3621
        %v3670 = vadd.f32 %v3202, %v3624
        %v3671 = vadd.f32 %v3203, %v3629
        %v3672 = vadd.f32 %v3204, %v3632
        %v3673 = vadd.f32 %v3205, %v3637
        %v3674 = vadd.f32 %v3206, %v3640
        %v3675 = vadd.f32 %v3207, %v3645
        %v3676 = vadd.f32 %v3208, %v3648
        %v3677 = vadd.f32 %v3209, %v3653
        %v3678 = vadd.f32 %v3210, %v3656
        %v3679 = vld [vmem:[%s753] sm:$0xe]
        %v3680 = vld [vmem:[%s753 + $0xc] sm:$0xe]
        %v3681 = vld [vmem:[%s753 + $0x18] sm:$0xe]
        %v3682 = vld [vmem:[%s753 + $0x24] sm:$0xe]
        %v3683 = vld [vmem:[%s753 + $0x30] sm:$0xe]
        %v3684 = vld [vmem:[%s753 + $0x3c] sm:$0xe]
        %v3685 = vld [vmem:[%s753 + $0x48] sm:$0xe]
        %v3686 = vld [vmem:[%s753 + $0x54] sm:$0xe]
        %v3687 = vld [vmem:[%s753 + $0x60] sm:$0xe]
        %v3688 = vld [vmem:[%s753 + $0x6c] sm:$0xe]
        %v3719 = vrot.slane %v3679, 5
        %v3720 = vrot.slane %v3719, 4
        %v3721 = vrot.slane %v3212, 5
        %v3722 = vsel %vm1689, %v3720, %v3721
        %v3723 = vrot.slane %v3721, 4
        %v3724 = vrot.slane %v3213, 5
        %v3725 = vsel %vm1689, %v3723, %v3724
        %v3726 = vrot.slane %v3680, 5
        %v3727 = vrot.slane %v3726, 4
        %v3728 = vrot.slane %v3215, 5
        %v3729 = vsel %vm1689, %v3727, %v3728
        %v3730 = vrot.slane %v3728, 4
        %v3731 = vrot.slane %v3216, 5
        %v3732 = vsel %vm1689, %v3730, %v3731
        %v3733 = vrot.slane %v3681, 5
        %v3734 = vrot.slane %v3733, 4
        %v3735 = vrot.slane %v3218, 5
        %v3736 = vsel %vm1689, %v3734, %v3735
        %v3737 = vrot.slane %v3735, 4
        %v3738 = vrot.slane %v3219, 5
        %v3739 = vsel %vm1689, %v3737, %v3738
        %v3740 = vrot.slane %v3682, 5
        %v3741 = vrot.slane %v3740, 4
        %v3742 = vrot.slane %v3221, 5
        %v3743 = vsel %vm1689, %v3741, %v3742
        %v3744 = vrot.slane %v3742, 4
        %v3745 = vrot.slane %v3222, 5
        %v3746 = vsel %vm1689, %v3744, %v3745
        %v3747 = vrot.slane %v3683, 5
        %v3748 = vrot.slane %v3747, 4
        %v3749 = vrot.slane %v3224, 5
        %v3750 = vsel %vm1689, %v3748, %v3749
        %v3751 = vrot.slane %v3749, 4
        %v3752 = vrot.slane %v3225, 5
        %v3753 = vsel %vm1689, %v3751, %v3752
        %v3754 = vrot.slane %v3684, 5
        %v3755 = vrot.slane %v3754, 4
        %v3756 = vrot.slane %v3227, 5
        %v3757 = vsel %vm1689, %v3755, %v3756
        %v3758 = vrot.slane %v3756, 4
        %v3759 = vrot.slane %v3228, 5
        %v3760 = vsel %vm1689, %v3758, %v3759
        %v3761 = vrot.slane %v3685, 5
        %v3762 = vrot.slane %v3761, 4
        %v3763 = vrot.slane %v3230, 5
        %v3764 = vsel %vm1689, %v3762, %v3763
        %v3765 = vrot.slane %v3763, 4
        %v3766 = vrot.slane %v3231, 5
        %v3767 = vsel %vm1689, %v3765, %v3766
        %v3768 = vrot.slane %v3686, 5
        %v3769 = vrot.slane %v3768, 4
        %v3770 = vrot.slane %v3233, 5
        %v3771 = vsel %vm1689, %v3769, %v3770
        %v3772 = vrot.slane %v3770, 4
        %v3773 = vrot.slane %v3234, 5
        %v3774 = vsel %vm1689, %v3772, %v3773
        %v3775 = vrot.slane %v3687, 5
        %v3776 = vrot.slane %v3775, 4
        %v3777 = vrot.slane %v3236, 5
        %v3778 = vsel %vm1689, %v3776, %v3777
        %v3779 = vrot.slane %v3777, 4
        %v3780 = vrot.slane %v3237, 5
        %v3781 = vsel %vm1689, %v3779, %v3780
        %v3782 = vrot.slane %v3688, 5
        %v3783 = vrot.slane %v3782, 4
        %v3784 = vrot.slane %v3239, 5
        %v3785 = vsel %vm1689, %v3783, %v3784
        %v3786 = vrot.slane %v3784, 4
        %v3787 = vrot.slane %v3240, 5
        %v3788 = vsel %vm1689, %v3786, %v3787
        %s3789 = scalar_lea.vmem %s3, 16
        %v3790 = vld [vmem:[%s3789] sm:$0x3]
        %v3791 = vunpack.c.l.b16 %v3722
        %v3792 = vunpack.c.l.b16 %v3725
        %v3793 = vunpack.c.l.b16 %v3729
        %v3794 = vunpack.c.l.b16 %v3732
        %v3795 = vunpack.c.l.b16 %v3736
        %v3796 = vunpack.c.l.b16 %v3739
        %v3797 = vunpack.c.l.b16 %v3743
        %v3798 = vunpack.c.l.b16 %v3746
        %v3799 = vunpack.c.l.b16 %v3750
        %v3800 = vunpack.c.l.b16 %v3753
        %v3801 = vunpack.c.l.b16 %v3757
        %v3802 = vunpack.c.l.b16 %v3760
        %v3803 = vunpack.c.l.b16 %v3764
        %v3804 = vunpack.c.l.b16 %v3767
        %v3805 = vunpack.c.l.b16 %v3771
        %v3806 = vunpack.c.l.b16 %v3774
        %v3807 = vunpack.c.l.b16 %v3778
        %v3808 = vunpack.c.l.b16 %v3781
        %v3809 = vunpack.c.l.b16 %v3785
        %v3810 = vunpack.c.l.b16 %v3788
        %v3811 = vpack.c.b16 %v3792, %v3791
        %v3812 = vpack.c.b16 %v3794, %v3793
        %v3813 = vpack.c.b16 %v3796, %v3795
        %v3814 = vpack.c.b16 %v3798, %v3797
        %v3815 = vpack.c.b16 %v3800, %v3799
        %v3816 = vpack.c.b16 %v3802, %v3801
        %v3817 = vpack.c.b16 %v3804, %v3803
        %v3818 = vpack.c.b16 %v3806, %v3805
        %v3819 = vpack.c.b16 %v3808, %v3807
        %v3820 = vpack.c.b16 %v3810, %v3809
        %v3822 = vsel %vm1313, %v3811, 0
        %v3825 = vsel %vm1313, %v3812, 0
        %v3828 = vsel %vm1313, %v3813, 0
        %v3831 = vsel %vm1313, %v3814, 0
        %v3834 = vsel %vm1313, %v3815, 0
        %v3837 = vsel %vm1313, %v3816, 0
        %v3840 = vsel %vm1313, %v3817, 0
        %v3843 = vsel %vm1313, %v3818, 0
        %v3846 = vsel %vm1313, %v3819, 0
        %v3849 = vsel %vm1313, %v3820, 0
        %v3852 = vsel %vm1344, %v3790, 0
        %3854 = vmatprep.subr.bf16.mxu0 0
        %3855 = vmatpush1.bf16.msra.mxu0 %v3852
        %3856 = vmatprep.subr.bf16.mxu0 0
        %3857 = vmatpush1.bf16.msra.mxu0 0
        %3858 = vmatprep.subr.bf16.mxu0 0
        %3859 = vmatpush1.bf16.msra.mxu0 0
        %3860 = vmatprep.subr.bf16.mxu0 0
        %3861 = vmatpush1.bf16.msra.mxu0 0
        %3862 = vmatprep.subr.bf16.mxu0 0
        %3863 = vmatpush1.bf16.msra.mxu0 0
        %3864 = vmatprep.subr.bf16.mxu0 0
        %3865 = vmatpush1.bf16.msra.mxu0 0
        %3866 = vmatprep.subr.bf16.mxu0 0
        %3867 = vmatpush1.bf16.msra.mxu0 0
        %3868 = vmatprep.subr.bf16.mxu0 0
        %3869 = vmatpush1.bf16.msra.mxu0 0
        %3870 = vmatprep.subr.bf16.mxu0 0
        %3871 = vmatpush1.bf16.msra.mxu0 0
        %3872 = vmatprep.subr.bf16.mxu0 0
        %3873 = vmatpush1.bf16.msra.mxu0 0
        %3874 = vmatprep.subr.bf16.mxu0 0
        %3875 = vmatpush1.bf16.msra.mxu0 0
        %3876 = vmatprep.subr.bf16.mxu0 0
        %3877 = vmatpush1.bf16.msra.mxu0 0
        %3878 = vmatprep.subr.bf16.mxu0 0
        %3879 = vmatpush1.bf16.msra.mxu0 0
        %3880 = vmatprep.subr.bf16.mxu0 0
        %3881 = vmatpush1.bf16.msra.mxu0 0
        %3882 = vmatprep.subr.bf16.mxu0 0
        %3883 = vmatpush1.bf16.msra.mxu0 0
        %3884 = vmatprep.subr.bf16.mxu0 0
        %3885 = vmatpush1.bf16.msra.mxu0 0
        %3886 = vmatprep.mubr.bf16.mxu0 0
        %3887 = vmatmul.mubr.bf16.gmra.mrb[0].mxu0 %v3822
        %v3888 = vpop.f32.mrb[0].mxu0
        %v3889 = vadd.f32 0.0, %v3888
        %v3890 = vpop.f32.mrb[0].mxu0
        %v3891 = vpop.f32.mrb[0].mxu0
        %v3892 = vadd.f32 0.0, %v3891
        %v3893 = vpop.f32.mrb[0].mxu0
        %3894 = vmatprep.mubr.bf16.mxu0 0
        %3895 = vmatmul.mubr.bf16.gmra.mrb[0].mxu0 %v3825
        %v3896 = vpop.f32.mrb[0].mxu0
        %v3897 = vadd.f32 0.0, %v3896
        %v3898 = vpop.f32.mrb[0].mxu0
        %v3899 = vpop.f32.mrb[0].mxu0
        %v3900 = vadd.f32 0.0, %v3899
        %v3901 = vpop.f32.mrb[0].mxu0
        %3902 = vmatprep.mubr.bf16.mxu0 0
        %3903 = vmatmul.mubr.bf16.gmra.mrb[0].mxu0 %v3828
        %v3904 = vpop.f32.mrb[0].mxu0
        %v3905 = vadd.f32 0.0, %v3904
        %v3906 = vpop.f32.mrb[0].mxu0
        %v3907 = vpop.f32.mrb[0].mxu0
        %v3908 = vadd.f32 0.0, %v3907
        %v3909 = vpop.f32.mrb[0].mxu0
        %3910 = vmatprep.mubr.bf16.mxu0 0
        %3911 = vmatmul.mubr.bf16.gmra.mrb[0].mxu0 %v3831
        %v3912 = vpop.f32.mrb[0].mxu0
        %v3913 = vadd.f32 0.0, %v3912
        %v3914 = vpop.f32.mrb[0].mxu0
        %v3915 = vpop.f32.mrb[0].mxu0
        %v3916 = vadd.f32 0.0, %v3915
        %v3917 = vpop.f32.mrb[0].mxu0
        %3918 = vmatprep.mubr.bf16.mxu0 0
        %3919 = vmatmul.mubr.bf16.gmra.mrb[0].mxu0 %v3834
        %v3920 = vpop.f32.mrb[0].mxu0
        %v3921 = vadd.f32 0.0, %v3920
        %v3922 = vpop.f32.mrb[0].mxu0
        %v3923 = vpop.f32.mrb[0].mxu0
        %v3924 = vadd.f32 0.0, %v3923
        %v3925 = vpop.f32.mrb[0].mxu0
        %3926 = vmatprep.mubr.bf16.mxu0 0
        %3927 = vmatmul.mubr.bf16.gmra.mrb[0].mxu0 %v3837
        %v3928 = vpop.f32.mrb[0].mxu0
        %v3929 = vadd.f32 0.0, %v3928
        %v3930 = vpop.f32.mrb[0].mxu0
        %v3931 = vpop.f32.mrb[0].mxu0
        %v3932 = vadd.f32 0.0, %v3931
        %v3933 = vpop.f32.mrb[0].mxu0
        %3934 = vmatprep.mubr.bf16.mxu0 0
        %3935 = vmatmul.mubr.bf16.gmra.mrb[0].mxu0 %v3840
        %v3936 = vpop.f32.mrb[0].mxu0
        %v3937 = vadd.f32 0.0, %v3936
        %v3938 = vpop.f32.mrb[0].mxu0
        %v3939 = vpop.f32.mrb[0].mxu0
        %v3940 = vadd.f32 0.0, %v3939
        %v3941 = vpop.f32.mrb[0].mxu0
        %3942 = vmatprep.mubr.bf16.mxu0 0
        %3943 = vmatmul.mubr.bf16.gmra.mrb[0].mxu0 %v3843
        %v3944 = vpop.f32.mrb[0].mxu0
        %v3945 = vadd.f32 0.0, %v3944
        %v3946 = vpop.f32.mrb[0].mxu0
        %v3947 = vpop.f32.mrb[0].mxu0
        %v3948 = vadd.f32 0.0, %v3947
        %v3949 = vpop.f32.mrb[0].mxu0
        %3950 = vmatprep.mubr.bf16.mxu0 0
        %3951 = vmatmul.mubr.bf16.gmra.mrb[0].mxu0 %v3846
        %v3952 = vpop.f32.mrb[0].mxu0
        %v3953 = vadd.f32 0.0, %v3952
        %v3954 = vpop.f32.mrb[0].mxu0
        %v3955 = vpop.f32.mrb[0].mxu0
        %v3956 = vadd.f32 0.0, %v3955
        %v3957 = vpop.f32.mrb[0].mxu0
        %3958 = vmatprep.mubr.bf16.mxu0 0
        %3959 = vmatmul.mubr.bf16.gmra.mrb[0].mxu0 %v3849
        %v3960 = vpop.f32.mrb[0].mxu0
        %v3961 = vadd.f32 0.0, %v3960
        %v3962 = vpop.f32.mrb[0].mxu0
        %v3963 = vpop.f32.mrb[0].mxu0
        %v3964 = vadd.f32 0.0, %v3963
        %v3965 = vpop.f32.mrb[0].mxu0
        %3966 = vdwg.mxu0
        %v3967 = vadd.f32 %v3659, %v3889
        %v3968 = vadd.f32 %v3660, %v3892
        %v3969 = vadd.f32 %v3661, %v3897
        %v3970 = vadd.f32 %v3662, %v3900
        %v3971 = vadd.f32 %v3663, %v3905
        %v3972 = vadd.f32 %v3664, %v3908
        %v3973 = vadd.f32 %v3665, %v3913
        %v3974 = vadd.f32 %v3666, %v3916
        %v3975 = vadd.f32 %v3667, %v3921
        %v3976 = vadd.f32 %v3668, %v3924
        %v3977 = vadd.f32 %v3669, %v3929
        %v3978 = vadd.f32 %v3670, %v3932
        %v3979 = vadd.f32 %v3671, %v3937
        %v3980 = vadd.f32 %v3672, %v3940
        %v3981 = vadd.f32 %v3673, %v3945
        %v3982 = vadd.f32 %v3674, %v3948
        %v3983 = vadd.f32 %v3675, %v3953
        %v3984 = vadd.f32 %v3676, %v3956
        %v3985 = vadd.f32 %v3677, %v3961
        %v3986 = vadd.f32 %v3678, %v3964
        %vm3987 = vcmp.gt.f32.partialorder %v3967, 0.0
        %vm3988 = vcmp.gt.f32.partialorder %v3968, 0.0
        %vm3989 = vcmp.gt.f32.partialorder %v3969, 0.0
        %vm3990 = vcmp.gt.f32.partialorder %v3970, 0.0
        %vm3991 = vcmp.gt.f32.partialorder %v3971, 0.0
        %vm3992 = vcmp.gt.f32.partialorder %v3972, 0.0
        %vm3993 = vcmp.gt.f32.partialorder %v3973, 0.0
        %vm3994 = vcmp.gt.f32.partialorder %v3974, 0.0
        %vm3995 = vcmp.gt.f32.partialorder %v3975, 0.0
        %vm3996 = vcmp.gt.f32.partialorder %v3976, 0.0
        %vm3997 = vcmp.gt.f32.partialorder %v3977, 0.0
        %vm3998 = vcmp.gt.f32.partialorder %v3978, 0.0
        %vm3999 = vcmp.gt.f32.partialorder %v3979, 0.0
        %vm4000 = vcmp.gt.f32.partialorder %v3980, 0.0
        %vm4001 = vcmp.gt.f32.partialorder %v3981, 0.0
        %vm4002 = vcmp.gt.f32.partialorder %v3982, 0.0
        %vm4003 = vcmp.gt.f32.partialorder %v3983, 0.0
        %vm4004 = vcmp.gt.f32.partialorder %v3984, 0.0
        %vm4005 = vcmp.gt.f32.partialorder %v3985, 0.0
        %vm4006 = vcmp.gt.f32.partialorder %v3986, 0.0
        %v4007 = vld [vmem:[%s4] sm:$0x1]
        %v4009 = vlaneseq
        %v4010 = vshrl.u32 %v4009, 7
        %v4011 = vsub.s32 0, %v4010
        %v4012 = vrot.slane %v4007, %v4011
        %v4014 = vmul.f32 %v3967, %v4012
        %v4015 = vmul.f32 %v3968, %v4012
        %v4016 = vmul.f32 %v3969, %v4012
        %v4017 = vmul.f32 %v3970, %v4012
        %v4018 = vmul.f32 %v3971, %v4012
        %v4019 = vmul.f32 %v3972, %v4012
        %v4020 = vmul.f32 %v3973, %v4012
        %v4021 = vmul.f32 %v3974, %v4012
        %v4022 = vmul.f32 %v3975, %v4012
        %v4023 = vmul.f32 %v3976, %v4012
        %v4024 = vmul.f32 %v3977, %v4012
        %v4025 = vmul.f32 %v3978, %v4012
        %v4026 = vmul.f32 %v3979, %v4012
        %v4027 = vmul.f32 %v3980, %v4012
        %v4028 = vmul.f32 %v3981, %v4012
        %v4029 = vmul.f32 %v3982, %v4012
        %v4030 = vmul.f32 %v3983, %v4012
        %v4031 = vmul.f32 %v3984, %v4012
        %v4032 = vmul.f32 %v3985, %v4012
        %v4033 = vmul.f32 %v3986, %v4012
        %v4034 = vsel %vm3987, %v3967, %v4014
        %v4035 = vsel %vm3988, %v3968, %v4015
        %v4036 = vsel %vm3989, %v3969, %v4016
        %v4037 = vsel %vm3990, %v3970, %v4017
        %v4038 = vsel %vm3991, %v3971, %v4018
        %v4039 = vsel %vm3992, %v3972, %v4019
        %v4040 = vsel %vm3993, %v3973, %v4020
        %v4041 = vsel %vm3994, %v3974, %v4021
        %v4042 = vsel %vm3995, %v3975, %v4022
        %v4043 = vsel %vm3996, %v3976, %v4023
        %v4044 = vsel %vm3997, %v3977, %v4024
        %v4045 = vsel %vm3998, %v3978, %v4025
        %v4046 = vsel %vm3999, %v3979, %v4026
        %v4047 = vsel %vm4000, %v3980, %v4027
        %v4048 = vsel %vm4001, %v3981, %v4028
        %v4049 = vsel %vm4002, %v3982, %v4029
        %v4050 = vsel %vm4003, %v3983, %v4030
        %v4051 = vsel %vm4004, %v3984, %v4031
        %v4052 = vsel %vm4005, %v3985, %v4032
        %v4053 = vsel %vm4006, %v3986, %v4033
        %vm4054 = vcmask 57344
        %vm4055 = vmand %vm4054, %vm405
        %v4056 = vld [vmem:[#allocation3] sm:$0x1]
        %v4057 = vsel %vm4055, 0, %v4056
        %4058 = vst [vmem:[#allocation3] sm:$0x1] %v4057
        %v4059 = vld [vmem:[#allocation3 + $0xc] sm:$0x1]
        %v4060 = vsel %vm4055, 0, %v4059
        %4061 = vst [vmem:[#allocation3 + $0xc] sm:$0x1] %v4060
        %v4062 = vld [vmem:[#allocation3 + $0x18] sm:$0x1]
        %v4063 = vsel %vm4055, 0, %v4062
        %4064 = vst [vmem:[#allocation3 + $0x18] sm:$0x1] %v4063
        %v4065 = vld [vmem:[#allocation3 + $0x24] sm:$0x1]
        %v4066 = vsel %vm4055, 0, %v4065
        %4067 = vst [vmem:[#allocation3 + $0x24] sm:$0x1] %v4066
        %v4068 = vld [vmem:[#allocation3 + $0x30] sm:$0x1]
        %v4069 = vsel %vm4055, 0, %v4068
        %4070 = vst [vmem:[#allocation3 + $0x30] sm:$0x1] %v4069
        %v4071 = vld [vmem:[#allocation3 + $0x3c] sm:$0x1]
        %v4072 = vsel %vm4055, 0, %v4071
        %4073 = vst [vmem:[#allocation3 + $0x3c] sm:$0x1] %v4072
        %v4074 = vld [vmem:[#allocation3 + $0x48] sm:$0x1]
        %v4075 = vsel %vm4055, 0, %v4074
        %4076 = vst [vmem:[#allocation3 + $0x48] sm:$0x1] %v4075
        %v4077 = vld [vmem:[#allocation3 + $0x54] sm:$0x1]
        %v4078 = vsel %vm4055, 0, %v4077
        %4079 = vst [vmem:[#allocation3 + $0x54] sm:$0x1] %v4078
        %v4080 = vld [vmem:[#allocation3 + $0x60] sm:$0x1]
        %v4081 = vsel %vm4055, 0, %v4080
        %4082 = vst [vmem:[#allocation3 + $0x60] sm:$0x1] %v4081
        %v4083 = vld [vmem:[#allocation3 + $0x6c] sm:$0x1]
        %v4084 = vsel %vm4055, 0, %v4083
        %4085 = vst [vmem:[#allocation3 + $0x6c] sm:$0x1] %v4084
        %vm4086 = vmand %vm4054, %vm443
        %v4087 = vld [vmem:[#allocation3 + $0x8] sm:$0x1]
        %v4088 = vsel %vm4086, 0, %v4087
        %4089 = vst [vmem:[#allocation3 + $0x8] sm:$0x1] %v4088
        %v4090 = vld [vmem:[#allocation3 + $0x14] sm:$0x1]
        %v4091 = vsel %vm4086, 0, %v4090
        %4092 = vst [vmem:[#allocation3 + $0x14] sm:$0x1] %v4091
        %v4093 = vld [vmem:[#allocation3 + $0x20] sm:$0x1]
        %v4094 = vsel %vm4086, 0, %v4093
        %4095 = vst [vmem:[#allocation3 + $0x20] sm:$0x1] %v4094
        %v4096 = vld [vmem:[#allocation3 + $0x2c] sm:$0x1]
        %v4097 = vsel %vm4086, 0, %v4096
        %4098 = vst [vmem:[#allocation3 + $0x2c] sm:$0x1] %v4097
        %v4099 = vld [vmem:[#allocation3 + $0x38] sm:$0x1]
        %v4100 = vsel %vm4086, 0, %v4099
        %4101 = vst [vmem:[#allocation3 + $0x38] sm:$0x1] %v4100
        %v4102 = vld [vmem:[#allocation3 + $0x44] sm:$0x1]
        %v4103 = vsel %vm4086, 0, %v4102
        %4104 = vst [vmem:[#allocation3 + $0x44] sm:$0x1] %v4103
        %v4105 = vld [vmem:[#allocation3 + $0x50] sm:$0x1]
        %v4106 = vsel %vm4086, 0, %v4105
        %4107 = vst [vmem:[#allocation3 + $0x50] sm:$0x1] %v4106
        %v4108 = vld [vmem:[#allocation3 + $0x5c] sm:$0x1]
        %v4109 = vsel %vm4086, 0, %v4108
        %4110 = vst [vmem:[#allocation3 + $0x5c] sm:$0x1] %v4109
        %v4111 = vld [vmem:[#allocation3 + $0x68] sm:$0x1]
        %v4112 = vsel %vm4086, 0, %v4111
        %4113 = vst [vmem:[#allocation3 + $0x68] sm:$0x1] %v4112
        %v4114 = vld [vmem:[#allocation3 + $0x74] sm:$0x1]
        %v4115 = vsel %vm4086, 0, %v4114
        %4116 = vst [vmem:[#allocation3 + $0x74] sm:$0x1] %v4115
        %v4117 = vpack.c.bf16 %v4035, %v4034
        %v4118 = vpack.c.bf16 %v4037, %v4036
        %v4119 = vpack.c.bf16 %v4039, %v4038
        %v4120 = vpack.c.bf16 %v4041, %v4040
        %v4121 = vpack.c.bf16 %v4043, %v4042
        %v4122 = vpack.c.bf16 %v4045, %v4044
        %v4123 = vpack.c.bf16 %v4047, %v4046
        %v4124 = vpack.c.bf16 %v4049, %v4048
        %v4125 = vpack.c.bf16 %v4051, %v4050
        %v4126 = vpack.c.bf16 %v4053, %v4052
        %v4137 = vunpack.c.l.b16 %v4117
        %v4138 = vunpack.c.h.b16 %v4117
        %v4139 = vunpack.c.l.b16 %v4118
        %v4140 = vunpack.c.h.b16 %v4118
        %v4141 = vunpack.c.l.b16 %v4119
        %v4142 = vunpack.c.h.b16 %v4119
        %v4143 = vunpack.c.l.b16 %v4120
        %v4144 = vunpack.c.h.b16 %v4120
        %v4145 = vunpack.c.l.b16 %v4121
        %v4146 = vunpack.c.h.b16 %v4121
        %v4147 = vunpack.c.l.b16 %v4122
        %v4148 = vunpack.c.h.b16 %v4122
        %v4149 = vunpack.c.l.b16 %v4123
        %v4150 = vunpack.c.h.b16 %v4123
        %v4151 = vunpack.c.l.b16 %v4124
        %v4152 = vunpack.c.h.b16 %v4124
        %v4153 = vunpack.c.l.b16 %v4125
        %v4154 = vunpack.c.h.b16 %v4125
        %v4155 = vunpack.c.l.b16 %v4126
        %v4156 = vunpack.c.h.b16 %v4126
        %v4157 = vpack.c.b16 %v4137, %v4137
        %v4158 = vpack.c.b16 %v4138, %v4138
        %v4159 = vpack.c.b16 %v4139, %v4139
        %v4160 = vpack.c.b16 %v4140, %v4140
        %v4161 = vpack.c.b16 %v4141, %v4141
        %v4162 = vpack.c.b16 %v4142, %v4142
        %v4163 = vpack.c.b16 %v4143, %v4143
        %v4164 = vpack.c.b16 %v4144, %v4144
        %v4165 = vpack.c.b16 %v4145, %v4145
        %v4166 = vpack.c.b16 %v4146, %v4146
        %v4167 = vpack.c.b16 %v4147, %v4147
        %v4168 = vpack.c.b16 %v4148, %v4148
        %v4169 = vpack.c.b16 %v4149, %v4149
        %v4170 = vpack.c.b16 %v4150, %v4150
        %v4171 = vpack.c.b16 %v4151, %v4151
        %v4172 = vpack.c.b16 %v4152, %v4152
        %v4173 = vpack.c.b16 %v4153, %v4153
        %v4174 = vpack.c.b16 %v4154, %v4154
        %v4175 = vpack.c.b16 %v4155, %v4155
        %v4176 = vpack.c.b16 %v4156, %v4156
        %v4178 = vshrl.u32 %v4157, 16
        %v4180 = vrot.slane %v4178, 7
        %v4181 = vshll.u32 %v4157, 16
        %v4183 = vor.u32 %v4180, %v4181
        %v4184 = vrot.slane %v4180, 4
        %v4186 = vshrl.u32 %v4158, 16
        %v4188 = vrot.slane %v4186, 7
        %v4189 = vshll.u32 %v4158, 16
        %v4191 = vor.u32 %v4188, %v4189
        %v4192 = vsel %vm592, %v4184, %v4191
        %v4193 = vrot.slane %v4188, 4
        %v4195 = vshrl.u32 %v4159, 16
        %v4197 = vrot.slane %v4195, 7
        %v4198 = vshll.u32 %v4159, 16
        %v4200 = vor.u32 %v4197, %v4198
        %v4201 = vrot.slane %v4197, 4
        %v4203 = vshrl.u32 %v4160, 16
        %v4205 = vrot.slane %v4203, 7
        %v4206 = vshll.u32 %v4160, 16
        %v4208 = vor.u32 %v4205, %v4206
        %v4209 = vsel %vm592, %v4201, %v4208
        %v4210 = vrot.slane %v4205, 4
        %v4212 = vshrl.u32 %v4161, 16
        %v4214 = vrot.slane %v4212, 7
        %v4215 = vshll.u32 %v4161, 16
        %v4217 = vor.u32 %v4214, %v4215
        %v4218 = vrot.slane %v4214, 4
        %v4220 = vshrl.u32 %v4162, 16
        %v4222 = vrot.slane %v4220, 7
        %v4223 = vshll.u32 %v4162, 16
        %v4225 = vor.u32 %v4222, %v4223
        %v4226 = vsel %vm592, %v4218, %v4225
        %v4227 = vrot.slane %v4222, 4
        %v4229 = vshrl.u32 %v4163, 16
        %v4231 = vrot.slane %v4229, 7
        %v4232 = vshll.u32 %v4163, 16
        %v4234 = vor.u32 %v4231, %v4232
        %v4235 = vrot.slane %v4231, 4
        %v4237 = vshrl.u32 %v4164, 16
        %v4239 = vrot.slane %v4237, 7
        %v4240 = vshll.u32 %v4164, 16
        %v4242 = vor.u32 %v4239, %v4240
        %v4243 = vsel %vm592, %v4235, %v4242
        %v4244 = vrot.slane %v4239, 4
        %v4246 = vshrl.u32 %v4165, 16
        %v4248 = vrot.slane %v4246, 7
        %v4249 = vshll.u32 %v4165, 16
        %v4251 = vor.u32 %v4248, %v4249
        %v4252 = vrot.slane %v4248, 4
        %v4254 = vshrl.u32 %v4166, 16
        %v4256 = vrot.slane %v4254, 7
        %v4257 = vshll.u32 %v4166, 16
        %v4259 = vor.u32 %v4256, %v4257
        %v4260 = vsel %vm592, %v4252, %v4259
        %v4261 = vrot.slane %v4256, 4
        %v4263 = vshrl.u32 %v4167, 16
        %v4265 = vrot.slane %v4263, 7
        %v4266 = vshll.u32 %v4167, 16
        %v4268 = vor.u32 %v4265, %v4266
        %v4269 = vrot.slane %v4265, 4
        %v4271 = vshrl.u32 %v4168, 16
        %v4273 = vrot.slane %v4271, 7
        %v4274 = vshll.u32 %v4168, 16
        %v4276 = vor.u32 %v4273, %v4274
        %v4277 = vsel %vm592, %v4269, %v4276
        %v4278 = vrot.slane %v4273, 4
        %v4280 = vshrl.u32 %v4169, 16
        %v4282 = vrot.slane %v4280, 7
        %v4283 = vshll.u32 %v4169, 16
        %v4285 = vor.u32 %v4282, %v4283
        %v4286 = vrot.slane %v4282, 4
        %v4288 = vshrl.u32 %v4170, 16
        %v4290 = vrot.slane %v4288, 7
        %v4291 = vshll.u32 %v4170, 16
        %v4293 = vor.u32 %v4290, %v4291
        %v4294 = vsel %vm592, %v4286, %v4293
        %v4295 = vrot.slane %v4290, 4
        %v4297 = vshrl.u32 %v4171, 16
        %v4299 = vrot.slane %v4297, 7
        %v4300 = vshll.u32 %v4171, 16
        %v4302 = vor.u32 %v4299, %v4300
        %v4303 = vrot.slane %v4299, 4
        %v4305 = vshrl.u32 %v4172, 16
        %v4307 = vrot.slane %v4305, 7
        %v4308 = vshll.u32 %v4172, 16
        %v4310 = vor.u32 %v4307, %v4308
        %v4311 = vsel %vm592, %v4303, %v4310
        %v4312 = vrot.slane %v4307, 4
        %v4314 = vshrl.u32 %v4173, 16
        %v4316 = vrot.slane %v4314, 7
        %v4317 = vshll.u32 %v4173, 16
        %v4319 = vor.u32 %v4316, %v4317
        %v4320 = vrot.slane %v4316, 4
        %v4322 = vshrl.u32 %v4174, 16
        %v4324 = vrot.slane %v4322, 7
        %v4325 = vshll.u32 %v4174, 16
        %v4327 = vor.u32 %v4324, %v4325
        %v4328 = vsel %vm592, %v4320, %v4327
        %v4329 = vrot.slane %v4324, 4
        %v4331 = vshrl.u32 %v4175, 16
        %v4333 = vrot.slane %v4331, 7
        %v4334 = vshll.u32 %v4175, 16
        %v4336 = vor.u32 %v4333, %v4334
        %v4337 = vrot.slane %v4333, 4
        %v4339 = vshrl.u32 %v4176, 16
        %v4341 = vrot.slane %v4339, 7
        %v4342 = vshll.u32 %v4176, 16
        %v4344 = vor.u32 %v4341, %v4342
        %v4345 = vsel %vm592, %v4337, %v4344
        %v4346 = vrot.slane %v4341, 4
        %vm4377 = vcmask 60416
        %vm4378 = vmand %vm4377, %vm443
        %v4379 = vld [vmem:[#allocation3] sm:$0xf]
        %v4380 = vsel %vm4378, %v4183, %v4379
        %4381 = vst [vmem:[#allocation3] sm:$0xf] %v4380
        %vm4382 = vcmask 60416
        %4383 = vst.msk [vmem:[#allocation3 + $0x4] sm:$0xf] %vm4382, %v4192
        %v4384 = vld [vmem:[#allocation3 + $0x8] sm:$0x1]
        %v4385 = vsel %vm4055, %v4193, %v4384
        %4386 = vst [vmem:[#allocation3 + $0x8] sm:$0x1] %v4385
        %v4387 = vld [vmem:[#allocation3 + $0xc] sm:$0xf]
        %v4388 = vsel %vm4378, %v4200, %v4387
        %4389 = vst [vmem:[#allocation3 + $0xc] sm:$0xf] %v4388
        %4390 = vst.msk [vmem:[#allocation3 + $0x10] sm:$0xf] %vm4382, %v4209
        %v4391 = vld [vmem:[#allocation3 + $0x14] sm:$0x1]
        %v4392 = vsel %vm4055, %v4210, %v4391
        %4393 = vst [vmem:[#allocation3 + $0x14] sm:$0x1] %v4392
        %v4394 = vld [vmem:[#allocation3 + $0x18] sm:$0xf]
        %v4395 = vsel %vm4378, %v4217, %v4394
        %4396 = vst [vmem:[#allocation3 + $0x18] sm:$0xf] %v4395
        %4397 = vst.msk [vmem:[#allocation3 + $0x1c] sm:$0xf] %vm4382, %v4226
        %v4398 = vld [vmem:[#allocation3 + $0x20] sm:$0x1]
        %v4399 = vsel %vm4055, %v4227, %v4398
        %4400 = vst [vmem:[#allocation3 + $0x20] sm:$0x1] %v4399
        %v4401 = vld [vmem:[#allocation3 + $0x24] sm:$0xf]
        %v4402 = vsel %vm4378, %v4234, %v4401
        %4403 = vst [vmem:[#allocation3 + $0x24] sm:$0xf] %v4402
        %4404 = vst.msk [vmem:[#allocation3 + $0x28] sm:$0xf] %vm4382, %v4243
        %v4405 = vld [vmem:[#allocation3 + $0x2c] sm:$0x1]
        %v4406 = vsel %vm4055, %v4244, %v4405
        %4407 = vst [vmem:[#allocation3 + $0x2c] sm:$0x1] %v4406
        %v4408 = vld [vmem:[#allocation3 + $0x30] sm:$0xf]
        %v4409 = vsel %vm4378, %v4251, %v4408
        %4410 = vst [vmem:[#allocation3 + $0x30] sm:$0xf] %v4409
        %4411 = vst.msk [vmem:[#allocation3 + $0x34] sm:$0xf] %vm4382, %v4260
        %v4412 = vld [vmem:[#allocation3 + $0x38] sm:$0x1]
        %v4413 = vsel %vm4055, %v4261, %v4412
        %4414 = vst [vmem:[#allocation3 + $0x38] sm:$0x1] %v4413
        %v4415 = vld [vmem:[#allocation3 + $0x3c] sm:$0xf]
        %v4416 = vsel %vm4378, %v4268, %v4415
        %4417 = vst [vmem:[#allocation3 + $0x3c] sm:$0xf] %v4416
        %4418 = vst.msk [vmem:[#allocation3 + $0x40] sm:$0xf] %vm4382, %v4277
        %v4419 = vld [vmem:[#allocation3 + $0x44] sm:$0x1]
        %v4420 = vsel %vm4055, %v4278, %v4419
        %4421 = vst [vmem:[#allocation3 + $0x44] sm:$0x1] %v4420
        %v4422 = vld [vmem:[#allocation3 + $0x48] sm:$0xf]
        %v4423 = vsel %vm4378, %v4285, %v4422
        %4424 = vst [vmem:[#allocation3 + $0x48] sm:$0xf] %v4423
        %4425 = vst.msk [vmem:[#allocation3 + $0x4c] sm:$0xf] %vm4382, %v4294
        %v4426 = vld [vmem:[#allocation3 + $0x50] sm:$0x1]
        %v4427 = vsel %vm4055, %v4295, %v4426
        %4428 = vst [vmem:[#allocation3 + $0x50] sm:$0x1] %v4427
        %v4429 = vld [vmem:[#allocation3 + $0x54] sm:$0xf]
        %v4430 = vsel %vm4378, %v4302, %v4429
        %4431 = vst [vmem:[#allocation3 + $0x54] sm:$0xf] %v4430
        %4432 = vst.msk [vmem:[#allocation3 + $0x58] sm:$0xf] %vm4382, %v4311
        %v4433 = vld [vmem:[#allocation3 + $0x5c] sm:$0x1]
        %v4434 = vsel %vm4055, %v4312, %v4433
        %4435 = vst [vmem:[#allocation3 + $0x5c] sm:$0x1] %v4434
        %v4436 = vld [vmem:[#allocation3 + $0x60] sm:$0xf]
        %v4437 = vsel %vm4378, %v4319, %v4436
        %4438 = vst [vmem:[#allocation3 + $0x60] sm:$0xf] %v4437
        %4439 = vst.msk [vmem:[#allocation3 + $0x64] sm:$0xf] %vm4382, %v4328
        %v4440 = vld [vmem:[#allocation3 + $0x68] sm:$0x1]
        %v4441 = vsel %vm4055, %v4329, %v4440
        %4442 = vst [vmem:[#allocation3 + $0x68] sm:$0x1] %v4441
        %v4443 = vld [vmem:[#allocation3 + $0x6c] sm:$0xf]
        %v4444 = vsel %vm4378, %v4336, %v4443
        %4445 = vst [vmem:[#allocation3 + $0x6c] sm:$0xf] %v4444
        %4446 = vst.msk [vmem:[#allocation3 + $0x70] sm:$0xf] %vm4382, %v4345
        %v4447 = vld [vmem:[#allocation3 + $0x74] sm:$0x1]
        %v4448 = vsel %vm4055, %v4346, %v4447
        %4449 = vst [vmem:[#allocation3 + $0x74] sm:$0x1] %v4448
        // Predicated region
        $region81: #{tpu_custom_call.1} parent=63 // pred_check
          %p4450 = pneg %p813
        $region82: #{tpu_custom_call.1} parent=63 // pred_check_branch
          %4452 = sbr.rel (%p4450) target = $region84
        $region83: #{tpu_custom_call.1} parent=63 // pred_region
          %4453 = vst.msk [vmem:[#allocation3] sm:$0xf] %vm4382, 0
          %4454 = vst.msk [vmem:[#allocation3 + $0x4] sm:$0xf] %vm4382, 0
          %vm4455 = vcmask 57344
          %4456 = vst.msk [vmem:[#allocation3 + $0x8] sm:$0x1] %vm4455, 0
        $region84: #{tpu_custom_call.1} parent=63 // pred_fallthru
          _
        // Predicated region
        $region85: #{tpu_custom_call.1} parent=63 // pred_check
          %p4457 = pneg %p909
        $region86: #{tpu_custom_call.1} parent=63 // pred_check_branch
          %4459 = sbr.rel (%p4457) target = $region88
        $region87: #{tpu_custom_call.1} parent=63 // pred_region
          %s4460 = scalar_lea.vmem [#allocation3], 108
          %4461 = vst.msk [vmem:[%s4460] sm:$0xf] %vm4382, 0
          %4462 = vst.msk [vmem:[%s4460 + $0x4] sm:$0xf] %vm4382, 0
          %vm4463 = vcmask 57344
          %4464 = vst.msk [vmem:[%s4460 + $0x8] sm:$0x1] %vm4463, 0
        $region88: #{tpu_custom_call.1} parent=63 // pred_fallthru
          _
        %v4465 = vld [vmem:[#allocation3] sm:$0xf]
        %v4466 = vld [vmem:[#allocation3 + $0x4] sm:$0xf]
        %v4467 = vld [vmem:[#allocation3 + $0xc] sm:$0xf]
        %v4468 = vld [vmem:[#allocation3 + $0x10] sm:$0xf]
        %v4469 = vld [vmem:[#allocation3 + $0x18] sm:$0xf]
        %v4470 = vld [vmem:[#allocation3 + $0x1c] sm:$0xf]
        %v4471 = vld [vmem:[#allocation3 + $0x24] sm:$0xf]
        %v4472 = vld [vmem:[#allocation3 + $0x28] sm:$0xf]
        %v4473 = vld [vmem:[#allocation3 + $0x30] sm:$0xf]
        %v4474 = vld [vmem:[#allocation3 + $0x34] sm:$0xf]
        %v4475 = vld [vmem:[#allocation3 + $0x3c] sm:$0xf]
        %v4476 = vld [vmem:[#allocation3 + $0x40] sm:$0xf]
        %v4477 = vld [vmem:[#allocation3 + $0x48] sm:$0xf]
        %v4478 = vld [vmem:[#allocation3 + $0x4c] sm:$0xf]
        %v4479 = vld [vmem:[#allocation3 + $0x54] sm:$0xf]
        %v4480 = vld [vmem:[#allocation3 + $0x58] sm:$0xf]
        %v4481 = vld [vmem:[%s5] sm:$0xf]
        %v4482 = vld [vmem:[#allocation3 + $0x8] sm:$0x1]
        %v4483 = vld [vmem:[#allocation3 + $0x14] sm:$0x1]
        %v4484 = vld [vmem:[#allocation3 + $0x20] sm:$0x1]
        %v4485 = vld [vmem:[#allocation3 + $0x2c] sm:$0x1]
        %v4486 = vld [vmem:[#allocation3 + $0x38] sm:$0x1]
        %v4487 = vld [vmem:[#allocation3 + $0x44] sm:$0x1]
        %v4488 = vld [vmem:[#allocation3 + $0x50] sm:$0x1]
        %v4489 = vld [vmem:[#allocation3 + $0x5c] sm:$0x1]
        %v4491 = vshrl.u32 %v4465, 16
        %v4493 = vrot.slane %v4491, 4
        %v4494 = vshll.u32 %v4465, 16
        %v4496 = vrot.slane %v4494, 5
        %v4497 = vor.u32 %v4493, %v4496
        %v4498 = vrot.slane %v4497, 4
        %v4500 = vshll.u32 %v4466, 16
        %v4502 = vrot.slane %v4500, 5
        %v4503 = vsel %vm1040, %v4498, %v4502
        %v4504 = vshrl.u32 %v4466, 16
        %v4506 = vrot.slane %v4504, 4
        %v4507 = vor.u32 %v4506, %v4502
        %v4508 = vrot.slane %v4507, 4
        %v4510 = vshll.u32 %v4482, 16
        %v4512 = vrot.slane %v4510, 5
        %v4513 = vsel %vm1040, %v4508, %v4512
        %v4515 = vshrl.u32 %v4467, 16
        %v4517 = vrot.slane %v4515, 4
        %v4518 = vshll.u32 %v4467, 16
        %v4520 = vrot.slane %v4518, 5
        %v4521 = vor.u32 %v4517, %v4520
        %v4522 = vrot.slane %v4521, 4
        %v4524 = vshll.u32 %v4468, 16
        %v4526 = vrot.slane %v4524, 5
        %v4527 = vsel %vm1040, %v4522, %v4526
        %v4528 = vshrl.u32 %v4468, 16
        %v4530 = vrot.slane %v4528, 4
        %v4531 = vor.u32 %v4530, %v4526
        %v4532 = vrot.slane %v4531, 4
        %v4534 = vshll.u32 %v4483, 16
        %v4536 = vrot.slane %v4534, 5
        %v4537 = vsel %vm1040, %v4532, %v4536
        %v4539 = vshrl.u32 %v4469, 16
        %v4541 = vrot.slane %v4539, 4
        %v4542 = vshll.u32 %v4469, 16
        %v4544 = vrot.slane %v4542, 5
        %v4545 = vor.u32 %v4541, %v4544
        %v4546 = vrot.slane %v4545, 4
        %v4548 = vshll.u32 %v4470, 16
        %v4550 = vrot.slane %v4548, 5
        %v4551 = vsel %vm1040, %v4546, %v4550
        %v4552 = vshrl.u32 %v4470, 16
        %v4554 = vrot.slane %v4552, 4
        %v4555 = vor.u32 %v4554, %v4550
        %v4556 = vrot.slane %v4555, 4
        %v4558 = vshll.u32 %v4484, 16
        %v4560 = vrot.slane %v4558, 5
        %v4561 = vsel %vm1040, %v4556, %v4560
        %v4563 = vshrl.u32 %v4471, 16
        %v4565 = vrot.slane %v4563, 4
        %v4566 = vshll.u32 %v4471, 16
        %v4568 = vrot.slane %v4566, 5
        %v4569 = vor.u32 %v4565, %v4568
        %v4570 = vrot.slane %v4569, 4
        %v4572 = vshll.u32 %v4472, 16
        %v4574 = vrot.slane %v4572, 5
        %v4575 = vsel %vm1040, %v4570, %v4574
        %v4576 = vshrl.u32 %v4472, 16
        %v4578 = vrot.slane %v4576, 4
        %v4579 = vor.u32 %v4578, %v4574
        %v4580 = vrot.slane %v4579, 4
        %v4582 = vshll.u32 %v4485, 16
        %v4584 = vrot.slane %v4582, 5
        %v4585 = vsel %vm1040, %v4580, %v4584
        %v4587 = vshrl.u32 %v4473, 16
        %v4589 = vrot.slane %v4587, 4
        %v4590 = vshll.u32 %v4473, 16
        %v4592 = vrot.slane %v4590, 5
        %v4593 = vor.u32 %v4589, %v4592
        %v4594 = vrot.slane %v4593, 4
        %v4596 = vshll.u32 %v4474, 16
        %v4598 = vrot.slane %v4596, 5
        %v4599 = vsel %vm1040, %v4594, %v4598
        %v4600 = vshrl.u32 %v4474, 16
        %v4602 = vrot.slane %v4600, 4
        %v4603 = vor.u32 %v4602, %v4598
        %v4604 = vrot.slane %v4603, 4
        %v4606 = vshll.u32 %v4486, 16
        %v4608 = vrot.slane %v4606, 5
        %v4609 = vsel %vm1040, %v4604, %v4608
        %v4611 = vshrl.u32 %v4475, 16
        %v4613 = vrot.slane %v4611, 4
        %v4614 = vshll.u32 %v4475, 16
        %v4616 = vrot.slane %v4614, 5
        %v4617 = vor.u32 %v4613, %v4616
        %v4618 = vrot.slane %v4617, 4
        %v4620 = vshll.u32 %v4476, 16
        %v4622 = vrot.slane %v4620, 5
        %v4623 = vsel %vm1040, %v4618, %v4622
        %v4624 = vshrl.u32 %v4476, 16
        %v4626 = vrot.slane %v4624, 4
        %v4627 = vor.u32 %v4626, %v4622
        %v4628 = vrot.slane %v4627, 4
        %v4630 = vshll.u32 %v4487, 16
        %v4632 = vrot.slane %v4630, 5
        %v4633 = vsel %vm1040, %v4628, %v4632
        %v4635 = vshrl.u32 %v4477, 16
        %v4637 = vrot.slane %v4635, 4
        %v4638 = vshll.u32 %v4477, 16
        %v4640 = vrot.slane %v4638, 5
        %v4641 = vor.u32 %v4637, %v4640
        %v4642 = vrot.slane %v4641, 4
        %v4644 = vshll.u32 %v4478, 16
        %v4646 = vrot.slane %v4644, 5
        %v4647 = vsel %vm1040, %v4642, %v4646
        %v4648 = vshrl.u32 %v4478, 16
        %v4650 = vrot.slane %v4648, 4
        %v4651 = vor.u32 %v4650, %v4646
        %v4652 = vrot.slane %v4651, 4
        %v4654 = vshll.u32 %v4488, 16
        %v4656 = vrot.slane %v4654, 5
        %v4657 = vsel %vm1040, %v4652, %v4656
        %v4659 = vshrl.u32 %v4479, 16
        %v4661 = vrot.slane %v4659, 4
        %v4662 = vshll.u32 %v4479, 16
        %v4664 = vrot.slane %v4662, 5
        %v4665 = vor.u32 %v4661, %v4664
        %v4666 = vrot.slane %v4665, 4
        %v4668 = vshll.u32 %v4480, 16
        %v4670 = vrot.slane %v4668, 5
        %v4671 = vsel %vm1040, %v4666, %v4670
        %v4672 = vshrl.u32 %v4480, 16
        %v4674 = vrot.slane %v4672, 4
        %v4675 = vor.u32 %v4674, %v4670
        %v4676 = vrot.slane %v4675, 4
        %v4678 = vshll.u32 %v4489, 16
        %v4680 = vrot.slane %v4678, 5
        %v4681 = vsel %vm1040, %v4676, %v4680
        %s4682 = scalar_lea.vmem %s5, 4
        %v4683 = vld [vmem:[%s4682] sm:$0xf]
        %v4684 = vunpack.c.l.b16 %v4503
        %v4685 = vunpack.c.l.b16 %v4513
        %v4686 = vunpack.c.l.b16 %v4527
        %v4687 = vunpack.c.l.b16 %v4537
        %v4688 = vunpack.c.l.b16 %v4551
        %v4689 = vunpack.c.l.b16 %v4561
        %v4690 = vunpack.c.l.b16 %v4575
        %v4691 = vunpack.c.l.b16 %v4585
        %v4692 = vunpack.c.l.b16 %v4599
        %v4693 = vunpack.c.l.b16 %v4609
        %v4694 = vunpack.c.l.b16 %v4623
        %v4695 = vunpack.c.l.b16 %v4633
        %v4696 = vunpack.c.l.b16 %v4647
        %v4697 = vunpack.c.l.b16 %v4657
        %v4698 = vunpack.c.l.b16 %v4671
        %v4699 = vunpack.c.l.b16 %v4681
        %v4700 = vpack.c.b16 %v4685, %v4684
        %v4701 = vpack.c.b16 %v4687, %v4686
        %v4702 = vpack.c.b16 %v4689, %v4688
        %v4703 = vpack.c.b16 %v4691, %v4690
        %v4704 = vpack.c.b16 %v4693, %v4692
        %v4705 = vpack.c.b16 %v4695, %v4694
        %v4706 = vpack.c.b16 %v4697, %v4696
        %v4707 = vpack.c.b16 %v4699, %v4698
        %vm4708 = vcmask 64512
        %v4710 = vsel %vm4708, %v4700, 0
        %v4713 = vsel %vm4708, %v4701, 0
        %v4716 = vsel %vm4708, %v4702, 0
        %v4719 = vsel %vm4708, %v4703, 0
        %v4722 = vsel %vm4708, %v4704, 0
        %v4725 = vsel %vm4708, %v4705, 0
        %v4728 = vsel %vm4708, %v4706, 0
        %v4731 = vsel %vm4708, %v4707, 0
        %vm4733 = vcmask 1043456
        %v4735 = vsel %vm4733, %v4683, 0
        %4737 = vmatprep.subr.bf16.mxu0 0
        %4738 = vmatpush1.bf16.msra.mxu0 %v4735
        %4739 = vmatprep.subr.bf16.mxu0 0
        %4740 = vmatpush1.bf16.msra.mxu0 0
        %4741 = vmatprep.subr.bf16.mxu0 0
        %4742 = vmatpush1.bf16.msra.mxu0 0
        %4743 = vmatprep.subr.bf16.mxu0 0
        %4744 = vmatpush1.bf16.msra.mxu0 0
        %4745 = vmatprep.subr.bf16.mxu0 0
        %4746 = vmatpush1.bf16.msra.mxu0 0
        %4747 = vmatprep.subr.bf16.mxu0 0
        %4748 = vmatpush1.bf16.msra.mxu0 0
        %4749 = vmatprep.subr.bf16.mxu0 0
        %4750 = vmatpush1.bf16.msra.mxu0 0
        %4751 = vmatprep.subr.bf16.mxu0 0
        %4752 = vmatpush1.bf16.msra.mxu0 0
        %4753 = vmatprep.subr.bf16.mxu0 0
        %4754 = vmatpush1.bf16.msra.mxu0 0
        %4755 = vmatprep.subr.bf16.mxu0 0
        %4756 = vmatpush1.bf16.msra.mxu0 0
        %4757 = vmatprep.subr.bf16.mxu0 0
        %4758 = vmatpush1.bf16.msra.mxu0 0
        %4759 = vmatprep.subr.bf16.mxu0 0
        %4760 = vmatpush1.bf16.msra.mxu0 0
        %4761 = vmatprep.subr.bf16.mxu0 0
        %4762 = vmatpush1.bf16.msra.mxu0 0
        %4763 = vmatprep.subr.bf16.mxu0 0
        %4764 = vmatpush1.bf16.msra.mxu0 0
        %4765 = vmatprep.subr.bf16.mxu0 0
        %4766 = vmatpush1.bf16.msra.mxu0 0
        %4767 = vmatprep.subr.bf16.mxu0 0
        %4768 = vmatpush1.bf16.msra.mxu0 0
        %4769 = vmatprep.mubr.bf16.mxu0 0
        %4770 = vmatmul.mubr.bf16.gmra.mrb[0].mxu0 %v4710
        %v4771 = vpop.f32.mrb[0].mxu0
        %v4772 = vadd.f32 0.0, %v4771
        %v4773 = vpop.f32.mrb[0].mxu0
        %v4774 = vpop.f32.mrb[0].mxu0
        %v4775 = vadd.f32 0.0, %v4774
        %v4776 = vpop.f32.mrb[0].mxu0
        %4777 = vmatprep.mubr.bf16.mxu0 0
        %4778 = vmatmul.mubr.bf16.gmra.mrb[0].mxu0 %v4713
        %v4779 = vpop.f32.mrb[0].mxu0
        %v4780 = vpop.f32.mrb[0].mxu0
        %v4781 = vpop.f32.mrb[0].mxu0
        %v4782 = vpop.f32.mrb[0].mxu0
        %4783 = vmatprep.mubr.bf16.mxu0 0
        %4784 = vmatmul.mubr.bf16.gmra.mrb[0].mxu0 %v4716
        %v4785 = vpop.f32.mrb[0].mxu0
        %v4786 = vadd.f32 0.0, %v4785
        %v4787 = vpop.f32.mrb[0].mxu0
        %v4788 = vpop.f32.mrb[0].mxu0
        %v4789 = vadd.f32 0.0, %v4788
        %v4790 = vpop.f32.mrb[0].mxu0
        %4791 = vmatprep.mubr.bf16.mxu0 0
        %4792 = vmatmul.mubr.bf16.gmra.mrb[0].mxu0 %v4719
        %v4793 = vpop.f32.mrb[0].mxu0
        %v4794 = vpop.f32.mrb[0].mxu0
        %v4795 = vpop.f32.mrb[0].mxu0
        %v4796 = vpop.f32.mrb[0].mxu0
        %4797 = vmatprep.mubr.bf16.mxu0 0
        %4798 = vmatmul.mubr.bf16.gmra.mrb[0].mxu0 %v4722
        %v4799 = vpop.f32.mrb[0].mxu0
        %v4800 = vadd.f32 0.0, %v4799
        %v4801 = vpop.f32.mrb[0].mxu0
        %v4802 = vpop.f32.mrb[0].mxu0
        %v4803 = vadd.f32 0.0, %v4802
        %v4804 = vpop.f32.mrb[0].mxu0
        %4805 = vmatprep.mubr.bf16.mxu0 0
        %4806 = vmatmul.mubr.bf16.gmra.mrb[0].mxu0 %v4725
        %v4807 = vpop.f32.mrb[0].mxu0
        %v4808 = vpop.f32.mrb[0].mxu0
        %v4809 = vpop.f32.mrb[0].mxu0
        %v4810 = vpop.f32.mrb[0].mxu0
        %4811 = vmatprep.mubr.bf16.mxu0 0
        %4812 = vmatmul.mubr.bf16.gmra.mrb[0].mxu0 %v4728
        %v4813 = vpop.f32.mrb[0].mxu0
        %v4814 = vadd.f32 0.0, %v4813
        %v4815 = vpop.f32.mrb[0].mxu0
        %v4816 = vpop.f32.mrb[0].mxu0
        %v4817 = vadd.f32 0.0, %v4816
        %v4818 = vpop.f32.mrb[0].mxu0
        %4819 = vmatprep.mubr.bf16.mxu0 0
        %4820 = vmatmul.mubr.bf16.gmra.mrb[0].mxu0 %v4731
        %v4821 = vpop.f32.mrb[0].mxu0
        %v4822 = vpop.f32.mrb[0].mxu0
        %v4823 = vpop.f32.mrb[0].mxu0
        %v4824 = vpop.f32.mrb[0].mxu0
        %4825 = vdwg.mxu0
        %v4842 = vunpack.c.l.b16 %v4465
        %v4843 = vunpack.c.l.b16 %v4466
        %v4844 = vunpack.c.l.b16 %v4467
        %v4845 = vunpack.c.l.b16 %v4468
        %v4846 = vunpack.c.l.b16 %v4469
        %v4847 = vunpack.c.l.b16 %v4470
        %v4848 = vunpack.c.l.b16 %v4471
        %v4849 = vunpack.c.l.b16 %v4472
        %v4850 = vunpack.c.l.b16 %v4473
        %v4851 = vunpack.c.l.b16 %v4474
        %v4852 = vunpack.c.l.b16 %v4475
        %v4853 = vunpack.c.l.b16 %v4476
        %v4854 = vunpack.c.l.b16 %v4477
        %v4855 = vunpack.c.l.b16 %v4478
        %v4856 = vunpack.c.l.b16 %v4479
        %v4857 = vunpack.c.l.b16 %v4480
        %v4858 = vpack.c.b16 %v4843, %v4842
        %v4859 = vpack.c.b16 %v4845, %v4844
        %v4860 = vpack.c.b16 %v4847, %v4846
        %v4861 = vpack.c.b16 %v4849, %v4848
        %v4862 = vpack.c.b16 %v4851, %v4850
        %v4863 = vpack.c.b16 %v4853, %v4852
        %v4864 = vpack.c.b16 %v4855, %v4854
        %v4865 = vpack.c.b16 %v4857, %v4856
        %v4867 = vsel %vm4708, %v4858, 0
        %v4870 = vsel %vm4708, %v4859, 0
        %v4873 = vsel %vm4708, %v4860, 0
        %v4876 = vsel %vm4708, %v4861, 0
        %v4879 = vsel %vm4708, %v4862, 0
        %v4882 = vsel %vm4708, %v4863, 0
        %v4885 = vsel %vm4708, %v4864, 0
        %v4888 = vsel %vm4708, %v4865, 0
        %v4891 = vsel %vm4733, %v4481, 0
        %4893 = vmatprep.subr.bf16.mxu0 0
        %4894 = vmatpush1.bf16.msra.mxu0 %v4891
        %4895 = vmatprep.subr.bf16.mxu0 0
        %4896 = vmatpush1.bf16.msra.mxu0 0
        %4897 = vmatprep.subr.bf16.mxu0 0
        %4898 = vmatpush1.bf16.msra.mxu0 0
        %4899 = vmatprep.subr.bf16.mxu0 0
        %4900 = vmatpush1.bf16.msra.mxu0 0
        %4901 = vmatprep.subr.bf16.mxu0 0
        %4902 = vmatpush1.bf16.msra.mxu0 0
        %4903 = vmatprep.subr.bf16.mxu0 0
        %4904 = vmatpush1.bf16.msra.mxu0 0
        %4905 = vmatprep.subr.bf16.mxu0 0
        %4906 = vmatpush1.bf16.msra.mxu0 0
        %4907 = vmatprep.subr.bf16.mxu0 0
        %4908 = vmatpush1.bf16.msra.mxu0 0
        %4909 = vmatprep.subr.bf16.mxu0 0
        %4910 = vmatpush1.bf16.msra.mxu0 0
        %4911 = vmatprep.subr.bf16.mxu0 0
        %4912 = vmatpush1.bf16.msra.mxu0 0
        %4913 = vmatprep.subr.bf16.mxu0 0
        %4914 = vmatpush1.bf16.msra.mxu0 0
        %4915 = vmatprep.subr.bf16.mxu0 0
        %4916 = vmatpush1.bf16.msra.mxu0 0
        %4917 = vmatprep.subr.bf16.mxu0 0
        %4918 = vmatpush1.bf16.msra.mxu0 0
        %4919 = vmatprep.subr.bf16.mxu0 0
        %4920 = vmatpush1.bf16.msra.mxu0 0
        %4921 = vmatprep.subr.bf16.mxu0 0
        %4922 = vmatpush1.bf16.msra.mxu0 0
        %4923 = vmatprep.subr.bf16.mxu0 0
        %4924 = vmatpush1.bf16.msra.mxu0 0
        %4925 = vmatprep.mubr.bf16.mxu0 0
        %4926 = vmatmul.mubr.bf16.gmra.mrb[0].mxu0 %v4867
        %v4927 = vpop.f32.mrb[0].mxu0
        %v4928 = vadd.f32 %v4772, %v4927
        %v4929 = vpop.f32.mrb[0].mxu0
        %v4930 = vpop.f32.mrb[0].mxu0
        %v4931 = vadd.f32 %v4775, %v4930
        %v4932 = vpop.f32.mrb[0].mxu0
        %4933 = vmatprep.mubr.bf16.mxu0 0
        %4934 = vmatmul.mubr.bf16.gmra.mrb[0].mxu0 %v4870
        %v4935 = vpop.f32.mrb[0].mxu0
        %v4936 = vpop.f32.mrb[0].mxu0
        %v4937 = vpop.f32.mrb[0].mxu0
        %v4938 = vpop.f32.mrb[0].mxu0
        %4939 = vmatprep.mubr.bf16.mxu0 0
        %4940 = vmatmul.mubr.bf16.gmra.mrb[0].mxu0 %v4873
        %v4941 = vpop.f32.mrb[0].mxu0
        %v4942 = vadd.f32 %v4786, %v4941
        %v4943 = vpop.f32.mrb[0].mxu0
        %v4944 = vpop.f32.mrb[0].mxu0
        %v4945 = vadd.f32 %v4789, %v4944
        %v4946 = vpop.f32.mrb[0].mxu0
        %4947 = vmatprep.mubr.bf16.mxu0 0
        %4948 = vmatmul.mubr.bf16.gmra.mrb[0].mxu0 %v4876
        %v4949 = vpop.f32.mrb[0].mxu0
        %v4950 = vpop.f32.mrb[0].mxu0
        %v4951 = vpop.f32.mrb[0].mxu0
        %v4952 = vpop.f32.mrb[0].mxu0
        %4953 = vmatprep.mubr.bf16.mxu0 0
        %4954 = vmatmul.mubr.bf16.gmra.mrb[0].mxu0 %v4879
        %v4955 = vpop.f32.mrb[0].mxu0
        %v4956 = vadd.f32 %v4800, %v4955
        %v4957 = vpop.f32.mrb[0].mxu0
        %v4958 = vpop.f32.mrb[0].mxu0
        %v4959 = vadd.f32 %v4803, %v4958
        %v4960 = vpop.f32.mrb[0].mxu0
        %4961 = vmatprep.mubr.bf16.mxu0 0
        %4962 = vmatmul.mubr.bf16.gmra.mrb[0].mxu0 %v4882
        %v4963 = vpop.f32.mrb[0].mxu0
        %v4964 = vpop.f32.mrb[0].mxu0
        %v4965 = vpop.f32.mrb[0].mxu0
        %v4966 = vpop.f32.mrb[0].mxu0
        %4967 = vmatprep.mubr.bf16.mxu0 0
        %4968 = vmatmul.mubr.bf16.gmra.mrb[0].mxu0 %v4885
        %v4969 = vpop.f32.mrb[0].mxu0
        %v4970 = vadd.f32 %v4814, %v4969
        %v4971 = vpop.f32.mrb[0].mxu0
        %v4972 = vpop.f32.mrb[0].mxu0
        %v4973 = vadd.f32 %v4817, %v4972
        %v4974 = vpop.f32.mrb[0].mxu0
        %4975 = vmatprep.mubr.bf16.mxu0 0
        %4976 = vmatmul.mubr.bf16.gmra.mrb[0].mxu0 %v4888
        %v4977 = vpop.f32.mrb[0].mxu0
        %v4978 = vpop.f32.mrb[0].mxu0
        %v4979 = vpop.f32.mrb[0].mxu0
        %v4980 = vpop.f32.mrb[0].mxu0
        %4981 = vdwg.mxu0
        %v4982 = vld [vmem:[#allocation3] sm:$0xe]
        %v4983 = vld [vmem:[#allocation3 + $0xc] sm:$0xe]
        %v4984 = vld [vmem:[#allocation3 + $0x18] sm:$0xe]
        %v4985 = vld [vmem:[#allocation3 + $0x24] sm:$0xe]
        %v4986 = vld [vmem:[#allocation3 + $0x30] sm:$0xe]
        %v4987 = vld [vmem:[#allocation3 + $0x3c] sm:$0xe]
        %v4988 = vld [vmem:[#allocation3 + $0x48] sm:$0xe]
        %v4989 = vld [vmem:[#allocation3 + $0x54] sm:$0xe]
        %v5006 = vrot.slane %v4982, 5
        %v5007 = vrot.slane %v5006, 4
        %v5008 = vrot.slane %v4466, 5
        %v5009 = vsel %vm1689, %v5007, %v5008
        %v5010 = vrot.slane %v5008, 4
        %v5011 = vrot.slane %v4482, 5
        %v5012 = vsel %vm1689, %v5010, %v5011
        %v5013 = vrot.slane %v4983, 5
        %v5014 = vrot.slane %v5013, 4
        %v5015 = vrot.slane %v4468, 5
        %v5016 = vsel %vm1689, %v5014, %v5015
        %v5017 = vrot.slane %v5015, 4
        %v5018 = vrot.slane %v4483, 5
        %v5019 = vsel %vm1689, %v5017, %v5018
        %v5020 = vrot.slane %v4984, 5
        %v5021 = vrot.slane %v5020, 4
        %v5022 = vrot.slane %v4470, 5
        %v5023 = vsel %vm1689, %v5021, %v5022
        %v5024 = vrot.slane %v5022, 4
        %v5025 = vrot.slane %v4484, 5
        %v5026 = vsel %vm1689, %v5024, %v5025
        %v5027 = vrot.slane %v4985, 5
        %v5028 = vrot.slane %v5027, 4
        %v5029 = vrot.slane %v4472, 5
        %v5030 = vsel %vm1689, %v5028, %v5029
        %v5031 = vrot.slane %v5029, 4
        %v5032 = vrot.slane %v4485, 5
        %v5033 = vsel %vm1689, %v5031, %v5032
        %v5034 = vrot.slane %v4986, 5
        %v5035 = vrot.slane %v5034, 4
        %v5036 = vrot.slane %v4474, 5
        %v5037 = vsel %vm1689, %v5035, %v5036
        %v5038 = vrot.slane %v5036, 4
        %v5039 = vrot.slane %v4486, 5
        %v5040 = vsel %vm1689, %v5038, %v5039
        %v5041 = vrot.slane %v4987, 5
        %v5042 = vrot.slane %v5041, 4
        %v5043 = vrot.slane %v4476, 5
        %v5044 = vsel %vm1689, %v5042, %v5043
        %v5045 = vrot.slane %v5043, 4
        %v5046 = vrot.slane %v4487, 5
        %v5047 = vsel %vm1689, %v5045, %v5046
        %v5048 = vrot.slane %v4988, 5
        %v5049 = vrot.slane %v5048, 4
        %v5050 = vrot.slane %v4478, 5
        %v5051 = vsel %vm1689, %v5049, %v5050
        %v5052 = vrot.slane %v5050, 4
        %v5053 = vrot.slane %v4488, 5
        %v5054 = vsel %vm1689, %v5052, %v5053
        %v5055 = vrot.slane %v4989, 5
        %v5056 = vrot.slane %v5055, 4
        %v5057 = vrot.slane %v4480, 5
        %v5058 = vsel %vm1689, %v5056, %v5057
        %v5059 = vrot.slane %v5057, 4
        %v5060 = vrot.slane %v4489, 5
        %v5061 = vsel %vm1689, %v5059, %v5060
        %s5062 = scalar_lea.vmem %s5, 8
        %v5063 = vld [vmem:[%s5062] sm:$0xf]
        %v5064 = vunpack.c.l.b16 %v5009
        %v5065 = vunpack.c.l.b16 %v5012
        %v5066 = vunpack.c.l.b16 %v5016
        %v5067 = vunpack.c.l.b16 %v5019
        %v5068 = vunpack.c.l.b16 %v5023
        %v5069 = vunpack.c.l.b16 %v5026
        %v5070 = vunpack.c.l.b16 %v5030
        %v5071 = vunpack.c.l.b16 %v5033
        %v5072 = vunpack.c.l.b16 %v5037
        %v5073 = vunpack.c.l.b16 %v5040
        %v5074 = vunpack.c.l.b16 %v5044
        %v5075 = vunpack.c.l.b16 %v5047
        %v5076 = vunpack.c.l.b16 %v5051
        %v5077 = vunpack.c.l.b16 %v5054
        %v5078 = vunpack.c.l.b16 %v5058
        %v5079 = vunpack.c.l.b16 %v5061
        %v5080 = vpack.c.b16 %v5065, %v5064
        %v5081 = vpack.c.b16 %v5067, %v5066
        %v5082 = vpack.c.b16 %v5069, %v5068
        %v5083 = vpack.c.b16 %v5071, %v5070
        %v5084 = vpack.c.b16 %v5073, %v5072
        %v5085 = vpack.c.b16 %v5075, %v5074
        %v5086 = vpack.c.b16 %v5077, %v5076
        %v5087 = vpack.c.b16 %v5079, %v5078
        %v5089 = vsel %vm4708, %v5080, 0
        %v5092 = vsel %vm4708, %v5081, 0
        %v5095 = vsel %vm4708, %v5082, 0
        %v5098 = vsel %vm4708, %v5083, 0
        %v5101 = vsel %vm4708, %v5084, 0
        %v5104 = vsel %vm4708, %v5085, 0
        %v5107 = vsel %vm4708, %v5086, 0
        %v5110 = vsel %vm4708, %v5087, 0
        %v5113 = vsel %vm4733, %v5063, 0
        %5115 = vmatprep.subr.bf16.mxu0 0
        %5116 = vmatpush1.bf16.msra.mxu0 %v5113
        %5117 = vmatprep.subr.bf16.mxu0 0
        %5118 = vmatpush1.bf16.msra.mxu0 0
        %5119 = vmatprep.subr.bf16.mxu0 0
        %5120 = vmatpush1.bf16.msra.mxu0 0
        %5121 = vmatprep.subr.bf16.mxu0 0
        %5122 = vmatpush1.bf16.msra.mxu0 0
        %5123 = vmatprep.subr.bf16.mxu0 0
        %5124 = vmatpush1.bf16.msra.mxu0 0
        %5125 = vmatprep.subr.bf16.mxu0 0
        %5126 = vmatpush1.bf16.msra.mxu0 0
        %5127 = vmatprep.subr.bf16.mxu0 0
        %5128 = vmatpush1.bf16.msra.mxu0 0
        %5129 = vmatprep.subr.bf16.mxu0 0
        %5130 = vmatpush1.bf16.msra.mxu0 0
        %5131 = vmatprep.subr.bf16.mxu0 0
        %5132 = vmatpush1.bf16.msra.mxu0 0
        %5133 = vmatprep.subr.bf16.mxu0 0
        %5134 = vmatpush1.bf16.msra.mxu0 0
        %5135 = vmatprep.subr.bf16.mxu0 0
        %5136 = vmatpush1.bf16.msra.mxu0 0
        %5137 = vmatprep.subr.bf16.mxu0 0
        %5138 = vmatpush1.bf16.msra.mxu0 0
        %5139 = vmatprep.subr.bf16.mxu0 0
        %5140 = vmatpush1.bf16.msra.mxu0 0
        %5141 = vmatprep.subr.bf16.mxu0 0
        %5142 = vmatpush1.bf16.msra.mxu0 0
        %5143 = vmatprep.subr.bf16.mxu0 0
        %5144 = vmatpush1.bf16.msra.mxu0 0
        %5145 = vmatprep.subr.bf16.mxu0 0
        %5146 = vmatpush1.bf16.msra.mxu0 0
        %5147 = vmatprep.mubr.bf16.mxu0 0
        %5148 = vmatmul.mubr.bf16.gmra.mrb[0].mxu0 %v5089
        %v5149 = vpop.f32.mrb[0].mxu0
        %v5150 = vadd.f32 0.0, %v5149
        %v5151 = vpop.f32.mrb[0].mxu0
        %v5152 = vpop.f32.mrb[0].mxu0
        %v5153 = vadd.f32 0.0, %v5152
        %v5154 = vpop.f32.mrb[0].mxu0
        %5155 = vmatprep.mubr.bf16.mxu0 0
        %5156 = vmatmul.mubr.bf16.gmra.mrb[0].mxu0 %v5092
        %v5157 = vpop.f32.mrb[0].mxu0
        %v5158 = vpop.f32.mrb[0].mxu0
        %v5159 = vpop.f32.mrb[0].mxu0
        %v5160 = vpop.f32.mrb[0].mxu0
        %5161 = vmatprep.mubr.bf16.mxu0 0
        %5162 = vmatmul.mubr.bf16.gmra.mrb[0].mxu0 %v5095
        %v5163 = vpop.f32.mrb[0].mxu0
        %v5164 = vadd.f32 0.0, %v5163
        %v5165 = vpop.f32.mrb[0].mxu0
        %v5166 = vpop.f32.mrb[0].mxu0
        %v5167 = vadd.f32 0.0, %v5166
        %v5168 = vpop.f32.mrb[0].mxu0
        %5169 = vmatprep.mubr.bf16.mxu0 0
        %5170 = vmatmul.mubr.bf16.gmra.mrb[0].mxu0 %v5098
        %v5171 = vpop.f32.mrb[0].mxu0
        %v5172 = vpop.f32.mrb[0].mxu0
        %v5173 = vpop.f32.mrb[0].mxu0
        %v5174 = vpop.f32.mrb[0].mxu0
        %5175 = vmatprep.mubr.bf16.mxu0 0
        %5176 = vmatmul.mubr.bf16.gmra.mrb[0].mxu0 %v5101
        %v5177 = vpop.f32.mrb[0].mxu0
        %v5178 = vadd.f32 0.0, %v5177
        %v5179 = vpop.f32.mrb[0].mxu0
        %v5180 = vpop.f32.mrb[0].mxu0
        %v5181 = vadd.f32 0.0, %v5180
        %v5182 = vpop.f32.mrb[0].mxu0
        %5183 = vmatprep.mubr.bf16.mxu0 0
        %5184 = vmatmul.mubr.bf16.gmra.mrb[0].mxu0 %v5104
        %v5185 = vpop.f32.mrb[0].mxu0
        %v5186 = vpop.f32.mrb[0].mxu0
        %v5187 = vpop.f32.mrb[0].mxu0
        %v5188 = vpop.f32.mrb[0].mxu0
        %5189 = vmatprep.mubr.bf16.mxu0 0
        %5190 = vmatmul.mubr.bf16.gmra.mrb[0].mxu0 %v5107
        %v5191 = vpop.f32.mrb[0].mxu0
        %v5192 = vadd.f32 0.0, %v5191
        %v5193 = vpop.f32.mrb[0].mxu0
        %v5194 = vpop.f32.mrb[0].mxu0
        %v5195 = vadd.f32 0.0, %v5194
        %v5196 = vpop.f32.mrb[0].mxu0
        %5197 = vmatprep.mubr.bf16.mxu0 0
        %5198 = vmatmul.mubr.bf16.gmra.mrb[0].mxu0 %v5110
        %v5199 = vpop.f32.mrb[0].mxu0
        %v5200 = vpop.f32.mrb[0].mxu0
        %v5201 = vpop.f32.mrb[0].mxu0
        %v5202 = vpop.f32.mrb[0].mxu0
        %5203 = vdwg.mxu0
        %v5204 = vadd.f32 %v4928, %v5150
        %v5205 = vadd.f32 %v4931, %v5153
        %v5206 = vadd.f32 %v4942, %v5164
        %v5207 = vadd.f32 %v4945, %v5167
        %v5208 = vadd.f32 %v4956, %v5178
        %v5209 = vadd.f32 %v4959, %v5181
        %v5210 = vadd.f32 %v4970, %v5192
        %v5211 = vadd.f32 %v4973, %v5195
        %s5212 = scalar_lea.vmem [#allocation3], 12
        %v5213 = vld [vmem:[%s5212] sm:$0xf]
        %v5214 = vld [vmem:[%s5212 + $0x4] sm:$0xf]
        %v5215 = vld [vmem:[%s5212 + $0xc] sm:$0xf]
        %v5216 = vld [vmem:[%s5212 + $0x10] sm:$0xf]
        %v5217 = vld [vmem:[%s5212 + $0x18] sm:$0xf]
        %v5218 = vld [vmem:[%s5212 + $0x1c] sm:$0xf]
        %v5219 = vld [vmem:[%s5212 + $0x24] sm:$0xf]
        %v5220 = vld [vmem:[%s5212 + $0x28] sm:$0xf]
        %v5221 = vld [vmem:[%s5212 + $0x30] sm:$0xf]
        %v5222 = vld [vmem:[%s5212 + $0x34] sm:$0xf]
        %v5223 = vld [vmem:[%s5212 + $0x3c] sm:$0xf]
        %v5224 = vld [vmem:[%s5212 + $0x40] sm:$0xf]
        %v5225 = vld [vmem:[%s5212 + $0x48] sm:$0xf]
        %v5226 = vld [vmem:[%s5212 + $0x4c] sm:$0xf]
        %v5227 = vld [vmem:[%s5212 + $0x54] sm:$0xf]
        %v5228 = vld [vmem:[%s5212 + $0x58] sm:$0xf]
        %s5229 = scalar_lea.vmem %s5, 12
        %v5230 = vld [vmem:[%s5229] sm:$0xf]
        %v5247 = vunpack.c.l.b16 %v5213
        %v5248 = vunpack.c.l.b16 %v5214
        %v5249 = vunpack.c.l.b16 %v5215
        %v5250 = vunpack.c.l.b16 %v5216
        %v5251 = vunpack.c.l.b16 %v5217
        %v5252 = vunpack.c.l.b16 %v5218
        %v5253 = vunpack.c.l.b16 %v5219
        %v5254 = vunpack.c.l.b16 %v5220
        %v5255 = vunpack.c.l.b16 %v5221
        %v5256 = vunpack.c.l.b16 %v5222
        %v5257 = vunpack.c.l.b16 %v5223
        %v5258 = vunpack.c.l.b16 %v5224
        %v5259 = vunpack.c.l.b16 %v5225
        %v5260 = vunpack.c.l.b16 %v5226
        %v5261 = vunpack.c.l.b16 %v5227
        %v5262 = vunpack.c.l.b16 %v5228
        %v5263 = vpack.c.b16 %v5248, %v5247
        %v5264 = vpack.c.b16 %v5250, %v5249
        %v5265 = vpack.c.b16 %v5252, %v5251
        %v5266 = vpack.c.b16 %v5254, %v5253
        %v5267 = vpack.c.b16 %v5256, %v5255
        %v5268 = vpack.c.b16 %v5258, %v5257
        %v5269 = vpack.c.b16 %v5260, %v5259
        %v5270 = vpack.c.b16 %v5262, %v5261
        %v5272 = vsel %vm4708, %v5263, 0
        %v5275 = vsel %vm4708, %v5264, 0
        %v5278 = vsel %vm4708, %v5265, 0
        %v5281 = vsel %vm4708, %v5266, 0
        %v5284 = vsel %vm4708, %v5267, 0
        %v5287 = vsel %vm4708, %v5268, 0
        %v5290 = vsel %vm4708, %v5269, 0
        %v5293 = vsel %vm4708, %v5270, 0
        %v5296 = vsel %vm4733, %v5230, 0
        %5298 = vmatprep.subr.bf16.mxu0 0
        %5299 = vmatpush1.bf16.msra.mxu0 %v5296
        %5300 = vmatprep.subr.bf16.mxu0 0
        %5301 = vmatpush1.bf16.msra.mxu0 0
        %5302 = vmatprep.subr.bf16.mxu0 0
        %5303 = vmatpush1.bf16.msra.mxu0 0
        %5304 = vmatprep.subr.bf16.mxu0 0
        %5305 = vmatpush1.bf16.msra.mxu0 0
        %5306 = vmatprep.subr.bf16.mxu0 0
        %5307 = vmatpush1.bf16.msra.mxu0 0
        %5308 = vmatprep.subr.bf16.mxu0 0
        %5309 = vmatpush1.bf16.msra.mxu0 0
        %5310 = vmatprep.subr.bf16.mxu0 0
        %5311 = vmatpush1.bf16.msra.mxu0 0
        %5312 = vmatprep.subr.bf16.mxu0 0
        %5313 = vmatpush1.bf16.msra.mxu0 0
        %5314 = vmatprep.subr.bf16.mxu0 0
        %5315 = vmatpush1.bf16.msra.mxu0 0
        %5316 = vmatprep.subr.bf16.mxu0 0
        %5317 = vmatpush1.bf16.msra.mxu0 0
        %5318 = vmatprep.subr.bf16.mxu0 0
        %5319 = vmatpush1.bf16.msra.mxu0 0
        %5320 = vmatprep.subr.bf16.mxu0 0
        %5321 = vmatpush1.bf16.msra.mxu0 0
        %5322 = vmatprep.subr.bf16.mxu0 0
        %5323 = vmatpush1.bf16.msra.mxu0 0
        %5324 = vmatprep.subr.bf16.mxu0 0
        %5325 = vmatpush1.bf16.msra.mxu0 0
        %5326 = vmatprep.subr.bf16.mxu0 0
        %5327 = vmatpush1.bf16.msra.mxu0 0
        %5328 = vmatprep.subr.bf16.mxu0 0
        %5329 = vmatpush1.bf16.msra.mxu0 0
        %5330 = vmatprep.mubr.bf16.mxu0 0
        %5331 = vmatmul.mubr.bf16.gmra.mrb[0].mxu0 %v5272
        %v5332 = vpop.f32.mrb[0].mxu0
        %v5333 = vadd.f32 0.0, %v5332
        %v5334 = vpop.f32.mrb[0].mxu0
        %v5335 = vpop.f32.mrb[0].mxu0
        %v5336 = vadd.f32 0.0, %v5335
        %v5337 = vpop.f32.mrb[0].mxu0
        %5338 = vmatprep.mubr.bf16.mxu0 0
        %5339 = vmatmul.mubr.bf16.gmra.mrb[0].mxu0 %v5275
        %v5340 = vpop.f32.mrb[0].mxu0
        %v5341 = vpop.f32.mrb[0].mxu0
        %v5342 = vpop.f32.mrb[0].mxu0
        %v5343 = vpop.f32.mrb[0].mxu0
        %5344 = vmatprep.mubr.bf16.mxu0 0
        %5345 = vmatmul.mubr.bf16.gmra.mrb[0].mxu0 %v5278
        %v5346 = vpop.f32.mrb[0].mxu0
        %v5347 = vadd.f32 0.0, %v5346
        %v5348 = vpop.f32.mrb[0].mxu0
        %v5349 = vpop.f32.mrb[0].mxu0
        %v5350 = vadd.f32 0.0, %v5349
        %v5351 = vpop.f32.mrb[0].mxu0
        %5352 = vmatprep.mubr.bf16.mxu0 0
        %5353 = vmatmul.mubr.bf16.gmra.mrb[0].mxu0 %v5281
        %v5354 = vpop.f32.mrb[0].mxu0
        %v5355 = vpop.f32.mrb[0].mxu0
        %v5356 = vpop.f32.mrb[0].mxu0
        %v5357 = vpop.f32.mrb[0].mxu0
        %5358 = vmatprep.mubr.bf16.mxu0 0
        %5359 = vmatmul.mubr.bf16.gmra.mrb[0].mxu0 %v5284
        %v5360 = vpop.f32.mrb[0].mxu0
        %v5361 = vadd.f32 0.0, %v5360
        %v5362 = vpop.f32.mrb[0].mxu0
        %v5363 = vpop.f32.mrb[0].mxu0
        %v5364 = vadd.f32 0.0, %v5363
        %v5365 = vpop.f32.mrb[0].mxu0
        %5366 = vmatprep.mubr.bf16.mxu0 0
        %5367 = vmatmul.mubr.bf16.gmra.mrb[0].mxu0 %v5287
        %v5368 = vpop.f32.mrb[0].mxu0
        %v5369 = vpop.f32.mrb[0].mxu0
        %v5370 = vpop.f32.mrb[0].mxu0
        %v5371 = vpop.f32.mrb[0].mxu0
        %5372 = vmatprep.mubr.bf16.mxu0 0
        %5373 = vmatmul.mubr.bf16.gmra.mrb[0].mxu0 %v5290
        %v5374 = vpop.f32.mrb[0].mxu0
        %v5375 = vadd.f32 0.0, %v5374
        %v5376 = vpop.f32.mrb[0].mxu0
        %v5377 = vpop.f32.mrb[0].mxu0
        %v5378 = vadd.f32 0.0, %v5377
        %v5379 = vpop.f32.mrb[0].mxu0
        %5380 = vmatprep.mubr.bf16.mxu0 0
        %5381 = vmatmul.mubr.bf16.gmra.mrb[0].mxu0 %v5293
        %v5382 = vpop.f32.mrb[0].mxu0
        %v5383 = vpop.f32.mrb[0].mxu0
        %v5384 = vpop.f32.mrb[0].mxu0
        %v5385 = vpop.f32.mrb[0].mxu0
        %5386 = vdwg.mxu0
        %v5387 = vadd.f32 %v5204, %v5333
        %v5388 = vadd.f32 %v5205, %v5336
        %v5389 = vadd.f32 %v5206, %v5347
        %v5390 = vadd.f32 %v5207, %v5350
        %v5391 = vadd.f32 %v5208, %v5361
        %v5392 = vadd.f32 %v5209, %v5364
        %v5393 = vadd.f32 %v5210, %v5375
        %v5394 = vadd.f32 %v5211, %v5378
        %v5395 = vld [vmem:[%s5212] sm:$0xf]
        %v5396 = vld [vmem:[%s5212 + $0x4] sm:$0xf]
        %v5397 = vld [vmem:[%s5212 + $0x8] sm:$0x1]
        %v5398 = vld [vmem:[%s5212 + $0xc] sm:$0xf]
        %v5399 = vld [vmem:[%s5212 + $0x10] sm:$0xf]
        %v5400 = vld [vmem:[%s5212 + $0x14] sm:$0x1]
        %v5401 = vld [vmem:[%s5212 + $0x18] sm:$0xf]
        %v5402 = vld [vmem:[%s5212 + $0x1c] sm:$0xf]
        %v5403 = vld [vmem:[%s5212 + $0x20] sm:$0x1]
        %v5404 = vld [vmem:[%s5212 + $0x24] sm:$0xf]
        %v5405 = vld [vmem:[%s5212 + $0x28] sm:$0xf]
        %v5406 = vld [vmem:[%s5212 + $0x2c] sm:$0x1]
        %v5407 = vld [vmem:[%s5212 + $0x30] sm:$0xf]
        %v5408 = vld [vmem:[%s5212 + $0x34] sm:$0xf]
        %v5409 = vld [vmem:[%s5212 + $0x38] sm:$0x1]
        %v5410 = vld [vmem:[%s5212 + $0x3c] sm:$0xf]
        %v5411 = vld [vmem:[%s5212 + $0x40] sm:$0xf]
        %v5412 = vld [vmem:[%s5212 + $0x44] sm:$0x1]
        %v5413 = vld [vmem:[%s5212 + $0x48] sm:$0xf]
        %v5414 = vld [vmem:[%s5212 + $0x4c] sm:$0xf]
        %v5415 = vld [vmem:[%s5212 + $0x50] sm:$0x1]
        %v5416 = vld [vmem:[%s5212 + $0x54] sm:$0xf]
        %v5417 = vld [vmem:[%s5212 + $0x58] sm:$0xf]
        %v5418 = vld [vmem:[%s5212 + $0x5c] sm:$0x1]
        %v5420 = vshrl.u32 %v5395, 16
        %v5422 = vrot.slane %v5420, 4
        %v5423 = vshll.u32 %v5395, 16
        %v5425 = vrot.slane %v5423, 5
        %v5426 = vor.u32 %v5422, %v5425
        %v5427 = vrot.slane %v5426, 4
        %v5429 = vshll.u32 %v5396, 16
        %v5431 = vrot.slane %v5429, 5
        %v5432 = vsel %vm1040, %v5427, %v5431
        %v5433 = vshrl.u32 %v5396, 16
        %v5435 = vrot.slane %v5433, 4
        %v5436 = vor.u32 %v5435, %v5431
        %v5437 = vrot.slane %v5436, 4
        %v5439 = vshll.u32 %v5397, 16
        %v5441 = vrot.slane %v5439, 5
        %v5442 = vsel %vm1040, %v5437, %v5441
        %v5444 = vshrl.u32 %v5398, 16
        %v5446 = vrot.slane %v5444, 4
        %v5447 = vshll.u32 %v5398, 16
        %v5449 = vrot.slane %v5447, 5
        %v5450 = vor.u32 %v5446, %v5449
        %v5451 = vrot.slane %v5450, 4
        %v5453 = vshll.u32 %v5399, 16
        %v5455 = vrot.slane %v5453, 5
        %v5456 = vsel %vm1040, %v5451, %v5455
        %v5457 = vshrl.u32 %v5399, 16
        %v5459 = vrot.slane %v5457, 4
        %v5460 = vor.u32 %v5459, %v5455
        %v5461 = vrot.slane %v5460, 4
        %v5463 = vshll.u32 %v5400, 16
        %v5465 = vrot.slane %v5463, 5
        %v5466 = vsel %vm1040, %v5461, %v5465
        %v5468 = vshrl.u32 %v5401, 16
        %v5470 = vrot.slane %v5468, 4
        %v5471 = vshll.u32 %v5401, 16
        %v5473 = vrot.slane %v5471, 5
        %v5474 = vor.u32 %v5470, %v5473
        %v5475 = vrot.slane %v5474, 4
        %v5477 = vshll.u32 %v5402, 16
        %v5479 = vrot.slane %v5477, 5
        %v5480 = vsel %vm1040, %v5475, %v5479
        %v5481 = vshrl.u32 %v5402, 16
        %v5483 = vrot.slane %v5481, 4
        %v5484 = vor.u32 %v5483, %v5479
        %v5485 = vrot.slane %v5484, 4
        %v5487 = vshll.u32 %v5403, 16
        %v5489 = vrot.slane %v5487, 5
        %v5490 = vsel %vm1040, %v5485, %v5489
        %v5492 = vshrl.u32 %v5404, 16
        %v5494 = vrot.slane %v5492, 4
        %v5495 = vshll.u32 %v5404, 16
        %v5497 = vrot.slane %v5495, 5
        %v5498 = vor.u32 %v5494, %v5497
        %v5499 = vrot.slane %v5498, 4
        %v5501 = vshll.u32 %v5405, 16
        %v5503 = vrot.slane %v5501, 5
        %v5504 = vsel %vm1040, %v5499, %v5503
        %v5505 = vshrl.u32 %v5405, 16
        %v5507 = vrot.slane %v5505, 4
        %v5508 = vor.u32 %v5507, %v5503
        %v5509 = vrot.slane %v5508, 4
        %v5511 = vshll.u32 %v5406, 16
        %v5513 = vrot.slane %v5511, 5
        %v5514 = vsel %vm1040, %v5509, %v5513
        %v5516 = vshrl.u32 %v5407, 16
        %v5518 = vrot.slane %v5516, 4
        %v5519 = vshll.u32 %v5407, 16
        %v5521 = vrot.slane %v5519, 5
        %v5522 = vor.u32 %v5518, %v5521
        %v5523 = vrot.slane %v5522, 4
        %v5525 = vshll.u32 %v5408, 16
        %v5527 = vrot.slane %v5525, 5
        %v5528 = vsel %vm1040, %v5523, %v5527
        %v5529 = vshrl.u32 %v5408, 16
        %v5531 = vrot.slane %v5529, 4
        %v5532 = vor.u32 %v5531, %v5527
        %v5533 = vrot.slane %v5532, 4
        %v5535 = vshll.u32 %v5409, 16
        %v5537 = vrot.slane %v5535, 5
        %v5538 = vsel %vm1040, %v5533, %v5537
        %v5540 = vshrl.u32 %v5410, 16
        %v5542 = vrot.slane %v5540, 4
        %v5543 = vshll.u32 %v5410, 16
        %v5545 = vrot.slane %v5543, 5
        %v5546 = vor.u32 %v5542, %v5545
        %v5547 = vrot.slane %v5546, 4
        %v5549 = vshll.u32 %v5411, 16
        %v5551 = vrot.slane %v5549, 5
        %v5552 = vsel %vm1040, %v5547, %v5551
        %v5553 = vshrl.u32 %v5411, 16
        %v5555 = vrot.slane %v5553, 4
        %v5556 = vor.u32 %v5555, %v5551
        %v5557 = vrot.slane %v5556, 4
        %v5559 = vshll.u32 %v5412, 16
        %v5561 = vrot.slane %v5559, 5
        %v5562 = vsel %vm1040, %v5557, %v5561
        %v5564 = vshrl.u32 %v5413, 16
        %v5566 = vrot.slane %v5564, 4
        %v5567 = vshll.u32 %v5413, 16
        %v5569 = vrot.slane %v5567, 5
        %v5570 = vor.u32 %v5566, %v5569
        %v5571 = vrot.slane %v5570, 4
        %v5573 = vshll.u32 %v5414, 16
        %v5575 = vrot.slane %v5573, 5
        %v5576 = vsel %vm1040, %v5571, %v5575
        %v5577 = vshrl.u32 %v5414, 16
        %v5579 = vrot.slane %v5577, 4
        %v5580 = vor.u32 %v5579, %v5575
        %v5581 = vrot.slane %v5580, 4
        %v5583 = vshll.u32 %v5415, 16
        %v5585 = vrot.slane %v5583, 5
        %v5586 = vsel %vm1040, %v5581, %v5585
        %v5588 = vshrl.u32 %v5416, 16
        %v5590 = vrot.slane %v5588, 4
        %v5591 = vshll.u32 %v5416, 16
        %v5593 = vrot.slane %v5591, 5
        %v5594 = vor.u32 %v5590, %v5593
        %v5595 = vrot.slane %v5594, 4
        %v5597 = vshll.u32 %v5417, 16
        %v5599 = vrot.slane %v5597, 5
        %v5600 = vsel %vm1040, %v5595, %v5599
        %v5601 = vshrl.u32 %v5417, 16
        %v5603 = vrot.slane %v5601, 4
        %v5604 = vor.u32 %v5603, %v5599
        %v5605 = vrot.slane %v5604, 4
        %v5607 = vshll.u32 %v5418, 16
        %v5609 = vrot.slane %v5607, 5
        %v5610 = vsel %vm1040, %v5605, %v5609
        %s5611 = scalar_lea.vmem %s5, 16
        %v5612 = vld [vmem:[%s5611] sm:$0xf]
        %v5613 = vunpack.c.l.b16 %v5432
        %v5614 = vunpack.c.l.b16 %v5442
        %v5615 = vunpack.c.l.b16 %v5456
        %v5616 = vunpack.c.l.b16 %v5466
        %v5617 = vunpack.c.l.b16 %v5480
        %v5618 = vunpack.c.l.b16 %v5490
        %v5619 = vunpack.c.l.b16 %v5504
        %v5620 = vunpack.c.l.b16 %v5514
        %v5621 = vunpack.c.l.b16 %v5528
        %v5622 = vunpack.c.l.b16 %v5538
        %v5623 = vunpack.c.l.b16 %v5552
        %v5624 = vunpack.c.l.b16 %v5562
        %v5625 = vunpack.c.l.b16 %v5576
        %v5626 = vunpack.c.l.b16 %v5586
        %v5627 = vunpack.c.l.b16 %v5600
        %v5628 = vunpack.c.l.b16 %v5610
        %v5629 = vpack.c.b16 %v5614, %v5613
        %v5630 = vpack.c.b16 %v5616, %v5615
        %v5631 = vpack.c.b16 %v5618, %v5617
        %v5632 = vpack.c.b16 %v5620, %v5619
        %v5633 = vpack.c.b16 %v5622, %v5621
        %v5634 = vpack.c.b16 %v5624, %v5623
        %v5635 = vpack.c.b16 %v5626, %v5625
        %v5636 = vpack.c.b16 %v5628, %v5627
        %v5638 = vsel %vm4708, %v5629, 0
        %v5641 = vsel %vm4708, %v5630, 0
        %v5644 = vsel %vm4708, %v5631, 0
        %v5647 = vsel %vm4708, %v5632, 0
        %v5650 = vsel %vm4708, %v5633, 0
        %v5653 = vsel %vm4708, %v5634, 0
        %v5656 = vsel %vm4708, %v5635, 0
        %v5659 = vsel %vm4708, %v5636, 0
        %v5662 = vsel %vm4733, %v5612, 0
        %5664 = vmatprep.subr.bf16.mxu0 0
        %5665 = vmatpush1.bf16.msra.mxu0 %v5662
        %5666 = vmatprep.subr.bf16.mxu0 0
        %5667 = vmatpush1.bf16.msra.mxu0 0
        %5668 = vmatprep.subr.bf16.mxu0 0
        %5669 = vmatpush1.bf16.msra.mxu0 0
        %5670 = vmatprep.subr.bf16.mxu0 0
        %5671 = vmatpush1.bf16.msra.mxu0 0
        %5672 = vmatprep.subr.bf16.mxu0 0
        %5673 = vmatpush1.bf16.msra.mxu0 0
        %5674 = vmatprep.subr.bf16.mxu0 0
        %5675 = vmatpush1.bf16.msra.mxu0 0
        %5676 = vmatprep.subr.bf16.mxu0 0
        %5677 = vmatpush1.bf16.msra.mxu0 0
        %5678 = vmatprep.subr.bf16.mxu0 0
        %5679 = vmatpush1.bf16.msra.mxu0 0
        %5680 = vmatprep.subr.bf16.mxu0 0
        %5681 = vmatpush1.bf16.msra.mxu0 0
        %5682 = vmatprep.subr.bf16.mxu0 0
        %5683 = vmatpush1.bf16.msra.mxu0 0
        %5684 = vmatprep.subr.bf16.mxu0 0
        %5685 = vmatpush1.bf16.msra.mxu0 0
        %5686 = vmatprep.subr.bf16.mxu0 0
        %5687 = vmatpush1.bf16.msra.mxu0 0
        %5688 = vmatprep.subr.bf16.mxu0 0
        %5689 = vmatpush1.bf16.msra.mxu0 0
        %5690 = vmatprep.subr.bf16.mxu0 0
        %5691 = vmatpush1.bf16.msra.mxu0 0
        %5692 = vmatprep.subr.bf16.mxu0 0
        %5693 = vmatpush1.bf16.msra.mxu0 0
        %5694 = vmatprep.subr.bf16.mxu0 0
        %5695 = vmatpush1.bf16.msra.mxu0 0
        %5696 = vmatprep.mubr.bf16.mxu0 0
        %5697 = vmatmul.mubr.bf16.gmra.mrb[0].mxu0 %v5638
        %v5698 = vpop.f32.mrb[0].mxu0
        %v5699 = vadd.f32 0.0, %v5698
        %v5700 = vpop.f32.mrb[0].mxu0
        %v5701 = vpop.f32.mrb[0].mxu0
        %v5702 = vadd.f32 0.0, %v5701
        %v5703 = vpop.f32.mrb[0].mxu0
        %5704 = vmatprep.mubr.bf16.mxu0 0
        %5705 = vmatmul.mubr.bf16.gmra.mrb[0].mxu0 %v5641
        %v5706 = vpop.f32.mrb[0].mxu0
        %v5707 = vpop.f32.mrb[0].mxu0
        %v5708 = vpop.f32.mrb[0].mxu0
        %v5709 = vpop.f32.mrb[0].mxu0
        %5710 = vmatprep.mubr.bf16.mxu0 0
        %5711 = vmatmul.mubr.bf16.gmra.mrb[0].mxu0 %v5644
        %v5712 = vpop.f32.mrb[0].mxu0
        %v5713 = vadd.f32 0.0, %v5712
        %v5714 = vpop.f32.mrb[0].mxu0
        %v5715 = vpop.f32.mrb[0].mxu0
        %v5716 = vadd.f32 0.0, %v5715
        %v5717 = vpop.f32.mrb[0].mxu0
        %5718 = vmatprep.mubr.bf16.mxu0 0
        %5719 = vmatmul.mubr.bf16.gmra.mrb[0].mxu0 %v5647
        %v5720 = vpop.f32.mrb[0].mxu0
        %v5721 = vpop.f32.mrb[0].mxu0
        %v5722 = vpop.f32.mrb[0].mxu0
        %v5723 = vpop.f32.mrb[0].mxu0
        %5724 = vmatprep.mubr.bf16.mxu0 0
        %5725 = vmatmul.mubr.bf16.gmra.mrb[0].mxu0 %v5650
        %v5726 = vpop.f32.mrb[0].mxu0
        %v5727 = vadd.f32 0.0, %v5726
        %v5728 = vpop.f32.mrb[0].mxu0
        %v5729 = vpop.f32.mrb[0].mxu0
        %v5730 = vadd.f32 0.0, %v5729
        %v5731 = vpop.f32.mrb[0].mxu0
        %5732 = vmatprep.mubr.bf16.mxu0 0
        %5733 = vmatmul.mubr.bf16.gmra.mrb[0].mxu0 %v5653
        %v5734 = vpop.f32.mrb[0].mxu0
        %v5735 = vpop.f32.mrb[0].mxu0
        %v5736 = vpop.f32.mrb[0].mxu0
        %v5737 = vpop.f32.mrb[0].mxu0
        %5738 = vmatprep.mubr.bf16.mxu0 0
        %5739 = vmatmul.mubr.bf16.gmra.mrb[0].mxu0 %v5656
        %v5740 = vpop.f32.mrb[0].mxu0
        %v5741 = vadd.f32 0.0, %v5740
        %v5742 = vpop.f32.mrb[0].mxu0
        %v5743 = vpop.f32.mrb[0].mxu0
        %v5744 = vadd.f32 0.0, %v5743
        %v5745 = vpop.f32.mrb[0].mxu0
        %5746 = vmatprep.mubr.bf16.mxu0 0
        %5747 = vmatmul.mubr.bf16.gmra.mrb[0].mxu0 %v5659
        %v5748 = vpop.f32.mrb[0].mxu0
        %v5749 = vpop.f32.mrb[0].mxu0
        %v5750 = vpop.f32.mrb[0].mxu0
        %v5751 = vpop.f32.mrb[0].mxu0
        %5752 = vdwg.mxu0
        %v5753 = vadd.f32 %v5387, %v5699
        %v5754 = vadd.f32 %v5388, %v5702
        %v5755 = vadd.f32 %v5389, %v5713
        %v5756 = vadd.f32 %v5390, %v5716
        %v5757 = vadd.f32 %v5391, %v5727
        %v5758 = vadd.f32 %v5392, %v5730
        %v5759 = vadd.f32 %v5393, %v5741
        %v5760 = vadd.f32 %v5394, %v5744
        %v5761 = vld [vmem:[%s5212] sm:$0xe]
        %v5762 = vld [vmem:[%s5212 + $0xc] sm:$0xe]
        %v5763 = vld [vmem:[%s5212 + $0x18] sm:$0xe]
        %v5764 = vld [vmem:[%s5212 + $0x24] sm:$0xe]
        %v5765 = vld [vmem:[%s5212 + $0x30] sm:$0xe]
        %v5766 = vld [vmem:[%s5212 + $0x3c] sm:$0xe]
        %v5767 = vld [vmem:[%s5212 + $0x48] sm:$0xe]
        %v5768 = vld [vmem:[%s5212 + $0x54] sm:$0xe]
        %v5793 = vrot.slane %v5761, 5
        %v5794 = vrot.slane %v5793, 4
        %v5795 = vrot.slane %v5396, 5
        %v5796 = vsel %vm1689, %v5794, %v5795
        %v5797 = vrot.slane %v5795, 4
        %v5798 = vrot.slane %v5397, 5
        %v5799 = vsel %vm1689, %v5797, %v5798
        %v5800 = vrot.slane %v5762, 5
        %v5801 = vrot.slane %v5800, 4
        %v5802 = vrot.slane %v5399, 5
        %v5803 = vsel %vm1689, %v5801, %v5802
        %v5804 = vrot.slane %v5802, 4
        %v5805 = vrot.slane %v5400, 5
        %v5806 = vsel %vm1689, %v5804, %v5805
        %v5807 = vrot.slane %v5763, 5
        %v5808 = vrot.slane %v5807, 4
        %v5809 = vrot.slane %v5402, 5
        %v5810 = vsel %vm1689, %v5808, %v5809
        %v5811 = vrot.slane %v5809, 4
        %v5812 = vrot.slane %v5403, 5
        %v5813 = vsel %vm1689, %v5811, %v5812
        %v5814 = vrot.slane %v5764, 5
        %v5815 = vrot.slane %v5814, 4
        %v5816 = vrot.slane %v5405, 5
        %v5817 = vsel %vm1689, %v5815, %v5816
        %v5818 = vrot.slane %v5816, 4
        %v5819 = vrot.slane %v5406, 5
        %v5820 = vsel %vm1689, %v5818, %v5819
        %v5821 = vrot.slane %v5765, 5
        %v5822 = vrot.slane %v5821, 4
        %v5823 = vrot.slane %v5408, 5
        %v5824 = vsel %vm1689, %v5822, %v5823
        %v5825 = vrot.slane %v5823, 4
        %v5826 = vrot.slane %v5409, 5
        %v5827 = vsel %vm1689, %v5825, %v5826
        %v5828 = vrot.slane %v5766, 5
        %v5829 = vrot.slane %v5828, 4
        %v5830 = vrot.slane %v5411, 5
        %v5831 = vsel %vm1689, %v5829, %v5830
        %v5832 = vrot.slane %v5830, 4
        %v5833 = vrot.slane %v5412, 5
        %v5834 = vsel %vm1689, %v5832, %v5833
        %v5835 = vrot.slane %v5767, 5
        %v5836 = vrot.slane %v5835, 4
        %v5837 = vrot.slane %v5414, 5
        %v5838 = vsel %vm1689, %v5836, %v5837
        %v5839 = vrot.slane %v5837, 4
        %v5840 = vrot.slane %v5415, 5
        %v5841 = vsel %vm1689, %v5839, %v5840
        %v5842 = vrot.slane %v5768, 5
        %v5843 = vrot.slane %v5842, 4
        %v5844 = vrot.slane %v5417, 5
        %v5845 = vsel %vm1689, %v5843, %v5844
        %v5846 = vrot.slane %v5844, 4
        %v5847 = vrot.slane %v5418, 5
        %v5848 = vsel %vm1689, %v5846, %v5847
        %s5849 = scalar_lea.vmem %s5, 20
        %v5850 = vld [vmem:[%s5849] sm:$0xf]
        %v5851 = vunpack.c.l.b16 %v5796
        %v5852 = vunpack.c.l.b16 %v5799
        %v5853 = vunpack.c.l.b16 %v5803
        %v5854 = vunpack.c.l.b16 %v5806
        %v5855 = vunpack.c.l.b16 %v5810
        %v5856 = vunpack.c.l.b16 %v5813
        %v5857 = vunpack.c.l.b16 %v5817
        %v5858 = vunpack.c.l.b16 %v5820
        %v5859 = vunpack.c.l.b16 %v5824
        %v5860 = vunpack.c.l.b16 %v5827
        %v5861 = vunpack.c.l.b16 %v5831
        %v5862 = vunpack.c.l.b16 %v5834
        %v5863 = vunpack.c.l.b16 %v5838
        %v5864 = vunpack.c.l.b16 %v5841
        %v5865 = vunpack.c.l.b16 %v5845
        %v5866 = vunpack.c.l.b16 %v5848
        %v5867 = vpack.c.b16 %v5852, %v5851
        %v5868 = vpack.c.b16 %v5854, %v5853
        %v5869 = vpack.c.b16 %v5856, %v5855
        %v5870 = vpack.c.b16 %v5858, %v5857
        %v5871 = vpack.c.b16 %v5860, %v5859
        %v5872 = vpack.c.b16 %v5862, %v5861
        %v5873 = vpack.c.b16 %v5864, %v5863
        %v5874 = vpack.c.b16 %v5866, %v5865
        %v5876 = vsel %vm4708, %v5867, 0
        %v5879 = vsel %vm4708, %v5868, 0
        %v5882 = vsel %vm4708, %v5869, 0
        %v5885 = vsel %vm4708, %v5870, 0
        %v5888 = vsel %vm4708, %v5871, 0
        %v5891 = vsel %vm4708, %v5872, 0
        %v5894 = vsel %vm4708, %v5873, 0
        %v5897 = vsel %vm4708, %v5874, 0
        %v5900 = vsel %vm4733, %v5850, 0
        %5902 = vmatprep.subr.bf16.mxu0 0
        %5903 = vmatpush1.bf16.msra.mxu0 %v5900
        %5904 = vmatprep.subr.bf16.mxu0 0
        %5905 = vmatpush1.bf16.msra.mxu0 0
        %5906 = vmatprep.subr.bf16.mxu0 0
        %5907 = vmatpush1.bf16.msra.mxu0 0
        %5908 = vmatprep.subr.bf16.mxu0 0
        %5909 = vmatpush1.bf16.msra.mxu0 0
        %5910 = vmatprep.subr.bf16.mxu0 0
        %5911 = vmatpush1.bf16.msra.mxu0 0
        %5912 = vmatprep.subr.bf16.mxu0 0
        %5913 = vmatpush1.bf16.msra.mxu0 0
        %5914 = vmatprep.subr.bf16.mxu0 0
        %5915 = vmatpush1.bf16.msra.mxu0 0
        %5916 = vmatprep.subr.bf16.mxu0 0
        %5917 = vmatpush1.bf16.msra.mxu0 0
        %5918 = vmatprep.subr.bf16.mxu0 0
        %5919 = vmatpush1.bf16.msra.mxu0 0
        %5920 = vmatprep.subr.bf16.mxu0 0
        %5921 = vmatpush1.bf16.msra.mxu0 0
        %5922 = vmatprep.subr.bf16.mxu0 0
        %5923 = vmatpush1.bf16.msra.mxu0 0
        %5924 = vmatprep.subr.bf16.mxu0 0
        %5925 = vmatpush1.bf16.msra.mxu0 0
        %5926 = vmatprep.subr.bf16.mxu0 0
        %5927 = vmatpush1.bf16.msra.mxu0 0
        %5928 = vmatprep.subr.bf16.mxu0 0
        %5929 = vmatpush1.bf16.msra.mxu0 0
        %5930 = vmatprep.subr.bf16.mxu0 0
        %5931 = vmatpush1.bf16.msra.mxu0 0
        %5932 = vmatprep.subr.bf16.mxu0 0
        %5933 = vmatpush1.bf16.msra.mxu0 0
        %5934 = vmatprep.mubr.bf16.mxu0 0
        %5935 = vmatmul.mubr.bf16.gmra.mrb[0].mxu0 %v5876
        %v5936 = vpop.f32.mrb[0].mxu0
        %v5937 = vadd.f32 0.0, %v5936
        %v5938 = vpop.f32.mrb[0].mxu0
        %v5939 = vpop.f32.mrb[0].mxu0
        %v5940 = vadd.f32 0.0, %v5939
        %v5941 = vpop.f32.mrb[0].mxu0
        %5942 = vmatprep.mubr.bf16.mxu0 0
        %5943 = vmatmul.mubr.bf16.gmra.mrb[0].mxu0 %v5879
        %v5944 = vpop.f32.mrb[0].mxu0
        %v5945 = vpop.f32.mrb[0].mxu0
        %v5946 = vpop.f32.mrb[0].mxu0
        %v5947 = vpop.f32.mrb[0].mxu0
        %5948 = vmatprep.mubr.bf16.mxu0 0
        %5949 = vmatmul.mubr.bf16.gmra.mrb[0].mxu0 %v5882
        %v5950 = vpop.f32.mrb[0].mxu0
        %v5951 = vadd.f32 0.0, %v5950
        %v5952 = vpop.f32.mrb[0].mxu0
        %v5953 = vpop.f32.mrb[0].mxu0
        %v5954 = vadd.f32 0.0, %v5953
        %v5955 = vpop.f32.mrb[0].mxu0
        %5956 = vmatprep.mubr.bf16.mxu0 0
        %5957 = vmatmul.mubr.bf16.gmra.mrb[0].mxu0 %v5885
        %v5958 = vpop.f32.mrb[0].mxu0
        %v5959 = vpop.f32.mrb[0].mxu0
        %v5960 = vpop.f32.mrb[0].mxu0
        %v5961 = vpop.f32.mrb[0].mxu0
        %5962 = vmatprep.mubr.bf16.mxu0 0
        %5963 = vmatmul.mubr.bf16.gmra.mrb[0].mxu0 %v5888
        %v5964 = vpop.f32.mrb[0].mxu0
        %v5965 = vadd.f32 0.0, %v5964
        %v5966 = vpop.f32.mrb[0].mxu0
        %v5967 = vpop.f32.mrb[0].mxu0
        %v5968 = vadd.f32 0.0, %v5967
        %v5969 = vpop.f32.mrb[0].mxu0
        %5970 = vmatprep.mubr.bf16.mxu0 0
        %5971 = vmatmul.mubr.bf16.gmra.mrb[0].mxu0 %v5891
        %v5972 = vpop.f32.mrb[0].mxu0
        %v5973 = vpop.f32.mrb[0].mxu0
        %v5974 = vpop.f32.mrb[0].mxu0
        %v5975 = vpop.f32.mrb[0].mxu0
        %5976 = vmatprep.mubr.bf16.mxu0 0
        %5977 = vmatmul.mubr.bf16.gmra.mrb[0].mxu0 %v5894
        %v5978 = vpop.f32.mrb[0].mxu0
        %v5979 = vadd.f32 0.0, %v5978
        %v5980 = vpop.f32.mrb[0].mxu0
        %v5981 = vpop.f32.mrb[0].mxu0
        %v5982 = vadd.f32 0.0, %v5981
        %v5983 = vpop.f32.mrb[0].mxu0
        %5984 = vmatprep.mubr.bf16.mxu0 0
        %5985 = vmatmul.mubr.bf16.gmra.mrb[0].mxu0 %v5897
        %v5986 = vpop.f32.mrb[0].mxu0
        %v5987 = vpop.f32.mrb[0].mxu0
        %v5988 = vpop.f32.mrb[0].mxu0
        %v5989 = vpop.f32.mrb[0].mxu0
        %5990 = vdwg.mxu0
        %v5991 = vadd.f32 %v5753, %v5937
        %v5992 = vadd.f32 %v5754, %v5940
        %v5993 = vadd.f32 %v5755, %v5951
        %v5994 = vadd.f32 %v5756, %v5954
        %v5995 = vadd.f32 %v5757, %v5965
        %v5996 = vadd.f32 %v5758, %v5968
        %v5997 = vadd.f32 %v5759, %v5979
        %v5998 = vadd.f32 %v5760, %v5982
        %s5999 = scalar_lea.vmem [#allocation3], 24
        %v6000 = vld [vmem:[%s5999] sm:$0xf]
        %v6001 = vld [vmem:[%s5999 + $0x4] sm:$0xf]
        %v6002 = vld [vmem:[%s5999 + $0xc] sm:$0xf]
        %v6003 = vld [vmem:[%s5999 + $0x10] sm:$0xf]
        %v6004 = vld [vmem:[%s5999 + $0x18] sm:$0xf]
        %v6005 = vld [vmem:[%s5999 + $0x1c] sm:$0xf]
        %v6006 = vld [vmem:[%s5999 + $0x24] sm:$0xf]
        %v6007 = vld [vmem:[%s5999 + $0x28] sm:$0xf]
        %v6008 = vld [vmem:[%s5999 + $0x30] sm:$0xf]
        %v6009 = vld [vmem:[%s5999 + $0x34] sm:$0xf]
        %v6010 = vld [vmem:[%s5999 + $0x3c] sm:$0xf]
        %v6011 = vld [vmem:[%s5999 + $0x40] sm:$0xf]
        %v6012 = vld [vmem:[%s5999 + $0x48] sm:$0xf]
        %v6013 = vld [vmem:[%s5999 + $0x4c] sm:$0xf]
        %v6014 = vld [vmem:[%s5999 + $0x54] sm:$0xf]
        %v6015 = vld [vmem:[%s5999 + $0x58] sm:$0xf]
        %s6016 = scalar_lea.vmem %s5, 24
        %v6017 = vld [vmem:[%s6016] sm:$0xf]
        %v6034 = vunpack.c.l.b16 %v6000
        %v6035 = vunpack.c.l.b16 %v6001
        %v6036 = vunpack.c.l.b16 %v6002
        %v6037 = vunpack.c.l.b16 %v6003
        %v6038 = vunpack.c.l.b16 %v6004
        %v6039 = vunpack.c.l.b16 %v6005
        %v6040 = vunpack.c.l.b16 %v6006
        %v6041 = vunpack.c.l.b16 %v6007
        %v6042 = vunpack.c.l.b16 %v6008
        %v6043 = vunpack.c.l.b16 %v6009
        %v6044 = vunpack.c.l.b16 %v6010
        %v6045 = vunpack.c.l.b16 %v6011
        %v6046 = vunpack.c.l.b16 %v6012
        %v6047 = vunpack.c.l.b16 %v6013
        %v6048 = vunpack.c.l.b16 %v6014
        %v6049 = vunpack.c.l.b16 %v6015
        %v6050 = vpack.c.b16 %v6035, %v6034
        %v6051 = vpack.c.b16 %v6037, %v6036
        %v6052 = vpack.c.b16 %v6039, %v6038
        %v6053 = vpack.c.b16 %v6041, %v6040
        %v6054 = vpack.c.b16 %v6043, %v6042
        %v6055 = vpack.c.b16 %v6045, %v6044
        %v6056 = vpack.c.b16 %v6047, %v6046
        %v6057 = vpack.c.b16 %v6049, %v6048
        %v6059 = vsel %vm4708, %v6050, 0
        %v6062 = vsel %vm4708, %v6051, 0
        %v6065 = vsel %vm4708, %v6052, 0
        %v6068 = vsel %vm4708, %v6053, 0
        %v6071 = vsel %vm4708, %v6054, 0
        %v6074 = vsel %vm4708, %v6055, 0
        %v6077 = vsel %vm4708, %v6056, 0
        %v6080 = vsel %vm4708, %v6057, 0
        %v6083 = vsel %vm4733, %v6017, 0
        %6085 = vmatprep.subr.bf16.mxu0 0
        %6086 = vmatpush1.bf16.msra.mxu0 %v6083
        %6087 = vmatprep.subr.bf16.mxu0 0
        %6088 = vmatpush1.bf16.msra.mxu0 0
        %6089 = vmatprep.subr.bf16.mxu0 0
        %6090 = vmatpush1.bf16.msra.mxu0 0
        %6091 = vmatprep.subr.bf16.mxu0 0
        %6092 = vmatpush1.bf16.msra.mxu0 0
        %6093 = vmatprep.subr.bf16.mxu0 0
        %6094 = vmatpush1.bf16.msra.mxu0 0
        %6095 = vmatprep.subr.bf16.mxu0 0
        %6096 = vmatpush1.bf16.msra.mxu0 0
        %6097 = vmatprep.subr.bf16.mxu0 0
        %6098 = vmatpush1.bf16.msra.mxu0 0
        %6099 = vmatprep.subr.bf16.mxu0 0
        %6100 = vmatpush1.bf16.msra.mxu0 0
        %6101 = vmatprep.subr.bf16.mxu0 0
        %6102 = vmatpush1.bf16.msra.mxu0 0
        %6103 = vmatprep.subr.bf16.mxu0 0
        %6104 = vmatpush1.bf16.msra.mxu0 0
        %6105 = vmatprep.subr.bf16.mxu0 0
        %6106 = vmatpush1.bf16.msra.mxu0 0
        %6107 = vmatprep.subr.bf16.mxu0 0
        %6108 = vmatpush1.bf16.msra.mxu0 0
        %6109 = vmatprep.subr.bf16.mxu0 0
        %6110 = vmatpush1.bf16.msra.mxu0 0
        %6111 = vmatprep.subr.bf16.mxu0 0
        %6112 = vmatpush1.bf16.msra.mxu0 0
        %6113 = vmatprep.subr.bf16.mxu0 0
        %6114 = vmatpush1.bf16.msra.mxu0 0
        %6115 = vmatprep.subr.bf16.mxu0 0
        %6116 = vmatpush1.bf16.msra.mxu0 0
        %6117 = vmatprep.mubr.bf16.mxu0 0
        %6118 = vmatmul.mubr.bf16.gmra.mrb[0].mxu0 %v6059
        %v6119 = vpop.f32.mrb[0].mxu0
        %v6120 = vadd.f32 0.0, %v6119
        %v6121 = vpop.f32.mrb[0].mxu0
        %v6122 = vpop.f32.mrb[0].mxu0
        %v6123 = vadd.f32 0.0, %v6122
        %v6124 = vpop.f32.mrb[0].mxu0
        %6125 = vmatprep.mubr.bf16.mxu0 0
        %6126 = vmatmul.mubr.bf16.gmra.mrb[0].mxu0 %v6062
        %v6127 = vpop.f32.mrb[0].mxu0
        %v6128 = vpop.f32.mrb[0].mxu0
        %v6129 = vpop.f32.mrb[0].mxu0
        %v6130 = vpop.f32.mrb[0].mxu0
        %6131 = vmatprep.mubr.bf16.mxu0 0
        %6132 = vmatmul.mubr.bf16.gmra.mrb[0].mxu0 %v6065
        %v6133 = vpop.f32.mrb[0].mxu0
        %v6134 = vadd.f32 0.0, %v6133
        %v6135 = vpop.f32.mrb[0].mxu0
        %v6136 = vpop.f32.mrb[0].mxu0
        %v6137 = vadd.f32 0.0, %v6136
        %v6138 = vpop.f32.mrb[0].mxu0
        %6139 = vmatprep.mubr.bf16.mxu0 0
        %6140 = vmatmul.mubr.bf16.gmra.mrb[0].mxu0 %v6068
        %v6141 = vpop.f32.mrb[0].mxu0
        %v6142 = vpop.f32.mrb[0].mxu0
        %v6143 = vpop.f32.mrb[0].mxu0
        %v6144 = vpop.f32.mrb[0].mxu0
        %6145 = vmatprep.mubr.bf16.mxu0 0
        %6146 = vmatmul.mubr.bf16.gmra.mrb[0].mxu0 %v6071
        %v6147 = vpop.f32.mrb[0].mxu0
        %v6148 = vadd.f32 0.0, %v6147
        %v6149 = vpop.f32.mrb[0].mxu0
        %v6150 = vpop.f32.mrb[0].mxu0
        %v6151 = vadd.f32 0.0, %v6150
        %v6152 = vpop.f32.mrb[0].mxu0
        %6153 = vmatprep.mubr.bf16.mxu0 0
        %6154 = vmatmul.mubr.bf16.gmra.mrb[0].mxu0 %v6074
        %v6155 = vpop.f32.mrb[0].mxu0
        %v6156 = vpop.f32.mrb[0].mxu0
        %v6157 = vpop.f32.mrb[0].mxu0
        %v6158 = vpop.f32.mrb[0].mxu0
        %6159 = vmatprep.mubr.bf16.mxu0 0
        %6160 = vmatmul.mubr.bf16.gmra.mrb[0].mxu0 %v6077
        %v6161 = vpop.f32.mrb[0].mxu0
        %v6162 = vadd.f32 0.0, %v6161
        %v6163 = vpop.f32.mrb[0].mxu0
        %v6164 = vpop.f32.mrb[0].mxu0
        %v6165 = vadd.f32 0.0, %v6164
        %v6166 = vpop.f32.mrb[0].mxu0
        %6167 = vmatprep.mubr.bf16.mxu0 0
        %6168 = vmatmul.mubr.bf16.gmra.mrb[0].mxu0 %v6080
        %v6169 = vpop.f32.mrb[0].mxu0
        %v6170 = vpop.f32.mrb[0].mxu0
        %v6171 = vpop.f32.mrb[0].mxu0
        %v6172 = vpop.f32.mrb[0].mxu0
        %6173 = vdwg.mxu0
        %v6174 = vadd.f32 %v5991, %v6120
        %v6175 = vadd.f32 %v5992, %v6123
        %v6176 = vadd.f32 %v5993, %v6134
        %v6177 = vadd.f32 %v5994, %v6137
        %v6178 = vadd.f32 %v5995, %v6148
        %v6179 = vadd.f32 %v5996, %v6151
        %v6180 = vadd.f32 %v5997, %v6162
        %v6181 = vadd.f32 %v5998, %v6165
        %v6182 = vld [vmem:[%s5999] sm:$0xf]
        %v6183 = vld [vmem:[%s5999 + $0x4] sm:$0xf]
        %v6184 = vld [vmem:[%s5999 + $0x8] sm:$0x1]
        %v6185 = vld [vmem:[%s5999 + $0xc] sm:$0xf]
        %v6186 = vld [vmem:[%s5999 + $0x10] sm:$0xf]
        %v6187 = vld [vmem:[%s5999 + $0x14] sm:$0x1]
        %v6188 = vld [vmem:[%s5999 + $0x18] sm:$0xf]
        %v6189 = vld [vmem:[%s5999 + $0x1c] sm:$0xf]
        %v6190 = vld [vmem:[%s5999 + $0x20] sm:$0x1]
        %v6191 = vld [vmem:[%s5999 + $0x24] sm:$0xf]
        %v6192 = vld [vmem:[%s5999 + $0x28] sm:$0xf]
        %v6193 = vld [vmem:[%s5999 + $0x2c] sm:$0x1]
        %v6194 = vld [vmem:[%s5999 + $0x30] sm:$0xf]
        %v6195 = vld [vmem:[%s5999 + $0x34] sm:$0xf]
        %v6196 = vld [vmem:[%s5999 + $0x38] sm:$0x1]
        %v6197 = vld [vmem:[%s5999 + $0x3c] sm:$0xf]
        %v6198 = vld [vmem:[%s5999 + $0x40] sm:$0xf]
        %v6199 = vld [vmem:[%s5999 + $0x44] sm:$0x1]
        %v6200 = vld [vmem:[%s5999 + $0x48] sm:$0xf]
        %v6201 = vld [vmem:[%s5999 + $0x4c] sm:$0xf]
        %v6202 = vld [vmem:[%s5999 + $0x50] sm:$0x1]
        %v6203 = vld [vmem:[%s5999 + $0x54] sm:$0xf]
        %v6204 = vld [vmem:[%s5999 + $0x58] sm:$0xf]
        %v6205 = vld [vmem:[%s5999 + $0x5c] sm:$0x1]
        %v6207 = vshrl.u32 %v6182, 16
        %v6209 = vrot.slane %v6207, 4
        %v6210 = vshll.u32 %v6182, 16
        %v6212 = vrot.slane %v6210, 5
        %v6213 = vor.u32 %v6209, %v6212
        %v6214 = vrot.slane %v6213, 4
        %v6216 = vshll.u32 %v6183, 16
        %v6218 = vrot.slane %v6216, 5
        %v6219 = vsel %vm1040, %v6214, %v6218
        %v6220 = vshrl.u32 %v6183, 16
        %v6222 = vrot.slane %v6220, 4
        %v6223 = vor.u32 %v6222, %v6218
        %v6224 = vrot.slane %v6223, 4
        %v6226 = vshll.u32 %v6184, 16
        %v6228 = vrot.slane %v6226, 5
        %v6229 = vsel %vm1040, %v6224, %v6228
        %v6231 = vshrl.u32 %v6185, 16
        %v6233 = vrot.slane %v6231, 4
        %v6234 = vshll.u32 %v6185, 16
        %v6236 = vrot.slane %v6234, 5
        %v6237 = vor.u32 %v6233, %v6236
        %v6238 = vrot.slane %v6237, 4
        %v6240 = vshll.u32 %v6186, 16
        %v6242 = vrot.slane %v6240, 5
        %v6243 = vsel %vm1040, %v6238, %v6242
        %v6244 = vshrl.u32 %v6186, 16
        %v6246 = vrot.slane %v6244, 4
        %v6247 = vor.u32 %v6246, %v6242
        %v6248 = vrot.slane %v6247, 4
        %v6250 = vshll.u32 %v6187, 16
        %v6252 = vrot.slane %v6250, 5
        %v6253 = vsel %vm1040, %v6248, %v6252
        %v6255 = vshrl.u32 %v6188, 16
        %v6257 = vrot.slane %v6255, 4
        %v6258 = vshll.u32 %v6188, 16
        %v6260 = vrot.slane %v6258, 5
        %v6261 = vor.u32 %v6257, %v6260
        %v6262 = vrot.slane %v6261, 4
        %v6264 = vshll.u32 %v6189, 16
        %v6266 = vrot.slane %v6264, 5
        %v6267 = vsel %vm1040, %v6262, %v6266
        %v6268 = vshrl.u32 %v6189, 16
        %v6270 = vrot.slane %v6268, 4
        %v6271 = vor.u32 %v6270, %v6266
        %v6272 = vrot.slane %v6271, 4
        %v6274 = vshll.u32 %v6190, 16
        %v6276 = vrot.slane %v6274, 5
        %v6277 = vsel %vm1040, %v6272, %v6276
        %v6279 = vshrl.u32 %v6191, 16
        %v6281 = vrot.slane %v6279, 4
        %v6282 = vshll.u32 %v6191, 16
        %v6284 = vrot.slane %v6282, 5
        %v6285 = vor.u32 %v6281, %v6284
        %v6286 = vrot.slane %v6285, 4
        %v6288 = vshll.u32 %v6192, 16
        %v6290 = vrot.slane %v6288, 5
        %v6291 = vsel %vm1040, %v6286, %v6290
        %v6292 = vshrl.u32 %v6192, 16
        %v6294 = vrot.slane %v6292, 4
        %v6295 = vor.u32 %v6294, %v6290
        %v6296 = vrot.slane %v6295, 4
        %v6298 = vshll.u32 %v6193, 16
        %v6300 = vrot.slane %v6298, 5
        %v6301 = vsel %vm1040, %v6296, %v6300
        %v6303 = vshrl.u32 %v6194, 16
        %v6305 = vrot.slane %v6303, 4
        %v6306 = vshll.u32 %v6194, 16
        %v6308 = vrot.slane %v6306, 5
        %v6309 = vor.u32 %v6305, %v6308
        %v6310 = vrot.slane %v6309, 4
        %v6312 = vshll.u32 %v6195, 16
        %v6314 = vrot.slane %v6312, 5
        %v6315 = vsel %vm1040, %v6310, %v6314
        %v6316 = vshrl.u32 %v6195, 16
        %v6318 = vrot.slane %v6316, 4
        %v6319 = vor.u32 %v6318, %v6314
        %v6320 = vrot.slane %v6319, 4
        %v6322 = vshll.u32 %v6196, 16
        %v6324 = vrot.slane %v6322, 5
        %v6325 = vsel %vm1040, %v6320, %v6324
        %v6327 = vshrl.u32 %v6197, 16
        %v6329 = vrot.slane %v6327, 4
        %v6330 = vshll.u32 %v6197, 16
        %v6332 = vrot.slane %v6330, 5
        %v6333 = vor.u32 %v6329, %v6332
        %v6334 = vrot.slane %v6333, 4
        %v6336 = vshll.u32 %v6198, 16
        %v6338 = vrot.slane %v6336, 5
        %v6339 = vsel %vm1040, %v6334, %v6338
        %v6340 = vshrl.u32 %v6198, 16
        %v6342 = vrot.slane %v6340, 4
        %v6343 = vor.u32 %v6342, %v6338
        %v6344 = vrot.slane %v6343, 4
        %v6346 = vshll.u32 %v6199, 16
        %v6348 = vrot.slane %v6346, 5
        %v6349 = vsel %vm1040, %v6344, %v6348
        %v6351 = vshrl.u32 %v6200, 16
        %v6353 = vrot.slane %v6351, 4
        %v6354 = vshll.u32 %v6200, 16
        %v6356 = vrot.slane %v6354, 5
        %v6357 = vor.u32 %v6353, %v6356
        %v6358 = vrot.slane %v6357, 4
        %v6360 = vshll.u32 %v6201, 16
        %v6362 = vrot.slane %v6360, 5
        %v6363 = vsel %vm1040, %v6358, %v6362
        %v6364 = vshrl.u32 %v6201, 16
        %v6366 = vrot.slane %v6364, 4
        %v6367 = vor.u32 %v6366, %v6362
        %v6368 = vrot.slane %v6367, 4
        %v6370 = vshll.u32 %v6202, 16
        %v6372 = vrot.slane %v6370, 5
        %v6373 = vsel %vm1040, %v6368, %v6372
        %v6375 = vshrl.u32 %v6203, 16
        %v6377 = vrot.slane %v6375, 4
        %v6378 = vshll.u32 %v6203, 16
        %v6380 = vrot.slane %v6378, 5
        %v6381 = vor.u32 %v6377, %v6380
        %v6382 = vrot.slane %v6381, 4
        %v6384 = vshll.u32 %v6204, 16
        %v6386 = vrot.slane %v6384, 5
        %v6387 = vsel %vm1040, %v6382, %v6386
        %v6388 = vshrl.u32 %v6204, 16
        %v6390 = vrot.slane %v6388, 4
        %v6391 = vor.u32 %v6390, %v6386
        %v6392 = vrot.slane %v6391, 4
        %v6394 = vshll.u32 %v6205, 16
        %v6396 = vrot.slane %v6394, 5
        %v6397 = vsel %vm1040, %v6392, %v6396
        %s6398 = scalar_lea.vmem %s5, 28
        %v6399 = vld [vmem:[%s6398] sm:$0xf]
        %v6400 = vunpack.c.l.b16 %v6219
        %v6401 = vunpack.c.l.b16 %v6229
        %v6402 = vunpack.c.l.b16 %v6243
        %v6403 = vunpack.c.l.b16 %v6253
        %v6404 = vunpack.c.l.b16 %v6267
        %v6405 = vunpack.c.l.b16 %v6277
        %v6406 = vunpack.c.l.b16 %v6291
        %v6407 = vunpack.c.l.b16 %v6301
        %v6408 = vunpack.c.l.b16 %v6315
        %v6409 = vunpack.c.l.b16 %v6325
        %v6410 = vunpack.c.l.b16 %v6339
        %v6411 = vunpack.c.l.b16 %v6349
        %v6412 = vunpack.c.l.b16 %v6363
        %v6413 = vunpack.c.l.b16 %v6373
        %v6414 = vunpack.c.l.b16 %v6387
        %v6415 = vunpack.c.l.b16 %v6397
        %v6416 = vpack.c.b16 %v6401, %v6400
        %v6417 = vpack.c.b16 %v6403, %v6402
        %v6418 = vpack.c.b16 %v6405, %v6404
        %v6419 = vpack.c.b16 %v6407, %v6406
        %v6420 = vpack.c.b16 %v6409, %v6408
        %v6421 = vpack.c.b16 %v6411, %v6410
        %v6422 = vpack.c.b16 %v6413, %v6412
        %v6423 = vpack.c.b16 %v6415, %v6414
        %v6425 = vsel %vm4708, %v6416, 0
        %v6428 = vsel %vm4708, %v6417, 0
        %v6431 = vsel %vm4708, %v6418, 0
        %v6434 = vsel %vm4708, %v6419, 0
        %v6437 = vsel %vm4708, %v6420, 0
        %v6440 = vsel %vm4708, %v6421, 0
        %v6443 = vsel %vm4708, %v6422, 0
        %v6446 = vsel %vm4708, %v6423, 0
        %v6449 = vsel %vm4733, %v6399, 0
        %6451 = vmatprep.subr.bf16.mxu0 0
        %6452 = vmatpush1.bf16.msra.mxu0 %v6449
        %6453 = vmatprep.subr.bf16.mxu0 0
        %6454 = vmatpush1.bf16.msra.mxu0 0
        %6455 = vmatprep.subr.bf16.mxu0 0
        %6456 = vmatpush1.bf16.msra.mxu0 0
        %6457 = vmatprep.subr.bf16.mxu0 0
        %6458 = vmatpush1.bf16.msra.mxu0 0
        %6459 = vmatprep.subr.bf16.mxu0 0
        %6460 = vmatpush1.bf16.msra.mxu0 0
        %6461 = vmatprep.subr.bf16.mxu0 0
        %6462 = vmatpush1.bf16.msra.mxu0 0
        %6463 = vmatprep.subr.bf16.mxu0 0
        %6464 = vmatpush1.bf16.msra.mxu0 0
        %6465 = vmatprep.subr.bf16.mxu0 0
        %6466 = vmatpush1.bf16.msra.mxu0 0
        %6467 = vmatprep.subr.bf16.mxu0 0
        %6468 = vmatpush1.bf16.msra.mxu0 0
        %6469 = vmatprep.subr.bf16.mxu0 0
        %6470 = vmatpush1.bf16.msra.mxu0 0
        %6471 = vmatprep.subr.bf16.mxu0 0
        %6472 = vmatpush1.bf16.msra.mxu0 0
        %6473 = vmatprep.subr.bf16.mxu0 0
        %6474 = vmatpush1.bf16.msra.mxu0 0
        %6475 = vmatprep.subr.bf16.mxu0 0
        %6476 = vmatpush1.bf16.msra.mxu0 0
        %6477 = vmatprep.subr.bf16.mxu0 0
        %6478 = vmatpush1.bf16.msra.mxu0 0
        %6479 = vmatprep.subr.bf16.mxu0 0
        %6480 = vmatpush1.bf16.msra.mxu0 0
        %6481 = vmatprep.subr.bf16.mxu0 0
        %6482 = vmatpush1.bf16.msra.mxu0 0
        %6483 = vmatprep.mubr.bf16.mxu0 0
        %6484 = vmatmul.mubr.bf16.gmra.mrb[0].mxu0 %v6425
        %v6485 = vpop.f32.mrb[0].mxu0
        %v6486 = vadd.f32 0.0, %v6485
        %v6487 = vpop.f32.mrb[0].mxu0
        %v6488 = vpop.f32.mrb[0].mxu0
        %v6489 = vadd.f32 0.0, %v6488
        %v6490 = vpop.f32.mrb[0].mxu0
        %6491 = vmatprep.mubr.bf16.mxu0 0
        %6492 = vmatmul.mubr.bf16.gmra.mrb[0].mxu0 %v6428
        %v6493 = vpop.f32.mrb[0].mxu0
        %v6494 = vpop.f32.mrb[0].mxu0
        %v6495 = vpop.f32.mrb[0].mxu0
        %v6496 = vpop.f32.mrb[0].mxu0
        %6497 = vmatprep.mubr.bf16.mxu0 0
        %6498 = vmatmul.mubr.bf16.gmra.mrb[0].mxu0 %v6431
        %v6499 = vpop.f32.mrb[0].mxu0
        %v6500 = vadd.f32 0.0, %v6499
        %v6501 = vpop.f32.mrb[0].mxu0
        %v6502 = vpop.f32.mrb[0].mxu0
        %v6503 = vadd.f32 0.0, %v6502
        %v6504 = vpop.f32.mrb[0].mxu0
        %6505 = vmatprep.mubr.bf16.mxu0 0
        %6506 = vmatmul.mubr.bf16.gmra.mrb[0].mxu0 %v6434
        %v6507 = vpop.f32.mrb[0].mxu0
        %v6508 = vpop.f32.mrb[0].mxu0
        %v6509 = vpop.f32.mrb[0].mxu0
        %v6510 = vpop.f32.mrb[0].mxu0
        %6511 = vmatprep.mubr.bf16.mxu0 0
        %6512 = vmatmul.mubr.bf16.gmra.mrb[0].mxu0 %v6437
        %v6513 = vpop.f32.mrb[0].mxu0
        %v6514 = vadd.f32 0.0, %v6513
        %v6515 = vpop.f32.mrb[0].mxu0
        %v6516 = vpop.f32.mrb[0].mxu0
        %v6517 = vadd.f32 0.0, %v6516
        %v6518 = vpop.f32.mrb[0].mxu0
        %6519 = vmatprep.mubr.bf16.mxu0 0
        %6520 = vmatmul.mubr.bf16.gmra.mrb[0].mxu0 %v6440
        %v6521 = vpop.f32.mrb[0].mxu0
        %v6522 = vpop.f32.mrb[0].mxu0
        %v6523 = vpop.f32.mrb[0].mxu0
        %v6524 = vpop.f32.mrb[0].mxu0
        %6525 = vmatprep.mubr.bf16.mxu0 0
        %6526 = vmatmul.mubr.bf16.gmra.mrb[0].mxu0 %v6443
        %v6527 = vpop.f32.mrb[0].mxu0
        %v6528 = vadd.f32 0.0, %v6527
        %v6529 = vpop.f32.mrb[0].mxu0
        %v6530 = vpop.f32.mrb[0].mxu0
        %v6531 = vadd.f32 0.0, %v6530
        %v6532 = vpop.f32.mrb[0].mxu0
        %6533 = vmatprep.mubr.bf16.mxu0 0
        %6534 = vmatmul.mubr.bf16.gmra.mrb[0].mxu0 %v6446
        %v6535 = vpop.f32.mrb[0].mxu0
        %v6536 = vpop.f32.mrb[0].mxu0
        %v6537 = vpop.f32.mrb[0].mxu0
        %v6538 = vpop.f32.mrb[0].mxu0
        %6539 = vdwg.mxu0
        %v6540 = vadd.f32 %v6174, %v6486
        %v6541 = vadd.f32 %v6175, %v6489
        %v6542 = vadd.f32 %v6176, %v6500
        %v6543 = vadd.f32 %v6177, %v6503
        %v6544 = vadd.f32 %v6178, %v6514
        %v6545 = vadd.f32 %v6179, %v6517
        %v6546 = vadd.f32 %v6180, %v6528
        %v6547 = vadd.f32 %v6181, %v6531
        %v6548 = vld [vmem:[%s5999] sm:$0xe]
        %v6549 = vld [vmem:[%s5999 + $0xc] sm:$0xe]
        %v6550 = vld [vmem:[%s5999 + $0x18] sm:$0xe]
        %v6551 = vld [vmem:[%s5999 + $0x24] sm:$0xe]
        %v6552 = vld [vmem:[%s5999 + $0x30] sm:$0xe]
        %v6553 = vld [vmem:[%s5999 + $0x3c] sm:$0xe]
        %v6554 = vld [vmem:[%s5999 + $0x48] sm:$0xe]
        %v6555 = vld [vmem:[%s5999 + $0x54] sm:$0xe]
        %v6580 = vrot.slane %v6548, 5
        %v6581 = vrot.slane %v6580, 4
        %v6582 = vrot.slane %v6183, 5
        %v6583 = vsel %vm1689, %v6581, %v6582
        %v6584 = vrot.slane %v6582, 4
        %v6585 = vrot.slane %v6184, 5
        %v6586 = vsel %vm1689, %v6584, %v6585
        %v6587 = vrot.slane %v6549, 5
        %v6588 = vrot.slane %v6587, 4
        %v6589 = vrot.slane %v6186, 5
        %v6590 = vsel %vm1689, %v6588, %v6589
        %v6591 = vrot.slane %v6589, 4
        %v6592 = vrot.slane %v6187, 5
        %v6593 = vsel %vm1689, %v6591, %v6592
        %v6594 = vrot.slane %v6550, 5
        %v6595 = vrot.slane %v6594, 4
        %v6596 = vrot.slane %v6189, 5
        %v6597 = vsel %vm1689, %v6595, %v6596
        %v6598 = vrot.slane %v6596, 4
        %v6599 = vrot.slane %v6190, 5
        %v6600 = vsel %vm1689, %v6598, %v6599
        %v6601 = vrot.slane %v6551, 5
        %v6602 = vrot.slane %v6601, 4
        %v6603 = vrot.slane %v6192, 5
        %v6604 = vsel %vm1689, %v6602, %v6603
        %v6605 = vrot.slane %v6603, 4
        %v6606 = vrot.slane %v6193, 5
        %v6607 = vsel %vm1689, %v6605, %v6606
        %v6608 = vrot.slane %v6552, 5
        %v6609 = vrot.slane %v6608, 4
        %v6610 = vrot.slane %v6195, 5
        %v6611 = vsel %vm1689, %v6609, %v6610
        %v6612 = vrot.slane %v6610, 4
        %v6613 = vrot.slane %v6196, 5
        %v6614 = vsel %vm1689, %v6612, %v6613
        %v6615 = vrot.slane %v6553, 5
        %v6616 = vrot.slane %v6615, 4
        %v6617 = vrot.slane %v6198, 5
        %v6618 = vsel %vm1689, %v6616, %v6617
        %v6619 = vrot.slane %v6617, 4
        %v6620 = vrot.slane %v6199, 5
        %v6621 = vsel %vm1689, %v6619, %v6620
        %v6622 = vrot.slane %v6554, 5
        %v6623 = vrot.slane %v6622, 4
        %v6624 = vrot.slane %v6201, 5
        %v6625 = vsel %vm1689, %v6623, %v6624
        %v6626 = vrot.slane %v6624, 4
        %v6627 = vrot.slane %v6202, 5
        %v6628 = vsel %vm1689, %v6626, %v6627
        %v6629 = vrot.slane %v6555, 5
        %v6630 = vrot.slane %v6629, 4
        %v6631 = vrot.slane %v6204, 5
        %v6632 = vsel %vm1689, %v6630, %v6631
        %v6633 = vrot.slane %v6631, 4
        %v6634 = vrot.slane %v6205, 5
        %v6635 = vsel %vm1689, %v6633, %v6634
        %s6636 = scalar_lea.vmem %s5, 32
        %v6637 = vld [vmem:[%s6636] sm:$0xf]
        %v6638 = vunpack.c.l.b16 %v6583
        %v6639 = vunpack.c.l.b16 %v6586
        %v6640 = vunpack.c.l.b16 %v6590
        %v6641 = vunpack.c.l.b16 %v6593
        %v6642 = vunpack.c.l.b16 %v6597
        %v6643 = vunpack.c.l.b16 %v6600
        %v6644 = vunpack.c.l.b16 %v6604
        %v6645 = vunpack.c.l.b16 %v6607
        %v6646 = vunpack.c.l.b16 %v6611
        %v6647 = vunpack.c.l.b16 %v6614
        %v6648 = vunpack.c.l.b16 %v6618
        %v6649 = vunpack.c.l.b16 %v6621
        %v6650 = vunpack.c.l.b16 %v6625
        %v6651 = vunpack.c.l.b16 %v6628
        %v6652 = vunpack.c.l.b16 %v6632
        %v6653 = vunpack.c.l.b16 %v6635
        %v6654 = vpack.c.b16 %v6639, %v6638
        %v6655 = vpack.c.b16 %v6641, %v6640
        %v6656 = vpack.c.b16 %v6643, %v6642
        %v6657 = vpack.c.b16 %v6645, %v6644
        %v6658 = vpack.c.b16 %v6647, %v6646
        %v6659 = vpack.c.b16 %v6649, %v6648
        %v6660 = vpack.c.b16 %v6651, %v6650
        %v6661 = vpack.c.b16 %v6653, %v6652
        %v6663 = vsel %vm4708, %v6654, 0
        %v6666 = vsel %vm4708, %v6655, 0
        %v6669 = vsel %vm4708, %v6656, 0
        %v6672 = vsel %vm4708, %v6657, 0
        %v6675 = vsel %vm4708, %v6658, 0
        %v6678 = vsel %vm4708, %v6659, 0
        %v6681 = vsel %vm4708, %v6660, 0
        %v6684 = vsel %vm4708, %v6661, 0
        %v6687 = vsel %vm4733, %v6637, 0
        %6689 = vmatprep.subr.bf16.mxu0 0
        %6690 = vmatpush1.bf16.msra.mxu0 %v6687
        %6691 = vmatprep.subr.bf16.mxu0 0
        %6692 = vmatpush1.bf16.msra.mxu0 0
        %6693 = vmatprep.subr.bf16.mxu0 0
        %6694 = vmatpush1.bf16.msra.mxu0 0
        %6695 = vmatprep.subr.bf16.mxu0 0
        %6696 = vmatpush1.bf16.msra.mxu0 0
        %6697 = vmatprep.subr.bf16.mxu0 0
        %6698 = vmatpush1.bf16.msra.mxu0 0
        %6699 = vmatprep.subr.bf16.mxu0 0
        %6700 = vmatpush1.bf16.msra.mxu0 0
        %6701 = vmatprep.subr.bf16.mxu0 0
        %6702 = vmatpush1.bf16.msra.mxu0 0
        %6703 = vmatprep.subr.bf16.mxu0 0
        %6704 = vmatpush1.bf16.msra.mxu0 0
        %6705 = vmatprep.subr.bf16.mxu0 0
        %6706 = vmatpush1.bf16.msra.mxu0 0
        %6707 = vmatprep.subr.bf16.mxu0 0
        %6708 = vmatpush1.bf16.msra.mxu0 0
        %6709 = vmatprep.subr.bf16.mxu0 0
        %6710 = vmatpush1.bf16.msra.mxu0 0
        %6711 = vmatprep.subr.bf16.mxu0 0
        %6712 = vmatpush1.bf16.msra.mxu0 0
        %6713 = vmatprep.subr.bf16.mxu0 0
        %6714 = vmatpush1.bf16.msra.mxu0 0
        %6715 = vmatprep.subr.bf16.mxu0 0
        %6716 = vmatpush1.bf16.msra.mxu0 0
        %6717 = vmatprep.subr.bf16.mxu0 0
        %6718 = vmatpush1.bf16.msra.mxu0 0
        %6719 = vmatprep.subr.bf16.mxu0 0
        %6720 = vmatpush1.bf16.msra.mxu0 0
        %6721 = vmatprep.mubr.bf16.mxu0 0
        %6722 = vmatmul.mubr.bf16.gmra.mrb[0].mxu0 %v6663
        %v6723 = vpop.f32.mrb[0].mxu0
        %v6724 = vadd.f32 0.0, %v6723
        %v6725 = vpop.f32.mrb[0].mxu0
        %v6726 = vpop.f32.mrb[0].mxu0
        %v6727 = vadd.f32 0.0, %v6726
        %v6728 = vpop.f32.mrb[0].mxu0
        %6729 = vmatprep.mubr.bf16.mxu0 0
        %6730 = vmatmul.mubr.bf16.gmra.mrb[0].mxu0 %v6666
        %v6731 = vpop.f32.mrb[0].mxu0
        %v6732 = vpop.f32.mrb[0].mxu0
        %v6733 = vpop.f32.mrb[0].mxu0
        %v6734 = vpop.f32.mrb[0].mxu0
        %6735 = vmatprep.mubr.bf16.mxu0 0
        %6736 = vmatmul.mubr.bf16.gmra.mrb[0].mxu0 %v6669
        %v6737 = vpop.f32.mrb[0].mxu0
        %v6738 = vadd.f32 0.0, %v6737
        %v6739 = vpop.f32.mrb[0].mxu0
        %v6740 = vpop.f32.mrb[0].mxu0
        %v6741 = vadd.f32 0.0, %v6740
        %v6742 = vpop.f32.mrb[0].mxu0
        %6743 = vmatprep.mubr.bf16.mxu0 0
        %6744 = vmatmul.mubr.bf16.gmra.mrb[0].mxu0 %v6672
        %v6745 = vpop.f32.mrb[0].mxu0
        %v6746 = vpop.f32.mrb[0].mxu0
        %v6747 = vpop.f32.mrb[0].mxu0
        %v6748 = vpop.f32.mrb[0].mxu0
        %6749 = vmatprep.mubr.bf16.mxu0 0
        %6750 = vmatmul.mubr.bf16.gmra.mrb[0].mxu0 %v6675
        %v6751 = vpop.f32.mrb[0].mxu0
        %v6752 = vadd.f32 0.0, %v6751
        %v6753 = vpop.f32.mrb[0].mxu0
        %v6754 = vpop.f32.mrb[0].mxu0
        %v6755 = vadd.f32 0.0, %v6754
        %v6756 = vpop.f32.mrb[0].mxu0
        %6757 = vmatprep.mubr.bf16.mxu0 0
        %6758 = vmatmul.mubr.bf16.gmra.mrb[0].mxu0 %v6678
        %v6759 = vpop.f32.mrb[0].mxu0
        %v6760 = vpop.f32.mrb[0].mxu0
        %v6761 = vpop.f32.mrb[0].mxu0
        %v6762 = vpop.f32.mrb[0].mxu0
        %6763 = vmatprep.mubr.bf16.mxu0 0
        %6764 = vmatmul.mubr.bf16.gmra.mrb[0].mxu0 %v6681
        %v6765 = vpop.f32.mrb[0].mxu0
        %v6766 = vadd.f32 0.0, %v6765
        %v6767 = vpop.f32.mrb[0].mxu0
        %v6768 = vpop.f32.mrb[0].mxu0
        %v6769 = vadd.f32 0.0, %v6768
        %v6770 = vpop.f32.mrb[0].mxu0
        %6771 = vmatprep.mubr.bf16.mxu0 0
        %6772 = vmatmul.mubr.bf16.gmra.mrb[0].mxu0 %v6684
        %v6773 = vpop.f32.mrb[0].mxu0
        %v6774 = vpop.f32.mrb[0].mxu0
        %v6775 = vpop.f32.mrb[0].mxu0
        %v6776 = vpop.f32.mrb[0].mxu0
        %6777 = vdwg.mxu0
        %v6778 = vadd.f32 %v6540, %v6724
        %v6779 = vadd.f32 %v6541, %v6727
        %v6780 = vadd.f32 %v6542, %v6738
        %v6781 = vadd.f32 %v6543, %v6741
        %v6782 = vadd.f32 %v6544, %v6752
        %v6783 = vadd.f32 %v6545, %v6755
        %v6784 = vadd.f32 %v6546, %v6766
        %v6785 = vadd.f32 %v6547, %v6769
        %v6786 = vld [vmem:[%s6] sm:$0x1]
        %v6788 = vlaneseq
        %v6789 = vshrl.u32 %v6788, 7
        %v6790 = vsub.s32 0, %v6789
        %v6791 = vrot.slane %v6786, %v6790
        %v6793 = vmul.f32 %v6778, %v6791
        %v6794 = vmul.f32 %v6779, %v6791
        %v6795 = vmul.f32 %v6780, %v6791
        %v6796 = vmul.f32 %v6781, %v6791
        %v6797 = vmul.f32 %v6782, %v6791
        %v6798 = vmul.f32 %v6783, %v6791
        %v6799 = vmul.f32 %v6784, %v6791
        %v6800 = vmul.f32 %v6785, %v6791
        %v6801 = vld [vmem:[%s7] sm:$0x1]
        %v6803 = vlaneseq
        %v6804 = vshrl.u32 %v6803, 7
        %v6805 = vsub.s32 0, %v6804
        %v6806 = vrot.slane %v6801, %v6805
        %v6808 = vadd.f32 %v6793, %v6806
        %v6809 = vadd.f32 %v6794, %v6806
        %v6810 = vadd.f32 %v6795, %v6806
        %v6811 = vadd.f32 %v6796, %v6806
        %v6812 = vadd.f32 %v6797, %v6806
        %v6813 = vadd.f32 %v6798, %v6806
        %v6814 = vadd.f32 %v6799, %v6806
        %v6815 = vadd.f32 %v6800, %v6806
        %v6824 = vcombine.high %v6808, %v6808
        %v6826 = vunpack.c.l.s4 1983009808
        %v6827 = vunpack.c.0.s8 %v6826
        %v6828 = vlaneseq
        %v6829 = vshrl.u32 %v6828, 7
        %v6830 = vsub.s32 %v6827, %v6829
        %v6831 = vrot.slane %v6808, %v6830
        %v6833 = vunpack.c.l.s4 1983009808
        %v6834 = vunpack.c.0.s8 %v6833
        %v6835 = vlaneseq
        %v6836 = vshrl.u32 %v6835, 7
        %v6837 = vsub.s32 %v6834, %v6836
        %v6838 = vrot.slane %v6824, %v6837
        %v6839 = vcombine.high %v6831, %v6831
        %v6840 = vcombine.high %v6838, %v6838
        %v6841 = vcombine.high %v6809, %v6809
        %v6843 = vunpack.c.l.s4 1983009808
        %v6844 = vunpack.c.0.s8 %v6843
        %v6845 = vlaneseq
        %v6846 = vshrl.u32 %v6845, 7
        %v6847 = vsub.s32 %v6844, %v6846
        %v6848 = vrot.slane %v6809, %v6847
        %v6850 = vunpack.c.l.s4 1983009808
        %v6851 = vunpack.c.0.s8 %v6850
        %v6852 = vlaneseq
        %v6853 = vshrl.u32 %v6852, 7
        %v6854 = vsub.s32 %v6851, %v6853
        %v6855 = vrot.slane %v6841, %v6854
        %v6856 = vcombine.high %v6848, %v6848
        %v6857 = vcombine.high %v6855, %v6855
        %v6858 = vcombine.high %v6810, %v6810
        %v6860 = vunpack.c.l.s4 1983009808
        %v6861 = vunpack.c.0.s8 %v6860
        %v6862 = vlaneseq
        %v6863 = vshrl.u32 %v6862, 7
        %v6864 = vsub.s32 %v6861, %v6863
        %v6865 = vrot.slane %v6810, %v6864
        %v6867 = vunpack.c.l.s4 1983009808
        %v6868 = vunpack.c.0.s8 %v6867
        %v6869 = vlaneseq
        %v6870 = vshrl.u32 %v6869, 7
        %v6871 = vsub.s32 %v6868, %v6870
        %v6872 = vrot.slane %v6858, %v6871
        %v6873 = vcombine.high %v6865, %v6865
        %v6874 = vcombine.high %v6872, %v6872
        %v6875 = vcombine.high %v6811, %v6811
        %v6877 = vunpack.c.l.s4 1983009808
        %v6878 = vunpack.c.0.s8 %v6877
        %v6879 = vlaneseq
        %v6880 = vshrl.u32 %v6879, 7
        %v6881 = vsub.s32 %v6878, %v6880
        %v6882 = vrot.slane %v6811, %v6881
        %v6884 = vunpack.c.l.s4 1983009808
        %v6885 = vunpack.c.0.s8 %v6884
        %v6886 = vlaneseq
        %v6887 = vshrl.u32 %v6886, 7
        %v6888 = vsub.s32 %v6885, %v6887
        %v6889 = vrot.slane %v6875, %v6888
        %v6890 = vcombine.high %v6882, %v6882
        %v6891 = vcombine.high %v6889, %v6889
        %v6892 = vcombine.high %v6812, %v6812
        %v6894 = vunpack.c.l.s4 1983009808
        %v6895 = vunpack.c.0.s8 %v6894
        %v6896 = vlaneseq
        %v6897 = vshrl.u32 %v6896, 7
        %v6898 = vsub.s32 %v6895, %v6897
        %v6899 = vrot.slane %v6812, %v6898
        %v6901 = vunpack.c.l.s4 1983009808
        %v6902 = vunpack.c.0.s8 %v6901
        %v6903 = vlaneseq
        %v6904 = vshrl.u32 %v6903, 7
        %v6905 = vsub.s32 %v6902, %v6904
        %v6906 = vrot.slane %v6892, %v6905
        %v6907 = vcombine.high %v6899, %v6899
        %v6908 = vcombine.high %v6906, %v6906
        %v6909 = vcombine.high %v6813, %v6813
        %v6911 = vunpack.c.l.s4 1983009808
        %v6912 = vunpack.c.0.s8 %v6911
        %v6913 = vlaneseq
        %v6914 = vshrl.u32 %v6913, 7
        %v6915 = vsub.s32 %v6912, %v6914
        %v6916 = vrot.slane %v6813, %v6915
        %v6918 = vunpack.c.l.s4 1983009808
        %v6919 = vunpack.c.0.s8 %v6918
        %v6920 = vlaneseq
        %v6921 = vshrl.u32 %v6920, 7
        %v6922 = vsub.s32 %v6919, %v6921
        %v6923 = vrot.slane %v6909, %v6922
        %v6924 = vcombine.high %v6916, %v6916
        %v6925 = vcombine.high %v6923, %v6923
        %v6926 = vcombine.high %v6814, %v6814
        %v6928 = vunpack.c.l.s4 1983009808
        %v6929 = vunpack.c.0.s8 %v6928
        %v6930 = vlaneseq
        %v6931 = vshrl.u32 %v6930, 7
        %v6932 = vsub.s32 %v6929, %v6931
        %v6933 = vrot.slane %v6814, %v6932
        %v6935 = vunpack.c.l.s4 1983009808
        %v6936 = vunpack.c.0.s8 %v6935
        %v6937 = vlaneseq
        %v6938 = vshrl.u32 %v6937, 7
        %v6939 = vsub.s32 %v6936, %v6938
        %v6940 = vrot.slane %v6926, %v6939
        %v6941 = vcombine.high %v6933, %v6933
        %v6942 = vcombine.high %v6940, %v6940
        %v6943 = vcombine.high %v6815, %v6815
        %v6945 = vunpack.c.l.s4 1983009808
        %v6946 = vunpack.c.0.s8 %v6945
        %v6947 = vlaneseq
        %v6948 = vshrl.u32 %v6947, 7
        %v6949 = vsub.s32 %v6946, %v6948
        %v6950 = vrot.slane %v6815, %v6949
        %v6952 = vunpack.c.l.s4 1983009808
        %v6953 = vunpack.c.0.s8 %v6952
        %v6954 = vlaneseq
        %v6955 = vshrl.u32 %v6954, 7
        %v6956 = vsub.s32 %v6953, %v6955
        %v6957 = vrot.slane %v6943, %v6956
        %v6958 = vcombine.high %v6950, %v6950
        %v6959 = vcombine.high %v6957, %v6957
        %v7000 = vcombine.high %v483, %v483
        %v7002 = vunpack.c.l.s4 1983009808
        %v7003 = vunpack.c.0.s8 %v7002
        %v7004 = vlaneseq
        %v7005 = vshrl.u32 %v7004, 7
        %v7006 = vsub.s32 %v7003, %v7005
        %v7007 = vrot.slane %v483, %v7006
        %v7009 = vunpack.c.l.s4 1983009808
        %v7010 = vunpack.c.0.s8 %v7009
        %v7011 = vlaneseq
        %v7012 = vshrl.u32 %v7011, 7
        %v7013 = vsub.s32 %v7010, %v7012
        %v7014 = vrot.slane %v7000, %v7013
        %v7015 = vcombine.high %v7007, %v7007
        %v7016 = vcombine.high %v7014, %v7014
        %v7017 = vcombine.high %v484, %v484
        %v7019 = vunpack.c.l.s4 1983009808
        %v7020 = vunpack.c.0.s8 %v7019
        %v7021 = vlaneseq
        %v7022 = vshrl.u32 %v7021, 7
        %v7023 = vsub.s32 %v7020, %v7022
        %v7024 = vrot.slane %v484, %v7023
        %v7026 = vunpack.c.l.s4 1983009808
        %v7027 = vunpack.c.0.s8 %v7026
        %v7028 = vlaneseq
        %v7029 = vshrl.u32 %v7028, 7
        %v7030 = vsub.s32 %v7027, %v7029
        %v7031 = vrot.slane %v7017, %v7030
        %v7032 = vcombine.high %v7024, %v7024
        %v7033 = vcombine.high %v7031, %v7031
        %v7034 = vcombine.high %v487, %v487
        %v7036 = vunpack.c.l.s4 1983009808
        %v7037 = vunpack.c.0.s8 %v7036
        %v7038 = vlaneseq
        %v7039 = vshrl.u32 %v7038, 7
        %v7040 = vsub.s32 %v7037, %v7039
        %v7041 = vrot.slane %v487, %v7040
        %v7043 = vunpack.c.l.s4 1983009808
        %v7044 = vunpack.c.0.s8 %v7043
        %v7045 = vlaneseq
        %v7046 = vshrl.u32 %v7045, 7
        %v7047 = vsub.s32 %v7044, %v7046
        %v7048 = vrot.slane %v7034, %v7047
        %v7049 = vcombine.high %v7041, %v7041
        %v7050 = vcombine.high %v7048, %v7048
        %v7051 = vcombine.high %v488, %v488
        %v7053 = vunpack.c.l.s4 1983009808
        %v7054 = vunpack.c.0.s8 %v7053
        %v7055 = vlaneseq
        %v7056 = vshrl.u32 %v7055, 7
        %v7057 = vsub.s32 %v7054, %v7056
        %v7058 = vrot.slane %v488, %v7057
        %v7060 = vunpack.c.l.s4 1983009808
        %v7061 = vunpack.c.0.s8 %v7060
        %v7062 = vlaneseq
        %v7063 = vshrl.u32 %v7062, 7
        %v7064 = vsub.s32 %v7061, %v7063
        %v7065 = vrot.slane %v7051, %v7064
        %v7066 = vcombine.high %v7058, %v7058
        %v7067 = vcombine.high %v7065, %v7065
        %v7068 = vcombine.high %v491, %v491
        %v7070 = vunpack.c.l.s4 1983009808
        %v7071 = vunpack.c.0.s8 %v7070
        %v7072 = vlaneseq
        %v7073 = vshrl.u32 %v7072, 7
        %v7074 = vsub.s32 %v7071, %v7073
        %v7075 = vrot.slane %v491, %v7074
        %v7077 = vunpack.c.l.s4 1983009808
        %v7078 = vunpack.c.0.s8 %v7077
        %v7079 = vlaneseq
        %v7080 = vshrl.u32 %v7079, 7
        %v7081 = vsub.s32 %v7078, %v7080
        %v7082 = vrot.slane %v7068, %v7081
        %v7083 = vcombine.high %v7075, %v7075
        %v7084 = vcombine.high %v7082, %v7082
        %v7085 = vcombine.high %v492, %v492
        %v7087 = vunpack.c.l.s4 1983009808
        %v7088 = vunpack.c.0.s8 %v7087
        %v7089 = vlaneseq
        %v7090 = vshrl.u32 %v7089, 7
        %v7091 = vsub.s32 %v7088, %v7090
        %v7092 = vrot.slane %v492, %v7091
        %v7094 = vunpack.c.l.s4 1983009808
        %v7095 = vunpack.c.0.s8 %v7094
        %v7096 = vlaneseq
        %v7097 = vshrl.u32 %v7096, 7
        %v7098 = vsub.s32 %v7095, %v7097
        %v7099 = vrot.slane %v7085, %v7098
        %v7100 = vcombine.high %v7092, %v7092
        %v7101 = vcombine.high %v7099, %v7099
        %v7102 = vcombine.high %v495, %v495
        %v7104 = vunpack.c.l.s4 1983009808
        %v7105 = vunpack.c.0.s8 %v7104
        %v7106 = vlaneseq
        %v7107 = vshrl.u32 %v7106, 7
        %v7108 = vsub.s32 %v7105, %v7107
        %v7109 = vrot.slane %v495, %v7108
        %v7111 = vunpack.c.l.s4 1983009808
        %v7112 = vunpack.c.0.s8 %v7111
        %v7113 = vlaneseq
        %v7114 = vshrl.u32 %v7113, 7
        %v7115 = vsub.s32 %v7112, %v7114
        %v7116 = vrot.slane %v7102, %v7115
        %v7117 = vcombine.high %v7109, %v7109
        %v7118 = vcombine.high %v7116, %v7116
        %v7119 = vcombine.high %v496, %v496
        %v7121 = vunpack.c.l.s4 1983009808
        %v7122 = vunpack.c.0.s8 %v7121
        %v7123 = vlaneseq
        %v7124 = vshrl.u32 %v7123, 7
        %v7125 = vsub.s32 %v7122, %v7124
        %v7126 = vrot.slane %v496, %v7125
        %v7128 = vunpack.c.l.s4 1983009808
        %v7129 = vunpack.c.0.s8 %v7128
        %v7130 = vlaneseq
        %v7131 = vshrl.u32 %v7130, 7
        %v7132 = vsub.s32 %v7129, %v7131
        %v7133 = vrot.slane %v7119, %v7132
        %v7134 = vcombine.high %v7126, %v7126
        %v7135 = vcombine.high %v7133, %v7133
        %v7168 = vpack.c.bf16 %v7007, %v7007
        %v7169 = vpack.c.bf16 %v7015, %v7015
        %v7170 = vpack.c.bf16 %v7014, %v7014
        %v7171 = vpack.c.bf16 %v7016, %v7016
        %v7172 = vpack.c.bf16 %v7024, %v7024
        %v7173 = vpack.c.bf16 %v7032, %v7032
        %v7174 = vpack.c.bf16 %v7031, %v7031
        %v7175 = vpack.c.bf16 %v7033, %v7033
        %v7176 = vpack.c.bf16 %v7041, %v7041
        %v7177 = vpack.c.bf16 %v7049, %v7049
        %v7178 = vpack.c.bf16 %v7048, %v7048
        %v7179 = vpack.c.bf16 %v7050, %v7050
        %v7180 = vpack.c.bf16 %v7058, %v7058
        %v7181 = vpack.c.bf16 %v7066, %v7066
        %v7182 = vpack.c.bf16 %v7065, %v7065
        %v7183 = vpack.c.bf16 %v7067, %v7067
        %v7184 = vpack.c.bf16 %v7075, %v7075
        %v7185 = vpack.c.bf16 %v7083, %v7083
        %v7186 = vpack.c.bf16 %v7082, %v7082
        %v7187 = vpack.c.bf16 %v7084, %v7084
        %v7188 = vpack.c.bf16 %v7092, %v7092
        %v7189 = vpack.c.bf16 %v7100, %v7100
        %v7190 = vpack.c.bf16 %v7099, %v7099
        %v7191 = vpack.c.bf16 %v7101, %v7101
        %v7192 = vpack.c.bf16 %v7109, %v7109
        %v7193 = vpack.c.bf16 %v7117, %v7117
        %v7194 = vpack.c.bf16 %v7116, %v7116
        %v7195 = vpack.c.bf16 %v7118, %v7118
        %v7196 = vpack.c.bf16 %v7126, %v7126
        %v7197 = vpack.c.bf16 %v7134, %v7134
        %v7198 = vpack.c.bf16 %v7133, %v7133
        %v7199 = vpack.c.bf16 %v7135, %v7135
        %v7200 = vld [vmem:[%s8] sm:$0x3]
        %v7233 = vunpack.c.l.b16 %v7168
        %v7234 = vunpack.c.l.b16 %v7169
        %v7235 = vunpack.c.l.b16 %v7170
        %v7236 = vunpack.c.l.b16 %v7171
        %v7237 = vunpack.c.l.b16 %v7172
        %v7238 = vunpack.c.l.b16 %v7173
        %v7239 = vunpack.c.l.b16 %v7174
        %v7240 = vunpack.c.l.b16 %v7175
        %v7241 = vunpack.c.l.b16 %v7176
        %v7242 = vunpack.c.l.b16 %v7177
        %v7243 = vunpack.c.l.b16 %v7178
        %v7244 = vunpack.c.l.b16 %v7179
        %v7245 = vunpack.c.l.b16 %v7180
        %v7246 = vunpack.c.l.b16 %v7181
        %v7247 = vunpack.c.l.b16 %v7182
        %v7248 = vunpack.c.l.b16 %v7183
        %v7249 = vunpack.c.l.b16 %v7184
        %v7250 = vunpack.c.l.b16 %v7185
        %v7251 = vunpack.c.l.b16 %v7186
        %v7252 = vunpack.c.l.b16 %v7187
        %v7253 = vunpack.c.l.b16 %v7188
        %v7254 = vunpack.c.l.b16 %v7189
        %v7255 = vunpack.c.l.b16 %v7190
        %v7256 = vunpack.c.l.b16 %v7191
        %v7257 = vunpack.c.l.b16 %v7192
        %v7258 = vunpack.c.l.b16 %v7193
        %v7259 = vunpack.c.l.b16 %v7194
        %v7260 = vunpack.c.l.b16 %v7195
        %v7261 = vunpack.c.l.b16 %v7196
        %v7262 = vunpack.c.l.b16 %v7197
        %v7263 = vunpack.c.l.b16 %v7198
        %v7264 = vunpack.c.l.b16 %v7199
        %v7265 = vrot.slane %v7234, 7
        %vm7266 = vcmask 1041409
        %v7267 = vsel %vm7266, %v7265, %v7233
        %v7268 = vrot.slane %v7235, 6
        %vm7269 = vcmask 1042434
        %v7270 = vsel %vm7269, %v7268, %v7267
        %v7271 = vrot.slane %v7236, 5
        %vm7272 = vcmask 1043459
        %v7273 = vsel %vm7272, %v7271, %v7270
        %v7274 = vrot.slane %v7237, 4
        %vm7275 = vcmask 1044484
        %v7276 = vsel %vm7275, %v7274, %v7273
        %v7277 = vrot.slane %v7238, 3
        %vm7278 = vcmask 1045509
        %v7279 = vsel %vm7278, %v7277, %v7276
        %v7280 = vrot.slane %v7239, 2
        %vm7281 = vcmask 1046534
        %v7282 = vsel %vm7281, %v7280, %v7279
        %v7283 = vrot.slane %v7240, 1
        %vm7284 = vcmask 1047559
        %v7285 = vsel %vm7284, %v7283, %v7282
        %v7286 = vrot.slane %v7242, 7
        %v7287 = vsel %vm7266, %v7286, %v7241
        %v7288 = vrot.slane %v7243, 6
        %v7289 = vsel %vm7269, %v7288, %v7287
        %v7290 = vrot.slane %v7244, 5
        %v7291 = vsel %vm7272, %v7290, %v7289
        %v7292 = vrot.slane %v7245, 4
        %v7293 = vsel %vm7275, %v7292, %v7291
        %v7294 = vrot.slane %v7246, 3
        %v7295 = vsel %vm7278, %v7294, %v7293
        %v7296 = vrot.slane %v7247, 2
        %v7297 = vsel %vm7281, %v7296, %v7295
        %v7298 = vrot.slane %v7248, 1
        %v7299 = vsel %vm7284, %v7298, %v7297
        %v7300 = vrot.slane %v7250, 7
        %v7301 = vsel %vm7266, %v7300, %v7249
        %v7302 = vrot.slane %v7251, 6
        %v7303 = vsel %vm7269, %v7302, %v7301
        %v7304 = vrot.slane %v7252, 5
        %v7305 = vsel %vm7272, %v7304, %v7303
        %v7306 = vrot.slane %v7253, 4
        %v7307 = vsel %vm7275, %v7306, %v7305
        %v7308 = vrot.slane %v7254, 3
        %v7309 = vsel %vm7278, %v7308, %v7307
        %v7310 = vrot.slane %v7255, 2
        %v7311 = vsel %vm7281, %v7310, %v7309
        %v7312 = vrot.slane %v7256, 1
        %v7313 = vsel %vm7284, %v7312, %v7311
        %v7314 = vrot.slane %v7258, 7
        %v7315 = vsel %vm7266, %v7314, %v7257
        %v7316 = vrot.slane %v7259, 6
        %v7317 = vsel %vm7269, %v7316, %v7315
        %v7318 = vrot.slane %v7260, 5
        %v7319 = vsel %vm7272, %v7318, %v7317
        %v7320 = vrot.slane %v7261, 4
        %v7321 = vsel %vm7275, %v7320, %v7319
        %v7322 = vrot.slane %v7262, 3
        %v7323 = vsel %vm7278, %v7322, %v7321
        %v7324 = vrot.slane %v7263, 2
        %v7325 = vsel %vm7281, %v7324, %v7323
        %v7326 = vrot.slane %v7264, 1
        %v7327 = vsel %vm7284, %v7326, %v7325
        %v7328 = vpack.c.b16 %v7299, %v7285
        %v7329 = vpack.c.b16 %v7327, %v7313
        %v7331 = vsel %vm1313, %v7328, 0
        %v7334 = vsel %vm1313, %v7329, 0
        %v7337 = vsel %vm1344, %v7200, 0
        %7339 = vmatprep.subr.bf16.mxu0 0
        %7340 = vmatpush1.bf16.msra.mxu0 %v7337
        %7341 = vmatprep.subr.bf16.mxu0 0
        %7342 = vmatpush1.bf16.msra.mxu0 0
        %7343 = vmatprep.subr.bf16.mxu0 0
        %7344 = vmatpush1.bf16.msra.mxu0 0
        %7345 = vmatprep.subr.bf16.mxu0 0
        %7346 = vmatpush1.bf16.msra.mxu0 0
        %7347 = vmatprep.subr.bf16.mxu0 0
        %7348 = vmatpush1.bf16.msra.mxu0 0
        %7349 = vmatprep.subr.bf16.mxu0 0
        %7350 = vmatpush1.bf16.msra.mxu0 0
        %7351 = vmatprep.subr.bf16.mxu0 0
        %7352 = vmatpush1.bf16.msra.mxu0 0
        %7353 = vmatprep.subr.bf16.mxu0 0
        %7354 = vmatpush1.bf16.msra.mxu0 0
        %7355 = vmatprep.subr.bf16.mxu0 0
        %7356 = vmatpush1.bf16.msra.mxu0 0
        %7357 = vmatprep.subr.bf16.mxu0 0
        %7358 = vmatpush1.bf16.msra.mxu0 0
        %7359 = vmatprep.subr.bf16.mxu0 0
        %7360 = vmatpush1.bf16.msra.mxu0 0
        %7361 = vmatprep.subr.bf16.mxu0 0
        %7362 = vmatpush1.bf16.msra.mxu0 0
        %7363 = vmatprep.subr.bf16.mxu0 0
        %7364 = vmatpush1.bf16.msra.mxu0 0
        %7365 = vmatprep.subr.bf16.mxu0 0
        %7366 = vmatpush1.bf16.msra.mxu0 0
        %7367 = vmatprep.subr.bf16.mxu0 0
        %7368 = vmatpush1.bf16.msra.mxu0 0
        %7369 = vmatprep.subr.bf16.mxu0 0
        %7370 = vmatpush1.bf16.msra.mxu0 0
        %7371 = vmatprep.mubr.bf16.mxu0 0
        %7372 = vmatmul.mubr.bf16.gmra.mrb[0].mxu0 %v7331
        %v7373 = vpop.f32.mrb[0].mxu0
        %v7374 = vadd.f32 0.0, %v7373
        %v7375 = vpop.f32.mrb[0].mxu0
        %v7376 = vpop.f32.mrb[0].mxu0
        %v7377 = vadd.f32 0.0, %v7376
        %v7378 = vpop.f32.mrb[0].mxu0
        %7379 = vmatprep.mubr.bf16.mxu0 0
        %7380 = vmatmul.mubr.bf16.gmra.mrb[0].mxu0 %v7334
        %v7381 = vpop.f32.mrb[0].mxu0
        %v7382 = vadd.f32 0.0, %v7381
        %v7383 = vpop.f32.mrb[0].mxu0
        %v7384 = vpop.f32.mrb[0].mxu0
        %v7385 = vadd.f32 0.0, %v7384
        %v7386 = vpop.f32.mrb[0].mxu0
        %7387 = vdwg.mxu0
        %v7388 = vld [vmem:[%s9] sm:$0x1]
        %v7390 = vlaneseq
        %v7391 = vshrl.u32 %v7390, 7
        %v7392 = vsub.s32 0, %v7391
        %v7393 = vrot.slane %v7388, %v7392
        %v7395 = vmul.f32 %v7374, %v7393
        %v7396 = vmul.f32 %v7377, %v7393
        %v7397 = vmul.f32 %v7382, %v7393
        %v7398 = vmul.f32 %v7385, %v7393
        %v7399 = vld [vmem:[%s10] sm:$0x1]
        %v7401 = vlaneseq
        %v7402 = vshrl.u32 %v7401, 7
        %v7403 = vsub.s32 0, %v7402
        %v7404 = vrot.slane %v7399, %v7403
        %v7406 = vadd.f32 %v7395, %v7404
        %v7407 = vadd.f32 %v7396, %v7404
        %v7408 = vadd.f32 %v7397, %v7404
        %v7409 = vadd.f32 %v7398, %v7404
        %v7414 = vcombine.high %v7406, %v7406
        %v7416 = vunpack.c.l.s4 1983009808
        %v7417 = vunpack.c.0.s8 %v7416
        %v7418 = vlaneseq
        %v7419 = vshrl.u32 %v7418, 7
        %v7420 = vsub.s32 %v7417, %v7419
        %v7421 = vrot.slane %v7406, %v7420
        %v7423 = vunpack.c.l.s4 1983009808
        %v7424 = vunpack.c.0.s8 %v7423
        %v7425 = vlaneseq
        %v7426 = vshrl.u32 %v7425, 7
        %v7427 = vsub.s32 %v7424, %v7426
        %v7428 = vrot.slane %v7414, %v7427
        %v7429 = vcombine.high %v7421, %v7421
        %v7430 = vcombine.high %v7428, %v7428
        %v7431 = vcombine.high %v7407, %v7407
        %v7433 = vunpack.c.l.s4 1983009808
        %v7434 = vunpack.c.0.s8 %v7433
        %v7435 = vlaneseq
        %v7436 = vshrl.u32 %v7435, 7
        %v7437 = vsub.s32 %v7434, %v7436
        %v7438 = vrot.slane %v7407, %v7437
        %v7440 = vunpack.c.l.s4 1983009808
        %v7441 = vunpack.c.0.s8 %v7440
        %v7442 = vlaneseq
        %v7443 = vshrl.u32 %v7442, 7
        %v7444 = vsub.s32 %v7441, %v7443
        %v7445 = vrot.slane %v7431, %v7444
        %v7446 = vcombine.high %v7438, %v7438
        %v7447 = vcombine.high %v7445, %v7445
        %v7448 = vcombine.high %v7408, %v7408
        %v7450 = vunpack.c.l.s4 1983009808
        %v7451 = vunpack.c.0.s8 %v7450
        %v7452 = vlaneseq
        %v7453 = vshrl.u32 %v7452, 7
        %v7454 = vsub.s32 %v7451, %v7453
        %v7455 = vrot.slane %v7408, %v7454
        %v7457 = vunpack.c.l.s4 1983009808
        %v7458 = vunpack.c.0.s8 %v7457
        %v7459 = vlaneseq
        %v7460 = vshrl.u32 %v7459, 7
        %v7461 = vsub.s32 %v7458, %v7460
        %v7462 = vrot.slane %v7448, %v7461
        %v7463 = vcombine.high %v7455, %v7455
        %v7464 = vcombine.high %v7462, %v7462
        %v7465 = vcombine.high %v7409, %v7409
        %v7467 = vunpack.c.l.s4 1983009808
        %v7468 = vunpack.c.0.s8 %v7467
        %v7469 = vlaneseq
        %v7470 = vshrl.u32 %v7469, 7
        %v7471 = vsub.s32 %v7468, %v7470
        %v7472 = vrot.slane %v7409, %v7471
        %v7474 = vunpack.c.l.s4 1983009808
        %v7475 = vunpack.c.0.s8 %v7474
        %v7476 = vlaneseq
        %v7477 = vshrl.u32 %v7476, 7
        %v7478 = vsub.s32 %v7475, %v7477
        %v7479 = vrot.slane %v7465, %v7478
        %v7480 = vcombine.high %v7472, %v7472
        %v7481 = vcombine.high %v7479, %v7479
        %v7482 = vrot.slane %v7421, 1
        %v7483 = vrot.slane %v7429, 1
        %v7484 = vrot.slane %v7428, 1
        %v7485 = vrot.slane %v7430, 1
        %v7486 = vrot.slane %v7438, 1
        %v7487 = vrot.slane %v7446, 1
        %v7488 = vrot.slane %v7445, 1
        %v7489 = vrot.slane %v7447, 1
        %v7490 = vrot.slane %v7455, 1
        %v7491 = vrot.slane %v7463, 1
        %v7492 = vrot.slane %v7462, 1
        %v7493 = vrot.slane %v7464, 1
        %v7494 = vrot.slane %v7472, 1
        %v7495 = vrot.slane %v7480, 1
        %v7496 = vrot.slane %v7479, 1
        %v7497 = vrot.slane %v7481, 1
        %v7530 = vadd.f32 %v6831, %v7421
        %v7531 = vadd.f32 %v6839, %v7482
        %v7532 = vadd.f32 %v6838, %v7429
        %v7533 = vadd.f32 %v6840, %v7483
        %v7534 = vadd.f32 %v6848, %v7428
        %v7535 = vadd.f32 %v6856, %v7484
        %v7536 = vadd.f32 %v6855, %v7430
        %v7537 = vadd.f32 %v6857, %v7485
        %v7538 = vadd.f32 %v6865, %v7438
        %v7539 = vadd.f32 %v6873, %v7486
        %v7540 = vadd.f32 %v6872, %v7446
        %v7541 = vadd.f32 %v6874, %v7487
        %v7542 = vadd.f32 %v6882, %v7445
        %v7543 = vadd.f32 %v6890, %v7488
        %v7544 = vadd.f32 %v6889, %v7447
        %v7545 = vadd.f32 %v6891, %v7489
        %v7546 = vadd.f32 %v6899, %v7455
        %v7547 = vadd.f32 %v6907, %v7490
        %v7548 = vadd.f32 %v6906, %v7463
        %v7549 = vadd.f32 %v6908, %v7491
        %v7550 = vadd.f32 %v6916, %v7462
        %v7551 = vadd.f32 %v6924, %v7492
        %v7552 = vadd.f32 %v6923, %v7464
        %v7553 = vadd.f32 %v6925, %v7493
        %v7554 = vadd.f32 %v6933, %v7472
        %v7555 = vadd.f32 %v6941, %v7494
        %v7556 = vadd.f32 %v6940, %v7480
        %v7557 = vadd.f32 %v6942, %v7495
        %v7558 = vadd.f32 %v6950, %v7479
        %v7559 = vadd.f32 %v6958, %v7496
        %v7560 = vadd.f32 %v6957, %v7481
        %v7561 = vadd.f32 %v6959, %v7497
        %v7594 = vlaneseq
        %v7595 = vshrl.u32 %v7594, 7
        %v7596 = vsub.s32 0, %v7595
        %v7597 = vrot.slane %v7530, %v7596
        %v7598 = vlaneseq
        %v7599 = vshrl.u32 %v7598, 7
        %v7600 = vsub.s32 0, %v7599
        %v7601 = vrot.slane %v7531, %v7600
        %v7602 = vlaneseq
        %v7603 = vshrl.u32 %v7602, 7
        %v7604 = vsub.s32 0, %v7603
        %v7605 = vrot.slane %v7532, %v7604
        %v7606 = vlaneseq
        %v7607 = vshrl.u32 %v7606, 7
        %v7608 = vsub.s32 0, %v7607
        %v7609 = vrot.slane %v7533, %v7608
        %v7610 = vlaneseq
        %v7611 = vshrl.u32 %v7610, 7
        %v7612 = vsub.s32 0, %v7611
        %v7613 = vrot.slane %v7534, %v7612
        %v7614 = vlaneseq
        %v7615 = vshrl.u32 %v7614, 7
        %v7616 = vsub.s32 0, %v7615
        %v7617 = vrot.slane %v7535, %v7616
        %v7618 = vlaneseq
        %v7619 = vshrl.u32 %v7618, 7
        %v7620 = vsub.s32 0, %v7619
        %v7621 = vrot.slane %v7536, %v7620
        %v7622 = vlaneseq
        %v7623 = vshrl.u32 %v7622, 7
        %v7624 = vsub.s32 0, %v7623
        %v7625 = vrot.slane %v7537, %v7624
        %v7626 = vlaneseq
        %v7627 = vshrl.u32 %v7626, 7
        %v7628 = vsub.s32 0, %v7627
        %v7629 = vrot.slane %v7538, %v7628
        %v7630 = vlaneseq
        %v7631 = vshrl.u32 %v7630, 7
        %v7632 = vsub.s32 0, %v7631
        %v7633 = vrot.slane %v7539, %v7632
        %v7634 = vlaneseq
        %v7635 = vshrl.u32 %v7634, 7
        %v7636 = vsub.s32 0, %v7635
        %v7637 = vrot.slane %v7540, %v7636
        %v7638 = vlaneseq
        %v7639 = vshrl.u32 %v7638, 7
        %v7640 = vsub.s32 0, %v7639
        %v7641 = vrot.slane %v7541, %v7640
        %v7642 = vlaneseq
        %v7643 = vshrl.u32 %v7642, 7
        %v7644 = vsub.s32 0, %v7643
        %v7645 = vrot.slane %v7542, %v7644
        %v7646 = vlaneseq
        %v7647 = vshrl.u32 %v7646, 7
        %v7648 = vsub.s32 0, %v7647
        %v7649 = vrot.slane %v7543, %v7648
        %v7650 = vlaneseq
        %v7651 = vshrl.u32 %v7650, 7
        %v7652 = vsub.s32 0, %v7651
        %v7653 = vrot.slane %v7544, %v7652
        %v7654 = vlaneseq
        %v7655 = vshrl.u32 %v7654, 7
        %v7656 = vsub.s32 0, %v7655
        %v7657 = vrot.slane %v7545, %v7656
        %v7658 = vlaneseq
        %v7659 = vshrl.u32 %v7658, 7
        %v7660 = vsub.s32 0, %v7659
        %v7661 = vrot.slane %v7546, %v7660
        %v7662 = vlaneseq
        %v7663 = vshrl.u32 %v7662, 7
        %v7664 = vsub.s32 0, %v7663
        %v7665 = vrot.slane %v7547, %v7664
        %v7666 = vlaneseq
        %v7667 = vshrl.u32 %v7666, 7
        %v7668 = vsub.s32 0, %v7667
        %v7669 = vrot.slane %v7548, %v7668
        %v7670 = vlaneseq
        %v7671 = vshrl.u32 %v7670, 7
        %v7672 = vsub.s32 0, %v7671
        %v7673 = vrot.slane %v7549, %v7672
        %v7674 = vlaneseq
        %v7675 = vshrl.u32 %v7674, 7
        %v7676 = vsub.s32 0, %v7675
        %v7677 = vrot.slane %v7550, %v7676
        %v7678 = vlaneseq
        %v7679 = vshrl.u32 %v7678, 7
        %v7680 = vsub.s32 0, %v7679
        %v7681 = vrot.slane %v7551, %v7680
        %v7682 = vlaneseq
        %v7683 = vshrl.u32 %v7682, 7
        %v7684 = vsub.s32 0, %v7683
        %v7685 = vrot.slane %v7552, %v7684
        %v7686 = vlaneseq
        %v7687 = vshrl.u32 %v7686, 7
        %v7688 = vsub.s32 0, %v7687
        %v7689 = vrot.slane %v7553, %v7688
        %v7690 = vlaneseq
        %v7691 = vshrl.u32 %v7690, 7
        %v7692 = vsub.s32 0, %v7691
        %v7693 = vrot.slane %v7554, %v7692
        %v7694 = vlaneseq
        %v7695 = vshrl.u32 %v7694, 7
        %v7696 = vsub.s32 0, %v7695
        %v7697 = vrot.slane %v7555, %v7696
        %v7698 = vlaneseq
        %v7699 = vshrl.u32 %v7698, 7
        %v7700 = vsub.s32 0, %v7699
        %v7701 = vrot.slane %v7556, %v7700
        %v7702 = vlaneseq
        %v7703 = vshrl.u32 %v7702, 7
        %v7704 = vsub.s32 0, %v7703
        %v7705 = vrot.slane %v7557, %v7704
        %v7706 = vlaneseq
        %v7707 = vshrl.u32 %v7706, 7
        %v7708 = vsub.s32 0, %v7707
        %v7709 = vrot.slane %v7558, %v7708
        %v7710 = vlaneseq
        %v7711 = vshrl.u32 %v7710, 7
        %v7712 = vsub.s32 0, %v7711
        %v7713 = vrot.slane %v7559, %v7712
        %v7714 = vlaneseq
        %v7715 = vshrl.u32 %v7714, 7
        %v7716 = vsub.s32 0, %v7715
        %v7717 = vrot.slane %v7560, %v7716
        %v7718 = vlaneseq
        %v7719 = vshrl.u32 %v7718, 7
        %v7720 = vsub.s32 0, %v7719
        %v7721 = vrot.slane %v7561, %v7720
        %v7722 = vsel %vm7266, %v7601, %v7597
        %v7723 = vsel %vm7269, %v7605, %v7722
        %v7724 = vsel %vm7272, %v7609, %v7723
        %v7725 = vsel %vm7275, %v7613, %v7724
        %v7726 = vsel %vm7278, %v7617, %v7725
        %v7727 = vsel %vm7281, %v7621, %v7726
        %v7728 = vsel %vm7284, %v7625, %v7727
        %v7729 = vsel %vm7266, %v7633, %v7629
        %v7730 = vsel %vm7269, %v7637, %v7729
        %v7731 = vsel %vm7272, %v7641, %v7730
        %v7732 = vsel %vm7275, %v7645, %v7731
        %v7733 = vsel %vm7278, %v7649, %v7732
        %v7734 = vsel %vm7281, %v7653, %v7733
        %v7735 = vsel %vm7284, %v7657, %v7734
        %v7736 = vsel %vm7266, %v7665, %v7661
        %v7737 = vsel %vm7269, %v7669, %v7736
        %v7738 = vsel %vm7272, %v7673, %v7737
        %v7739 = vsel %vm7275, %v7677, %v7738
        %v7740 = vsel %vm7278, %v7681, %v7739
        %v7741 = vsel %vm7281, %v7685, %v7740
        %v7742 = vsel %vm7284, %v7689, %v7741
        %v7743 = vsel %vm7266, %v7697, %v7693
        %v7744 = vsel %vm7269, %v7701, %v7743
        %v7745 = vsel %vm7272, %v7705, %v7744
        %v7746 = vsel %vm7275, %v7709, %v7745
        %v7747 = vsel %vm7278, %v7713, %v7746
        %v7748 = vsel %vm7281, %v7717, %v7747
        %v7749 = vsel %vm7284, %v7721, %v7748
        %7754 = vst.msk [vmem:[%s393] sm:$0xff] %vm4708, %v7728
        %7755 = vst.msk [vmem:[%s393 + $0x8] sm:$0xff] %vm4708, %v7735
        %7756 = vst.msk [vmem:[%s393 + $0x10] sm:$0xff] %vm4708, %v7742
        %7757 = vst.msk [vmem:[%s393 + $0x18] sm:$0xff] %vm4708, %v7749
        %s7758 = sand.u32 %s283, 1
        %s7759 = scalar_lea.sflag [#allocation5], %s7758
        %s7760 = sand.u32 %s283, 1
        %s7761 = smul.addr %s7760, 32
        %s7762 = scalar_lea.vmem [#allocation4], %s7761
        // Predicated region
        $region89: #{tpu_custom_call.1} parent=63 // pred_check
          %p7763 = pneg %p293
        $region90: #{tpu_custom_call.1} parent=63 // pred_check_branch
          %7765 = sbr.rel (%p7763) target = $region92
        $region91: #{tpu_custom_call.1} parent=63 // pred_region
          %s7766 = smul.u32 4, %s30
          %s7768 = ssub.s32 512, 512
          %7769 = vsyncadd %s7759, %s7768
          %s7770 = smul.addr %s29, 8
          %s7771 = sadd.s32 %s7766, %s7770
          %s7772 = smul.addr %s7771, 128
          %s7773 = scalar_lea.hbm %s11, %s7772
          %s7774 = sshll.u32 %s7762, 4
          %s7775 = int_to_ptr.vmem [resolvable:$true] %s7774
          %7780 = dma.vmem_to_hbm [thread:$0]  %s7775, 512, %s7773, %s7759, 128, 128, 8
        $region92: #{tpu_custom_call.1} parent=63 // pred_fallthru
          _
      $region64: #{tpu_custom_call.1} parent=5 // pred_fallthru
        _
      %p7781 = scmp.le.s32.totalorder 2, %s20
      // Predicated region
      $region93: #{tpu_custom_call.1} parent=5 // pred_check
        %p7782 = pneg %p7781
      $region94: #{tpu_custom_call.1} parent=5 // pred_check_branch
        %7784 = sbr.rel (%p7782) target = $region96
      $region95: #{tpu_custom_call.1} parent=5 // pred_region
        %s7785 = ssub.s32 %s20, 2
        // Predicated region
        $region97: #{tpu_custom_call.1} parent=95 // pred_check
          %p7786 = pneg %p299
        $region98: #{tpu_custom_call.1} parent=95 // pred_check_branch
          %7788 = sbr.rel (%p7786) target = $region100
        $region99: #{tpu_custom_call.1} parent=95 // pred_region
          %s7789 = sand.u32 %s284, 1
          %s7790 = scalar_lea.sflag [#allocation5], %s7789
          %s7791 = sand.u32 %s284, 1
          %s7792 = smul.addr %s7791, 32
          %s7793 = scalar_lea.vmem [#allocation4], %s7792
          %7794 = dma.done %s7790, 512
        $region100: #{tpu_custom_call.1} parent=95 // pred_fallthru
          _
      $region96: #{tpu_custom_call.1} parent=5 // pred_fallthru
        _
    $region6: #{tpu_custom_call.1} parent=1 // loop_footer
      %s24 = sadd.s32 1, %s20
    $region7: #{tpu_custom_call.1} parent=1 // loop_footer_branch
      %19 = sbr.rel target = $region3
    $region8: #{tpu_custom_call.1} parent=1 // loop_exit
      _
    %7795 = vsyncpa [#allocation5], 1
    %s7796 = scalar_lea.sflag [#allocation5], 1
    %7797 = vsyncpa %s7796, 1

</llo_original>
